<compile_context>
chip_gen: v7x
topology: tpu7x:2x2x1
jax: 0.10.0
libtpu: 0.0.40
codegen_flags: <defaults>
</compile_context>

<pallas_src>
import functools

import numpy as np
import jax
import jax.numpy as jnp
from jax.experimental import pallas as pl
from jax.experimental.pallas import tpu as pltpu

LATENT = 128            # self.latent_dim
STRIDE = 8              # self.stride
S_FRAMES = 8            # self.S
DEPTH_EXTEND_MARGIN = 0.2
N_FREQS = 10            # embed3d: Embedder_Fourier(input_dim=3, max_freq_log2=10, N_freqs=10)
MAX_FREQ_LOG2 = 10.0
PE_DIM = 3 + 2 * N_FREQS * 3  # 63

_FREQS = np.array([2.0 ** (MAX_FREQ_LOG2 * i / (N_FREQS - 1)) for i in range(N_FREQS)],
                  np.float32)
# Row r of the 60 trig rows corresponds to coordinate (r % 3), frequency (r // 6),
# sin if (r % 6) < 3 else cos (computed as sin(u + pi/2)) -> matches the original
# channel order [xyz, sin(f0 xyz), cos(f0 xyz), sin(f1 xyz), ...].
_TRIG_SCALE = np.repeat(_FREQS, 6).reshape(2 * N_FREQS * 3, 1).astype(np.float32)
_TRIG_PHASE = np.tile(np.array([0.0] * 3 + [np.pi / 2] * 3, np.float32),
                      N_FREQS).reshape(2 * N_FREQS * 3, 1).astype(np.float32)


def _round_up(v, m):
    return ((v + m - 1) // m) * m


def _default_vmem_limit():
    # generation-aware scoped-VMEM budget: half of physical VMEM, capped.
    cap = 128 * 1024 * 1024
    try:
        info = pltpu.get_tpu_info()
        cap = int(getattr(info, "vmem_capacity_bytes", cap) or cap)
    except Exception:
        pass
    return max(16 * 1024 * 1024, min(cap // 2, 96 * 1024 * 1024))


_VMEM_LIMIT = _default_vmem_limit()


def _cparams(*sems):
    return pltpu.CompilerParams(dimension_semantics=sems,
                                vmem_limit_bytes=_VMEM_LIMIT)


# ----------------------------------------------------------------------------
# Pallas kernels
# ----------------------------------------------------------------------------
def depth_minmax_kernel(d_ref, min_ref, max_ref, vmin_ref, vmax_ref):
    # Masked min/max of depth (> 0.01).  Per-block work is pure elementwise VPU
    # min/max into an (8, W) accumulator; the single cross-lane/sublane XLU
    # reduce and the (1,1) store happen only on the last grid step.
    i = pl.program_id(0)

    @pl.when(i == 0)
    def _():
        vmin_ref[...] = jnp.full(vmin_ref.shape, 1e30, jnp.float32)
        vmax_ref[...] = jnp.full(vmax_ref.shape, -1e30, jnp.float32)

    d = d_ref[...]
    rows, w = d.shape
    mask = d > 0.01
    dmin = jnp.where(mask, d, 1e30).reshape(rows // 8, 8, w)
    dmax = jnp.where(mask, d, -1e30).reshape(rows // 8, 8, w)
    vmin_ref[...] = jnp.minimum(vmin_ref[...], jnp.min(dmin, axis=0))
    vmax_ref[...] = jnp.maximum(vmax_ref[...], jnp.max(dmax, axis=0))

    @pl.when(i == pl.num_programs(0) - 1)
    def _():
        min_ref[...] = jnp.min(vmin_ref[...], keepdims=True)
        max_ref[...] = jnp.max(vmax_ref[...], keepdims=True)


def fourier_kernel(x_ref, scale_ref, phase_ref, o_ref):
    # Embedder_Fourier (include_input=True), lane-dense layout:
    # x_ref: (3, Pt) normalized coords with the point dim on lanes,
    # o_ref: (63, Pt).  cos is computed as sin(u + pi/2) so all 60 trig rows
    # go through a single lane-dense EUP pass.  The per-row frequency scale /
    # phase tables are kernel inputs (Pallas forbids captured array constants).
    x = x_ref[...]                                               # (3, Pt)
    xt = jnp.concatenate([x] * (2 * N_FREQS), axis=0)            # (60, Pt)
    trig = jnp.sin(xt * scale_ref[...] + phase_ref[...])
    o_ref[...] = jnp.concatenate([x, trig], axis=0)


def fnet_kernel(x_ref, w_ref, b_ref, o_ref):
    # TODO(synk): BasicEncoder's full residual CNN is defined elsewhere; this
    # stand-in is a single stride-8 patchify conv + InstanceNorm + ReLU with
    # the correct in/out shapes ((T,3,H,W) -> (T,128,H/8,W/8)).
    # x_ref: (1, P, K) bf16, w_ref: (K, C) bf16, b_ref: (1, C) f32, o_ref: (1, P, C) f32
    feat = jnp.dot(x_ref[0], w_ref[...], preferred_element_type=jnp.float32)
    feat = feat + b_ref[...]
    mu = jnp.mean(feat, axis=0, keepdims=True)                    # stats kept in f32
    var = jnp.mean((feat - mu) ** 2, axis=0, keepdims=True)
    feat = (feat - mu) * jax.lax.rsqrt(var + 1e-5)
    o_ref[0] = jnp.maximum(feat, 0.0)


def _conv3x3_taps(x, w, Hs, Ws):
    # 3x3 conv on a spatially (1,1)-padded channel-last tile as 9 accumulating
    # MXU matmuls (one per (dy,dx) tap, K = Cin each) -- no (rows, 9*Cin)
    # im2col concat copy.  x: (Hs+2, Ws+2, Cin) array or ref (any float dtype),
    # w: (9, Cin, Cout) bf16 ref/array.  Returns (Hs*Ws, Cout) f32.
    cin = x.shape[-1]
    acc = None
    for dy in range(3):
        for dx in range(3):
            patch = x[dy:dy + Hs, dx:dx + Ws, :].reshape(Hs * Ws, cin)
            patch = patch.astype(jnp.bfloat16)
            part = jnp.dot(patch, w[dy * 3 + dx],
                           preferred_element_type=jnp.float32)
            acc = part if acc is None else acc + part
    return acc


def conv3x3_kernel(x_ref, w_ref, b_ref, o_ref, *, relu):
    # x_ref: (1, Hs+2, Ws+2, Cin) bf16; w_ref: (9, Cin, Cout) bf16;
    # b_ref: (1, Cout) f32; o_ref: (1, Hs, Ws, Cout) f32
    _, Hs, Ws, Cout = o_ref.shape
    acc = _conv3x3_taps(x_ref[0], w_ref, Hs, Ws) + b_ref[...]
    if relu:
        acc = jnp.maximum(acc, 0.0)
    o_ref[0] = acc.reshape(Hs, Ws, Cout)


def head_pair_kernel(x_ref, w1_ref, b1_ref, w2_ref, b2_ref, o_ref, mid_ref):
    # Fused head: conv3x3 + ReLU -> conv3x3.  The intermediate activation stays
    # in a VMEM scratch with a zero 1-pixel border; only the border is zeroed
    # (the interior is fully overwritten every step) and conv-1's result is
    # written straight into the interior.
    # TODO(synk): bf16 scratch + sublane-aligned interior offset would further
    # halve scratch footprint / conv-2 read traffic (kept f32 for lowering safety).
    _, Hs, Ws, C = o_ref.shape
    mid = jnp.maximum(_conv3x3_taps(x_ref[0], w1_ref, Hs, Ws) + b1_ref[...], 0.0)
    zrow = jnp.zeros((1, Ws + 2, C), mid_ref.dtype)
    zcol = jnp.zeros((Hs + 2, 1, C), mid_ref.dtype)
    mid_ref[0:1, :, :] = zrow
    mid_ref[Hs + 1:Hs + 2, :, :] = zrow
    mid_ref[:, 0:1, :] = zcol
    mid_ref[:, Ws + 1:Ws + 2, :] = zcol
    mid_ref[1:Hs + 1, 1:Ws + 1, :] = mid.reshape(Hs, Ws, C)
    out = _conv3x3_taps(mid_ref, w2_ref, Hs, Ws) + b2_ref[...]
    o_ref[0] = out.reshape(Hs, Ws, C)


def trilerp_kernel(idx_ref, wgt_ref, fmap_ref, o_ref):
    # Block-of-queries bilinear sampling.  The whole feature plane is resident
    # in VMEM (constant-index full-array BlockSpec); the 4 corner rows of each
    # query are gathered with dynamic-sublane slices inside a fori_loop and
    # blended on the VPU, so there is one grid step per *block* of queries and
    # no tiny per-query DMAs.
    # idx_ref/wgt_ref: SMEM (4, Npad) int32/f32 (long axis last, no SMEM
    # padding blow-up); fmap_ref: (HW, C) f32; o_ref: (nb, C) f32.
    nb = o_ref.shape[0]
    base = pl.program_id(0) * nb

    def body(i, carry):
        q = base + i
        row = (wgt_ref[0, q] * fmap_ref[pl.ds(idx_ref[0, q], 1), :]
               + wgt_ref[1, q] * fmap_ref[pl.ds(idx_ref[1, q], 1), :]
               + wgt_ref[2, q] * fmap_ref[pl.ds(idx_ref[2, q], 1), :]
               + wgt_ref[3, q] * fmap_ref[pl.ds(idx_ref[3, q], 1), :])
        o_ref[pl.ds(i, 1), :] = row
        return carry

    jax.lax.fori_loop(0, nb, body, 0)


# ----------------------------------------------------------------------------
# Pallas wrappers
# ----------------------------------------------------------------------------
def depth_minmax_pallas(d2):
    # d2: (R, W) float32 -> scalar masked min / max
    R, W = d2.shape
    block_rows = min(1024, _round_up(R, 8))
    R_pad = _round_up(R, block_rows)
    if R_pad != R:
        d2 = jnp.pad(d2, ((0, R_pad - R), (0, 0)))      # zeros fail the > 0.01 mask
    mn, mx = pl.pallas_call(
        depth_minmax_kernel,
        out_shape=(jax.ShapeDtypeStruct((1, 1), jnp.float32),
                   jax.ShapeDtypeStruct((1, 1), jnp.float32)),
        grid=(R_pad // block_rows,),
        in_specs=[pl.BlockSpec((block_rows, W), lambda i: (i, 0))],
        out_specs=(pl.BlockSpec((1, 1), lambda i: (0, 0)),
                   pl.BlockSpec((1, 1), lambda i: (0, 0))),
        scratch_shapes=[pltpu.VMEM((8, W), jnp.float32),
                        pltpu.VMEM((8, W), jnp.float32)],
        compiler_params=_cparams("arbitrary"),
    )(d2)
    return mn[0, 0], mx[0, 0]


def fourier_embed_pallas(x_cn):
    # x_cn: (3, P) normalized coords (channel-major) -> (63, P), points on lanes.
    P = x_cn.shape[1]
    p_tile = min(2048, _round_up(P, 128))         # large tiles: step-overhead bound otherwise
    P_pad = _round_up(P, p_tile)
    if P_pad != P:
        x_cn = jnp.pad(x_cn, ((0, 0), (0, P_pad - P)))
    scale = jnp.asarray(_TRIG_SCALE)              # (60, 1) kernel inputs, not captured consts
    phase = jnp.asarray(_TRIG_PHASE)
    out = pl.pallas_call(
        fourier_kernel,
        out_shape=jax.ShapeDtypeStruct((PE_DIM, P_pad), jnp.float32),
        grid=(P_pad // p_tile,),
        in_specs=[pl.BlockSpec((3, p_tile), lambda i: (0, i)),
                  pl.BlockSpec((2 * N_FREQS * 3, 1), lambda i: (0, 0)),
                  pl.BlockSpec((2 * N_FREQS * 3, 1), lambda i: (0, 0))],
        out_specs=pl.BlockSpec((PE_DIM, p_tile), lambda i: (0, i)),
        compiler_params=_cparams("parallel"),
    )(x_cn, scale, phase)
    return out[:, :P]


def fnet_standin_pallas(rgbs_nchw, w, b, stride):
    # rgbs_nchw: (T, 3, H, W) -> (T, H/stride, W/stride, 128) NHWC
    # TODO(synk): fold the stride-8 patchify into the kernel via a row-strip
    # index_map over the NCHW input to avoid the wrapper transpose HBM pass.
    T, C, H, W = rgbs_nchw.shape
    h, wd = H // stride, W // stride
    x = jnp.transpose(rgbs_nchw, (0, 2, 3, 1))                    # (T,H,W,3)
    patches = x.reshape(T, h, stride, wd, stride, C)
    patches = patches.transpose(0, 1, 3, 2, 4, 5).reshape(T, h * wd,
                                                          stride * stride * C)
    patches = patches.astype(jnp.bfloat16)
    K = stride * stride * C
    Cout = w.shape[-1]
    out = pl.pallas_call(
        fnet_kernel,
        out_shape=jax.ShapeDtypeStruct((T, h * wd, Cout), jnp.float32),
        grid=(T,),
        in_specs=[pl.BlockSpec((1, h * wd, K), lambda t: (t, 0, 0)),
                  pl.BlockSpec((K, Cout), lambda t: (0, 0)),
                  pl.BlockSpec((1, Cout), lambda t: (0, 0))],
        out_specs=pl.BlockSpec((1, h * wd, Cout), lambda t: (t, 0, 0)),
        compiler_params=_cparams("parallel"),
    )(patches, w.astype(jnp.bfloat16), b.reshape(1, Cout))
    return out.reshape(T, h, wd, Cout)


def conv3x3_pallas(x, w, b, relu=False):
    # x: (N, Hs, Ws, Cin) NHWC f32; w: (3,3,Cin,Cout); b: (Cout,)
    # activations DMA'd as bf16 (data-movement-bound path); f32 accumulation.
    N, Hs, Ws, Cin = x.shape
    Cout = w.shape[-1]
    Cin_p = _round_up(Cin, 64)                   # 191 -> 192: no wasted MXU FLOPs
    if Cin_p != Cin:
        x = jnp.pad(x, ((0, 0), (0, 0), (0, 0), (0, Cin_p - Cin)))
        w = jnp.pad(w, ((0, 0), (0, 0), (0, Cin_p - Cin), (0, 0)))
    xp = jnp.pad(x, ((0, 0), (1, 1), (1, 1), (0, 0))).astype(jnp.bfloat16)  # padding=1
    wc = w.reshape(9, Cin_p, Cout).astype(jnp.bfloat16)                     # per-tap weights
    # TODO(synk): for large resolutions, row-strip (halo) blocking over Hs would
    # bound per-step VMEM independent of frame size (relevant on v7x's 64 MiB VMEM).
    return pl.pallas_call(
        functools.partial(conv3x3_kernel, relu=relu),
        out_shape=jax.ShapeDtypeStruct((N, Hs, Ws, Cout), jnp.float32),
        grid=(N,),
        in_specs=[pl.BlockSpec((1, Hs + 2, Ws + 2, Cin_p), lambda n: (n, 0, 0, 0)),
                  pl.BlockSpec((9, Cin_p, Cout), lambda n: (0, 0, 0)),
                  pl.BlockSpec((1, Cout), lambda n: (0, 0))],
        out_specs=pl.BlockSpec((1, Hs, Ws, Cout), lambda n: (n, 0, 0, 0)),
        compiler_params=_cparams("parallel"),
    )(xp, wc, b.reshape(1, Cout))


def head_pair_pallas(x, w1, b1, w2, b2):
    # fused nn.Sequential(Conv2d 3x3, ReLU, Conv2d 3x3) per frame
    T, Hs, Ws, C = x.shape
    xp = jnp.pad(x, ((0, 0), (1, 1), (1, 1), (0, 0))).astype(jnp.bfloat16)
    w1c = w1.reshape(9, C, C).astype(jnp.bfloat16)
    w2c = w2.reshape(9, C, C).astype(jnp.bfloat16)
    return pl.pallas_call(
        head_pair_kernel,
        out_shape=jax.ShapeDtypeStruct((T, Hs, Ws, C), jnp.float32),
        grid=(T,),
        in_specs=[pl.BlockSpec((1, Hs + 2, Ws + 2, C), lambda t: (t, 0, 0, 0)),
                  pl.BlockSpec((9, C, C), lambda t: (0, 0, 0)),
                  pl.BlockSpec((1, C), lambda t: (0, 0)),
                  pl.BlockSpec((9, C, C), lambda t: (0, 0, 0)),
                  pl.BlockSpec((1, C), lambda t: (0, 0))],
        out_specs=pl.BlockSpec((1, Hs, Ws, C), lambda t: (t, 0, 0, 0)),
        scratch_shapes=[pltpu.VMEM((Hs + 2, Ws + 2, C), jnp.float32)],
        compiler_params=_cparams("parallel"),
    )(xp, w1c, b1.reshape(1, C), w2c, b2.reshape(1, C))


def sample_plane_pallas(fmap_flat, x, y, h, w):
    # bilinear sampling (border clamp) of fmap_flat ((h*w, C), row-major) at
    # pixel coords (x, y); block-of-queries gather with the plane resident in VMEM.
    N = x.shape[0]
    HW, C = fmap_flat.shape
    x0 = jnp.floor(x)
    y0 = jnp.floor(y)
    wx = x - x0
    wy = y - y0
    x0i = jnp.clip(x0.astype(jnp.int32), 0, w - 1)
    x1i = jnp.clip(x0.astype(jnp.int32) + 1, 0, w - 1)
    y0i = jnp.clip(y0.astype(jnp.int32), 0, h - 1)
    y1i = jnp.clip(y0.astype(jnp.int32) + 1, 0, h - 1)
    # (4, N) layout: long query axis last so the SMEM tables do not pad 4 -> 128.
    idx = jnp.stack([y0i * w + x0i, y0i * w + x1i,
                     y1i * w + x0i, y1i * w + x1i], axis=0).astype(jnp.int32)
    wgt = jnp.stack([(1 - wx) * (1 - wy), wx * (1 - wy),
                     (1 - wx) * wy, wx * wy], axis=0).astype(jnp.float32)

    nb = min(256, _round_up(N, 8))
    N_pad = _round_up(N, nb)
    if N_pad != N:
        idx = jnp.pad(idx, ((0, 0), (0, N_pad - N)))
        wgt = jnp.pad(wgt, ((0, 0), (0, N_pad - N)))

    out = pl.pallas_call(
        trilerp_kernel,
        out_shape=jax.ShapeDtypeStruct((N_pad, C), jnp.float32),
        grid=(N_pad // nb,),
        in_specs=[pl.BlockSpec(memory_space=pltpu.MemorySpace.SMEM),   # idx (4, Npad)
                  pl.BlockSpec(memory_space=pltpu.MemorySpace.SMEM),   # wgt (4, Npad)
                  pl.BlockSpec((HW, C), lambda n: (0, 0))],            # plane, VMEM resident
        out_specs=pl.BlockSpec((nb, C), lambda n: (n, 0)),
        compiler_params=_cparams("parallel"),
    )(idx, wgt, fmap_flat)
    return out[:N]


# ----------------------------------------------------------------------------
# Plain-JAX glue
# ----------------------------------------------------------------------------
def splat_to_plane(feat, z, Dz, keep_axis):
    """softsplat(..., strMode='avg') specialised to the tri-plane flows.

    The flows are Fxy2yz = [y - x, z - y] and Fxy2xz = [0, z - y], so the output
    x coordinate is an exact integer (y resp. x) and only the output row (z) is
    fractional: the 4-corner bilinear splat degenerates to a 2-tap splat along z,
    expressed as a one-hot matmul (einsum, bf16 operands + f32 accumulation ->
    MXU) instead of serialized scatter-adds.
    TODO(synk): a dedicated Pallas kernel could build the 2-tap one-hot and
    contract it without materializing M in HBM.
    feat: (T, h, w, C); z: (T, h, w) fractional target row; returns (T, Dz, *, C).
    """
    z0 = jnp.floor(z)
    w1 = z - z0
    w0 = 1.0 - w1
    z0i = z0.astype(jnp.int32)

    def tap(zi, wt):
        valid = (zi >= 0) & (zi < Dz)
        wt = jnp.where(valid, wt, 0.0)
        zi = jnp.clip(zi, 0, Dz - 1)
        return jax.nn.one_hot(zi, Dz, dtype=jnp.float32) * wt[..., None]

    M = tap(z0i, w0) + tap(z0i + 1, w1)                     # (T, h, w, Dz) f32
    Mb = M.astype(jnp.bfloat16)
    fb = feat.astype(jnp.bfloat16)
    if keep_axis == "x":                                    # contract over y -> (T, Dz, w, C)
        num = jnp.einsum("tyxd,tyxc->tdxc", Mb, fb,
                         preferred_element_type=jnp.float32)
        den = jnp.einsum("tyxd->tdx", M)[..., None]
    else:                                                   # contract over x -> (T, Dz, h, C)
        num = jnp.einsum("tyxd,tyxc->tdyc", Mb, fb,
                         preferred_element_type=jnp.float32)
        den = jnp.einsum("tyxd->tdy", M)[..., None]
    return num / jnp.where(den == 0.0, 1.0, den)


# ----------------------------------------------------------------------------
# Forward (mirrors FeatureExtractor.forward, args.Embed3D=True, fmaps_=None)
# ----------------------------------------------------------------------------
def feature_extractor_forward(params, rgbds, queries):
    B, T, C4, H, W = rgbds.shape
    assert B == 1 and C4 == 4
    stride = STRIDE
    Dz = W // stride
    h, w = H // stride, W // stride
    S = S_FRAMES

    rgbs = rgbds[0, :, :3]          # (T, 3, H, W)
    depth_all = rgbds[:, :, 3]      # (B, T, H, W)

    # d_near / d_far : masked reduction in Pallas + query-z extrema
    d_near_img, d_far_img = depth_minmax_pallas(depth_all.reshape(-1, W))
    qz_all = queries.reshape(B, -1, 3)[:, :, 2]
    d_near = jnp.minimum(d_near_img, jnp.min(qz_all))
    d_far = jnp.maximum(d_far_img, jnp.max(qz_all))
    d_near = jnp.minimum(d_near - DEPTH_EXTEND_MARGIN, 0.01)
    d_far = d_far + DEPTH_EXTEND_MARGIN

    depths = (depth_all - d_near) / jnp.maximum(d_far - d_near, 1e-6)
    depths_dn = depths[:, :, ::stride, ::stride]       # nearest, scale 1/stride
    depths_dnG = (depths_dn * Dz)[0]                    # (T, h, w)

    gx = jnp.linspace(0.0, w - 1, w)
    gy = jnp.linspace(0.0, h - 1, h)
    X, Y = jnp.meshgrid(gx, gy)                          # (h, w): X=x, Y=y
    gridxy = jnp.stack([X, Y], axis=0)                   # (2, h, w)
    gridxyz = jnp.concatenate(
        [jnp.broadcast_to(gridxy[None], (T, 2, h, w)),
         depths_dnG[:, None]], axis=1)                   # (T, 3, h, w)

    # --- Embed3D positional encoding (lane-dense Fourier kernel) ---
    mins = gridxyz.min(axis=(0, 2, 3), keepdims=True)
    maxs = gridxyz.max(axis=(0, 2, 3), keepdims=True)
    gnm = 2.0 * ((gridxyz - mins) / jnp.maximum(maxs - mins, 1e-6) - 0.5)
    gnm_cn = jnp.transpose(gnm, (1, 0, 2, 3)).reshape(3, T * h * w)
    pe = fourier_embed_pallas(gnm_cn)                    # (63, P)
    featPE = pe.T.reshape(T, h, w, PE_DIM)

    # fnet + embedConv
    fnet_out = fnet_standin_pallas(rgbs, params["fnet_w"], params["fnet_b"],
                                   stride)               # (T, h, w, 128)
    fmaps_in = jnp.concatenate([fnet_out, featPE], axis=-1)   # (T, h, w, 191)
    fmapXY = conv3x3_pallas(fmaps_in, params["embedConv_w"],
                            params["embedConv_b"])       # (T, h, w, 128)

    # tri-plane forward warp (softsplat avg) + fused head conv pairs
    fmapYZ = splat_to_plane(fmapXY, depths_dnG, Dz, keep_axis="y")   # (T, Dz, h, 128)
    fmapXZ = splat_to_plane(fmapXY, depths_dnG, Dz, keep_axis="x")   # (T, Dz, w, 128)
    fmapYZ = head_pair_pallas(fmapYZ, params["headyz_w1"], params["headyz_b1"],
                              params["headyz_w2"], params["headyz_b2"])
    fmapXZ = head_pair_pallas(fmapXZ, params["headxz_w1"], params["headxz_b1"],
                              params["headxz_w2"], params["headxz_b2"])

    # coords_init = queries[:, :1]; xy /= stride; z left raw (mirrors the
    # reference sample_trifeat call, which does not re-normalize query z); t=0.
    coords = queries[0, 0]                               # (N, 3)
    cx = coords[:, 0] / float(stride)
    cy = coords[:, 1] / float(stride)
    cz = coords[:, 2]

    featxy = sample_plane_pallas(fmapXY[0].reshape(h * w, LATENT), cx, cy, h, w)
    featyz = sample_plane_pallas(fmapYZ[0].reshape(Dz * h, LATENT), cy, cz, Dz, h)
    featxz = sample_plane_pallas(fmapXZ[0].reshape(Dz * w, LATENT), cx, cz, Dz, w)

    N = coords.shape[0]

    def rep(f):  # (N, C) -> (B, S, N, C)  (repeat over S frames)
        return jnp.broadcast_to(f[None, None], (B, S, N, LATENT))

    return jnp.stack([rep(featxy), rep(featyz), rep(featxz)], axis=-1)


# ----------------------------------------------------------------------------
# Deterministic parameter init (shapes from the module's __init__)
# ----------------------------------------------------------------------------
def init_params(key):
    ks = jax.random.split(key, 6)

    def w(k, shape, scale=0.02):
        return scale * jax.random.normal(k, shape, dtype=jnp.float32)

    p = {
        "fnet_w": w(ks[0], (STRIDE * STRIDE * 3, LATENT)),
        "fnet_b": jnp.zeros((LATENT,), jnp.float32),
        "embedConv_w": w(ks[1], (3, 3, LATENT + PE_DIM, LATENT)),
        "embedConv_b": jnp.zeros((LATENT,), jnp.float32),
        "headyz_w1": w(ks[2], (3, 3, LATENT, LATENT)),
        "headyz_b1": jnp.zeros((LATENT,), jnp.float32),
        "headyz_w2": w(ks[3], (3, 3, LATENT, LATENT)),
        "headyz_b2": jnp.zeros((LATENT,), jnp.float32),
        "headxz_w1": w(ks[4], (3, 3, LATENT, LATENT)),
        "headxz_b1": jnp.zeros((LATENT,), jnp.float32),
        "headxz_w2": w(ks[5], (3, 3, LATENT, LATENT)),
        "headxz_b2": jnp.zeros((LATENT,), jnp.float32),
    }
    return p


if __name__ == "__main__":
    key = jax.random.PRNGKey(0)
    kp, k1, k2, k3, k4, k5 = jax.random.split(key, 6)

    B, T, H, W = 1, S_FRAMES, 32, 32
    N = 8

    params = init_params(kp)

    rgb = jax.random.uniform(k1, (B, T, 3, H, W), minval=0.0, maxval=255.0)
    depth = jax.random.uniform(k2, (B, T, 1, H, W), minval=0.5, maxval=5.0)
    rgbds = jnp.concatenate([rgb, depth], axis=2)        # (B, T, 4, H, W)

    qx = jax.random.uniform(k3, (B, T, N), minval=0.0, maxval=W - 1.0)
    qy = jax.random.uniform(k4, (B, T, N), minval=0.0, maxval=H - 1.0)
    qz = jax.random.uniform(k5, (B, T, N), minval=0.5, maxval=5.0)
    queries = jnp.stack([qx, qy, qz], axis=-1)           # (B, T, N, 3)

    fwd = jax.jit(feature_extractor_forward)
    out = fwd(params, rgbds, queries)
    jax.block_until_ready(out)

    expected = (B, S_FRAMES, N, LATENT, 3)
    assert out.shape == expected, (out.shape, expected)
    assert bool(jnp.all(jnp.isfinite(out)))
    print("KERNEL_OK")
</pallas_src>

<mosaic_0001>
module attributes {stable_mosaic.version = 11 : i64} {
  func.func @depth_minmax_kernel(%arg0: i32, %arg1: memref<256x32xf32, #tpu.memory_space<vmem>>, %arg2: memref<1x1xf32, #tpu.memory_space<vmem>>, %arg3: memref<1x1xf32, #tpu.memory_space<vmem>>, %arg4: memref<8x32xf32, #tpu.memory_space<vmem>>, %arg5: memref<8x32xf32, #tpu.memory_space<vmem>>) attributes {dimension_semantics = [#tpu.dimension_semantics<arbitrary>], iteration_bounds = array<i64: 1>, scalar_prefetch = 0 : i64, scratch_operands = 2 : i64, tpu.core_type = #tpu.core_type<tc>, window_params = [{transform_indices = @transform_0, window_bounds = array<i64: 256, 32>}, {pipeline_mode = #tpu.pipeline_mode<synchronous>, transform_indices = @transform_1, window_bounds = array<i64: 1, 1>}, {pipeline_mode = #tpu.pipeline_mode<synchronous>, transform_indices = @transform_2, window_bounds = array<i64: 1, 1>}]} {
    %c0_i32 = arith.constant 0 : i32
    %0 = arith.cmpi eq, %arg0, %c0_i32 : i32
    %1 = arith.extui %0 : i1 to i32
    %c0_i32_0 = arith.constant 0 : i32
    %2 = arith.cmpi ne, %1, %c0_i32_0 : i32
    scf.if %2 {
      %cst_16 = arith.constant 1.000000e+30 : f32
      %23 = vector.broadcast %cst_16 : f32 to vector<8x32xf32>
      %c0_17 = arith.constant 0 : index
      %c0_18 = arith.constant 0 : index
      %24 = vector.load %arg4[%c0_17, %c0_18] : memref<8x32xf32, #tpu.memory_space<vmem>>, vector<8x32xf32>
      tpu.vector_store %arg4[%c0_17, %c0_18], %23 {strides = array<i32>} : memref<8x32xf32, #tpu.memory_space<vmem>>, vector<8x32xf32>,
      %cst_19 = arith.constant -1.000000e+30 : f32
      %25 = vector.broadcast %cst_19 : f32 to vector<8x32xf32>
      %c0_20 = arith.constant 0 : index
      %c0_21 = arith.constant 0 : index
      %26 = vector.load %arg5[%c0_20, %c0_21] : memref<8x32xf32, #tpu.memory_space<vmem>>, vector<8x32xf32>
      tpu.vector_store %arg5[%c0_20, %c0_21], %25 {strides = array<i32>} : memref<8x32xf32, #tpu.memory_space<vmem>>, vector<8x32xf32>,
    } else {
    }
    %c0 = arith.constant 0 : index
    %c0_1 = arith.constant 0 : index
    %3 = vector.load %arg1[%c0, %c0_1] : memref<256x32xf32, #tpu.memory_space<vmem>>, vector<256x32xf32>
    %cst = arith.constant 0.00999999977 : f32
    %4 = vector.broadcast %cst : f32 to vector<256x32xf32>
    %5 = arith.cmpf ogt, %3, %4 : vector<256x32xf32>
    %cst_2 = arith.constant 1.000000e+30 : f32
    %6 = vector.broadcast %cst_2 : f32 to vector<256x32xf32>
    %7 = arith.select %5, %3, %6 : vector<256x32xi1>, vector<256x32xf32>
    %8 = vector.shape_cast %7 : vector<256x32xf32> to vector<32x8x32xf32>
    %cst_3 = arith.constant -1.000000e+30 : f32
    %9 = vector.broadcast %cst_3 : f32 to vector<256x32xf32>
    %10 = arith.select %5, %3, %9 : vector<256x32xi1>, vector<256x32xf32>
    %11 = vector.shape_cast %10 : vector<256x32xf32> to vector<32x8x32xf32>
    %c0_4 = arith.constant 0 : index
    %c0_5 = arith.constant 0 : index
    %12 = vector.load %arg4[%c0_4, %c0_5] : memref<8x32xf32, #tpu.memory_space<vmem>>, vector<8x32xf32>
    %cst_6 = arith.constant dense<0x7F800000> : vector<8x32xf32>
    %13 = vector.multi_reduction <minimumf>, %8, %cst_6 [0] : vector<32x8x32xf32> to vector<8x32xf32>
    %14 = arith.minimumf %12, %13 : vector<8x32xf32>
    %c0_7 = arith.constant 0 : index
    %c0_8 = arith.constant 0 : index
    %15 = vector.load %arg4[%c0_7, %c0_8] : memref<8x32xf32, #tpu.memory_space<vmem>>, vector<8x32xf32>
    tpu.vector_store %arg4[%c0_7, %c0_8], %14 {strides = array<i32>} : memref<8x32xf32, #tpu.memory_space<vmem>>, vector<8x32xf32>,
    %c0_9 = arith.constant 0 : index
    %c0_10 = arith.constant 0 : index
    %16 = vector.load %arg5[%c0_9, %c0_10] : memref<8x32xf32, #tpu.memory_space<vmem>>, vector<8x32xf32>
    %cst_11 = arith.constant dense<0xFF800000> : vector<8x32xf32>
    %17 = vector.multi_reduction <maximumf>, %11, %cst_11 [0] : vector<32x8x32xf32> to vector<8x32xf32>
    %18 = arith.maximumf %16, %17 : vector<8x32xf32>
    %c0_12 = arith.constant 0 : index
    %c0_13 = arith.constant 0 : index
    %19 = vector.load %arg5[%c0_12, %c0_13] : memref<8x32xf32, #tpu.memory_space<vmem>>, vector<8x32xf32>
    tpu.vector_store %arg5[%c0_12, %c0_13], %18 {strides = array<i32>} : memref<8x32xf32, #tpu.memory_space<vmem>>, vector<8x32xf32>,
    %c0_i32_14 = arith.constant 0 : i32
    %20 = arith.cmpi eq, %arg0, %c0_i32_14 : i32
    %21 = arith.extui %20 : i1 to i32
    %c0_i32_15 = arith.constant 0 : i32
    %22 = arith.cmpi ne, %21, %c0_i32_15 : i32
    scf.if %22 {
      %c0_16 = arith.constant 0 : index
      %c0_17 = arith.constant 0 : index
      %23 = vector.load %arg4[%c0_16, %c0_17] : memref<8x32xf32, #tpu.memory_space<vmem>>, vector<8x32xf32>
      %24 = vector.shape_cast %23 : vector<8x32xf32> to vector<1x8x32xf32>
      %cst_18 = arith.constant dense<0x7F800000> : vector<1xf32>
      %25 = vector.multi_reduction <minimumf>, %24, %cst_18 [1, 2] : vector<1x8x32xf32> to vector<1xf32>
      %26 = vector.shape_cast %25 : vector<1xf32> to vector<1x1x1xf32>
      %27 = vector.extract %26[0, 0, 0] : f32 from vector<1x1x1xf32>
      %28 = vector.broadcast %27 : f32 to vector<1x1xf32>
      %c0_19 = arith.constant 0 : index
      %c0_20 = arith.constant 0 : index
      %29 = vector.load %arg2[%c0_19, %c0_20] : memref<1x1xf32, #tpu.memory_space<vmem>>, vector<1x1xf32>
      tpu.vector_store %arg2[%c0_19, %c0_20], %28 {strides = array<i32>} : memref<1x1xf32, #tpu.memory_space<vmem>>, vector<1x1xf32>,
      %c0_21 = arith.constant 0 : index
      %c0_22 = arith.constant 0 : index
      %30 = vector.load %arg5[%c0_21, %c0_22] : memref<8x32xf32, #tpu.memory_space<vmem>>, vector<8x32xf32>
      %31 = vector.shape_cast %30 : vector<8x32xf32> to vector<1x8x32xf32>
      %cst_23 = arith.constant dense<0xFF800000> : vector<1xf32>
      %32 = vector.multi_reduction <maximumf>, %31, %cst_23 [1, 2] : vector<1x8x32xf32> to vector<1xf32>
      %33 = vector.shape_cast %32 : vector<1xf32> to vector<1x1x1xf32>
      %34 = vector.extract %33[0, 0, 0] : f32 from vector<1x1x1xf32>
      %35 = vector.broadcast %34 : f32 to vector<1x1xf32>
      %c0_24 = arith.constant 0 : index
      %c0_25 = arith.constant 0 : index
      %36 = vector.load %arg3[%c0_24, %c0_25] : memref<1x1xf32, #tpu.memory_space<vmem>>, vector<1x1xf32>
      tpu.vector_store %arg3[%c0_24, %c0_25], %35 {strides = array<i32>} : memref<1x1xf32, #tpu.memory_space<vmem>>, vector<1x1xf32>,
    } else {
    }
    return
  }
  func.func @transform_0(%arg0: i32) -> (i32, i32) {
    %c0_i32 = arith.constant 0 : i32
    %c0_i32_0 = arith.constant 0 : i32
    return %arg0, %c0_i32 : i32, i32
  }
  func.func @transform_1(%arg0: i32) -> (i32, i32) {
    %c0_i32 = arith.constant 0 : i32
    %c0_i32_0 = arith.constant 0 : i32
    %c0_i32_1 = arith.constant 0 : i32
    return %c0_i32, %c0_i32_0 : i32, i32
  }
  func.func @transform_2(%arg0: i32) -> (i32, i32) {
    %c0_i32 = arith.constant 0 : i32
    %c0_i32_0 = arith.constant 0 : i32
    %c0_i32_1 = arith.constant 0 : i32
    return %c0_i32, %c0_i32_0 : i32, i32
  }
}

module attributes {stable_mosaic.version = 11 : i64} {
  func.func @fourier_kernel(%arg0: i32, %arg1: memref<3x128xf32, #tpu.memory_space<vmem>>, %arg2: memref<60x1xf32, #tpu.memory_space<vmem>>, %arg3: memref<60x1xf32, #tpu.memory_space<vmem>>, %arg4: memref<63x128xf32, #tpu.memory_space<vmem>>) attributes {dimension_semantics = [#tpu.dimension_semantics<parallel>], iteration_bounds = array<i64: 1>, scalar_prefetch = 0 : i64, scratch_operands = 0 : i64, tpu.core_type = #tpu.core_type<tc>, window_params = [{transform_indices = @transform_0, window_bounds = array<i64: 3, 128>}, {pipeline_mode = #tpu.pipeline_mode<synchronous>, transform_indices = @transform_1, window_bounds = array<i64: 60, 1>}, {pipeline_mode = #tpu.pipeline_mode<synchronous>, transform_indices = @transform_2, window_bounds = array<i64: 60, 1>}, {transform_indices = @transform_3, window_bounds = array<i64: 63, 128>}]} {
    %c0 = arith.constant 0 : index
    %c0_0 = arith.constant 0 : index
    %0 = vector.load %arg1[%c0, %c0_0] : memref<3x128xf32, #tpu.memory_space<vmem>>, vector<3x128xf32>
    %1 = tpu.concatenate %0, %0, %0, %0, %0, %0, %0, %0, %0, %0, %0, %0, %0, %0, %0, %0 in 0 : vector<3x128xf32>, vector<3x128xf32>, vector<3x128xf32>, vector<3x128xf32>, vector<3x128xf32>, vector<3x128xf32>, vector<3x128xf32>, vector<3x128xf32>, vector<3x128xf32>, vector<3x128xf32>, vector<3x128xf32>, vector<3x128xf32>, vector<3x128xf32>, vector<3x128xf32>, vector<3x128xf32>, vector<3x128xf32> -> vector<48x128xf32>
    %2 = tpu.concatenate %0, %0, %0, %0 in 0 : vector<3x128xf32>, vector<3x128xf32>, vector<3x128xf32>, vector<3x128xf32> -> vector<12x128xf32>
    %3 = tpu.concatenate %1, %2 in 0 : vector<48x128xf32>, vector<12x128xf32> -> vector<60x128xf32>
    %c0_1 = arith.constant 0 : index
    %c0_2 = arith.constant 0 : index
    %4 = vector.load %arg2[%c0_1, %c0_2] : memref<60x1xf32, #tpu.memory_space<vmem>>, vector<60x1xf32>
    %5 = vector.broadcast %4 : vector<60x1xf32> to vector<60x128xf32>
    %6 = arith.mulf %3, %5 : vector<60x128xf32>
    %c0_3 = arith.constant 0 : index
    %c0_4 = arith.constant 0 : index
    %7 = vector.load %arg3[%c0_3, %c0_4] : memref<60x1xf32, #tpu.memory_space<vmem>>, vector<60x1xf32>
    %8 = vector.broadcast %7 : vector<60x1xf32> to vector<60x128xf32>
    %9 = arith.addf %6, %8 : vector<60x128xf32>
    %10 = math.sin %9 : vector<60x128xf32>
    %11 = tpu.concatenate %0, %10 in 0 : vector<3x128xf32>, vector<60x128xf32> -> vector<63x128xf32>
    %c0_5 = arith.constant 0 : index
    %c0_6 = arith.constant 0 : index
    %12 = vector.load %arg4[%c0_5, %c0_6] : memref<63x128xf32, #tpu.memory_space<vmem>>, vector<63x128xf32>
    tpu.vector_store %arg4[%c0_5, %c0_6], %11 {strides = array<i32>} : memref<63x128xf32, #tpu.memory_space<vmem>>, vector<63x128xf32>,
    return
  }
  func.func @transform_0(%arg0: i32) -> (i32, i32) {
    %c0_i32 = arith.constant 0 : i32
    %c0_i32_0 = arith.constant 0 : i32
    return %c0_i32, %arg0 : i32, i32
  }
  func.func @transform_1(%arg0: i32) -> (i32, i32) {
    %c0_i32 = arith.constant 0 : i32
    %c0_i32_0 = arith.constant 0 : i32
    %c0_i32_1 = arith.constant 0 : i32
    return %c0_i32, %c0_i32_0 : i32, i32
  }
  func.func @transform_2(%arg0: i32) -> (i32, i32) {
    %c0_i32 = arith.constant 0 : i32
    %c0_i32_0 = arith.constant 0 : i32
    %c0_i32_1 = arith.constant 0 : i32
    return %c0_i32, %c0_i32_0 : i32, i32
  }
  func.func @transform_3(%arg0: i32) -> (i32, i32) {
    %c0_i32 = arith.constant 0 : i32
    %c0_i32_0 = arith.constant 0 : i32
    return %c0_i32, %arg0 : i32, i32
  }
}

module attributes {stable_mosaic.version = 11 : i64} {
  func.func @fnet_kernel(%arg0: i32, %arg1: memref<1x16x192xbf16, #tpu.memory_space<vmem>>, %arg2: memref<192x128xbf16, #tpu.memory_space<vmem>>, %arg3: memref<1x128xf32, #tpu.memory_space<vmem>>, %arg4: memref<1x16x128xf32, #tpu.memory_space<vmem>>) attributes {dimension_semantics = [#tpu.dimension_semantics<parallel>], iteration_bounds = array<i64: 8>, scalar_prefetch = 0 : i64, scratch_operands = 0 : i64, tpu.core_type = #tpu.core_type<tc>, window_params = [{transform_indices = @transform_0, window_bounds = array<i64: 1, 16, 192>}, {pipeline_mode = #tpu.pipeline_mode<synchronous>, transform_indices = @transform_1, window_bounds = array<i64: 192, 128>}, {pipeline_mode = #tpu.pipeline_mode<synchronous>, transform_indices = @transform_2, window_bounds = array<i64: 1, 128>}, {transform_indices = @transform_3, window_bounds = array<i64: 1, 16, 128>}]} {
    %c0 = arith.constant 0 : index
    %c0_0 = arith.constant 0 : index
    %c0_1 = arith.constant 0 : index
    %0 = vector.load %arg1[%c0, %c0_0, %c0_1] : memref<1x16x192xbf16, #tpu.memory_space<vmem>>, vector<1x16x192xbf16>
    %1 = vector.shape_cast %0 : vector<1x16x192xbf16> to vector<16x192xbf16>
    %c0_2 = arith.constant 0 : index
    %c0_3 = arith.constant 0 : index
    %2 = vector.load %arg2[%c0_2, %c0_3] : memref<192x128xbf16, #tpu.memory_space<vmem>>, vector<192x128xbf16>
    %cst = arith.constant dense<0.000000e+00> : vector<16x128xf32>
    %3 = tpu.matmul %1, %2, %cst {dimension_numbers = #tpu.dot_dimension_numbers<[1], [0], [0], [1], [0, 0, 1, 1], [], []>} : vector<16x192xbf16>, vector<192x128xbf16>, vector<16x128xf32> -> vector<16x128xf32>
    %c0_4 = arith.constant 0 : index
    %c0_5 = arith.constant 0 : index
    %4 = vector.load %arg3[%c0_4, %c0_5] : memref<1x128xf32, #tpu.memory_space<vmem>>, vector<1x128xf32>
    %5 = vector.broadcast %4 : vector<1x128xf32> to vector<16x128xf32>
    %6 = arith.addf %3, %5 : vector<16x128xf32>
    %cst_6 = arith.constant dense<0.000000e+00> : vector<128xf32>
    %7 = vector.multi_reduction <add>, %6, %cst_6 [0] : vector<16x128xf32> to vector<128xf32>
    %8 = vector.shape_cast %7 : vector<128xf32> to vector<1x128xf32>
    %cst_7 = arith.constant 1.600000e+01 : f32
    %9 = vector.broadcast %cst_7 : f32 to vector<1x128xf32>
    %10 = arith.divf %8, %9 : vector<1x128xf32>
    %11 = vector.broadcast %10 : vector<1x128xf32> to vector<16x128xf32>
    %12 = arith.subf %6, %11 : vector<16x128xf32>
    %13 = arith.mulf %12, %12 : vector<16x128xf32>
    %cst_8 = arith.constant dense<0.000000e+00> : vector<128xf32>
    %14 = vector.multi_reduction <add>, %13, %cst_8 [0] : vector<16x128xf32> to vector<128xf32>
    %15 = vector.shape_cast %14 : vector<128xf32> to vector<1x128xf32>
    %cst_9 = arith.constant 1.600000e+01 : f32
    %16 = vector.broadcast %cst_9 : f32 to vector<1x128xf32>
    %17 = arith.divf %15, %16 : vector<1x128xf32>
    %18 = vector.broadcast %10 : vector<1x128xf32> to vector<16x128xf32>
    %19 = arith.subf %6, %18 : vector<16x128xf32>
    %cst_10 = arith.constant 9.99999974E-6 : f32
    %20 = vector.broadcast %cst_10 : f32 to vector<1x128xf32>
    %21 = arith.addf %17, %20 : vector<1x128xf32>
    %22 = math.rsqrt %21 : vector<1x128xf32>
    %23 = vector.broadcast %22 : vector<1x128xf32> to vector<16x128xf32>
    %24 = arith.mulf %19, %23 : vector<16x128xf32>
    %cst_11 = arith.constant 0.000000e+00 : f32
    %25 = vector.broadcast %cst_11 : f32 to vector<16x128xf32>
    %26 = arith.maximumf %24, %25 : vector<16x128xf32>
    %c0_12 = arith.constant 0 : index
    %c0_13 = arith.constant 0 : index
    %c0_14 = arith.constant 0 : index
    %27 = vector.load %arg4[%c0_12, %c0_13, %c0_14] : memref<1x16x128xf32, #tpu.memory_space<vmem>>, vector<1x16x128xf32>
    %28 = vector.shape_cast %27 : vector<1x16x128xf32> to vector<16x128xf32>
    %29 = vector.shape_cast %26 : vector<16x128xf32> to vector<1x16x128xf32>
    tpu.vector_store %arg4[%c0_12, %c0_13, %c0_14], %29 {strides = array<i32>} : memref<1x16x128xf32, #tpu.memory_space<vmem>>, vector<1x16x128xf32>,
    return
  }
  func.func @transform_0(%arg0: i32) -> (i32, i32, i32) {
    %c0_i32 = arith.constant 0 : i32
    %c0_i32_0 = arith.constant 0 : i32
    %c0_i32_1 = arith.constant 0 : i32
    return %arg0, %c0_i32, %c0_i32_0 : i32, i32, i32
  }
  func.func @transform_1(%arg0: i32) -> (i32, i32) {
    %c0_i32 = arith.constant 0 : i32
    %c0_i32_0 = arith.constant 0 : i32
    %c0_i32_1 = arith.constant 0 : i32
    return %c0_i32, %c0_i32_0 : i32, i32
  }
  func.func @transform_2(%arg0: i32) -> (i32, i32) {
    %c0_i32 = arith.constant 0 : i32
    %c0_i32_0 = arith.constant 0 : i32
    %c0_i32_1 = arith.constant 0 : i32
    return %c0_i32, %c0_i32_0 : i32, i32
  }
  func.func @transform_3(%arg0: i32) -> (i32, i32, i32) {
    %c0_i32 = arith.constant 0 : i32
    %c0_i32_0 = arith.constant 0 : i32
    %c0_i32_1 = arith.constant 0 : i32
    return %arg0, %c0_i32, %c0_i32_0 : i32, i32, i32
  }
}

module attributes {stable_mosaic.version = 11 : i64} {
  func.func @conv3x3_kernel(%arg0: i32, %arg1: memref<1x6x6x192xbf16, #tpu.memory_space<vmem>>, %arg2: memref<9x192x128xbf16, #tpu.memory_space<vmem>>, %arg3: memref<1x128xf32, #tpu.memory_space<vmem>>, %arg4: memref<1x4x4x128xf32, #tpu.memory_space<vmem>>) attributes {dimension_semantics = [#tpu.dimension_semantics<parallel>], iteration_bounds = array<i64: 8>, scalar_prefetch = 0 : i64, scratch_operands = 0 : i64, tpu.core_type = #tpu.core_type<tc>, window_params = [{transform_indices = @transform_0, window_bounds = array<i64: 1, 6, 6, 192>}, {pipeline_mode = #tpu.pipeline_mode<synchronous>, transform_indices = @transform_1, window_bounds = array<i64: 9, 192, 128>}, {pipeline_mode = #tpu.pipeline_mode<synchronous>, transform_indices = @transform_2, window_bounds = array<i64: 1, 128>}, {transform_indices = @transform_3, window_bounds = array<i64: 1, 4, 4, 128>}]} {
    %c0 = arith.constant 0 : index
    %c0_0 = arith.constant 0 : index
    %c0_1 = arith.constant 0 : index
    %c0_2 = arith.constant 0 : index
    %0 = vector.load %arg1[%c0, %c0_0, %c0_1, %c0_2] : memref<1x6x6x192xbf16, #tpu.memory_space<vmem>>, vector<1x6x6x192xbf16>
    %1 = vector.shape_cast %0 : vector<1x6x6x192xbf16> to vector<6x6x192xbf16>
    %2 = vector.extract_strided_slice %1 {offsets = [0, 0, 0], sizes = [4, 4, 192], strides = [1, 1, 1]} : vector<6x6x192xbf16> to vector<4x4x192xbf16>
    %3 = vector.shape_cast %2 : vector<4x4x192xbf16> to vector<16x192xbf16>
    %c0_3 = arith.constant 0 : index
    %c0_4 = arith.constant 0 : index
    %c0_5 = arith.constant 0 : index
    %4 = vector.load %arg2[%c0_3, %c0_4, %c0_5] : memref<9x192x128xbf16, #tpu.memory_space<vmem>>, vector<1x192x128xbf16>
    %5 = vector.shape_cast %4 : vector<1x192x128xbf16> to vector<192x128xbf16>
    %cst = arith.constant dense<0.000000e+00> : vector<16x128xf32>
    %6 = tpu.matmul %3, %5, %cst {dimension_numbers = #tpu.dot_dimension_numbers<[1], [0], [0], [1], [0, 0, 1, 1], [], []>} : vector<16x192xbf16>, vector<192x128xbf16>, vector<16x128xf32> -> vector<16x128xf32>
    %7 = vector.extract_strided_slice %1 {offsets = [0, 1, 0], sizes = [4, 4, 192], strides = [1, 1, 1]} : vector<6x6x192xbf16> to vector<4x4x192xbf16>
    %8 = vector.shape_cast %7 : vector<4x4x192xbf16> to vector<16x192xbf16>
    %c1 = arith.constant 1 : index
    %c0_6 = arith.constant 0 : index
    %c0_7 = arith.constant 0 : index
    %9 = vector.load %arg2[%c1, %c0_6, %c0_7] : memref<9x192x128xbf16, #tpu.memory_space<vmem>>, vector<1x192x128xbf16>
    %10 = vector.shape_cast %9 : vector<1x192x128xbf16> to vector<192x128xbf16>
    %cst_8 = arith.constant dense<0.000000e+00> : vector<16x128xf32>
    %11 = tpu.matmul %8, %10, %cst_8 {dimension_numbers = #tpu.dot_dimension_numbers<[1], [0], [0], [1], [0, 0, 1, 1], [], []>} : vector<16x192xbf16>, vector<192x128xbf16>, vector<16x128xf32> -> vector<16x128xf32>
    %12 = arith.addf %6, %11 : vector<16x128xf32>
    %13 = vector.extract_strided_slice %1 {offsets = [0, 2, 0], sizes = [4, 4, 192], strides = [1, 1, 1]} : vector<6x6x192xbf16> to vector<4x4x192xbf16>
    %14 = vector.shape_cast %13 : vector<4x4x192xbf16> to vector<16x192xbf16>
    %c2 = arith.constant 2 : index
    %c0_9 = arith.constant 0 : index
    %c0_10 = arith.constant 0 : index
    %15 = vector.load %arg2[%c2, %c0_9, %c0_10] : memref<9x192x128xbf16, #tpu.memory_space<vmem>>, vector<1x192x128xbf16>
    %16 = vector.shape_cast %15 : vector<1x192x128xbf16> to vector<192x128xbf16>
    %cst_11 = arith.constant dense<0.000000e+00> : vector<16x128xf32>
    %17 = tpu.matmul %14, %16, %cst_11 {dimension_numbers = #tpu.dot_dimension_numbers<[1], [0], [0], [1], [0, 0, 1, 1], [], []>} : vector<16x192xbf16>, vector<192x128xbf16>, vector<16x128xf32> -> vector<16x128xf32>
    %18 = arith.addf %12, %17 : vector<16x128xf32>
    %19 = vector.extract_strided_slice %1 {offsets = [1, 0, 0], sizes = [4, 4, 192], strides = [1, 1, 1]} : vector<6x6x192xbf16> to vector<4x4x192xbf16>
    %20 = vector.shape_cast %19 : vector<4x4x192xbf16> to vector<16x192xbf16>
    %c3 = arith.constant 3 : index
    %c0_12 = arith.constant 0 : index
    %c0_13 = arith.constant 0 : index
    %21 = vector.load %arg2[%c3, %c0_12, %c0_13] : memref<9x192x128xbf16, #tpu.memory_space<vmem>>, vector<1x192x128xbf16>
    %22 = vector.shape_cast %21 : vector<1x192x128xbf16> to vector<192x128xbf16>
    %cst_14 = arith.constant dense<0.000000e+00> : vector<16x128xf32>
    %23 = tpu.matmul %20, %22, %cst_14 {dimension_numbers = #tpu.dot_dimension_numbers<[1], [0], [0], [1], [0, 0, 1, 1], [], []>} : vector<16x192xbf16>, vector<192x128xbf16>, vector<16x128xf32> -> vector<16x128xf32>
    %24 = arith.addf %18, %23 : vector<16x128xf32>
    %25 = vector.extract_strided_slice %1 {offsets = [1, 1, 0], sizes = [4, 4, 192], strides = [1, 1, 1]} : vector<6x6x192xbf16> to vector<4x4x192xbf16>
    %26 = vector.shape_cast %25 : vector<4x4x192xbf16> to vector<16x192xbf16>
    %c4 = arith.constant 4 : index
    %c0_15 = arith.constant 0 : index
    %c0_16 = arith.constant 0 : index
    %27 = vector.load %arg2[%c4, %c0_15, %c0_16] : memref<9x192x128xbf16, #tpu.memory_space<vmem>>, vector<1x192x128xbf16>
    %28 = vector.shape_cast %27 : vector<1x192x128xbf16> to vector<192x128xbf16>
    %cst_17 = arith.constant dense<0.000000e+00> : vector<16x128xf32>
    %29 = tpu.matmul %26, %28, %cst_17 {dimension_numbers = #tpu.dot_dimension_numbers<[1], [0], [0], [1], [0, 0, 1, 1], [], []>} : vector<16x192xbf16>, vector<192x128xbf16>, vector<16x128xf32> -> vector<16x128xf32>
    %30 = arith.addf %24, %29 : vector<16x128xf32>
    %31 = vector.extract_strided_slice %1 {offsets = [1, 2, 0], sizes = [4, 4, 192], strides = [1, 1, 1]} : vector<6x6x192xbf16> to vector<4x4x192xbf16>
    %32 = vector.shape_cast %31 : vector<4x4x192xbf16> to vector<16x192xbf16>
    %c5 = arith.constant 5 : index
    %c0_18 = arith.constant 0 : index
    %c0_19 = arith.constant 0 : index
    %33 = vector.load %arg2[%c5, %c0_18, %c0_19] : memref<9x192x128xbf16, #tpu.memory_space<vmem>>, vector<1x192x128xbf16>
    %34 = vector.shape_cast %33 : vector<1x192x128xbf16> to vector<192x128xbf16>
    %cst_20 = arith.constant dense<0.000000e+00> : vector<16x128xf32>
    %35 = tpu.matmul %32, %34, %cst_20 {dimension_numbers = #tpu.dot_dimension_numbers<[1], [0], [0], [1], [0, 0, 1, 1], [], []>} : vector<16x192xbf16>, vector<192x128xbf16>, vector<16x128xf32> -> vector<16x128xf32>
    %36 = arith.addf %30, %35 : vector<16x128xf32>
    %37 = vector.extract_strided_slice %1 {offsets = [2, 0, 0], sizes = [4, 4, 192], strides = [1, 1, 1]} : vector<6x6x192xbf16> to vector<4x4x192xbf16>
    %38 = vector.shape_cast %37 : vector<4x4x192xbf16> to vector<16x192xbf16>
    %c6 = arith.constant 6 : index
    %c0_21 = arith.constant 0 : index
    %c0_22 = arith.constant 0 : index
    %39 = vector.load %arg2[%c6, %c0_21, %c0_22] : memref<9x192x128xbf16, #tpu.memory_space<vmem>>, vector<1x192x128xbf16>
    %40 = vector.shape_cast %39 : vector<1x192x128xbf16> to vector<192x128xbf16>
    %cst_23 = arith.constant dense<0.000000e+00> : vector<16x128xf32>
    %41 = tpu.matmul %38, %40, %cst_23 {dimension_numbers = #tpu.dot_dimension_numbers<[1], [0], [0], [1], [0, 0, 1, 1], [], []>} : vector<16x192xbf16>, vector<192x128xbf16>, vector<16x128xf32> -> vector<16x128xf32>
    %42 = arith.addf %36, %41 : vector<16x128xf32>
    %43 = vector.extract_strided_slice %1 {offsets = [2, 1, 0], sizes = [4, 4, 192], strides = [1, 1, 1]} : vector<6x6x192xbf16> to vector<4x4x192xbf16>
    %44 = vector.shape_cast %43 : vector<4x4x192xbf16> to vector<16x192xbf16>
    %c7 = arith.constant 7 : index
    %c0_24 = arith.constant 0 : index
    %c0_25 = arith.constant 0 : index
    %45 = vector.load %arg2[%c7, %c0_24, %c0_25] : memref<9x192x128xbf16, #tpu.memory_space<vmem>>, vector<1x192x128xbf16>
    %46 = vector.shape_cast %45 : vector<1x192x128xbf16> to vector<192x128xbf16>
    %cst_26 = arith.constant dense<0.000000e+00> : vector<16x128xf32>
    %47 = tpu.matmul %44, %46, %cst_26 {dimension_numbers = #tpu.dot_dimension_numbers<[1], [0], [0], [1], [0, 0, 1, 1], [], []>} : vector<16x192xbf16>, vector<192x128xbf16>, vector<16x128xf32> -> vector<16x128xf32>
    %48 = arith.addf %42, %47 : vector<16x128xf32>
    %49 = vector.extract_strided_slice %1 {offsets = [2, 2, 0], sizes = [4, 4, 192], strides = [1, 1, 1]} : vector<6x6x192xbf16> to vector<4x4x192xbf16>
    %50 = vector.shape_cast %49 : vector<4x4x192xbf16> to vector<16x192xbf16>
    %c8 = arith.constant 8 : index
    %c0_27 = arith.constant 0 : index
    %c0_28 = arith.constant 0 : index
    %51 = vector.load %arg2[%c8, %c0_27, %c0_28] : memref<9x192x128xbf16, #tpu.memory_space<vmem>>, vector<1x192x128xbf16>
    %52 = vector.shape_cast %51 : vector<1x192x128xbf16> to vector<192x128xbf16>
    %cst_29 = arith.constant dense<0.000000e+00> : vector<16x128xf32>
    %53 = tpu.matmul %50, %52, %cst_29 {dimension_numbers = #tpu.dot_dimension_numbers<[1], [0], [0], [1], [0, 0, 1, 1], [], []>} : vector<16x192xbf16>, vector<192x128xbf16>, vector<16x128xf32> -> vector<16x128xf32>
    %54 = arith.addf %48, %53 : vector<16x128xf32>
    %c0_30 = arith.constant 0 : index
    %c0_31 = arith.constant 0 : index
    %55 = vector.load %arg3[%c0_30, %c0_31] : memref<1x128xf32, #tpu.memory_space<vmem>>, vector<1x128xf32>
    %56 = vector.broadcast %55 : vector<1x128xf32> to vector<16x128xf32>
    %57 = arith.addf %54, %56 : vector<16x128xf32>
    %58 = vector.shape_cast %57 : vector<16x128xf32> to vector<4x4x128xf32>
    %c0_32 = arith.constant 0 : index
    %c0_33 = arith.constant 0 : index
    %c0_34 = arith.constant 0 : index
    %c0_35 = arith.constant 0 : index
    %59 = vector.load %arg4[%c0_32, %c0_33, %c0_34, %c0_35] : memref<1x4x4x128xf32, #tpu.memory_space<vmem>>, vector<1x4x4x128xf32>
    %60 = vector.shape_cast %59 : vector<1x4x4x128xf32> to vector<4x4x128xf32>
    %61 = vector.shape_cast %58 : vector<4x4x128xf32> to vector<1x4x4x128xf32>
    tpu.vector_store %arg4[%c0_32, %c0_33, %c0_34, %c0_35], %61 {strides = array<i32>} : memref<1x4x4x128xf32, #tpu.memory_space<vmem>>, vector<1x4x4x128xf32>,
    return
  }
  func.func @transform_0(%arg0: i32) -> (i32, i32, i32, i32) {
    %c0_i32 = arith.constant 0 : i32
    %c0_i32_0 = arith.constant 0 : i32
    %c0_i32_1 = arith.constant 0 : i32
    %c0_i32_2 = arith.constant 0 : i32
    return %arg0, %c0_i32, %c0_i32_0, %c0_i32_1 : i32, i32, i32, i32
  }
  func.func @transform_1(%arg0: i32) -> (i32, i32, i32) {
    %c0_i32 = arith.constant 0 : i32
    %c0_i32_0 = arith.constant 0 : i32
    %c0_i32_1 = arith.constant 0 : i32
    %c0_i32_2 = arith.constant 0 : i32
    return %c0_i32, %c0_i32_0, %c0_i32_1 : i32, i32, i32
  }
  func.func @transform_2(%arg0: i32) -> (i32, i32) {
    %c0_i32 = arith.constant 0 : i32
    %c0_i32_0 = arith.constant 0 : i32
    %c0_i32_1 = arith.constant 0 : i32
    return %c0_i32, %c0_i32_0 : i32, i32
  }
  func.func @transform_3(%arg0: i32) -> (i32, i32, i32, i32) {
    %c0_i32 = arith.constant 0 : i32
    %c0_i32_0 = arith.constant 0 : i32
    %c0_i32_1 = arith.constant 0 : i32
    %c0_i32_2 = arith.constant 0 : i32
    return %arg0, %c0_i32, %c0_i32_0, %c0_i32_1 : i32, i32, i32, i32
  }
}

module attributes {stable_mosaic.version = 11 : i64} {
  func.func @head_pair_kernel(%arg0: i32, %arg1: memref<1x6x6x128xbf16, #tpu.memory_space<vmem>>, %arg2: memref<9x128x128xbf16, #tpu.memory_space<vmem>>, %arg3: memref<1x128xf32, #tpu.memory_space<vmem>>, %arg4: memref<9x128x128xbf16, #tpu.memory_space<vmem>>, %arg5: memref<1x128xf32, #tpu.memory_space<vmem>>, %arg6: memref<1x4x4x128xf32, #tpu.memory_space<vmem>>, %arg7: memref<6x6x128xf32, #tpu.memory_space<vmem>>) attributes {dimension_semantics = [#tpu.dimension_semantics<parallel>], iteration_bounds = array<i64: 8>, scalar_prefetch = 0 : i64, scratch_operands = 1 : i64, tpu.core_type = #tpu.core_type<tc>, window_params = [{transform_indices = @transform_0, window_bounds = array<i64: 1, 6, 6, 128>}, {pipeline_mode = #tpu.pipeline_mode<synchronous>, transform_indices = @transform_1, window_bounds = array<i64: 9, 128, 128>}, {pipeline_mode = #tpu.pipeline_mode<synchronous>, transform_indices = @transform_2, window_bounds = array<i64: 1, 128>}, {pipeline_mode = #tpu.pipeline_mode<synchronous>, transform_indices = @transform_3, window_bounds = array<i64: 9, 128, 128>}, {pipeline_mode = #tpu.pipeline_mode<synchronous>, transform_indices = @transform_4, window_bounds = array<i64: 1, 128>}, {transform_indices = @transform_5, window_bounds = array<i64: 1, 4, 4, 128>}]} {
    %c0 = arith.constant 0 : index
    %c0_0 = arith.constant 0 : index
    %c0_1 = arith.constant 0 : index
    %c0_2 = arith.constant 0 : index
    %0 = vector.load %arg1[%c0, %c0_0, %c0_1, %c0_2] : memref<1x6x6x128xbf16, #tpu.memory_space<vmem>>, vector<1x6x6x128xbf16>
    %1 = vector.shape_cast %0 : vector<1x6x6x128xbf16> to vector<6x6x128xbf16>
    %2 = vector.extract_strided_slice %1 {offsets = [0, 0, 0], sizes = [4, 4, 128], strides = [1, 1, 1]} : vector<6x6x128xbf16> to vector<4x4x128xbf16>
    %3 = vector.shape_cast %2 : vector<4x4x128xbf16> to vector<16x128xbf16>
    %c0_3 = arith.constant 0 : index
    %c0_4 = arith.constant 0 : index
    %c0_5 = arith.constant 0 : index
    %4 = vector.load %arg2[%c0_3, %c0_4, %c0_5] : memref<9x128x128xbf16, #tpu.memory_space<vmem>>, vector<1x128x128xbf16>
    %5 = vector.shape_cast %4 : vector<1x128x128xbf16> to vector<128x128xbf16>
    %cst = arith.constant dense<0.000000e+00> : vector<16x128xf32>
    %6 = tpu.matmul %3, %5, %cst {dimension_numbers = #tpu.dot_dimension_numbers<[1], [0], [0], [1], [0, 0, 1, 1], [], []>} : vector<16x128xbf16>, vector<128x128xbf16>, vector<16x128xf32> -> vector<16x128xf32>
    %7 = vector.extract_strided_slice %1 {offsets = [0, 1, 0], sizes = [4, 4, 128], strides = [1, 1, 1]} : vector<6x6x128xbf16> to vector<4x4x128xbf16>
    %8 = vector.shape_cast %7 : vector<4x4x128xbf16> to vector<16x128xbf16>
    %c1 = arith.constant 1 : index
    %c0_6 = arith.constant 0 : index
    %c0_7 = arith.constant 0 : index
    %9 = vector.load %arg2[%c1, %c0_6, %c0_7] : memref<9x128x128xbf16, #tpu.memory_space<vmem>>, vector<1x128x128xbf16>
    %10 = vector.shape_cast %9 : vector<1x128x128xbf16> to vector<128x128xbf16>
    %cst_8 = arith.constant dense<0.000000e+00> : vector<16x128xf32>
    %11 = tpu.matmul %8, %10, %cst_8 {dimension_numbers = #tpu.dot_dimension_numbers<[1], [0], [0], [1], [0, 0, 1, 1], [], []>} : vector<16x128xbf16>, vector<128x128xbf16>, vector<16x128xf32> -> vector<16x128xf32>
    %12 = arith.addf %6, %11 : vector<16x128xf32>
    %13 = vector.extract_strided_slice %1 {offsets = [0, 2, 0], sizes = [4, 4, 128], strides = [1, 1, 1]} : vector<6x6x128xbf16> to vector<4x4x128xbf16>
    %14 = vector.shape_cast %13 : vector<4x4x128xbf16> to vector<16x128xbf16>
    %c2 = arith.constant 2 : index
    %c0_9 = arith.constant 0 : index
    %c0_10 = arith.constant 0 : index
    %15 = vector.load %arg2[%c2, %c0_9, %c0_10] : memref<9x128x128xbf16, #tpu.memory_space<vmem>>, vector<1x128x128xbf16>
    %16 = vector.shape_cast %15 : vector<1x128x128xbf16> to vector<128x128xbf16>
    %cst_11 = arith.constant dense<0.000000e+00> : vector<16x128xf32>
    %17 = tpu.matmul %14, %16, %cst_11 {dimension_numbers = #tpu.dot_dimension_numbers<[1], [0], [0], [1], [0, 0, 1, 1], [], []>} : vector<16x128xbf16>, vector<128x128xbf16>, vector<16x128xf32> -> vector<16x128xf32>
    %18 = arith.addf %12, %17 : vector<16x128xf32>
    %19 = vector.extract_strided_slice %1 {offsets = [1, 0, 0], sizes = [4, 4, 128], strides = [1, 1, 1]} : vector<6x6x128xbf16> to vector<4x4x128xbf16>
    %20 = vector.shape_cast %19 : vector<4x4x128xbf16> to vector<16x128xbf16>
    %c3 = arith.constant 3 : index
    %c0_12 = arith.constant 0 : index
    %c0_13 = arith.constant 0 : index
    %21 = vector.load %arg2[%c3, %c0_12, %c0_13] : memref<9x128x128xbf16, #tpu.memory_space<vmem>>, vector<1x128x128xbf16>
    %22 = vector.shape_cast %21 : vector<1x128x128xbf16> to vector<128x128xbf16>
    %cst_14 = arith.constant dense<0.000000e+00> : vector<16x128xf32>
    %23 = tpu.matmul %20, %22, %cst_14 {dimension_numbers = #tpu.dot_dimension_numbers<[1], [0], [0], [1], [0, 0, 1, 1], [], []>} : vector<16x128xbf16>, vector<128x128xbf16>, vector<16x128xf32> -> vector<16x128xf32>
    %24 = arith.addf %18, %23 : vector<16x128xf32>
    %25 = vector.extract_strided_slice %1 {offsets = [1, 1, 0], sizes = [4, 4, 128], strides = [1, 1, 1]} : vector<6x6x128xbf16> to vector<4x4x128xbf16>
    %26 = vector.shape_cast %25 : vector<4x4x128xbf16> to vector<16x128xbf16>
    %c4 = arith.constant 4 : index
    %c0_15 = arith.constant 0 : index
    %c0_16 = arith.constant 0 : index
    %27 = vector.load %arg2[%c4, %c0_15, %c0_16] : memref<9x128x128xbf16, #tpu.memory_space<vmem>>, vector<1x128x128xbf16>
    %28 = vector.shape_cast %27 : vector<1x128x128xbf16> to vector<128x128xbf16>
    %cst_17 = arith.constant dense<0.000000e+00> : vector<16x128xf32>
    %29 = tpu.matmul %26, %28, %cst_17 {dimension_numbers = #tpu.dot_dimension_numbers<[1], [0], [0], [1], [0, 0, 1, 1], [], []>} : vector<16x128xbf16>, vector<128x128xbf16>, vector<16x128xf32> -> vector<16x128xf32>
    %30 = arith.addf %24, %29 : vector<16x128xf32>
    %31 = vector.extract_strided_slice %1 {offsets = [1, 2, 0], sizes = [4, 4, 128], strides = [1, 1, 1]} : vector<6x6x128xbf16> to vector<4x4x128xbf16>
    %32 = vector.shape_cast %31 : vector<4x4x128xbf16> to vector<16x128xbf16>
    %c5 = arith.constant 5 : index
    %c0_18 = arith.constant 0 : index
    %c0_19 = arith.constant 0 : index
    %33 = vector.load %arg2[%c5, %c0_18, %c0_19] : memref<9x128x128xbf16, #tpu.memory_space<vmem>>, vector<1x128x128xbf16>
    %34 = vector.shape_cast %33 : vector<1x128x128xbf16> to vector<128x128xbf16>
    %cst_20 = arith.constant dense<0.000000e+00> : vector<16x128xf32>
    %35 = tpu.matmul %32, %34, %cst_20 {dimension_numbers = #tpu.dot_dimension_numbers<[1], [0], [0], [1], [0, 0, 1, 1], [], []>} : vector<16x128xbf16>, vector<128x128xbf16>, vector<16x128xf32> -> vector<16x128xf32>
    %36 = arith.addf %30, %35 : vector<16x128xf32>
    %37 = vector.extract_strided_slice %1 {offsets = [2, 0, 0], sizes = [4, 4, 128], strides = [1, 1, 1]} : vector<6x6x128xbf16> to vector<4x4x128xbf16>
    %38 = vector.shape_cast %37 : vector<4x4x128xbf16> to vector<16x128xbf16>
    %c6 = arith.constant 6 : index
    %c0_21 = arith.constant 0 : index
    %c0_22 = arith.constant 0 : index
    %39 = vector.load %arg2[%c6, %c0_21, %c0_22] : memref<9x128x128xbf16, #tpu.memory_space<vmem>>, vector<1x128x128xbf16>
    %40 = vector.shape_cast %39 : vector<1x128x128xbf16> to vector<128x128xbf16>
    %cst_23 = arith.constant dense<0.000000e+00> : vector<16x128xf32>
    %41 = tpu.matmul %38, %40, %cst_23 {dimension_numbers = #tpu.dot_dimension_numbers<[1], [0], [0], [1], [0, 0, 1, 1], [], []>} : vector<16x128xbf16>, vector<128x128xbf16>, vector<16x128xf32> -> vector<16x128xf32>
    %42 = arith.addf %36, %41 : vector<16x128xf32>
    %43 = vector.extract_strided_slice %1 {offsets = [2, 1, 0], sizes = [4, 4, 128], strides = [1, 1, 1]} : vector<6x6x128xbf16> to vector<4x4x128xbf16>
    %44 = vector.shape_cast %43 : vector<4x4x128xbf16> to vector<16x128xbf16>
    %c7 = arith.constant 7 : index
    %c0_24 = arith.constant 0 : index
    %c0_25 = arith.constant 0 : index
    %45 = vector.load %arg2[%c7, %c0_24, %c0_25] : memref<9x128x128xbf16, #tpu.memory_space<vmem>>, vector<1x128x128xbf16>
    %46 = vector.shape_cast %45 : vector<1x128x128xbf16> to vector<128x128xbf16>
    %cst_26 = arith.constant dense<0.000000e+00> : vector<16x128xf32>
    %47 = tpu.matmul %44, %46, %cst_26 {dimension_numbers = #tpu.dot_dimension_numbers<[1], [0], [0], [1], [0, 0, 1, 1], [], []>} : vector<16x128xbf16>, vector<128x128xbf16>, vector<16x128xf32> -> vector<16x128xf32>
    %48 = arith.addf %42, %47 : vector<16x128xf32>
    %49 = vector.extract_strided_slice %1 {offsets = [2, 2, 0], sizes = [4, 4, 128], strides = [1, 1, 1]} : vector<6x6x128xbf16> to vector<4x4x128xbf16>
    %50 = vector.shape_cast %49 : vector<4x4x128xbf16> to vector<16x128xbf16>
    %c8 = arith.constant 8 : index
    %c0_27 = arith.constant 0 : index
    %c0_28 = arith.constant 0 : index
    %51 = vector.load %arg2[%c8, %c0_27, %c0_28] : memref<9x128x128xbf16, #tpu.memory_space<vmem>>, vector<1x128x128xbf16>
    %52 = vector.shape_cast %51 : vector<1x128x128xbf16> to vector<128x128xbf16>
    %cst_29 = arith.constant dense<0.000000e+00> : vector<16x128xf32>
    %53 = tpu.matmul %50, %52, %cst_29 {dimension_numbers = #tpu.dot_dimension_numbers<[1], [0], [0], [1], [0, 0, 1, 1], [], []>} : vector<16x128xbf16>, vector<128x128xbf16>, vector<16x128xf32> -> vector<16x128xf32>
    %54 = arith.addf %48, %53 : vector<16x128xf32>
    %c0_30 = arith.constant 0 : index
    %c0_31 = arith.constant 0 : index
    %55 = vector.load %arg3[%c0_30, %c0_31] : memref<1x128xf32, #tpu.memory_space<vmem>>, vector<1x128xf32>
    %56 = vector.broadcast %55 : vector<1x128xf32> to vector<16x128xf32>
    %57 = arith.addf %54, %56 : vector<16x128xf32>
    %cst_32 = arith.constant 0.000000e+00 : f32
    %58 = vector.broadcast %cst_32 : f32 to vector<16x128xf32>
    %59 = arith.maximumf %57, %58 : vector<16x128xf32>
    %cst_33 = arith.constant 0.000000e+00 : f32
    %60 = vector.broadcast %cst_33 : f32 to vector<1x6x128xf32>
    %cst_34 = arith.constant 0.000000e+00 : f32
    %61 = vector.broadcast %cst_34 : f32 to vector<6x1x128xf32>
    %c0_35 = arith.constant 0 : index
    %c0_36 = arith.constant 0 : index
    %c0_37 = arith.constant 0 : index
    %62 = vector.load %arg7[%c0_35, %c0_36, %c0_37] : memref<6x6x128xf32, #tpu.memory_space<vmem>>, vector<1x6x128xf32>
    tpu.vector_store %arg7[%c0_35, %c0_36, %c0_37], %60 {strides = array<i32>} : memref<6x6x128xf32, #tpu.memory_space<vmem>>, vector<1x6x128xf32>,
    %c5_38 = arith.constant 5 : index
    %c0_39 = arith.constant 0 : index
    %c0_40 = arith.constant 0 : index
    %63 = vector.load %arg7[%c5_38, %c0_39, %c0_40] : memref<6x6x128xf32, #tpu.memory_space<vmem>>, vector<1x6x128xf32>
    tpu.vector_store %arg7[%c5_38, %c0_39, %c0_40], %60 {strides = array<i32>} : memref<6x6x128xf32, #tpu.memory_space<vmem>>, vector<1x6x128xf32>,
    %c0_41 = arith.constant 0 : index
    %c0_42 = arith.constant 0 : index
    %c0_43 = arith.constant 0 : index
    %64 = vector.load %arg7[%c0_41, %c0_42, %c0_43] : memref<6x6x128xf32, #tpu.memory_space<vmem>>, vector<6x1x128xf32>
    tpu.vector_store %arg7[%c0_41, %c0_42, %c0_43], %61 {strides = array<i32>} : memref<6x6x128xf32, #tpu.memory_space<vmem>>, vector<6x1x128xf32>,
    %c0_44 = arith.constant 0 : index
    %c5_45 = arith.constant 5 : index
    %c0_46 = arith.constant 0 : index
    %65 = vector.load %arg7[%c0_44, %c5_45, %c0_46] : memref<6x6x128xf32, #tpu.memory_space<vmem>>, vector<6x1x128xf32>
    tpu.vector_store %arg7[%c0_44, %c5_45, %c0_46], %61 {strides = array<i32>} : memref<6x6x128xf32, #tpu.memory_space<vmem>>, vector<6x1x128xf32>,
    %66 = vector.shape_cast %59 : vector<16x128xf32> to vector<4x4x128xf32>
    %c1_47 = arith.constant 1 : index
    %c1_48 = arith.constant 1 : index
    %c0_49 = arith.constant 0 : index
    %67 = vector.load %arg7[%c1_47, %c1_48, %c0_49] : memref<6x6x128xf32, #tpu.memory_space<vmem>>, vector<4x4x128xf32>
    tpu.vector_store %arg7[%c1_47, %c1_48, %c0_49], %66 {strides = array<i32>} : memref<6x6x128xf32, #tpu.memory_space<vmem>>, vector<4x4x128xf32>,
    %c0_50 = arith.constant 0 : index
    %c0_51 = arith.constant 0 : index
    %c0_52 = arith.constant 0 : index
    %68 = vector.load %arg7[%c0_50, %c0_51, %c0_52] : memref<6x6x128xf32, #tpu.memory_space<vmem>>, vector<4x4x128xf32>
    %69 = vector.shape_cast %68 : vector<4x4x128xf32> to vector<16x128xf32>
    %70 = arith.truncf %69 : vector<16x128xf32> to vector<16x128xbf16>
    %c0_53 = arith.constant 0 : index
    %c0_54 = arith.constant 0 : index
    %c0_55 = arith.constant 0 : index
    %71 = vector.load %arg4[%c0_53, %c0_54, %c0_55] : memref<9x128x128xbf16, #tpu.memory_space<vmem>>, vector<1x128x128xbf16>
    %72 = vector.shape_cast %71 : vector<1x128x128xbf16> to vector<128x128xbf16>
    %cst_56 = arith.constant dense<0.000000e+00> : vector<16x128xf32>
    %73 = tpu.matmul %70, %72, %cst_56 {dimension_numbers = #tpu.dot_dimension_numbers<[1], [0], [0], [1], [0, 0, 1, 1], [], []>} : vector<16x128xbf16>, vector<128x128xbf16>, vector<16x128xf32> -> vector<16x128xf32>
    %c0_57 = arith.constant 0 : index
    %c1_58 = arith.constant 1 : index
    %c0_59 = arith.constant 0 : index
    %74 = vector.load %arg7[%c0_57, %c1_58, %c0_59] : memref<6x6x128xf32, #tpu.memory_space<vmem>>, vector<4x4x128xf32>
    %75 = vector.shape_cast %74 : vector<4x4x128xf32> to vector<16x128xf32>
    %76 = arith.truncf %75 : vector<16x128xf32> to vector<16x128xbf16>
    %c1_60 = arith.constant 1 : index
    %c0_61 = arith.constant 0 : index
    %c0_62 = arith.constant 0 : index
    %77 = vector.load %arg4[%c1_60, %c0_61, %c0_62] : memref<9x128x128xbf16, #tpu.memory_space<vmem>>, vector<1x128x128xbf16>
    %78 = vector.shape_cast %77 : vector<1x128x128xbf16> to vector<128x128xbf16>
    %cst_63 = arith.constant dense<0.000000e+00> : vector<16x128xf32>
    %79 = tpu.matmul %76, %78, %cst_63 {dimension_numbers = #tpu.dot_dimension_numbers<[1], [0], [0], [1], [0, 0, 1, 1], [], []>} : vector<16x128xbf16>, vector<128x128xbf16>, vector<16x128xf32> -> vector<16x128xf32>
    %80 = arith.addf %73, %79 : vector<16x128xf32>
    %c0_64 = arith.constant 0 : index
    %c2_65 = arith.constant 2 : index
    %c0_66 = arith.constant 0 : index
    %81 = vector.load %arg7[%c0_64, %c2_65, %c0_66] : memref<6x6x128xf32, #tpu.memory_space<vmem>>, vector<4x4x128xf32>
    %82 = vector.shape_cast %81 : vector<4x4x128xf32> to vector<16x128xf32>
    %83 = arith.truncf %82 : vector<16x128xf32> to vector<16x128xbf16>
    %c2_67 = arith.constant 2 : index
    %c0_68 = arith.constant 0 : index
    %c0_69 = arith.constant 0 : index
    %84 = vector.load %arg4[%c2_67, %c0_68, %c0_69] : memref<9x128x128xbf16, #tpu.memory_space<vmem>>, vector<1x128x128xbf16>
    %85 = vector.shape_cast %84 : vector<1x128x128xbf16> to vector<128x128xbf16>
    %cst_70 = arith.constant dense<0.000000e+00> : vector<16x128xf32>
    %86 = tpu.matmul %83, %85, %cst_70 {dimension_numbers = #tpu.dot_dimension_numbers<[1], [0], [0], [1], [0, 0, 1, 1], [], []>} : vector<16x128xbf16>, vector<128x128xbf16>, vector<16x128xf32> -> vector<16x128xf32>
    %87 = arith.addf %80, %86 : vector<16x128xf32>
    %c1_71 = arith.constant 1 : index
    %c0_72 = arith.constant 0 : index
    %c0_73 = arith.constant 0 : index
    %88 = vector.load %arg7[%c1_71, %c0_72, %c0_73] : memref<6x6x128xf32, #tpu.memory_space<vmem>>, vector<4x4x128xf32>
    %89 = vector.shape_cast %88 : vector<4x4x128xf32> to vector<16x128xf32>
    %90 = arith.truncf %89 : vector<16x128xf32> to vector<16x128xbf16>
    %c3_74 = arith.constant 3 : index
    %c0_75 = arith.constant 0 : index
    %c0_76 = arith.constant 0 : index
    %91 = vector.load %arg4[%c3_74, %c0_75, %c0_76] : memref<9x128x128xbf16, #tpu.memory_space<vmem>>, vector<1x128x128xbf16>
    %92 = vector.shape_cast %91 : vector<1x128x128xbf16> to vector<128x128xbf16>
    %cst_77 = arith.constant dense<0.000000e+00> : vector<16x128xf32>
    %93 = tpu.matmul %90, %92, %cst_77 {dimension_numbers = #tpu.dot_dimension_numbers<[1], [0], [0], [1], [0, 0, 1, 1], [], []>} : vector<16x128xbf16>, vector<128x128xbf16>, vector<16x128xf32> -> vector<16x128xf32>
    %94 = arith.addf %87, %93 : vector<16x128xf32>
    %c1_78 = arith.constant 1 : index
    %c1_79 = arith.constant 1 : index
    %c0_80 = arith.constant 0 : index
    %95 = vector.load %arg7[%c1_78, %c1_79, %c0_80] : memref<6x6x128xf32, #tpu.memory_space<vmem>>, vector<4x4x128xf32>
    %96 = vector.shape_cast %95 : vector<4x4x128xf32> to vector<16x128xf32>
    %97 = arith.truncf %96 : vector<16x128xf32> to vector<16x128xbf16>
    %c4_81 = arith.constant 4 : index
    %c0_82 = arith.constant 0 : index
    %c0_83 = arith.constant 0 : index
    %98 = vector.load %arg4[%c4_81, %c0_82, %c0_83] : memref<9x128x128xbf16, #tpu.memory_space<vmem>>, vector<1x128x128xbf16>
    %99 = vector.shape_cast %98 : vector<1x128x128xbf16> to vector<128x128xbf16>
    %cst_84 = arith.constant dense<0.000000e+00> : vector<16x128xf32>
    %100 = tpu.matmul %97, %99, %cst_84 {dimension_numbers = #tpu.dot_dimension_numbers<[1], [0], [0], [1], [0, 0, 1, 1], [], []>} : vector<16x128xbf16>, vector<128x128xbf16>, vector<16x128xf32> -> vector<16x128xf32>
    %101 = arith.addf %94, %100 : vector<16x128xf32>
    %c1_85 = arith.constant 1 : index
    %c2_86 = arith.constant 2 : index
    %c0_87 = arith.constant 0 : index
    %102 = vector.load %arg7[%c1_85, %c2_86, %c0_87] : memref<6x6x128xf32, #tpu.memory_space<vmem>>, vector<4x4x128xf32>
    %103 = vector.shape_cast %102 : vector<4x4x128xf32> to vector<16x128xf32>
    %104 = arith.truncf %103 : vector<16x128xf32> to vector<16x128xbf16>
    %c5_88 = arith.constant 5 : index
    %c0_89 = arith.constant 0 : index
    %c0_90 = arith.constant 0 : index
    %105 = vector.load %arg4[%c5_88, %c0_89, %c0_90] : memref<9x128x128xbf16, #tpu.memory_space<vmem>>, vector<1x128x128xbf16>
    %106 = vector.shape_cast %105 : vector<1x128x128xbf16> to vector<128x128xbf16>
    %cst_91 = arith.constant dense<0.000000e+00> : vector<16x128xf32>
    %107 = tpu.matmul %104, %106, %cst_91 {dimension_numbers = #tpu.dot_dimension_numbers<[1], [0], [0], [1], [0, 0, 1, 1], [], []>} : vector<16x128xbf16>, vector<128x128xbf16>, vector<16x128xf32> -> vector<16x128xf32>
    %108 = arith.addf %101, %107 : vector<16x128xf32>
    %c2_92 = arith.constant 2 : index
    %c0_93 = arith.constant 0 : index
    %c0_94 = arith.constant 0 : index
    %109 = vector.load %arg7[%c2_92, %c0_93, %c0_94] : memref<6x6x128xf32, #tpu.memory_space<vmem>>, vector<4x4x128xf32>
    %110 = vector.shape_cast %109 : vector<4x4x128xf32> to vector<16x128xf32>
    %111 = arith.truncf %110 : vector<16x128xf32> to vector<16x128xbf16>
    %c6_95 = arith.constant 6 : index
    %c0_96 = arith.constant 0 : index
    %c0_97 = arith.constant 0 : index
    %112 = vector.load %arg4[%c6_95, %c0_96, %c0_97] : memref<9x128x128xbf16, #tpu.memory_space<vmem>>, vector<1x128x128xbf16>
    %113 = vector.shape_cast %112 : vector<1x128x128xbf16> to vector<128x128xbf16>
    %cst_98 = arith.constant dense<0.000000e+00> : vector<16x128xf32>
    %114 = tpu.matmul %111, %113, %cst_98 {dimension_numbers = #tpu.dot_dimension_numbers<[1], [0], [0], [1], [0, 0, 1, 1], [], []>} : vector<16x128xbf16>, vector<128x128xbf16>, vector<16x128xf32> -> vector<16x128xf32>
    %115 = arith.addf %108, %114 : vector<16x128xf32>
    %c2_99 = arith.constant 2 : index
    %c1_100 = arith.constant 1 : index
    %c0_101 = arith.constant 0 : index
    %116 = vector.load %arg7[%c2_99, %c1_100, %c0_101] : memref<6x6x128xf32, #tpu.memory_space<vmem>>, vector<4x4x128xf32>
    %117 = vector.shape_cast %116 : vector<4x4x128xf32> to vector<16x128xf32>
    %118 = arith.truncf %117 : vector<16x128xf32> to vector<16x128xbf16>
    %c7_102 = arith.constant 7 : index
    %c0_103 = arith.constant 0 : index
    %c0_104 = arith.constant 0 : index
    %119 = vector.load %arg4[%c7_102, %c0_103, %c0_104] : memref<9x128x128xbf16, #tpu.memory_space<vmem>>, vector<1x128x128xbf16>
    %120 = vector.shape_cast %119 : vector<1x128x128xbf16> to vector<128x128xbf16>
    %cst_105 = arith.constant dense<0.000000e+00> : vector<16x128xf32>
    %121 = tpu.matmul %118, %120, %cst_105 {dimension_numbers = #tpu.dot_dimension_numbers<[1], [0], [0], [1], [0, 0, 1, 1], [], []>} : vector<16x128xbf16>, vector<128x128xbf16>, vector<16x128xf32> -> vector<16x128xf32>
    %122 = arith.addf %115, %121 : vector<16x128xf32>
    %c2_106 = arith.constant 2 : index
    %c2_107 = arith.constant 2 : index
    %c0_108 = arith.constant 0 : index
    %123 = vector.load %arg7[%c2_106, %c2_107, %c0_108] : memref<6x6x128xf32, #tpu.memory_space<vmem>>, vector<4x4x128xf32>
    %124 = vector.shape_cast %123 : vector<4x4x128xf32> to vector<16x128xf32>
    %125 = arith.truncf %124 : vector<16x128xf32> to vector<16x128xbf16>
    %c8_109 = arith.constant 8 : index
    %c0_110 = arith.constant 0 : index
    %c0_111 = arith.constant 0 : index
    %126 = vector.load %arg4[%c8_109, %c0_110, %c0_111] : memref<9x128x128xbf16, #tpu.memory_space<vmem>>, vector<1x128x128xbf16>
    %127 = vector.shape_cast %126 : vector<1x128x128xbf16> to vector<128x128xbf16>
    %cst_112 = arith.constant dense<0.000000e+00> : vector<16x128xf32>
    %128 = tpu.matmul %125, %127, %cst_112 {dimension_numbers = #tpu.dot_dimension_numbers<[1], [0], [0], [1], [0, 0, 1, 1], [], []>} : vector<16x128xbf16>, vector<128x128xbf16>, vector<16x128xf32> -> vector<16x128xf32>
    %129 = arith.addf %122, %128 : vector<16x128xf32>
    %c0_113 = arith.constant 0 : index
    %c0_114 = arith.constant 0 : index
    %130 = vector.load %arg5[%c0_113, %c0_114] : memref<1x128xf32, #tpu.memory_space<vmem>>, vector<1x128xf32>
    %131 = vector.broadcast %130 : vector<1x128xf32> to vector<16x128xf32>
    %132 = arith.addf %129, %131 : vector<16x128xf32>
    %133 = vector.shape_cast %132 : vector<16x128xf32> to vector<4x4x128xf32>
    %c0_115 = arith.constant 0 : index
    %c0_116 = arith.constant 0 : index
    %c0_117 = arith.constant 0 : index
    %c0_118 = arith.constant 0 : index
    %134 = vector.load %arg6[%c0_115, %c0_116, %c0_117, %c0_118] : memref<1x4x4x128xf32, #tpu.memory_space<vmem>>, vector<1x4x4x128xf32>
    %135 = vector.shape_cast %134 : vector<1x4x4x128xf32> to vector<4x4x128xf32>
    %136 = vector.shape_cast %133 : vector<4x4x128xf32> to vector<1x4x4x128xf32>
    tpu.vector_store %arg6[%c0_115, %c0_116, %c0_117, %c0_118], %136 {strides = array<i32>} : memref<1x4x4x128xf32, #tpu.memory_space<vmem>>, vector<1x4x4x128xf32>,
    return
  }
  func.func @transform_0(%arg0: i32) -> (i32, i32, i32, i32) {
    %c0_i32 = arith.constant 0 : i32
    %c0_i32_0 = arith.constant 0 : i32
    %c0_i32_1 = arith.constant 0 : i32
    %c0_i32_2 = arith.constant 0 : i32
    return %arg0, %c0_i32, %c0_i32_0, %c0_i32_1 : i32, i32, i32, i32
  }
  func.func @transform_1(%arg0: i32) -> (i32, i32, i32) {
    %c0_i32 = arith.constant 0 : i32
    %c0_i32_0 = arith.constant 0 : i32
    %c0_i32_1 = arith.constant 0 : i32
    %c0_i32_2 = arith.constant 0 : i32
    return %c0_i32, %c0_i32_0, %c0_i32_1 : i32, i32, i32
  }
  func.func @transform_2(%arg0: i32) -> (i32, i32) {
    %c0_i32 = arith.constant 0 : i32
    %c0_i32_0 = arith.constant 0 : i32
    %c0_i32_1 = arith.constant 0 : i32
    return %c0_i32, %c0_i32_0 : i32, i32
  }
  func.func @transform_3(%arg0: i32) -> (i32, i32, i32) {
    %c0_i32 = arith.constant 0 : i32
    %c0_i32_0 = arith.constant 0 : i32
    %c0_i32_1 = arith.constant 0 : i32
    %c0_i32_2 = arith.constant 0 : i32
    return %c0_i32, %c0_i32_0, %c0_i32_1 : i32, i32, i32
  }
  func.func @transform_4(%arg0: i32) -> (i32, i32) {
    %c0_i32 = arith.constant 0 : i32
    %c0_i32_0 = arith.constant 0 : i32
    %c0_i32_1 = arith.constant 0 : i32
    return %c0_i32, %c0_i32_0 : i32, i32
  }
  func.func @transform_5(%arg0: i32) -> (i32, i32, i32, i32) {
    %c0_i32 = arith.constant 0 : i32
    %c0_i32_0 = arith.constant 0 : i32
    %c0_i32_1 = arith.constant 0 : i32
    %c0_i32_2 = arith.constant 0 : i32
    return %arg0, %c0_i32, %c0_i32_0, %c0_i32_1 : i32, i32, i32, i32
  }
}

module attributes {stable_mosaic.version = 11 : i64} {
  func.func @trilerp_kernel(%arg0: i32, %arg1: memref<4x8xi32, #tpu.memory_space<smem>>, %arg2: memref<4x8xf32, #tpu.memory_space<smem>>, %arg3: memref<16x128xf32, #tpu.memory_space<vmem>>, %arg4: memref<8x128xf32, #tpu.memory_space<vmem>>) attributes {dimension_semantics = [#tpu.dimension_semantics<parallel>], iteration_bounds = array<i64: 1>, scalar_prefetch = 0 : i64, scratch_operands = 0 : i64, tpu.core_type = #tpu.core_type<tc>, window_params = [{transform_indices = @transform_0, window_bounds = array<i64: 4, 8>}, {transform_indices = @transform_1, window_bounds = array<i64: 4, 8>}, {pipeline_mode = #tpu.pipeline_mode<synchronous>, transform_indices = @transform_2, window_bounds = array<i64: 16, 128>}, {transform_indices = @transform_3, window_bounds = array<i64: 8, 128>}]} {
    %c8_i32 = arith.constant 8 : i32
    %0 = arith.muli %arg0, %c8_i32 : i32
    %c0_i32 = arith.constant 0 : i32
    %c8_i32_0 = arith.constant 8 : i32
    %1 = arith.addi %c0_i32, %c8_i32_0 : i32
    %c1_i32 = arith.constant 1 : i32
    scf.for %arg5 = %c0_i32 to %1 step %c1_i32  : i32 {
      %2 = arith.addi %0, %arg5 : i32
      %c0 = arith.constant 0 : index
      %3 = arith.index_cast %2 : i32 to index
      %4 = memref.load %arg2[%c0, %3] : memref<4x8xf32, #tpu.memory_space<smem>>
      %c0_2 = arith.constant 0 : index
      %5 = arith.index_cast %2 : i32 to index
      %6 = memref.load %arg1[%c0_2, %5] : memref<4x8xi32, #tpu.memory_space<smem>>
      %7 = arith.index_cast %6 : i32 to index
      %c0_3 = arith.constant 0 : index
      %8 = vector.load %arg3[%7, %c0_3] : memref<16x128xf32, #tpu.memory_space<vmem>>, vector<1x128xf32>
      %9 = vector.broadcast %4 : f32 to vector<1x128xf32>
      %10 = arith.mulf %9, %8 : vector<1x128xf32>
      %c1 = arith.constant 1 : index
      %11 = arith.index_cast %2 : i32 to index
      %12 = memref.load %arg2[%c1, %11] : memref<4x8xf32, #tpu.memory_space<smem>>
      %c1_4 = arith.constant 1 : index
      %13 = arith.index_cast %2 : i32 to index
      %14 = memref.load %arg1[%c1_4, %13] : memref<4x8xi32, #tpu.memory_space<smem>>
      %15 = arith.index_cast %14 : i32 to index
      %c0_5 = arith.constant 0 : index
      %16 = vector.load %arg3[%15, %c0_5] : memref<16x128xf32, #tpu.memory_space<vmem>>, vector<1x128xf32>
      %17 = vector.broadcast %12 : f32 to vector<1x128xf32>
      %18 = arith.mulf %17, %16 : vector<1x128xf32>
      %19 = arith.addf %10, %18 : vector<1x128xf32>
      %c2 = arith.constant 2 : index
      %20 = arith.index_cast %2 : i32 to index
      %21 = memref.load %arg2[%c2, %20] : memref<4x8xf32, #tpu.memory_space<smem>>
      %c2_6 = arith.constant 2 : index
      %22 = arith.index_cast %2 : i32 to index
      %23 = memref.load %arg1[%c2_6, %22] : memref<4x8xi32, #tpu.memory_space<smem>>
      %24 = arith.index_cast %23 : i32 to index
      %c0_7 = arith.constant 0 : index
      %25 = vector.load %arg3[%24, %c0_7] : memref<16x128xf32, #tpu.memory_space<vmem>>, vector<1x128xf32>
      %26 = vector.broadcast %21 : f32 to vector<1x128xf32>
      %27 = arith.mulf %26, %25 : vector<1x128xf32>
      %28 = arith.addf %19, %27 : vector<1x128xf32>
      %c3 = arith.constant 3 : index
      %29 = arith.index_cast %2 : i32 to index
      %30 = memref.load %arg2[%c3, %29] : memref<4x8xf32, #tpu.memory_space<smem>>
      %c3_8 = arith.constant 3 : index
      %31 = arith.index_cast %2 : i32 to index
      %32 = memref.load %arg1[%c3_8, %31] : memref<4x8xi32, #tpu.memory_space<smem>>
      %33 = arith.index_cast %32 : i32 to index
      %c0_9 = arith.constant 0 : index
      %34 = vector.load %arg3[%33, %c0_9] : memref<16x128xf32, #tpu.memory_space<vmem>>, vector<1x128xf32>
      %35 = vector.broadcast %30 : f32 to vector<1x128xf32>
      %36 = arith.mulf %35, %34 : vector<1x128xf32>
      %37 = arith.addf %28, %36 : vector<1x128xf32>
      %38 = arith.index_cast %arg5 : i32 to index
      %c0_10 = arith.constant 0 : index
      %39 = vector.load %arg4[%38, %c0_10] : memref<8x128xf32, #tpu.memory_space<vmem>>, vector<1x128xf32>
      tpu.vector_store %arg4[%38, %c0_10], %37 {strides = array<i32>} : memref<8x128xf32, #tpu.memory_space<vmem>>, vector<1x128xf32>,
    }
    %c8_i32_1 = arith.constant 8 : i32
    return
  }
  func.func @transform_0(%arg0: i32) -> (i32, i32) {
    %c0_i32 = arith.constant 0 : i32
    %c0_i32_0 = arith.constant 0 : i32
    %c0_i32_1 = arith.constant 0 : i32
    return %c0_i32, %c0_i32_0 : i32, i32
  }
  func.func @transform_1(%arg0: i32) -> (i32, i32) {
    %c0_i32 = arith.constant 0 : i32
    %c0_i32_0 = arith.constant 0 : i32
    %c0_i32_1 = arith.constant 0 : i32
    return %c0_i32, %c0_i32_0 : i32, i32
  }
  func.func @transform_2(%arg0: i32) -> (i32, i32) {
    %c0_i32 = arith.constant 0 : i32
    %c0_i32_0 = arith.constant 0 : i32
    %c0_i32_1 = arith.constant 0 : i32
    return %c0_i32, %c0_i32_0 : i32, i32
  }
  func.func @transform_3(%arg0: i32) -> (i32, i32) {
    %c0_i32 = arith.constant 0 : i32
    %c0_i32_0 = arith.constant 0 : i32
    return %arg0, %c0_i32 : i32, i32
  }
}

</mosaic_0001>

<llo_original>
// kernel: feature_extractor_forward.9
$region0: #{feature_extractor_forward.9}
  #allocation0 [shape = 'u32[]', space=smem, size = 0x4, offset = 0x4, fixed_abs, tag = 'smem constant byte address 0x4 - core index']
  #allocation1 [shape = 'u32[144,128]{1,0:T(1,128)}', space=vmem, size = 0x12000, scoped, tag = 'internal scratch']
  #allocation2 [shape = 'f32[8,32]{1,0:T(8,128)}', space=vmem, size = 0x1000, scoped, tag = 'scratch operand']
  #allocation3 [shape = 'f32[8,32]{1,0:T(8,128)}', space=vmem, size = 0x1000, scoped, tag = 'scratch operand']
  %s0 = inlined_call_operand.hbm [shape: f32[256,32], index: 0, kind: input, shape index: {}]
  %s1 = inlined_call_operand.hbm [shape: f32[1,1], index: 1, kind: output, shape index: {0}]
  %s2 = inlined_call_operand.hbm [shape: f32[1,1], index: 2, kind: output, shape index: {1}]
  %3 = xla_tuple %s1, %s2
  %s4 = sld [smem:[#allocation0]]
  $region34: #{feature_extractor_forward.9} parent=0
    _
  %s6 = ssub.s32 1, %s4
  %s7 = scalar_select 0, %s6, %s4
  $region1: #{feature_extractor_forward.9} parent=0
    #allocation4 [shape = 'u8[131072]{0}', space=vmem, size = 0x20000, scoped, tag = 'input window, operand 0, single buffered']
    #allocation5 [shape = 's32[1]{0}', space=sflag, size = 0x4, scoped, tag = 'scoped memory for feature_extractor_forward.9']
    #allocation6 [shape = 's32[1]{0}', space=sflag, size = 0x4, scoped, tag = 'scoped memory for feature_extractor_forward.9']
    #allocation7 [shape = 'u8[512]{0}', space=vmem, size = 0x400, scoped, tag = 'output window, operand 0, single buffered']
    #allocation8 [shape = 'u8[512]{0}', space=vmem, size = 0x400, scoped, tag = 'output window, operand 1, single buffered']
    #allocation9 [shape = 's32[1]{0}', space=sflag, size = 0x4, scoped, tag = 'scoped memory for feature_extractor_forward.9']
    %8 = vsyncpa [#allocation5], 0
    %9 = vsyncpa [#allocation6], 0
    %10 = vsyncpa [#allocation9], 0
    // Predicated region
    $region2: #{feature_extractor_forward.9} parent=1 // pred_check
      _
    $region3: #{feature_extractor_forward.9} parent=1 // pred_check_branch
      %12 = sbr.rel (0) target = $region5
    $region4: #{feature_extractor_forward.9} parent=1 // pred_region
      %s14 = ssub.s32 4096, 4096
      %15 = vsyncadd [#allocation5], %s14
      %s16 = sshll.u32 [#allocation4], 4
      %s17 = int_to_ptr.vmem [resolvable:$true] %s16
      %22 = dma.hbm_to_vmem [thread:$0]  %s0, 4096, %s17, [#allocation5], 128, 128, 8
    $region5: #{feature_extractor_forward.9} parent=1 // pred_fallthru
      _
    // Predicated region
    $region6: #{feature_extractor_forward.9} parent=1 // pred_check
      _
    $region7: #{feature_extractor_forward.9} parent=1 // pred_check_branch
      %24 = sbr.rel (0) target = $region9
    $region8: #{feature_extractor_forward.9} parent=1 // pred_region
      %25 = dma.done [#allocation5], 4096
    $region9: #{feature_extractor_forward.9} parent=1 // pred_fallthru
      _
    %p26 = scmp.eq.s32.totalorder 0, 0
    // Predicated region
    $region10: #{feature_extractor_forward.9} parent=1 // pred_check
      %p27 = pneg %p26
    $region11: #{feature_extractor_forward.9} parent=1 // pred_check_branch
      %29 = sbr.rel (%p27) target = $region13
    $region12: #{feature_extractor_forward.9} parent=1 // pred_region
      %vm30 = vcmask 261120
      %31 = vst.msk [vmem:[#allocation2] sm:$0xff] %vm30, 1e+30
      %32 = vst.msk [vmem:[#allocation3] sm:$0xff] %vm30, -1e+30
    $region13: #{feature_extractor_forward.9} parent=1 // pred_fallthru
      _
    %v33 = vld [vmem:[#allocation4] sm:$0xff]
    %v34 = vld [vmem:[#allocation4 + $0x8] sm:$0xff]
    %v35 = vld [vmem:[#allocation4 + $0x10] sm:$0xff]
    %v36 = vld [vmem:[#allocation4 + $0x18] sm:$0xff]
    %v37 = vld [vmem:[#allocation4 + $0x20] sm:$0xff]
    %v38 = vld [vmem:[#allocation4 + $0x28] sm:$0xff]
    %v39 = vld [vmem:[#allocation4 + $0x30] sm:$0xff]
    %v40 = vld [vmem:[#allocation4 + $0x38] sm:$0xff]
    %v41 = vld [vmem:[#allocation4 + $0x40] sm:$0xff]
    %v42 = vld [vmem:[#allocation4 + $0x48] sm:$0xff]
    %v43 = vld [vmem:[#allocation4 + $0x50] sm:$0xff]
    %v44 = vld [vmem:[#allocation4 + $0x58] sm:$0xff]
    %v45 = vld [vmem:[#allocation4 + $0x60] sm:$0xff]
    %v46 = vld [vmem:[#allocation4 + $0x68] sm:$0xff]
    %v47 = vld [vmem:[#allocation4 + $0x70] sm:$0xff]
    %v48 = vld [vmem:[#allocation4 + $0x78] sm:$0xff]
    %v49 = vld [vmem:[#allocation4 + $0x80] sm:$0xff]
    %v50 = vld [vmem:[#allocation4 + $0x88] sm:$0xff]
    %v51 = vld [vmem:[#allocation4 + $0x90] sm:$0xff]
    %v52 = vld [vmem:[#allocation4 + $0x98] sm:$0xff]
    %v53 = vld [vmem:[#allocation4 + $0xa0] sm:$0xff]
    %v54 = vld [vmem:[#allocation4 + $0xa8] sm:$0xff]
    %v55 = vld [vmem:[#allocation4 + $0xb0] sm:$0xff]
    %v56 = vld [vmem:[#allocation4 + $0xb8] sm:$0xff]
    %v57 = vld [vmem:[#allocation4 + $0xc0] sm:$0xff]
    %v58 = vld [vmem:[#allocation4 + $0xc8] sm:$0xff]
    %v59 = vld [vmem:[#allocation4 + $0xd0] sm:$0xff]
    %v60 = vld [vmem:[#allocation4 + $0xd8] sm:$0xff]
    %v61 = vld [vmem:[#allocation4 + $0xe0] sm:$0xff]
    %v62 = vld [vmem:[#allocation4 + $0xe8] sm:$0xff]
    %v63 = vld [vmem:[#allocation4 + $0xf0] sm:$0xff]
    %v64 = vld [vmem:[#allocation4 + $0xf8] sm:$0xff]
    %vm65 = vcmp.gt.f32.partialorder %v33, 0.01
    %vm66 = vcmp.gt.f32.partialorder %v34, 0.01
    %vm67 = vcmp.gt.f32.partialorder %v35, 0.01
    %vm68 = vcmp.gt.f32.partialorder %v36, 0.01
    %vm69 = vcmp.gt.f32.partialorder %v37, 0.01
    %vm70 = vcmp.gt.f32.partialorder %v38, 0.01
    %vm71 = vcmp.gt.f32.partialorder %v39, 0.01
    %vm72 = vcmp.gt.f32.partialorder %v40, 0.01
    %vm73 = vcmp.gt.f32.partialorder %v41, 0.01
    %vm74 = vcmp.gt.f32.partialorder %v42, 0.01
    %vm75 = vcmp.gt.f32.partialorder %v43, 0.01
    %vm76 = vcmp.gt.f32.partialorder %v44, 0.01
    %vm77 = vcmp.gt.f32.partialorder %v45, 0.01
    %vm78 = vcmp.gt.f32.partialorder %v46, 0.01
    %vm79 = vcmp.gt.f32.partialorder %v47, 0.01
    %vm80 = vcmp.gt.f32.partialorder %v48, 0.01
    %vm81 = vcmp.gt.f32.partialorder %v49, 0.01
    %vm82 = vcmp.gt.f32.partialorder %v50, 0.01
    %vm83 = vcmp.gt.f32.partialorder %v51, 0.01
    %vm84 = vcmp.gt.f32.partialorder %v52, 0.01
    %vm85 = vcmp.gt.f32.partialorder %v53, 0.01
    %vm86 = vcmp.gt.f32.partialorder %v54, 0.01
    %vm87 = vcmp.gt.f32.partialorder %v55, 0.01
    %vm88 = vcmp.gt.f32.partialorder %v56, 0.01
    %vm89 = vcmp.gt.f32.partialorder %v57, 0.01
    %vm90 = vcmp.gt.f32.partialorder %v58, 0.01
    %vm91 = vcmp.gt.f32.partialorder %v59, 0.01
    %vm92 = vcmp.gt.f32.partialorder %v60, 0.01
    %vm93 = vcmp.gt.f32.partialorder %v61, 0.01
    %vm94 = vcmp.gt.f32.partialorder %v62, 0.01
    %vm95 = vcmp.gt.f32.partialorder %v63, 0.01
    %vm96 = vcmp.gt.f32.partialorder %v64, 0.01
    %v97 = vsel %vm65, %v33, 1e+30
    %v98 = vsel %vm66, %v34, 1e+30
    %v99 = vsel %vm67, %v35, 1e+30
    %v100 = vsel %vm68, %v36, 1e+30
    %v101 = vsel %vm69, %v37, 1e+30
    %v102 = vsel %vm70, %v38, 1e+30
    %v103 = vsel %vm71, %v39, 1e+30
    %v104 = vsel %vm72, %v40, 1e+30
    %v105 = vsel %vm73, %v41, 1e+30
    %v106 = vsel %vm74, %v42, 1e+30
    %v107 = vsel %vm75, %v43, 1e+30
    %v108 = vsel %vm76, %v44, 1e+30
    %v109 = vsel %vm77, %v45, 1e+30
    %v110 = vsel %vm78, %v46, 1e+30
    %v111 = vsel %vm79, %v47, 1e+30
    %v112 = vsel %vm80, %v48, 1e+30
    %v113 = vsel %vm81, %v49, 1e+30
    %v114 = vsel %vm82, %v50, 1e+30
    %v115 = vsel %vm83, %v51, 1e+30
    %v116 = vsel %vm84, %v52, 1e+30
    %v117 = vsel %vm85, %v53, 1e+30
    %v118 = vsel %vm86, %v54, 1e+30
    %v119 = vsel %vm87, %v55, 1e+30
    %v120 = vsel %vm88, %v56, 1e+30
    %v121 = vsel %vm89, %v57, 1e+30
    %v122 = vsel %vm90, %v58, 1e+30
    %v123 = vsel %vm91, %v59, 1e+30
    %v124 = vsel %vm92, %v60, 1e+30
    %v125 = vsel %vm93, %v61, 1e+30
    %v126 = vsel %vm94, %v62, 1e+30
    %v127 = vsel %vm95, %v63, 1e+30
    %v128 = vsel %vm96, %v64, 1e+30
    %v129 = vsel %vm65, %v33, -1e+30
    %v130 = vsel %vm66, %v34, -1e+30
    %v131 = vsel %vm67, %v35, -1e+30
    %v132 = vsel %vm68, %v36, -1e+30
    %v133 = vsel %vm69, %v37, -1e+30
    %v134 = vsel %vm70, %v38, -1e+30
    %v135 = vsel %vm71, %v39, -1e+30
    %v136 = vsel %vm72, %v40, -1e+30
    %v137 = vsel %vm73, %v41, -1e+30
    %v138 = vsel %vm74, %v42, -1e+30
    %v139 = vsel %vm75, %v43, -1e+30
    %v140 = vsel %vm76, %v44, -1e+30
    %v141 = vsel %vm77, %v45, -1e+30
    %v142 = vsel %vm78, %v46, -1e+30
    %v143 = vsel %vm79, %v47, -1e+30
    %v144 = vsel %vm80, %v48, -1e+30
    %v145 = vsel %vm81, %v49, -1e+30
    %v146 = vsel %vm82, %v50, -1e+30
    %v147 = vsel %vm83, %v51, -1e+30
    %v148 = vsel %vm84, %v52, -1e+30
    %v149 = vsel %vm85, %v53, -1e+30
    %v150 = vsel %vm86, %v54, -1e+30
    %v151 = vsel %vm87, %v55, -1e+30
    %v152 = vsel %vm88, %v56, -1e+30
    %v153 = vsel %vm89, %v57, -1e+30
    %v154 = vsel %vm90, %v58, -1e+30
    %v155 = vsel %vm91, %v59, -1e+30
    %v156 = vsel %vm92, %v60, -1e+30
    %v157 = vsel %vm93, %v61, -1e+30
    %v158 = vsel %vm94, %v62, -1e+30
    %v159 = vsel %vm95, %v63, -1e+30
    %v160 = vsel %vm96, %v64, -1e+30
    %v161 = vld [vmem:[#allocation2] sm:$0xff]
    %vm162 = vcmask 261120
    %v163 = vsel %vm162, %v97, inf
    %v164 = vsel %vm162, %v98, inf
    %v165 = vsel %vm162, %v99, inf
    %v166 = vsel %vm162, %v100, inf
    %v167 = vsel %vm162, %v101, inf
    %v168 = vmin.f32 %v163, %v167
    %v169 = vsel %vm162, %v102, inf
    %v170 = vmin.f32 %v164, %v169
    %v171 = vsel %vm162, %v103, inf
    %v172 = vmin.f32 %v165, %v171
    %v173 = vsel %vm162, %v104, inf
    %v174 = vmin.f32 %v166, %v173
    %v175 = vsel %vm162, %v105, inf
    %v176 = vmin.f32 %v168, %v175
    %v177 = vsel %vm162, %v106, inf
    %v178 = vmin.f32 %v170, %v177
    %v179 = vsel %vm162, %v107, inf
    %v180 = vmin.f32 %v172, %v179
    %v181 = vsel %vm162, %v108, inf
    %v182 = vmin.f32 %v174, %v181
    %v183 = vsel %vm162, %v109, inf
    %v184 = vmin.f32 %v176, %v183
    %v185 = vsel %vm162, %v110, inf
    %v186 = vmin.f32 %v178, %v185
    %v187 = vsel %vm162, %v111, inf
    %v188 = vmin.f32 %v180, %v187
    %v189 = vsel %vm162, %v112, inf
    %v190 = vmin.f32 %v182, %v189
    %v191 = vsel %vm162, %v113, inf
    %v192 = vmin.f32 %v184, %v191
    %v193 = vsel %vm162, %v114, inf
    %v194 = vmin.f32 %v186, %v193
    %v195 = vsel %vm162, %v115, inf
    %v196 = vmin.f32 %v188, %v195
    %v197 = vsel %vm162, %v116, inf
    %v198 = vmin.f32 %v190, %v197
    %v199 = vsel %vm162, %v117, inf
    %v200 = vmin.f32 %v192, %v199
    %v201 = vsel %vm162, %v118, inf
    %v202 = vmin.f32 %v194, %v201
    %v203 = vsel %vm162, %v119, inf
    %v204 = vmin.f32 %v196, %v203
    %v205 = vsel %vm162, %v120, inf
    %v206 = vmin.f32 %v198, %v205
    %v207 = vsel %vm162, %v121, inf
    %v208 = vmin.f32 %v200, %v207
    %v209 = vsel %vm162, %v122, inf
    %v210 = vmin.f32 %v202, %v209
    %v211 = vsel %vm162, %v123, inf
    %v212 = vmin.f32 %v204, %v211
    %v213 = vsel %vm162, %v124, inf
    %v214 = vmin.f32 %v206, %v213
    %v215 = vsel %vm162, %v125, inf
    %v216 = vmin.f32 %v208, %v215
    %v217 = vsel %vm162, %v126, inf
    %v218 = vmin.f32 %v210, %v217
    %v219 = vsel %vm162, %v127, inf
    %v220 = vmin.f32 %v212, %v219
    %v221 = vsel %vm162, %v128, inf
    %v222 = vmin.f32 %v214, %v221
    %v223 = vmin.f32 %v216, %v218
    %v224 = vmin.f32 %v220, %v222
    %v225 = vmin.f32 %v223, %v224
    %v226 = vmin.f32 %v161, %v225
    %227 = vst.msk [vmem:[#allocation2] sm:$0xff] %vm162, %v226
    %v228 = vld [vmem:[#allocation3] sm:$0xff]
    %v229 = vsel %vm162, %v129, -inf
    %v230 = vsel %vm162, %v130, -inf
    %v231 = vsel %vm162, %v131, -inf
    %v232 = vsel %vm162, %v132, -inf
    %v233 = vsel %vm162, %v133, -inf
    %v234 = vmax.f32 %v229, %v233
    %v235 = vsel %vm162, %v134, -inf
    %v236 = vmax.f32 %v230, %v235
    %v237 = vsel %vm162, %v135, -inf
    %v238 = vmax.f32 %v231, %v237
    %v239 = vsel %vm162, %v136, -inf
    %v240 = vmax.f32 %v232, %v239
    %v241 = vsel %vm162, %v137, -inf
    %v242 = vmax.f32 %v234, %v241
    %v243 = vsel %vm162, %v138, -inf
    %v244 = vmax.f32 %v236, %v243
    %v245 = vsel %vm162, %v139, -inf
    %v246 = vmax.f32 %v238, %v245
    %v247 = vsel %vm162, %v140, -inf
    %v248 = vmax.f32 %v240, %v247
    %v249 = vsel %vm162, %v141, -inf
    %v250 = vmax.f32 %v242, %v249
    %v251 = vsel %vm162, %v142, -inf
    %v252 = vmax.f32 %v244, %v251
    %v253 = vsel %vm162, %v143, -inf
    %v254 = vmax.f32 %v246, %v253
    %v255 = vsel %vm162, %v144, -inf
    %v256 = vmax.f32 %v248, %v255
    %v257 = vsel %vm162, %v145, -inf
    %v258 = vmax.f32 %v250, %v257
    %v259 = vsel %vm162, %v146, -inf
    %v260 = vmax.f32 %v252, %v259
    %v261 = vsel %vm162, %v147, -inf
    %v262 = vmax.f32 %v254, %v261
    %v263 = vsel %vm162, %v148, -inf
    %v264 = vmax.f32 %v256, %v263
    %v265 = vsel %vm162, %v149, -inf
    %v266 = vmax.f32 %v258, %v265
    %v267 = vsel %vm162, %v150, -inf
    %v268 = vmax.f32 %v260, %v267
    %v269 = vsel %vm162, %v151, -inf
    %v270 = vmax.f32 %v262, %v269
    %v271 = vsel %vm162, %v152, -inf
    %v272 = vmax.f32 %v264, %v271
    %v273 = vsel %vm162, %v153, -inf
    %v274 = vmax.f32 %v266, %v273
    %v275 = vsel %vm162, %v154, -inf
    %v276 = vmax.f32 %v268, %v275
    %v277 = vsel %vm162, %v155, -inf
    %v278 = vmax.f32 %v270, %v277
    %v279 = vsel %vm162, %v156, -inf
    %v280 = vmax.f32 %v272, %v279
    %v281 = vsel %vm162, %v157, -inf
    %v282 = vmax.f32 %v274, %v281
    %v283 = vsel %vm162, %v158, -inf
    %v284 = vmax.f32 %v276, %v283
    %v285 = vsel %vm162, %v159, -inf
    %v286 = vmax.f32 %v278, %v285
    %v287 = vsel %vm162, %v160, -inf
    %v288 = vmax.f32 %v280, %v287
    %v289 = vmax.f32 %v282, %v284
    %v290 = vmax.f32 %v286, %v288
    %v291 = vmax.f32 %v289, %v290
    %v292 = vmax.f32 %v228, %v291
    %293 = vst.msk [vmem:[#allocation3] sm:$0xff] %vm162, %v292
    // Predicated region
    $region14: #{feature_extractor_forward.9} parent=1 // pred_check
      %p294 = pneg %p26
    $region15: #{feature_extractor_forward.9} parent=1 // pred_check_branch
      %296 = sbr.rel (%p294) target = $region17
    $region16: #{feature_extractor_forward.9} parent=1 // pred_region
      %v297 = vld [vmem:[#allocation2] sm:$0xff]
      %v298 = vsel %vm162, %v297, inf
      %299 = vmin.xlane.f32.xlu0 %v298
      %v300 = vpop.xlane.xlu0 %299
      %v301 = vrot.slane %v300, 4
      %v302 = vmin.f32 %v300, %v301
      %v303 = vrot.slane %v302, 2
      %v304 = vmin.f32 %v302, %v303
      %v305 = vrot.slane %v304, 1
      %v306 = vmin.f32 %v304, %v305
      %s307 = vtos %v306
      %v308 = vstv %s307
      %vm309 = vcmask 0
      %310 = vst.msk [vmem:[#allocation7] sm:$0x1] %vm309, %v308
      %v311 = vld [vmem:[#allocation3] sm:$0xff]
      %v312 = vsel %vm162, %v311, -inf
      %313 = vmax.xlane.f32.xlu0 %v312
      %v314 = vpop.xlane.xlu0 %313
      %v315 = vrot.slane %v314, 4
      %v316 = vmax.f32 %v314, %v315
      %v317 = vrot.slane %v316, 2
      %v318 = vmax.f32 %v316, %v317
      %v319 = vrot.slane %v318, 1
      %v320 = vmax.f32 %v318, %v319
      %s321 = vtos %v320
      %v322 = vstv %s321
      %323 = vst.msk [vmem:[#allocation8] sm:$0x1] %vm309, %v322
    $region17: #{feature_extractor_forward.9} parent=1 // pred_fallthru
      _
    // Predicated region
    $region18: #{feature_extractor_forward.9} parent=1 // pred_check
      _
    $region19: #{feature_extractor_forward.9} parent=1 // pred_check_branch
      %325 = sbr.rel (0) target = $region21
    $region20: #{feature_extractor_forward.9} parent=1 // pred_region
      %s327 = ssub.s32 16, 16
      %328 = vsyncadd [#allocation6], %s327
      %s330 = sshll.u32 [#allocation7], 4
      %s331 = int_to_ptr.vmem [resolvable:$true] %s330
      %333 = dma.vmem_to_hbm [thread:$0]  %s331, 16, %s1, [#allocation6]
    $region21: #{feature_extractor_forward.9} parent=1 // pred_fallthru
      _
    // Predicated region
    $region22: #{feature_extractor_forward.9} parent=1 // pred_check
      _
    $region23: #{feature_extractor_forward.9} parent=1 // pred_check_branch
      %335 = sbr.rel (0) target = $region25
    $region24: #{feature_extractor_forward.9} parent=1 // pred_region
      %s337 = ssub.s32 16, 16
      %338 = vsyncadd [#allocation9], %s337
      %s340 = sshll.u32 [#allocation8], 4
      %s341 = int_to_ptr.vmem [resolvable:$true] %s340
      %343 = dma.vmem_to_hbm [thread:$0]  %s341, 16, %s2, [#allocation9]
    $region25: #{feature_extractor_forward.9} parent=1 // pred_fallthru
      _
    // Predicated region
    $region26: #{feature_extractor_forward.9} parent=1 // pred_check
      _
    $region27: #{feature_extractor_forward.9} parent=1 // pred_check_branch
      %345 = sbr.rel (0) target = $region29
    $region28: #{feature_extractor_forward.9} parent=1 // pred_region
      %346 = dma.done [#allocation6], 16
    $region29: #{feature_extractor_forward.9} parent=1 // pred_fallthru
      _
    // Predicated region
    $region30: #{feature_extractor_forward.9} parent=1 // pred_check
      _
    $region31: #{feature_extractor_forward.9} parent=1 // pred_check_branch
      %348 = sbr.rel (0) target = $region33
    $region32: #{feature_extractor_forward.9} parent=1 // pred_region
      %349 = dma.done [#allocation9], 16
    $region33: #{feature_extractor_forward.9} parent=1 // pred_fallthru
      _
    %350 = vsyncpa [#allocation5], 1
    %351 = vsyncpa [#allocation6], 1
    %352 = vsyncpa [#allocation9], 1

// kernel: feature_extractor_forward.10
$region0: #{feature_extractor_forward.10}
  #allocation0 [shape = 'u32[]', space=smem, size = 0x4, offset = 0x4, fixed_abs, tag = 'smem constant byte address 0x4 - core index']
  #allocation1 [shape = 'u32[144,128]{1,0:T(1,128)}', space=vmem, size = 0x12000, scoped, tag = 'internal scratch']
  %s0 = inlined_call_operand.hbm [shape: f32[3,128], index: 0, kind: input, shape index: {}]
  %s1 = inlined_call_operand.hbm [shape: f32[60,1], index: 1, kind: input, shape index: {}]
  %s2 = inlined_call_operand.hbm [shape: f32[60,1], index: 2, kind: input, shape index: {}]
  %s3 = inlined_call_operand.hbm [shape: f32[63,128], index: 3, kind: output, shape index: {}]
  %s4 = sld [smem:[#allocation0]]
  $region34: #{feature_extractor_forward.10} parent=0
    _
  %s6 = ssub.s32 1, %s4
  %s7 = scalar_select 0, %s6, %s4
  $region1: #{feature_extractor_forward.10} parent=0
    #allocation2 [shape = 'u8[2048]{0}', space=vmem, size = 0x800, scoped, tag = 'input window, operand 0, single buffered']
    #allocation3 [shape = 's32[1]{0}', space=sflag, size = 0x4, scoped, tag = 'scoped memory for feature_extractor_forward.10']
    #allocation4 [shape = 's32[1]{0}', space=sflag, size = 0x4, scoped, tag = 'scoped memory for feature_extractor_forward.10']
    #allocation5 [shape = 'u8[32768]{0}', space=vmem, size = 0x8000, scoped, tag = 'input window, operand 1, single buffered']
    #allocation6 [shape = 's32[1]{0}', space=sflag, size = 0x4, scoped, tag = 'scoped memory for feature_extractor_forward.10']
    #allocation7 [shape = 'u8[32768]{0}', space=vmem, size = 0x8000, scoped, tag = 'input window, operand 2, single buffered']
    #allocation8 [shape = 'u8[32768]{0}', space=vmem, size = 0x8000, scoped, tag = 'output window, operand 0, single buffered']
    %8 = vsyncpa [#allocation3], 0
    %9 = vsyncpa [#allocation6], 0
    %10 = vsyncpa [#allocation4], 0
    // Predicated region
    $region2: #{feature_extractor_forward.10} parent=1 // pred_check
      _
    $region3: #{feature_extractor_forward.10} parent=1 // pred_check_branch
      %12 = sbr.rel (0) target = $region5
    $region4: #{feature_extractor_forward.10} parent=1 // pred_region
      %s14 = ssub.s32 64, 64
      %15 = vsyncadd [#allocation3], %s14
      %s17 = sshll.u32 [#allocation2], 4
      %s18 = int_to_ptr.vmem [resolvable:$true] %s17
      %20 = dma.hbm_to_vmem [thread:$0]  %s0, 64, %s18, [#allocation3]
    $region5: #{feature_extractor_forward.10} parent=1 // pred_fallthru
      _
    // Predicated region
    $region6: #{feature_extractor_forward.10} parent=1 // pred_check
      _
    $region7: #{feature_extractor_forward.10} parent=1 // pred_check_branch
      %22 = sbr.rel (0) target = $region9
    $region8: #{feature_extractor_forward.10} parent=1 // pred_region
      %s24 = ssub.s32 1024, 1024
      %25 = vsyncadd [#allocation6], %s24
      %s26 = sshll.u32 [#allocation5], 4
      %s27 = int_to_ptr.vmem [resolvable:$true] %s26
      %32 = dma.hbm_to_vmem [thread:$0]  %s1, 1024, %s27, [#allocation6], 128, 128, 8
    $region9: #{feature_extractor_forward.10} parent=1 // pred_fallthru
      _
    // Predicated region
    $region10: #{feature_extractor_forward.10} parent=1 // pred_check
      _
    $region11: #{feature_extractor_forward.10} parent=1 // pred_check_branch
      %34 = sbr.rel (0) target = $region13
    $region12: #{feature_extractor_forward.10} parent=1 // pred_region
      %s36 = ssub.s32 1024, 1024
      %37 = vsyncadd [#allocation6], %s36
      %s38 = sshll.u32 [#allocation7], 4
      %s39 = int_to_ptr.vmem [resolvable:$true] %s38
      %44 = dma.hbm_to_vmem [thread:$0]  %s2, 1024, %s39, [#allocation6], 128, 128, 8
    $region13: #{feature_extractor_forward.10} parent=1 // pred_fallthru
      _
    // Predicated region
    $region14: #{feature_extractor_forward.10} parent=1 // pred_check
      _
    $region15: #{feature_extractor_forward.10} parent=1 // pred_check_branch
      %46 = sbr.rel (0) target = $region17
    $region16: #{feature_extractor_forward.10} parent=1 // pred_region
      %47 = dma.done [#allocation3], 64
    $region17: #{feature_extractor_forward.10} parent=1 // pred_fallthru
      _
    // Predicated region
    $region18: #{feature_extractor_forward.10} parent=1 // pred_check
      _
    $region19: #{feature_extractor_forward.10} parent=1 // pred_check_branch
      %49 = sbr.rel (0) target = $region21
    $region20: #{feature_extractor_forward.10} parent=1 // pred_region
      %50 = dma.done [#allocation6], 1024
    $region21: #{feature_extractor_forward.10} parent=1 // pred_fallthru
      _
    // Predicated region
    $region22: #{feature_extractor_forward.10} parent=1 // pred_check
      _
    $region23: #{feature_extractor_forward.10} parent=1 // pred_check_branch
      %52 = sbr.rel (0) target = $region25
    $region24: #{feature_extractor_forward.10} parent=1 // pred_region
      %53 = dma.done [#allocation6], 1024
    $region25: #{feature_extractor_forward.10} parent=1 // pred_fallthru
      _
    %v54 = vld [vmem:[#allocation2] sm:$0x7]
    %v56 = vrot.slane %v54, 5
    %v58 = vrot.slane %v54, 2
    %v60 = vrot.slane %v54, 7
    %v62 = vrot.slane %v54, 4
    %v64 = vrot.slane %v54, 1
    %v66 = vrot.slane %v54, 6
    %v68 = vrot.slane %v54, 3
    %vm70 = vcmask 1042432
    %v71 = vsel %vm70, %v54, %v56
    %vm72 = vcmask 1045504
    %v73 = vsel %vm72, %v71, %v58
    %vm74 = vcmask 1040384
    %v75 = vsel %vm74, %v58, %v60
    %vm76 = vcmask 1043456
    %v77 = vsel %vm76, %v75, %v62
    %vm78 = vcmask 1046528
    %v79 = vsel %vm78, %v77, %v64
    %vm80 = vcmask 1041408
    %v81 = vsel %vm80, %v64, %v66
    %vm82 = vcmask 1044480
    %v83 = vsel %vm82, %v81, %v68
    %v84 = vld [vmem:[#allocation5] sm:$0xff]
    %v85 = vld [vmem:[#allocation5 + $0x8] sm:$0xff]
    %v86 = vld [vmem:[#allocation5 + $0x10] sm:$0xff]
    %v87 = vld [vmem:[#allocation5 + $0x18] sm:$0xff]
    %v88 = vld [vmem:[#allocation5 + $0x20] sm:$0xff]
    %v89 = vld [vmem:[#allocation5 + $0x28] sm:$0xff]
    %v90 = vld [vmem:[#allocation5 + $0x30] sm:$0xff]
    %v91 = vld [vmem:[#allocation5 + $0x38] sm:$0xf]
    %93 = vset.pattern.permute.xlu0 0
    %94 = vperm.xlu0 %93, %v84
    %v95 = vpop.permute.xlu0 %94
    %98 = vset.pattern.permute.xlu0 0
    %99 = vperm.xlu0 %98, %v85
    %v100 = vpop.permute.xlu0 %99
    %103 = vset.pattern.permute.xlu0 0
    %104 = vperm.xlu0 %103, %v86
    %v105 = vpop.permute.xlu0 %104
    %108 = vset.pattern.permute.xlu0 0
    %109 = vperm.xlu0 %108, %v87
    %v110 = vpop.permute.xlu0 %109
    %113 = vset.pattern.permute.xlu0 0
    %114 = vperm.xlu0 %113, %v88
    %v115 = vpop.permute.xlu0 %114
    %118 = vset.pattern.permute.xlu0 0
    %119 = vperm.xlu0 %118, %v89
    %v120 = vpop.permute.xlu0 %119
    %123 = vset.pattern.permute.xlu0 0
    %124 = vperm.xlu0 %123, %v90
    %v125 = vpop.permute.xlu0 %124
    %128 = vset.pattern.permute.xlu0 0
    %129 = vperm.xlu0 %128, %v91
    %v130 = vpop.permute.xlu0 %129
    %v132 = vmul.f32 %v73, %v95
    %v133 = vmul.f32 %v79, %v100
    %v134 = vmul.f32 %v83, %v105
    %v135 = vmul.f32 %v73, %v110
    %v136 = vmul.f32 %v79, %v115
    %v137 = vmul.f32 %v83, %v120
    %v138 = vmul.f32 %v73, %v125
    %v139 = vmul.f32 %v75, %v130
    %v140 = vld [vmem:[#allocation7] sm:$0xff]
    %v141 = vld [vmem:[#allocation7 + $0x8] sm:$0xff]
    %v142 = vld [vmem:[#allocation7 + $0x10] sm:$0xff]
    %v143 = vld [vmem:[#allocation7 + $0x18] sm:$0xff]
    %v144 = vld [vmem:[#allocation7 + $0x20] sm:$0xff]
    %v145 = vld [vmem:[#allocation7 + $0x28] sm:$0xff]
    %v146 = vld [vmem:[#allocation7 + $0x30] sm:$0xff]
    %v147 = vld [vmem:[#allocation7 + $0x38] sm:$0xf]
    %149 = vset.pattern.permute.xlu0 0
    %150 = vperm.xlu0 %149, %v140
    %v151 = vpop.permute.xlu0 %150
    %154 = vset.pattern.permute.xlu0 0
    %155 = vperm.xlu0 %154, %v141
    %v156 = vpop.permute.xlu0 %155
    %159 = vset.pattern.permute.xlu0 0
    %160 = vperm.xlu0 %159, %v142
    %v161 = vpop.permute.xlu0 %160
    %164 = vset.pattern.permute.xlu0 0
    %165 = vperm.xlu0 %164, %v143
    %v166 = vpop.permute.xlu0 %165
    %169 = vset.pattern.permute.xlu0 0
    %170 = vperm.xlu0 %169, %v144
    %v171 = vpop.permute.xlu0 %170
    %174 = vset.pattern.permute.xlu0 0
    %175 = vperm.xlu0 %174, %v145
    %v176 = vpop.permute.xlu0 %175
    %179 = vset.pattern.permute.xlu0 0
    %180 = vperm.xlu0 %179, %v146
    %v181 = vpop.permute.xlu0 %180
    %184 = vset.pattern.permute.xlu0 0
    %185 = vperm.xlu0 %184, %v147
    %v186 = vpop.permute.xlu0 %185
    %v188 = vadd.f32 %v132, %v151
    %v189 = vadd.f32 %v133, %v156
    %v190 = vadd.f32 %v134, %v161
    %v191 = vadd.f32 %v135, %v166
    %v192 = vadd.f32 %v136, %v171
    %v193 = vadd.f32 %v137, %v176
    %v194 = vadd.f32 %v138, %v181
    %v195 = vadd.f32 %v139, %v186
    %v196 = vand.u32 2147483647, %v188
    %vm197 = vcmp.le.f32.partialorder %v196, 0.7853982
    %vm198 = vcmp.lt.s32.totalorder %v188, 0
    %v199 = vand.u32 %v188, 2139095040
    %v200 = vshrl.u32 %v199, 23
    %v201 = vsub.s32 %v200, 127
    %v202 = vand.u32 2147483647, %v188
    %v203 = vand.u32 %v202, 8388607
    %v204 = vor.u32 %v203, 8388608
    %v205 = vsub.s32 0, %v204
    %v206 = vadd.s32 %v201, 1
    %vm207 = vcmp.gt.s32.totalorder %v206, 0
    %v208 = vsel %vm207, %v206, 0
    %v209 = vshrl.u32 %v208, 5
    %v210 = vand.u32 %v208, 31
    %v211 = vsub.s32 32, %v210
    %v212 = vshrl.u32 683565275, %v211
    %v213 = vshll.u32 683565275, %v210
    %v214 = vshrl.u32 2475754826, %v211
    %v215 = vor.u32 %v213, %v214
    %v216 = vshll.u32 2475754826, %v210
    %v217 = vshrl.u32 2131351028, %v211
    %v218 = vor.u32 %v216, %v217
    %v219 = vshll.u32 2131351028, %v210
    %v220 = vshrl.u32 2102212464, %v211
    %v221 = vor.u32 %v219, %v220
    %v222 = vshll.u32 2102212464, %v210
    %v223 = vshrl.u32 920167782, %v211
    %v224 = vor.u32 %v222, %v223
    %v225 = vshll.u32 920167782, %v210
    %v226 = vshrl.u32 1326507024, %v211
    %v227 = vor.u32 %v225, %v226
    %vm228 = vcmp.lt.s32.totalorder %v209, 1
    %vm229 = vcmp.lt.s32.totalorder %v209, 2
    %vm230 = vcmp.lt.s32.totalorder %v209, 3
    %vm231 = vcmp.lt.s32.totalorder %v209, 4
    %v232 = vsel %vm228, %v212, %v215
    %v233 = vsel %vm231, %v221, 2102212464
    %v234 = vsel %vm230, %v218, %v233
    %v235 = vsel %vm229, %v232, %v234
    %v236 = vsel %vm228, %v215, %v218
    %v237 = vsel %vm231, %v224, 920167782
    %v238 = vsel %vm230, %v221, %v237
    %v239 = vsel %vm229, %v236, %v238
    %v240 = vsel %vm228, %v218, %v221
    %v241 = vsel %vm231, %v227, 1326507024
    %v242 = vsel %vm230, %v224, %v241
    %v243 = vsel %vm229, %v240, %v242
    %v244 = vshll.u32 %v204, 8
    %v245 = vmul.u32.u64.compose %v244, %v243
    %v246 = vextract.low.u32 %v245
    %v247 = vextract.high.u32 %v245
    %v248 = vmul.u32.u64.compose %v244, %v239
    %v249 = vextract.low.u32 %v248
    %v250 = vextract.high.u32 %v248
    %v251 = vmul.u32 %v244, %v235
    %v252 = vadd.s32 %v247, %v249
    %vm253 = vc.u32 %v247, %v249
    %v254 = vadd.s32 %v250, 1
    %v255 = vsel %vm253, %v254, %v250
    %v256 = vadd.s32 %v251, %v255
    %v257 = vadd.s32 %v256, 536870912
    %v258 = vshrl.u32 %v257, 30
    %v259 = vshll.u32 %v258, 30
    %v260 = vsub.s32 %v256, %v259
    %vm261 = vcmp.lt.s32.totalorder %v260, 0
    %v262 = vsub.s32 0, %v260
    %v263 = vsel %vm261, %v262, %v260
    %v264 = vclz %v263
    %v265 = vsub.s32 %v264, 2
    %vm266 = vcmp.gt.s32.totalorder 0, %v265
    %v267 = vsel %vm266, 0, %v265
    %v268 = vsub.s32 32, %v267
    %v269 = vshll.u32 %v260, %v267
    %v270 = vshrl.u32 %v252, %v268
    %v271 = vor.u32 %v269, %v270
    %v272 = vsub.s32 4294967266, %v267
    %v273 = vadd.s32 %v272, 127
    %v274 = vshll.u32 %v273, 23
    %v275 = vor.u32 4788187, %v274
    %v276 = vand.u32 2147483647, %v275
    %v278 = vcvt.s32.f32 %v271
    %v279 = vmul.f32 %v278, %v276
    %v280 = vxor.u32 %v279, 2147483648
    %v281 = vsel %vm198, %v280, %v279
    %v282 = vsub.s32 4, %v258
    %v283 = vsel %vm198, %v282, %v258
    %v284 = vsel %vm197, %v188, %v281
    %v285 = vsel %vm197, 0, %v283
    %v286 = vcosq.f32.pop %v284
    %v287 = vsinq.f32.pop %v284
    %vm288 = vweird.f32 %v188
    %v289 = vadd.s32 %v285, 3
    %v290 = vand.u32 %v289, 3
    %vm291 = vcmp.lt.s32.totalorder %v290, 2
    %vm292 = vcmp.eq.s32.totalorder %v290, 0
    %v293 = vxor.u32 %v287, 2147483648
    %v294 = vsel %vm292, %v286, %v293
    %vm295 = vcmp.eq.s32.totalorder %v290, 2
    %v296 = vxor.u32 %v286, 2147483648
    %v297 = vsel %vm295, %v296, %v287
    %v298 = vsel %vm291, %v294, %v297
    %v299 = vsel %vm288, nan, %v298
    %v300 = vand.u32 2147483647, %v189
    %vm301 = vcmp.le.f32.partialorder %v300, 0.7853982
    %vm302 = vcmp.lt.s32.totalorder %v189, 0
    %v303 = vand.u32 %v189, 2139095040
    %v304 = vshrl.u32 %v303, 23
    %v305 = vsub.s32 %v304, 127
    %v306 = vand.u32 2147483647, %v189
    %v307 = vand.u32 %v306, 8388607
    %v308 = vor.u32 %v307, 8388608
    %v309 = vsub.s32 0, %v308
    %v310 = vadd.s32 %v305, 1
    %vm311 = vcmp.gt.s32.totalorder %v310, 0
    %v312 = vsel %vm311, %v310, 0
    %v313 = vshrl.u32 %v312, 5
    %v314 = vand.u32 %v312, 31
    %v315 = vsub.s32 32, %v314
    %v316 = vshrl.u32 683565275, %v315
    %v317 = vshll.u32 683565275, %v314
    %v318 = vshrl.u32 2475754826, %v315
    %v319 = vor.u32 %v317, %v318
    %v320 = vshll.u32 2475754826, %v314
    %v321 = vshrl.u32 2131351028, %v315
    %v322 = vor.u32 %v320, %v321
    %v323 = vshll.u32 2131351028, %v314
    %v324 = vshrl.u32 2102212464, %v315
    %v325 = vor.u32 %v323, %v324
    %v326 = vshll.u32 2102212464, %v314
    %v327 = vshrl.u32 920167782, %v315
    %v328 = vor.u32 %v326, %v327
    %v329 = vshll.u32 920167782, %v314
    %v330 = vshrl.u32 1326507024, %v315
    %v331 = vor.u32 %v329, %v330
    %vm332 = vcmp.lt.s32.totalorder %v313, 1
    %vm333 = vcmp.lt.s32.totalorder %v313, 2
    %vm334 = vcmp.lt.s32.totalorder %v313, 3
    %vm335 = vcmp.lt.s32.totalorder %v313, 4
    %v336 = vsel %vm332, %v316, %v319
    %v337 = vsel %vm335, %v325, 2102212464
    %v338 = vsel %vm334, %v322, %v337
    %v339 = vsel %vm333, %v336, %v338
    %v340 = vsel %vm332, %v319, %v322
    %v341 = vsel %vm335, %v328, 920167782
    %v342 = vsel %vm334, %v325, %v341
    %v343 = vsel %vm333, %v340, %v342
    %v344 = vsel %vm332, %v322, %v325
    %v345 = vsel %vm335, %v331, 1326507024
    %v346 = vsel %vm334, %v328, %v345
    %v347 = vsel %vm333, %v344, %v346
    %v348 = vshll.u32 %v308, 8
    %v349 = vmul.u32.u64.compose %v348, %v347
    %v350 = vextract.low.u32 %v349
    %v351 = vextract.high.u32 %v349
    %v352 = vmul.u32.u64.compose %v348, %v343
    %v353 = vextract.low.u32 %v352
    %v354 = vextract.high.u32 %v352
    %v355 = vmul.u32 %v348, %v339
    %v356 = vadd.s32 %v351, %v353
    %vm357 = vc.u32 %v351, %v353
    %v358 = vadd.s32 %v354, 1
    %v359 = vsel %vm357, %v358, %v354
    %v360 = vadd.s32 %v355, %v359
    %v361 = vadd.s32 %v360, 536870912
    %v362 = vshrl.u32 %v361, 30
    %v363 = vshll.u32 %v362, 30
    %v364 = vsub.s32 %v360, %v363
    %vm365 = vcmp.lt.s32.totalorder %v364, 0
    %v366 = vsub.s32 0, %v364
    %v367 = vsel %vm365, %v366, %v364
    %v368 = vclz %v367
    %v369 = vsub.s32 %v368, 2
    %vm370 = vcmp.gt.s32.totalorder 0, %v369
    %v371 = vsel %vm370, 0, %v369
    %v372 = vsub.s32 32, %v371
    %v373 = vshll.u32 %v364, %v371
    %v374 = vshrl.u32 %v356, %v372
    %v375 = vor.u32 %v373, %v374
    %v376 = vsub.s32 4294967266, %v371
    %v377 = vadd.s32 %v376, 127
    %v378 = vshll.u32 %v377, 23
    %v379 = vor.u32 4788187, %v378
    %v380 = vand.u32 2147483647, %v379
    %v382 = vcvt.s32.f32 %v375
    %v383 = vmul.f32 %v382, %v380
    %v384 = vxor.u32 %v383, 2147483648
    %v385 = vsel %vm302, %v384, %v383
    %v386 = vsub.s32 4, %v362
    %v387 = vsel %vm302, %v386, %v362
    %v388 = vsel %vm301, %v189, %v385
    %v389 = vsel %vm301, 0, %v387
    %v390 = vcosq.f32.pop %v388
    %v391 = vsinq.f32.pop %v388
    %vm392 = vweird.f32 %v189
    %v393 = vadd.s32 %v389, 3
    %v394 = vand.u32 %v393, 3
    %vm395 = vcmp.lt.s32.totalorder %v394, 2
    %vm396 = vcmp.eq.s32.totalorder %v394, 0
    %v397 = vxor.u32 %v391, 2147483648
    %v398 = vsel %vm396, %v390, %v397
    %vm399 = vcmp.eq.s32.totalorder %v394, 2
    %v400 = vxor.u32 %v390, 2147483648
    %v401 = vsel %vm399, %v400, %v391
    %v402 = vsel %vm395, %v398, %v401
    %v403 = vsel %vm392, nan, %v402
    %v404 = vand.u32 2147483647, %v190
    %vm405 = vcmp.le.f32.partialorder %v404, 0.7853982
    %vm406 = vcmp.lt.s32.totalorder %v190, 0
    %v407 = vand.u32 %v190, 2139095040
    %v408 = vshrl.u32 %v407, 23
    %v409 = vsub.s32 %v408, 127
    %v410 = vand.u32 2147483647, %v190
    %v411 = vand.u32 %v410, 8388607
    %v412 = vor.u32 %v411, 8388608
    %v413 = vsub.s32 0, %v412
    %v414 = vadd.s32 %v409, 1
    %vm415 = vcmp.gt.s32.totalorder %v414, 0
    %v416 = vsel %vm415, %v414, 0
    %v417 = vshrl.u32 %v416, 5
    %v418 = vand.u32 %v416, 31
    %v419 = vsub.s32 32, %v418
    %v420 = vshrl.u32 683565275, %v419
    %v421 = vshll.u32 683565275, %v418
    %v422 = vshrl.u32 2475754826, %v419
    %v423 = vor.u32 %v421, %v422
    %v424 = vshll.u32 2475754826, %v418
    %v425 = vshrl.u32 2131351028, %v419
    %v426 = vor.u32 %v424, %v425
    %v427 = vshll.u32 2131351028, %v418
    %v428 = vshrl.u32 2102212464, %v419
    %v429 = vor.u32 %v427, %v428
    %v430 = vshll.u32 2102212464, %v418
    %v431 = vshrl.u32 920167782, %v419
    %v432 = vor.u32 %v430, %v431
    %v433 = vshll.u32 920167782, %v418
    %v434 = vshrl.u32 1326507024, %v419
    %v435 = vor.u32 %v433, %v434
    %vm436 = vcmp.lt.s32.totalorder %v417, 1
    %vm437 = vcmp.lt.s32.totalorder %v417, 2
    %vm438 = vcmp.lt.s32.totalorder %v417, 3
    %vm439 = vcmp.lt.s32.totalorder %v417, 4
    %v440 = vsel %vm436, %v420, %v423
    %v441 = vsel %vm439, %v429, 2102212464
    %v442 = vsel %vm438, %v426, %v441
    %v443 = vsel %vm437, %v440, %v442
    %v444 = vsel %vm436, %v423, %v426
    %v445 = vsel %vm439, %v432, 920167782
    %v446 = vsel %vm438, %v429, %v445
    %v447 = vsel %vm437, %v444, %v446
    %v448 = vsel %vm436, %v426, %v429
    %v449 = vsel %vm439, %v435, 1326507024
    %v450 = vsel %vm438, %v432, %v449
    %v451 = vsel %vm437, %v448, %v450
    %v452 = vshll.u32 %v412, 8
    %v453 = vmul.u32.u64.compose %v452, %v451
    %v454 = vextract.low.u32 %v453
    %v455 = vextract.high.u32 %v453
    %v456 = vmul.u32.u64.compose %v452, %v447
    %v457 = vextract.low.u32 %v456
    %v458 = vextract.high.u32 %v456
    %v459 = vmul.u32 %v452, %v443
    %v460 = vadd.s32 %v455, %v457
    %vm461 = vc.u32 %v455, %v457
    %v462 = vadd.s32 %v458, 1
    %v463 = vsel %vm461, %v462, %v458
    %v464 = vadd.s32 %v459, %v463
    %v465 = vadd.s32 %v464, 536870912
    %v466 = vshrl.u32 %v465, 30
    %v467 = vshll.u32 %v466, 30
    %v468 = vsub.s32 %v464, %v467
    %vm469 = vcmp.lt.s32.totalorder %v468, 0
    %v470 = vsub.s32 0, %v468
    %v471 = vsel %vm469, %v470, %v468
    %v472 = vclz %v471
    %v473 = vsub.s32 %v472, 2
    %vm474 = vcmp.gt.s32.totalorder 0, %v473
    %v475 = vsel %vm474, 0, %v473
    %v476 = vsub.s32 32, %v475
    %v477 = vshll.u32 %v468, %v475
    %v478 = vshrl.u32 %v460, %v476
    %v479 = vor.u32 %v477, %v478
    %v480 = vsub.s32 4294967266, %v475
    %v481 = vadd.s32 %v480, 127
    %v482 = vshll.u32 %v481, 23
    %v483 = vor.u32 4788187, %v482
    %v484 = vand.u32 2147483647, %v483
    %v486 = vcvt.s32.f32 %v479
    %v487 = vmul.f32 %v486, %v484
    %v488 = vxor.u32 %v487, 2147483648
    %v489 = vsel %vm406, %v488, %v487
    %v490 = vsub.s32 4, %v466
    %v491 = vsel %vm406, %v490, %v466
    %v492 = vsel %vm405, %v190, %v489
    %v493 = vsel %vm405, 0, %v491
    %v494 = vcosq.f32.pop %v492
    %v495 = vsinq.f32.pop %v492
    %vm496 = vweird.f32 %v190
    %v497 = vadd.s32 %v493, 3
    %v498 = vand.u32 %v497, 3
    %vm499 = vcmp.lt.s32.totalorder %v498, 2
    %vm500 = vcmp.eq.s32.totalorder %v498, 0
    %v501 = vxor.u32 %v495, 2147483648
    %v502 = vsel %vm500, %v494, %v501
    %vm503 = vcmp.eq.s32.totalorder %v498, 2
    %v504 = vxor.u32 %v494, 2147483648
    %v505 = vsel %vm503, %v504, %v495
    %v506 = vsel %vm499, %v502, %v505
    %v507 = vsel %vm496, nan, %v506
    %v508 = vand.u32 2147483647, %v191
    %vm509 = vcmp.le.f32.partialorder %v508, 0.7853982
    %vm510 = vcmp.lt.s32.totalorder %v191, 0
    %v511 = vand.u32 %v191, 2139095040
    %v512 = vshrl.u32 %v511, 23
    %v513 = vsub.s32 %v512, 127
    %v514 = vand.u32 2147483647, %v191
    %v515 = vand.u32 %v514, 8388607
    %v516 = vor.u32 %v515, 8388608
    %v517 = vsub.s32 0, %v516
    %v518 = vadd.s32 %v513, 1
    %vm519 = vcmp.gt.s32.totalorder %v518, 0
    %v520 = vsel %vm519, %v518, 0
    %v521 = vshrl.u32 %v520, 5
    %v522 = vand.u32 %v520, 31
    %v523 = vsub.s32 32, %v522
    %v524 = vshrl.u32 683565275, %v523
    %v525 = vshll.u32 683565275, %v522
    %v526 = vshrl.u32 2475754826, %v523
    %v527 = vor.u32 %v525, %v526
    %v528 = vshll.u32 2475754826, %v522
    %v529 = vshrl.u32 2131351028, %v523
    %v530 = vor.u32 %v528, %v529
    %v531 = vshll.u32 2131351028, %v522
    %v532 = vshrl.u32 2102212464, %v523
    %v533 = vor.u32 %v531, %v532
    %v534 = vshll.u32 2102212464, %v522
    %v535 = vshrl.u32 920167782, %v523
    %v536 = vor.u32 %v534, %v535
    %v537 = vshll.u32 920167782, %v522
    %v538 = vshrl.u32 1326507024, %v523
    %v539 = vor.u32 %v537, %v538
    %vm540 = vcmp.lt.s32.totalorder %v521, 1
    %vm541 = vcmp.lt.s32.totalorder %v521, 2
    %vm542 = vcmp.lt.s32.totalorder %v521, 3
    %vm543 = vcmp.lt.s32.totalorder %v521, 4
    %v544 = vsel %vm540, %v524, %v527
    %v545 = vsel %vm543, %v533, 2102212464
    %v546 = vsel %vm542, %v530, %v545
    %v547 = vsel %vm541, %v544, %v546
    %v548 = vsel %vm540, %v527, %v530
    %v549 = vsel %vm543, %v536, 920167782
    %v550 = vsel %vm542, %v533, %v549
    %v551 = vsel %vm541, %v548, %v550
    %v552 = vsel %vm540, %v530, %v533
    %v553 = vsel %vm543, %v539, 1326507024
    %v554 = vsel %vm542, %v536, %v553
    %v555 = vsel %vm541, %v552, %v554
    %v556 = vshll.u32 %v516, 8
    %v557 = vmul.u32.u64.compose %v556, %v555
    %v558 = vextract.low.u32 %v557
    %v559 = vextract.high.u32 %v557
    %v560 = vmul.u32.u64.compose %v556, %v551
    %v561 = vextract.low.u32 %v560
    %v562 = vextract.high.u32 %v560
    %v563 = vmul.u32 %v556, %v547
    %v564 = vadd.s32 %v559, %v561
    %vm565 = vc.u32 %v559, %v561
    %v566 = vadd.s32 %v562, 1
    %v567 = vsel %vm565, %v566, %v562
    %v568 = vadd.s32 %v563, %v567
    %v569 = vadd.s32 %v568, 536870912
    %v570 = vshrl.u32 %v569, 30
    %v571 = vshll.u32 %v570, 30
    %v572 = vsub.s32 %v568, %v571
    %vm573 = vcmp.lt.s32.totalorder %v572, 0
    %v574 = vsub.s32 0, %v572
    %v575 = vsel %vm573, %v574, %v572
    %v576 = vclz %v575
    %v577 = vsub.s32 %v576, 2
    %vm578 = vcmp.gt.s32.totalorder 0, %v577
    %v579 = vsel %vm578, 0, %v577
    %v580 = vsub.s32 32, %v579
    %v581 = vshll.u32 %v572, %v579
    %v582 = vshrl.u32 %v564, %v580
    %v583 = vor.u32 %v581, %v582
    %v584 = vsub.s32 4294967266, %v579
    %v585 = vadd.s32 %v584, 127
    %v586 = vshll.u32 %v585, 23
    %v587 = vor.u32 4788187, %v586
    %v588 = vand.u32 2147483647, %v587
    %v590 = vcvt.s32.f32 %v583
    %v591 = vmul.f32 %v590, %v588
    %v592 = vxor.u32 %v591, 2147483648
    %v593 = vsel %vm510, %v592, %v591
    %v594 = vsub.s32 4, %v570
    %v595 = vsel %vm510, %v594, %v570
    %v596 = vsel %vm509, %v191, %v593
    %v597 = vsel %vm509, 0, %v595
    %v598 = vcosq.f32.pop %v596
    %v599 = vsinq.f32.pop %v596
    %vm600 = vweird.f32 %v191
    %v601 = vadd.s32 %v597, 3
    %v602 = vand.u32 %v601, 3
    %vm603 = vcmp.lt.s32.totalorder %v602, 2
    %vm604 = vcmp.eq.s32.totalorder %v602, 0
    %v605 = vxor.u32 %v599, 2147483648
    %v606 = vsel %vm604, %v598, %v605
    %vm607 = vcmp.eq.s32.totalorder %v602, 2
    %v608 = vxor.u32 %v598, 2147483648
    %v609 = vsel %vm607, %v608, %v599
    %v610 = vsel %vm603, %v606, %v609
    %v611 = vsel %vm600, nan, %v610
    %v612 = vand.u32 2147483647, %v192
    %vm613 = vcmp.le.f32.partialorder %v612, 0.7853982
    %vm614 = vcmp.lt.s32.totalorder %v192, 0
    %v615 = vand.u32 %v192, 2139095040
    %v616 = vshrl.u32 %v615, 23
    %v617 = vsub.s32 %v616, 127
    %v618 = vand.u32 2147483647, %v192
    %v619 = vand.u32 %v618, 8388607
    %v620 = vor.u32 %v619, 8388608
    %v621 = vsub.s32 0, %v620
    %v622 = vadd.s32 %v617, 1
    %vm623 = vcmp.gt.s32.totalorder %v622, 0
    %v624 = vsel %vm623, %v622, 0
    %v625 = vshrl.u32 %v624, 5
    %v626 = vand.u32 %v624, 31
    %v627 = vsub.s32 32, %v626
    %v628 = vshrl.u32 683565275, %v627
    %v629 = vshll.u32 683565275, %v626
    %v630 = vshrl.u32 2475754826, %v627
    %v631 = vor.u32 %v629, %v630
    %v632 = vshll.u32 2475754826, %v626
    %v633 = vshrl.u32 2131351028, %v627
    %v634 = vor.u32 %v632, %v633
    %v635 = vshll.u32 2131351028, %v626
    %v636 = vshrl.u32 2102212464, %v627
    %v637 = vor.u32 %v635, %v636
    %v638 = vshll.u32 2102212464, %v626
    %v639 = vshrl.u32 920167782, %v627
    %v640 = vor.u32 %v638, %v639
    %v641 = vshll.u32 920167782, %v626
    %v642 = vshrl.u32 1326507024, %v627
    %v643 = vor.u32 %v641, %v642
    %vm644 = vcmp.lt.s32.totalorder %v625, 1
    %vm645 = vcmp.lt.s32.totalorder %v625, 2
    %vm646 = vcmp.lt.s32.totalorder %v625, 3
    %vm647 = vcmp.lt.s32.totalorder %v625, 4
    %v648 = vsel %vm644, %v628, %v631
    %v649 = vsel %vm647, %v637, 2102212464
    %v650 = vsel %vm646, %v634, %v649
    %v651 = vsel %vm645, %v648, %v650
    %v652 = vsel %vm644, %v631, %v634
    %v653 = vsel %vm647, %v640, 920167782
    %v654 = vsel %vm646, %v637, %v653
    %v655 = vsel %vm645, %v652, %v654
    %v656 = vsel %vm644, %v634, %v637
    %v657 = vsel %vm647, %v643, 1326507024
    %v658 = vsel %vm646, %v640, %v657
    %v659 = vsel %vm645, %v656, %v658
    %v660 = vshll.u32 %v620, 8
    %v661 = vmul.u32.u64.compose %v660, %v659
    %v662 = vextract.low.u32 %v661
    %v663 = vextract.high.u32 %v661
    %v664 = vmul.u32.u64.compose %v660, %v655
    %v665 = vextract.low.u32 %v664
    %v666 = vextract.high.u32 %v664
    %v667 = vmul.u32 %v660, %v651
    %v668 = vadd.s32 %v663, %v665
    %vm669 = vc.u32 %v663, %v665
    %v670 = vadd.s32 %v666, 1
    %v671 = vsel %vm669, %v670, %v666
    %v672 = vadd.s32 %v667, %v671
    %v673 = vadd.s32 %v672, 536870912
    %v674 = vshrl.u32 %v673, 30
    %v675 = vshll.u32 %v674, 30
    %v676 = vsub.s32 %v672, %v675
    %vm677 = vcmp.lt.s32.totalorder %v676, 0
    %v678 = vsub.s32 0, %v676
    %v679 = vsel %vm677, %v678, %v676
    %v680 = vclz %v679
    %v681 = vsub.s32 %v680, 2
    %vm682 = vcmp.gt.s32.totalorder 0, %v681
    %v683 = vsel %vm682, 0, %v681
    %v684 = vsub.s32 32, %v683
    %v685 = vshll.u32 %v676, %v683
    %v686 = vshrl.u32 %v668, %v684
    %v687 = vor.u32 %v685, %v686
    %v688 = vsub.s32 4294967266, %v683
    %v689 = vadd.s32 %v688, 127
    %v690 = vshll.u32 %v689, 23
    %v691 = vor.u32 4788187, %v690
    %v692 = vand.u32 2147483647, %v691
    %v694 = vcvt.s32.f32 %v687
    %v695 = vmul.f32 %v694, %v692
    %v696 = vxor.u32 %v695, 2147483648
    %v697 = vsel %vm614, %v696, %v695
    %v698 = vsub.s32 4, %v674
    %v699 = vsel %vm614, %v698, %v674
    %v700 = vsel %vm613, %v192, %v697
    %v701 = vsel %vm613, 0, %v699
    %v702 = vcosq.f32.pop %v700
    %v703 = vsinq.f32.pop %v700
    %vm704 = vweird.f32 %v192
    %v705 = vadd.s32 %v701, 3
    %v706 = vand.u32 %v705, 3
    %vm707 = vcmp.lt.s32.totalorder %v706, 2
    %vm708 = vcmp.eq.s32.totalorder %v706, 0
    %v709 = vxor.u32 %v703, 2147483648
    %v710 = vsel %vm708, %v702, %v709
    %vm711 = vcmp.eq.s32.totalorder %v706, 2
    %v712 = vxor.u32 %v702, 2147483648
    %v713 = vsel %vm711, %v712, %v703
    %v714 = vsel %vm707, %v710, %v713
    %v715 = vsel %vm704, nan, %v714
    %v716 = vand.u32 2147483647, %v193
    %vm717 = vcmp.le.f32.partialorder %v716, 0.7853982
    %vm718 = vcmp.lt.s32.totalorder %v193, 0
    %v719 = vand.u32 %v193, 2139095040
    %v720 = vshrl.u32 %v719, 23
    %v721 = vsub.s32 %v720, 127
    %v722 = vand.u32 2147483647, %v193
    %v723 = vand.u32 %v722, 8388607
    %v724 = vor.u32 %v723, 8388608
    %v725 = vsub.s32 0, %v724
    %v726 = vadd.s32 %v721, 1
    %vm727 = vcmp.gt.s32.totalorder %v726, 0
    %v728 = vsel %vm727, %v726, 0
    %v729 = vshrl.u32 %v728, 5
    %v730 = vand.u32 %v728, 31
    %v731 = vsub.s32 32, %v730
    %v732 = vshrl.u32 683565275, %v731
    %v733 = vshll.u32 683565275, %v730
    %v734 = vshrl.u32 2475754826, %v731
    %v735 = vor.u32 %v733, %v734
    %v736 = vshll.u32 2475754826, %v730
    %v737 = vshrl.u32 2131351028, %v731
    %v738 = vor.u32 %v736, %v737
    %v739 = vshll.u32 2131351028, %v730
    %v740 = vshrl.u32 2102212464, %v731
    %v741 = vor.u32 %v739, %v740
    %v742 = vshll.u32 2102212464, %v730
    %v743 = vshrl.u32 920167782, %v731
    %v744 = vor.u32 %v742, %v743
    %v745 = vshll.u32 920167782, %v730
    %v746 = vshrl.u32 1326507024, %v731
    %v747 = vor.u32 %v745, %v746
    %vm748 = vcmp.lt.s32.totalorder %v729, 1
    %vm749 = vcmp.lt.s32.totalorder %v729, 2
    %vm750 = vcmp.lt.s32.totalorder %v729, 3
    %vm751 = vcmp.lt.s32.totalorder %v729, 4
    %v752 = vsel %vm748, %v732, %v735
    %v753 = vsel %vm751, %v741, 2102212464
    %v754 = vsel %vm750, %v738, %v753
    %v755 = vsel %vm749, %v752, %v754
    %v756 = vsel %vm748, %v735, %v738
    %v757 = vsel %vm751, %v744, 920167782
    %v758 = vsel %vm750, %v741, %v757
    %v759 = vsel %vm749, %v756, %v758
    %v760 = vsel %vm748, %v738, %v741
    %v761 = vsel %vm751, %v747, 1326507024
    %v762 = vsel %vm750, %v744, %v761
    %v763 = vsel %vm749, %v760, %v762
    %v764 = vshll.u32 %v724, 8
    %v765 = vmul.u32.u64.compose %v764, %v763
    %v766 = vextract.low.u32 %v765
    %v767 = vextract.high.u32 %v765
    %v768 = vmul.u32.u64.compose %v764, %v759
    %v769 = vextract.low.u32 %v768
    %v770 = vextract.high.u32 %v768
    %v771 = vmul.u32 %v764, %v755
    %v772 = vadd.s32 %v767, %v769
    %vm773 = vc.u32 %v767, %v769
    %v774 = vadd.s32 %v770, 1
    %v775 = vsel %vm773, %v774, %v770
    %v776 = vadd.s32 %v771, %v775
    %v777 = vadd.s32 %v776, 536870912
    %v778 = vshrl.u32 %v777, 30
    %v779 = vshll.u32 %v778, 30
    %v780 = vsub.s32 %v776, %v779
    %vm781 = vcmp.lt.s32.totalorder %v780, 0
    %v782 = vsub.s32 0, %v780
    %v783 = vsel %vm781, %v782, %v780
    %v784 = vclz %v783
    %v785 = vsub.s32 %v784, 2
    %vm786 = vcmp.gt.s32.totalorder 0, %v785
    %v787 = vsel %vm786, 0, %v785
    %v788 = vsub.s32 32, %v787
    %v789 = vshll.u32 %v780, %v787
    %v790 = vshrl.u32 %v772, %v788
    %v791 = vor.u32 %v789, %v790
    %v792 = vsub.s32 4294967266, %v787
    %v793 = vadd.s32 %v792, 127
    %v794 = vshll.u32 %v793, 23
    %v795 = vor.u32 4788187, %v794
    %v796 = vand.u32 2147483647, %v795
    %v798 = vcvt.s32.f32 %v791
    %v799 = vmul.f32 %v798, %v796
    %v800 = vxor.u32 %v799, 2147483648
    %v801 = vsel %vm718, %v800, %v799
    %v802 = vsub.s32 4, %v778
    %v803 = vsel %vm718, %v802, %v778
    %v804 = vsel %vm717, %v193, %v801
    %v805 = vsel %vm717, 0, %v803
    %v806 = vcosq.f32.pop %v804
    %v807 = vsinq.f32.pop %v804
    %vm808 = vweird.f32 %v193
    %v809 = vadd.s32 %v805, 3
    %v810 = vand.u32 %v809, 3
    %vm811 = vcmp.lt.s32.totalorder %v810, 2
    %vm812 = vcmp.eq.s32.totalorder %v810, 0
    %v813 = vxor.u32 %v807, 2147483648
    %v814 = vsel %vm812, %v806, %v813
    %vm815 = vcmp.eq.s32.totalorder %v810, 2
    %v816 = vxor.u32 %v806, 2147483648
    %v817 = vsel %vm815, %v816, %v807
    %v818 = vsel %vm811, %v814, %v817
    %v819 = vsel %vm808, nan, %v818
    %v820 = vand.u32 2147483647, %v194
    %vm821 = vcmp.le.f32.partialorder %v820, 0.7853982
    %vm822 = vcmp.lt.s32.totalorder %v194, 0
    %v823 = vand.u32 %v194, 2139095040
    %v824 = vshrl.u32 %v823, 23
    %v825 = vsub.s32 %v824, 127
    %v826 = vand.u32 2147483647, %v194
    %v827 = vand.u32 %v826, 8388607
    %v828 = vor.u32 %v827, 8388608
    %v829 = vsub.s32 0, %v828
    %v830 = vadd.s32 %v825, 1
    %vm831 = vcmp.gt.s32.totalorder %v830, 0
    %v832 = vsel %vm831, %v830, 0
    %v833 = vshrl.u32 %v832, 5
    %v834 = vand.u32 %v832, 31
    %v835 = vsub.s32 32, %v834
    %v836 = vshrl.u32 683565275, %v835
    %v837 = vshll.u32 683565275, %v834
    %v838 = vshrl.u32 2475754826, %v835
    %v839 = vor.u32 %v837, %v838
    %v840 = vshll.u32 2475754826, %v834
    %v841 = vshrl.u32 2131351028, %v835
    %v842 = vor.u32 %v840, %v841
    %v843 = vshll.u32 2131351028, %v834
    %v844 = vshrl.u32 2102212464, %v835
    %v845 = vor.u32 %v843, %v844
    %v846 = vshll.u32 2102212464, %v834
    %v847 = vshrl.u32 920167782, %v835
    %v848 = vor.u32 %v846, %v847
    %v849 = vshll.u32 920167782, %v834
    %v850 = vshrl.u32 1326507024, %v835
    %v851 = vor.u32 %v849, %v850
    %vm852 = vcmp.lt.s32.totalorder %v833, 1
    %vm853 = vcmp.lt.s32.totalorder %v833, 2
    %vm854 = vcmp.lt.s32.totalorder %v833, 3
    %vm855 = vcmp.lt.s32.totalorder %v833, 4
    %v856 = vsel %vm852, %v836, %v839
    %v857 = vsel %vm855, %v845, 2102212464
    %v858 = vsel %vm854, %v842, %v857
    %v859 = vsel %vm853, %v856, %v858
    %v860 = vsel %vm852, %v839, %v842
    %v861 = vsel %vm855, %v848, 920167782
    %v862 = vsel %vm854, %v845, %v861
    %v863 = vsel %vm853, %v860, %v862
    %v864 = vsel %vm852, %v842, %v845
    %v865 = vsel %vm855, %v851, 1326507024
    %v866 = vsel %vm854, %v848, %v865
    %v867 = vsel %vm853, %v864, %v866
    %v868 = vshll.u32 %v828, 8
    %v869 = vmul.u32.u64.compose %v868, %v867
    %v870 = vextract.low.u32 %v869
    %v871 = vextract.high.u32 %v869
    %v872 = vmul.u32.u64.compose %v868, %v863
    %v873 = vextract.low.u32 %v872
    %v874 = vextract.high.u32 %v872
    %v875 = vmul.u32 %v868, %v859
    %v876 = vadd.s32 %v871, %v873
    %vm877 = vc.u32 %v871, %v873
    %v878 = vadd.s32 %v874, 1
    %v879 = vsel %vm877, %v878, %v874
    %v880 = vadd.s32 %v875, %v879
    %v881 = vadd.s32 %v880, 536870912
    %v882 = vshrl.u32 %v881, 30
    %v883 = vshll.u32 %v882, 30
    %v884 = vsub.s32 %v880, %v883
    %vm885 = vcmp.lt.s32.totalorder %v884, 0
    %v886 = vsub.s32 0, %v884
    %v887 = vsel %vm885, %v886, %v884
    %v888 = vclz %v887
    %v889 = vsub.s32 %v888, 2
    %vm890 = vcmp.gt.s32.totalorder 0, %v889
    %v891 = vsel %vm890, 0, %v889
    %v892 = vsub.s32 32, %v891
    %v893 = vshll.u32 %v884, %v891
    %v894 = vshrl.u32 %v876, %v892
    %v895 = vor.u32 %v893, %v894
    %v896 = vsub.s32 4294967266, %v891
    %v897 = vadd.s32 %v896, 127
    %v898 = vshll.u32 %v897, 23
    %v899 = vor.u32 4788187, %v898
    %v900 = vand.u32 2147483647, %v899
    %v902 = vcvt.s32.f32 %v895
    %v903 = vmul.f32 %v902, %v900
    %v904 = vxor.u32 %v903, 2147483648
    %v905 = vsel %vm822, %v904, %v903
    %v906 = vsub.s32 4, %v882
    %v907 = vsel %vm822, %v906, %v882
    %v908 = vsel %vm821, %v194, %v905
    %v909 = vsel %vm821, 0, %v907
    %v910 = vcosq.f32.pop %v908
    %v911 = vsinq.f32.pop %v908
    %vm912 = vweird.f32 %v194
    %v913 = vadd.s32 %v909, 3
    %v914 = vand.u32 %v913, 3
    %vm915 = vcmp.lt.s32.totalorder %v914, 2
    %vm916 = vcmp.eq.s32.totalorder %v914, 0
    %v917 = vxor.u32 %v911, 2147483648
    %v918 = vsel %vm916, %v910, %v917
    %vm919 = vcmp.eq.s32.totalorder %v914, 2
    %v920 = vxor.u32 %v910, 2147483648
    %v921 = vsel %vm919, %v920, %v911
    %v922 = vsel %vm915, %v918, %v921
    %v923 = vsel %vm912, nan, %v922
    %v924 = vand.u32 2147483647, %v195
    %vm925 = vcmp.le.f32.partialorder %v924, 0.7853982
    %vm926 = vcmp.lt.s32.totalorder %v195, 0
    %v927 = vand.u32 %v195, 2139095040
    %v928 = vshrl.u32 %v927, 23
    %v929 = vsub.s32 %v928, 127
    %v930 = vand.u32 2147483647, %v195
    %v931 = vand.u32 %v930, 8388607
    %v932 = vor.u32 %v931, 8388608
    %v933 = vsub.s32 0, %v932
    %v934 = vadd.s32 %v929, 1
    %vm935 = vcmp.gt.s32.totalorder %v934, 0
    %v936 = vsel %vm935, %v934, 0
    %v937 = vshrl.u32 %v936, 5
    %v938 = vand.u32 %v936, 31
    %v939 = vsub.s32 32, %v938
    %v940 = vshrl.u32 683565275, %v939
    %v941 = vshll.u32 683565275, %v938
    %v942 = vshrl.u32 2475754826, %v939
    %v943 = vor.u32 %v941, %v942
    %v944 = vshll.u32 2475754826, %v938
    %v945 = vshrl.u32 2131351028, %v939
    %v946 = vor.u32 %v944, %v945
    %v947 = vshll.u32 2131351028, %v938
    %v948 = vshrl.u32 2102212464, %v939
    %v949 = vor.u32 %v947, %v948
    %v950 = vshll.u32 2102212464, %v938
    %v951 = vshrl.u32 920167782, %v939
    %v952 = vor.u32 %v950, %v951
    %v953 = vshll.u32 920167782, %v938
    %v954 = vshrl.u32 1326507024, %v939
    %v955 = vor.u32 %v953, %v954
    %vm956 = vcmp.lt.s32.totalorder %v937, 1
    %vm957 = vcmp.lt.s32.totalorder %v937, 2
    %vm958 = vcmp.lt.s32.totalorder %v937, 3
    %vm959 = vcmp.lt.s32.totalorder %v937, 4
    %v960 = vsel %vm956, %v940, %v943
    %v961 = vsel %vm959, %v949, 2102212464
    %v962 = vsel %vm958, %v946, %v961
    %v963 = vsel %vm957, %v960, %v962
    %v964 = vsel %vm956, %v943, %v946
    %v965 = vsel %vm959, %v952, 920167782
    %v966 = vsel %vm958, %v949, %v965
    %v967 = vsel %vm957, %v964, %v966
    %v968 = vsel %vm956, %v946, %v949
    %v969 = vsel %vm959, %v955, 1326507024
    %v970 = vsel %vm958, %v952, %v969
    %v971 = vsel %vm957, %v968, %v970
    %v972 = vshll.u32 %v932, 8
    %v973 = vmul.u32.u64.compose %v972, %v971
    %v974 = vextract.low.u32 %v973
    %v975 = vextract.high.u32 %v973
    %v976 = vmul.u32.u64.compose %v972, %v967
    %v977 = vextract.low.u32 %v976
    %v978 = vextract.high.u32 %v976
    %v979 = vmul.u32 %v972, %v963
    %v980 = vadd.s32 %v975, %v977
    %vm981 = vc.u32 %v975, %v977
    %v982 = vadd.s32 %v978, 1
    %v983 = vsel %vm981, %v982, %v978
    %v984 = vadd.s32 %v979, %v983
    %v985 = vadd.s32 %v984, 536870912
    %v986 = vshrl.u32 %v985, 30
    %v987 = vshll.u32 %v986, 30
    %v988 = vsub.s32 %v984, %v987
    %vm989 = vcmp.lt.s32.totalorder %v988, 0
    %v990 = vsub.s32 0, %v988
    %v991 = vsel %vm989, %v990, %v988
    %v992 = vclz %v991
    %v993 = vsub.s32 %v992, 2
    %vm994 = vcmp.gt.s32.totalorder 0, %v993
    %v995 = vsel %vm994, 0, %v993
    %v996 = vsub.s32 32, %v995
    %v997 = vshll.u32 %v988, %v995
    %v998 = vshrl.u32 %v980, %v996
    %v999 = vor.u32 %v997, %v998
    %v1000 = vsub.s32 4294967266, %v995
    %v1001 = vadd.s32 %v1000, 127
    %v1002 = vshll.u32 %v1001, 23
    %v1003 = vor.u32 4788187, %v1002
    %v1004 = vand.u32 2147483647, %v1003
    %v1006 = vcvt.s32.f32 %v999
    %v1007 = vmul.f32 %v1006, %v1004
    %v1008 = vxor.u32 %v1007, 2147483648
    %v1009 = vsel %vm926, %v1008, %v1007
    %v1010 = vsub.s32 4, %v986
    %v1011 = vsel %vm926, %v1010, %v986
    %v1012 = vsel %vm925, %v195, %v1009
    %v1013 = vsel %vm925, 0, %v1011
    %v1014 = vcosq.f32.pop %v1012
    %v1015 = vsinq.f32.pop %v1012
    %vm1016 = vweird.f32 %v195
    %v1017 = vadd.s32 %v1013, 3
    %v1018 = vand.u32 %v1017, 3
    %vm1019 = vcmp.lt.s32.totalorder %v1018, 2
    %vm1020 = vcmp.eq.s32.totalorder %v1018, 0
    %v1021 = vxor.u32 %v1015, 2147483648
    %v1022 = vsel %vm1020, %v1014, %v1021
    %vm1023 = vcmp.eq.s32.totalorder %v1018, 2
    %v1024 = vxor.u32 %v1014, 2147483648
    %v1025 = vsel %vm1023, %v1024, %v1015
    %v1026 = vsel %vm1019, %v1022, %v1025
    %v1027 = vsel %vm1016, nan, %v1026
    %v1036 = vrot.slane %v299, 5
    %v1037 = vrot.slane %v403, 5
    %v1038 = vsel %vm70, %v1036, %v1037
    %v1039 = vrot.slane %v507, 5
    %v1040 = vsel %vm70, %v1037, %v1039
    %v1041 = vrot.slane %v611, 5
    %v1042 = vsel %vm70, %v1039, %v1041
    %v1043 = vrot.slane %v715, 5
    %v1044 = vsel %vm70, %v1041, %v1043
    %v1045 = vrot.slane %v819, 5
    %v1046 = vsel %vm70, %v1043, %v1045
    %v1047 = vrot.slane %v923, 5
    %v1048 = vsel %vm70, %v1045, %v1047
    %v1049 = vrot.slane %v1027, 5
    %v1050 = vsel %vm70, %v1047, %v1049
    %v1059 = vsel %vm70, %v54, %v1036
    %1060 = vst [vmem:[#allocation8] sm:$0xff] %v1059
    %1061 = vst [vmem:[#allocation8 + $0x8] sm:$0xff] %v1038
    %1062 = vst [vmem:[#allocation8 + $0x10] sm:$0xff] %v1040
    %1063 = vst [vmem:[#allocation8 + $0x18] sm:$0xff] %v1042
    %1064 = vst [vmem:[#allocation8 + $0x20] sm:$0xff] %v1044
    %1065 = vst [vmem:[#allocation8 + $0x28] sm:$0xff] %v1046
    %1066 = vst [vmem:[#allocation8 + $0x30] sm:$0xff] %v1048
    %1067 = vst [vmem:[#allocation8 + $0x38] sm:$0x7f] %v1050
    // Predicated region
    $region26: #{feature_extractor_forward.10} parent=1 // pred_check
      _
    $region27: #{feature_extractor_forward.10} parent=1 // pred_check_branch
      %1069 = sbr.rel (0) target = $region29
    $region28: #{feature_extractor_forward.10} parent=1 // pred_region
      %s1071 = ssub.s32 1024, 1024
      %1072 = vsyncadd [#allocation4], %s1071
      %s1073 = sshll.u32 [#allocation8], 4
      %s1074 = int_to_ptr.vmem [resolvable:$true] %s1073
      %1079 = dma.vmem_to_hbm [thread:$0]  %s1074, 1024, %s3, [#allocation4], 128, 128, 8
    $region29: #{feature_extractor_forward.10} parent=1 // pred_fallthru
      _
    // Predicated region
    $region30: #{feature_extractor_forward.10} parent=1 // pred_check
      _
    $region31: #{feature_extractor_forward.10} parent=1 // pred_check_branch
      %1081 = sbr.rel (0) target = $region33
    $region32: #{feature_extractor_forward.10} parent=1 // pred_region
      %1082 = dma.done [#allocation4], 1024
    $region33: #{feature_extractor_forward.10} parent=1 // pred_fallthru
      _
    %1083 = vsyncpa [#allocation3], 1
    %1084 = vsyncpa [#allocation6], 1
    %1085 = vsyncpa [#allocation4], 1

// kernel: feature_extractor_forward.11
$region0: #{feature_extractor_forward.11}
  #allocation0 [shape = 'u32[]', space=smem, size = 0x4, offset = 0x4, fixed_abs, tag = 'smem constant byte address 0x4 - core index']
  #allocation1 [shape = 'u32[144,128]{1,0:T(1,128)}', space=vmem, size = 0x12000, scoped, tag = 'internal scratch']
  %s0 = inlined_call_operand.hbm [shape: bf16[8,16,192], index: 0, kind: input, shape index: {}]
  %s1 = inlined_call_operand.hbm [shape: bf16[192,128], index: 1, kind: input, shape index: {}]
  %s2 = inlined_call_operand.hbm [shape: f32[1,128], index: 2, kind: input, shape index: {}]
  %s3 = inlined_call_operand.hbm [shape: f32[8,16,128], index: 3, kind: output, shape index: {}]
  %s4 = sld [smem:[#allocation0]]
  $region57: #{feature_extractor_forward.11} parent=0
    _
  %s6 = ssub.s32 1, %s4
  %s7 = scalar_select 0, %s6, %s4
  $region1: #{feature_extractor_forward.11} parent=0
    #allocation2 [shape = 'u8[16384]{0}', space=vmem, size = 0x4000, scoped, tag = 'input window, operand 0']
    #allocation3 [shape = 's32[2]{0}', space=sflag, size = 0x8, scoped, tag = 'scoped memory for feature_extractor_forward.11']
    #allocation4 [shape = 's32[2]{0}', space=sflag, size = 0x8, scoped, tag = 'scoped memory for feature_extractor_forward.11']
    #allocation5 [shape = 'u8[49152]{0}', space=vmem, size = 0xc000, scoped, tag = 'input window, operand 1, single buffered']
    #allocation6 [shape = 's32[1]{0}', space=sflag, size = 0x4, scoped, tag = 'scoped memory for feature_extractor_forward.11']
    #allocation7 [shape = 'u8[512]{0}', space=vmem, size = 0x400, scoped, tag = 'input window, operand 2, single buffered']
    #allocation8 [shape = 'u8[16384]{0}', space=vmem, size = 0x4000, scoped, tag = 'output window, operand 0']
    %8 = vsyncpa [#allocation3], 0
    %s9 = scalar_lea.sflag [#allocation3], 1
    %10 = vsyncpa %s9, 0
    %11 = vsyncpa [#allocation6], 0
    %12 = vsyncpa [#allocation4], 0
    %s13 = scalar_lea.sflag [#allocation4], 1
    %14 = vsyncpa %s13, 0
    loop: start=0, step=1, limit=10
    $region2: #{feature_extractor_forward.11} parent=1 // loop_pre_header
      _
    $region3: #{feature_extractor_forward.11} parent=1 // loop_header
      %s16 = sphi 0, %s20
      %p17 = scmp.ge.s32.totalorder %s16, 10
      %s26 = sphi 0, %s28
      %s29 = sphi 0, %s26
      %s30 = sphi 0, %s29
      %s46 = sphi 0, %s30
      %s50 = sphi 0, %s50
      %s52 = sphi 0, %s50
      %s53 = sphi 0, %s52
      %s67 = sphi 0, %s53
      %s71 = sphi 0, %s71
      %s73 = sphi 0, %s71
      %s74 = sphi 0, %s73
      %s88 = sphi 0, %s74
      %s94 = sphi 0, %s96
      %s97 = sphi 0, %s94
      %s98 = sphi 0, %s97
      %s114 = sphi 0, %s98
    $region4: #{feature_extractor_forward.11} parent=1 // loop_header_branch
      %19 = sbr.rel (%p17) target = $region8
    $region5: #{feature_extractor_forward.11} parent=1 // loop_body
      %s21 = ssub.s32 %s16, 1
      %s22 = ssub.s32 %s16, 2
      %s23 = sadd.s32 %s16, 1
      %s24 = ssub.s32 %s16, %s23
      %p25 = scmp.eq.s32.totalorder %s24, 0
      %s27 = sadd.s32 %s26, 1
      %s28 = scalar_select %p25, %s26, %s27
      %p31 = pneg %p25
      %p32 = scmp.eq.s32.totalorder %s16, 7
      %p33 = por %p31, %p32
      %p34 = scmp.ne.s32.totalorder %s26, %s29
      %p35 = scmp.eq.s32.totalorder %s16, 0
      %p36 = por %p34, %p35
      %p37 = scmp.ne.s32.totalorder %s26, %s29
      %p38 = scmp.eq.s32.totalorder %s21, 7
      %p39 = por %p37, %p38
      %p40 = scmp.ne.s32.totalorder %s29, %s30
      %p41 = scmp.eq.s32.totalorder %s21, 0
      %p42 = por %p40, %p41
      %p43 = scmp.ne.s32.totalorder %s29, %s30
      %p44 = scmp.eq.s32.totalorder %s22, 7
      %p45 = por %p43, %p44
      %p47 = scmp.ne.s32.totalorder %s30, %s46
      %p48 = scmp.eq.s32.totalorder %s22, 0
      %p49 = por %p47, %p48
      %s51 = sadd.s32 %s50, 1
      %p54 = scmp.eq.s32.totalorder %s16, 7
      %p55 = scmp.ne.s32.totalorder %s50, %s52
      %p56 = scmp.eq.s32.totalorder %s16, 0
      %p57 = por %p55, %p56
      %p58 = scmp.ne.s32.totalorder %s50, %s52
      %p59 = scmp.eq.s32.totalorder %s21, 7
      %p60 = por %p58, %p59
      %p61 = scmp.ne.s32.totalorder %s52, %s53
      %p62 = scmp.eq.s32.totalorder %s21, 0
      %p63 = por %p61, %p62
      %p64 = scmp.ne.s32.totalorder %s52, %s53
      %p65 = scmp.eq.s32.totalorder %s22, 7
      %p66 = por %p64, %p65
      %p68 = scmp.ne.s32.totalorder %s53, %s67
      %p69 = scmp.eq.s32.totalorder %s22, 0
      %p70 = por %p68, %p69
      %s72 = sadd.s32 %s71, 1
      %p75 = scmp.eq.s32.totalorder %s16, 7
      %p76 = scmp.ne.s32.totalorder %s71, %s73
      %p77 = scmp.eq.s32.totalorder %s16, 0
      %p78 = por %p76, %p77
      %p79 = scmp.ne.s32.totalorder %s71, %s73
      %p80 = scmp.eq.s32.totalorder %s21, 7
      %p81 = por %p79, %p80
      %p82 = scmp.ne.s32.totalorder %s73, %s74
      %p83 = scmp.eq.s32.totalorder %s21, 0
      %p84 = por %p82, %p83
      %p85 = scmp.ne.s32.totalorder %s73, %s74
      %p86 = scmp.eq.s32.totalorder %s22, 7
      %p87 = por %p85, %p86
      %p89 = scmp.ne.s32.totalorder %s74, %s88
      %p90 = scmp.eq.s32.totalorder %s22, 0
      %p91 = por %p89, %p90
      %s92 = ssub.s32 %s16, %s23
      %p93 = scmp.eq.s32.totalorder %s92, 0
      %s95 = sadd.s32 %s94, 1
      %s96 = scalar_select %p93, %s94, %s95
      %p99 = pneg %p93
      %p100 = scmp.eq.s32.totalorder %s16, 7
      %p101 = por %p99, %p100
      %p102 = scmp.ne.s32.totalorder %s94, %s97
      %p103 = scmp.eq.s32.totalorder %s16, 0
      %p104 = por %p102, %p103
      %p105 = scmp.ne.s32.totalorder %s94, %s97
      %p106 = scmp.eq.s32.totalorder %s21, 7
      %p107 = por %p105, %p106
      %p108 = scmp.ne.s32.totalorder %s97, %s98
      %p109 = scmp.eq.s32.totalorder %s21, 0
      %p110 = por %p108, %p109
      %p111 = scmp.ne.s32.totalorder %s97, %s98
      %p112 = scmp.eq.s32.totalorder %s22, 7
      %p113 = por %p111, %p112
      %p115 = scmp.ne.s32.totalorder %s98, %s114
      %p116 = scmp.eq.s32.totalorder %s22, 0
      %p117 = por %p115, %p116
      %p118 = scmp.le.s32.totalorder 1, %s16
      %p119 = scmp.lt.s32.totalorder %s16, 9
      %p120 = pnand %p118, %p119
      %p121 = pneg %p120
      // Predicated region
      $region9: #{feature_extractor_forward.11} parent=5 // pred_check
        _
      $region10: #{feature_extractor_forward.11} parent=5 // pred_check_branch
        %123 = sbr.rel (%p120) target = $region12
      $region11: #{feature_extractor_forward.11} parent=5 // pred_region
        %s124 = ssub.s32 %s16, 1
        // Predicated region
        $region13: #{feature_extractor_forward.11} parent=11 // pred_check
          %p125 = pneg %p63
        $region14: #{feature_extractor_forward.11} parent=11 // pred_check_branch
          %127 = sbr.rel (%p125) target = $region16
        $region15: #{feature_extractor_forward.11} parent=11 // pred_region
          %s129 = ssub.s32 1536, 1536
          %130 = vsyncadd [#allocation6], %s129
          %s131 = sshll.u32 [#allocation5], 4
          %s132 = int_to_ptr.vmem [resolvable:$true] %s131
          %137 = dma.hbm_to_vmem [thread:$0]  %s1, 1536, %s132, [#allocation6], 64, 64, 4
        $region16: #{feature_extractor_forward.11} parent=11 // pred_fallthru
          _
        // Predicated region
        $region17: #{feature_extractor_forward.11} parent=11 // pred_check
          %p138 = pneg %p84
        $region18: #{feature_extractor_forward.11} parent=11 // pred_check_branch
          %140 = sbr.rel (%p138) target = $region20
        $region19: #{feature_extractor_forward.11} parent=11 // pred_region
          %s142 = ssub.s32 16, 16
          %143 = vsyncadd [#allocation6], %s142
          %s145 = sshll.u32 [#allocation7], 4
          %s146 = int_to_ptr.vmem [resolvable:$true] %s145
          %148 = dma.hbm_to_vmem [thread:$0]  %s2, 16, %s146, [#allocation6]
        $region20: #{feature_extractor_forward.11} parent=11 // pred_fallthru
          _
      $region12: #{feature_extractor_forward.11} parent=5 // pred_fallthru
        _
      %p149 = scmp.lt.s32.totalorder %s16, 8
      // Predicated region
      $region21: #{feature_extractor_forward.11} parent=5 // pred_check
        %p150 = pneg %p149
      $region22: #{feature_extractor_forward.11} parent=5 // pred_check_branch
        %152 = sbr.rel (%p150) target = $region24
      $region23: #{feature_extractor_forward.11} parent=5 // pred_region
        // Predicated region
        $region25: #{feature_extractor_forward.11} parent=23 // pred_check
          %p153 = pneg %p36
        $region26: #{feature_extractor_forward.11} parent=23 // pred_check_branch
          %155 = sbr.rel (%p153) target = $region28
        $region27: #{feature_extractor_forward.11} parent=23 // pred_region
          %s156 = sand.u32 %s26, 1
          %s157 = scalar_lea.sflag [#allocation3], %s156
          %s158 = sand.u32 %s26, 1
          %s159 = smul.addr %s158, 16
          %s160 = scalar_lea.vmem [#allocation2], %s159
          %s162 = ssub.s32 256, 256
          %163 = vsyncadd %s157, %s162
          %s164 = smul.addr %s16, 4
          %s165 = smul.addr %s164, 64
          %s166 = scalar_lea.hbm %s0, %s165
          %s167 = sshll.u32 %s160, 4
          %s168 = int_to_ptr.vmem [resolvable:$true] %s167
          %173 = dma.hbm_to_vmem [thread:$0]  %s166, 256, %s168, %s157, 128, 128, 8
        $region28: #{feature_extractor_forward.11} parent=23 // pred_fallthru
          _
      $region24: #{feature_extractor_forward.11} parent=5 // pred_fallthru
        _
      %p174 = scmp.le.s32.totalorder 1, %s16
      %p175 = scmp.lt.s32.totalorder %s16, 9
      %p176 = pnand %p174, %p175
      %p177 = pneg %p176
      // Predicated region
      $region29: #{feature_extractor_forward.11} parent=5 // pred_check
        _
      $region30: #{feature_extractor_forward.11} parent=5 // pred_check_branch
        %179 = sbr.rel (%p176) target = $region32
      $region31: #{feature_extractor_forward.11} parent=5 // pred_region
        %s180 = ssub.s32 %s16, 1
        %s181 = sand.u32 %s29, 1
        %s182 = scalar_lea.sflag [#allocation3], %s181
        %s183 = sand.u32 %s29, 1
        %s184 = smul.addr %s183, 16
        %s185 = scalar_lea.vmem [#allocation2], %s184
        // Predicated region
        $region33: #{feature_extractor_forward.11} parent=31 // pred_check
          %p186 = pneg %p42
        $region34: #{feature_extractor_forward.11} parent=31 // pred_check_branch
          %188 = sbr.rel (%p186) target = $region36
        $region35: #{feature_extractor_forward.11} parent=31 // pred_region
          %189 = dma.done %s182, 256
        $region36: #{feature_extractor_forward.11} parent=31 // pred_fallthru
          _
        // Predicated region
        $region37: #{feature_extractor_forward.11} parent=31 // pred_check
          %p190 = pneg %p63
        $region38: #{feature_extractor_forward.11} parent=31 // pred_check_branch
          %192 = sbr.rel (%p190) target = $region40
        $region39: #{feature_extractor_forward.11} parent=31 // pred_region
          %193 = dma.done [#allocation6], 1536
        $region40: #{feature_extractor_forward.11} parent=31 // pred_fallthru
          _
        // Predicated region
        $region41: #{feature_extractor_forward.11} parent=31 // pred_check
          %p194 = pneg %p84
        $region42: #{feature_extractor_forward.11} parent=31 // pred_check_branch
          %196 = sbr.rel (%p194) target = $region44
        $region43: #{feature_extractor_forward.11} parent=31 // pred_region
          %197 = dma.done [#allocation6], 16
        $region44: #{feature_extractor_forward.11} parent=31 // pred_fallthru
          _
        %s198 = sand.u32 %s29, 1
        %s199 = scalar_lea.sflag [#allocation3], %s198
        %s200 = sand.u32 %s29, 1
        %s201 = smul.addr %s200, 16
        %s202 = scalar_lea.vmem [#allocation2], %s201
        %p203 = pneg %p42
        %p204 = pneg %p39
        %p205 = pneg %p63
        %p206 = pneg %p60
        %p207 = pneg %p84
        %p208 = pneg %p81
        %p209 = pneg %p110
        %p210 = pneg %p107
        %s211 = sand.u32 %s97, 1
        %s212 = scalar_lea.sflag [#allocation4], %s211
        %s213 = sand.u32 %s97, 1
        %s214 = smul.addr %s213, 16
        %s215 = scalar_lea.vmem [#allocation8], %s214
        %v217 = vld [vmem:[%s185] sm:$0xff]
        %v218 = vld [vmem:[%s185 + $0x8] sm:$0xff]
        %v219 = vld [vmem:[#allocation5] sm:$0xf]
        %v220 = vld [vmem:[#allocation5 + $0x4] sm:$0xf]
        %v221 = vld [vmem:[#allocation5 + $0x8] sm:$0xf]
        %v222 = vld [vmem:[#allocation5 + $0xc] sm:$0xf]
        %v223 = vld [vmem:[#allocation5 + $0x10] sm:$0xf]
        %v224 = vld [vmem:[#allocation5 + $0x14] sm:$0xf]
        %v225 = vld [vmem:[#allocation5 + $0x18] sm:$0xf]
        %v226 = vld [vmem:[#allocation5 + $0x1c] sm:$0xf]
        %v227 = vld [vmem:[#allocation5 + $0x20] sm:$0xf]
        %v228 = vld [vmem:[#allocation5 + $0x24] sm:$0xf]
        %v229 = vld [vmem:[#allocation5 + $0x28] sm:$0xf]
        %v230 = vld [vmem:[#allocation5 + $0x2c] sm:$0xf]
        %v231 = vld [vmem:[#allocation5 + $0x30] sm:$0xf]
        %v232 = vld [vmem:[#allocation5 + $0x34] sm:$0xf]
        %v233 = vld [vmem:[#allocation5 + $0x38] sm:$0xf]
        %v234 = vld [vmem:[#allocation5 + $0x3c] sm:$0xf]
        %v235 = vld [vmem:[#allocation5 + $0x40] sm:$0xf]
        %v236 = vld [vmem:[#allocation5 + $0x44] sm:$0xf]
        %v237 = vld [vmem:[#allocation5 + $0x48] sm:$0xf]
        %v238 = vld [vmem:[#allocation5 + $0x4c] sm:$0xf]
        %v239 = vld [vmem:[#allocation5 + $0x50] sm:$0xf]
        %v240 = vld [vmem:[#allocation5 + $0x54] sm:$0xf]
        %v241 = vld [vmem:[#allocation5 + $0x58] sm:$0xf]
        %v242 = vld [vmem:[#allocation5 + $0x5c] sm:$0xf]
        %v243 = vld [vmem:[#allocation7] sm:$0x1]
        %v245 = vlaneseq
        %v246 = vshrl.u32 %v245, 7
        %v247 = vsub.s32 0, %v246
        %v248 = vrot.slane %v243, %v247
        %v252 = vunpack.c.l.b16 %v217
        %v253 = vunpack.c.h.b16 %v217
        %v254 = vunpack.c.l.b16 %v218
        %v255 = vunpack.c.h.b16 %v218
        %v256 = vpack.c.b16 %v254, %v252
        %v257 = vpack.c.b16 %v255, %v253
        %v283 = vunpack.c.l.b16 %v219
        %v284 = vunpack.c.l.b16 %v220
        %v285 = vunpack.c.l.b16 %v221
        %v286 = vunpack.c.l.b16 %v222
        %v287 = vunpack.c.l.b16 %v223
        %v288 = vunpack.c.l.b16 %v224
        %v289 = vunpack.c.l.b16 %v225
        %v290 = vunpack.c.l.b16 %v226
        %v291 = vunpack.c.l.b16 %v227
        %v292 = vunpack.c.l.b16 %v228
        %v293 = vunpack.c.l.b16 %v229
        %v294 = vunpack.c.l.b16 %v230
        %v295 = vunpack.c.l.b16 %v231
        %v296 = vunpack.c.l.b16 %v232
        %v297 = vunpack.c.l.b16 %v233
        %v298 = vunpack.c.l.b16 %v234
        %v299 = vunpack.c.l.b16 %v235
        %v300 = vunpack.c.l.b16 %v236
        %v301 = vunpack.c.l.b16 %v237
        %v302 = vunpack.c.l.b16 %v238
        %v303 = vunpack.c.l.b16 %v239
        %v304 = vunpack.c.l.b16 %v240
        %v305 = vunpack.c.l.b16 %v241
        %v306 = vunpack.c.l.b16 %v242
        %v307 = vpack.c.b16 %v284, %v283
        %v308 = vpack.c.b16 %v286, %v285
        %v309 = vpack.c.b16 %v288, %v287
        %v310 = vpack.c.b16 %v290, %v289
        %v311 = vpack.c.b16 %v292, %v291
        %v312 = vpack.c.b16 %v294, %v293
        %v313 = vpack.c.b16 %v296, %v295
        %v314 = vpack.c.b16 %v298, %v297
        %v315 = vpack.c.b16 %v300, %v299
        %v316 = vpack.c.b16 %v302, %v301
        %v317 = vpack.c.b16 %v304, %v303
        %v318 = vpack.c.b16 %v306, %v305
        %vm331 = vcmask 523264
        %v333 = vsel %vm331, %v257, 0
        %335 = vmatprep.subr.bf16.mxu0 0
        %336 = vmatpush1.bf16.msra.mxu0 %v307
        %337 = vmatprep.subr.bf16.mxu0 0
        %338 = vmatpush1.bf16.msra.mxu0 %v308
        %339 = vmatprep.subr.bf16.mxu0 0
        %340 = vmatpush1.bf16.msra.mxu0 %v309
        %341 = vmatprep.subr.bf16.mxu0 0
        %342 = vmatpush1.bf16.msra.mxu0 %v310
        %343 = vmatprep.subr.bf16.mxu0 0
        %344 = vmatpush1.bf16.msra.mxu0 %v311
        %345 = vmatprep.subr.bf16.mxu0 0
        %346 = vmatpush1.bf16.msra.mxu0 %v312
        %347 = vmatprep.subr.bf16.mxu0 0
        %348 = vmatpush1.bf16.msra.mxu0 %v313
        %349 = vmatprep.subr.bf16.mxu0 0
        %350 = vmatpush1.bf16.msra.mxu0 %v314
        %351 = vmatprep.subr.bf16.mxu0 0
        %352 = vmatpush1.bf16.msra.mxu0 %v315
        %353 = vmatprep.subr.bf16.mxu0 0
        %354 = vmatpush1.bf16.msra.mxu0 %v316
        %355 = vmatprep.subr.bf16.mxu0 0
        %356 = vmatpush1.bf16.msra.mxu0 %v317
        %357 = vmatprep.subr.bf16.mxu0 0
        %358 = vmatpush1.bf16.msra.mxu0 %v318
        %359 = vmatprep.subr.bf16.mxu0 0
        %360 = vmatpush1.bf16.msra.mxu0 0
        %361 = vmatprep.subr.bf16.mxu0 0
        %362 = vmatpush1.bf16.msra.mxu0 0
        %363 = vmatprep.subr.bf16.mxu0 0
        %364 = vmatpush1.bf16.msra.mxu0 0
        %365 = vmatprep.subr.bf16.mxu0 0
        %366 = vmatpush1.bf16.msra.mxu0 0
        %367 = vmatprep.mubr.bf16.mxu0 %v333
        %368 = vmatmul.mubr.bf16.gmra.mrb[0].mxu0 %v256
        %v369 = vpop.f32.mrb[0].mxu0
        %v370 = vadd.f32 %v248, %v369
        %v371 = vpop.f32.mrb[0].mxu0
        %v372 = vpop.f32.mrb[0].mxu0
        %v373 = vadd.f32 %v248, %v372
        %v374 = vpop.f32.mrb[0].mxu0
        %375 = vdwg.mxu0
        %v376 = vadd.f32 %v370, %v373
        %v377 = vrot.slane %v376, 4
        %v378 = vadd.f32 %v376, %v377
        %v379 = vrot.slane %v378, 2
        %v380 = vadd.f32 %v378, %v379
        %v381 = vrot.slane %v380, 1
        %v382 = vadd.f32 %v380, %v381
        %v383 = vrcp.pop 16.0
        %v384 = vmul.f32 %v382, %v383
        %v385 = vsub.f32 %v370, %v384
        %v386 = vsub.f32 %v373, %v384
        %v387 = vmul.f32 %v385, %v385
        %v388 = vmul.f32 %v386, %v386
        %v389 = vadd.f32 %v387, %v388
        %v390 = vrot.slane %v389, 4
        %v391 = vadd.f32 %v389, %v390
        %v392 = vrot.slane %v391, 2
        %v393 = vadd.f32 %v391, %v392
        %v394 = vrot.slane %v393, 1
        %v395 = vadd.f32 %v393, %v394
        %v396 = vmul.f32 %v395, %v383
        %v397 = vadd.f32 %v396, 1e-05
        %v398 = vrsqrt.pop %v397
        %v399 = vmul.f32 %v385, %v398
        %v400 = vmul.f32 %v386, %v398
        %v401 = vmax.f32 %v399, 0.0
        %v402 = vmax.f32 %v400, 0.0
        %403 = vst [vmem:[%s215] sm:$0xff] %v401
        %404 = vst [vmem:[%s215 + $0x8] sm:$0xff] %v402
        %s405 = sand.u32 %s97, 1
        %s406 = scalar_lea.sflag [#allocation4], %s405
        %s407 = sand.u32 %s97, 1
        %s408 = smul.addr %s407, 16
        %s409 = scalar_lea.vmem [#allocation8], %s408
        // Predicated region
        $region45: #{feature_extractor_forward.11} parent=31 // pred_check
          %p410 = pneg %p107
        $region46: #{feature_extractor_forward.11} parent=31 // pred_check_branch
          %412 = sbr.rel (%p410) target = $region48
        $region47: #{feature_extractor_forward.11} parent=31 // pred_region
          %s414 = ssub.s32 256, 256
          %415 = vsyncadd %s406, %s414
          %s416 = smul.addr %s21, 2
          %s417 = smul.addr %s416, 128
          %s418 = scalar_lea.hbm %s3, %s417
          %s419 = sshll.u32 %s409, 4
          %s420 = int_to_ptr.vmem [resolvable:$true] %s419
          %425 = dma.vmem_to_hbm [thread:$0]  %s420, 256, %s418, %s406, 128, 128, 8
        $region48: #{feature_extractor_forward.11} parent=31 // pred_fallthru
          _
      $region32: #{feature_extractor_forward.11} parent=5 // pred_fallthru
        _
      %p426 = scmp.le.s32.totalorder 2, %s16
      // Predicated region
      $region49: #{feature_extractor_forward.11} parent=5 // pred_check
        %p427 = pneg %p426
      $region50: #{feature_extractor_forward.11} parent=5 // pred_check_branch
        %429 = sbr.rel (%p427) target = $region52
      $region51: #{feature_extractor_forward.11} parent=5 // pred_region
        %s430 = ssub.s32 %s16, 2
        // Predicated region
        $region53: #{feature_extractor_forward.11} parent=51 // pred_check
          %p431 = pneg %p113
        $region54: #{feature_extractor_forward.11} parent=51 // pred_check_branch
          %433 = sbr.rel (%p431) target = $region56
        $region55: #{feature_extractor_forward.11} parent=51 // pred_region
          %s434 = sand.u32 %s98, 1
          %s435 = scalar_lea.sflag [#allocation4], %s434
          %s436 = sand.u32 %s98, 1
          %s437 = smul.addr %s436, 16
          %s438 = scalar_lea.vmem [#allocation8], %s437
          %439 = dma.done %s435, 256
        $region56: #{feature_extractor_forward.11} parent=51 // pred_fallthru
          _
      $region52: #{feature_extractor_forward.11} parent=5 // pred_fallthru
        _
    $region6: #{feature_extractor_forward.11} parent=1 // loop_footer
      %s20 = sadd.s32 1, %s16
    $region7: #{feature_extractor_forward.11} parent=1 // loop_footer_branch
      %15 = sbr.rel target = $region3
    $region8: #{feature_extractor_forward.11} parent=1 // loop_exit
      _
    %440 = vsyncpa [#allocation3], 1
    %s441 = scalar_lea.sflag [#allocation3], 1
    %442 = vsyncpa %s441, 1
    %443 = vsyncpa [#allocation6], 1
    %444 = vsyncpa [#allocation4], 1
    %s445 = scalar_lea.sflag [#allocation4], 1
    %446 = vsyncpa %s445, 1

// kernel: feature_extractor_forward.12
$region0: #{feature_extractor_forward.12}
  #allocation0 [shape = 'u32[]', space=smem, size = 0x4, offset = 0x4, fixed_abs, tag = 'smem constant byte address 0x4 - core index']
  #allocation1 [shape = 'u32[144,128]{1,0:T(1,128)}', space=vmem, size = 0x12000, scoped, tag = 'internal scratch']
  %s0 = inlined_call_operand.hbm [shape: bf16[8,6,6,192], index: 0, kind: input, shape index: {}]
  %s1 = inlined_call_operand.hbm [shape: bf16[9,192,128], index: 1, kind: input, shape index: {}]
  %s2 = inlined_call_operand.hbm [shape: f32[1,128], index: 2, kind: input, shape index: {}]
  %s3 = inlined_call_operand.hbm [shape: f32[8,4,4,128], index: 3, kind: output, shape index: {}]
  %s4 = sld [smem:[#allocation0]]
  $region57: #{feature_extractor_forward.12} parent=0
    _
  %s6 = ssub.s32 1, %s4
  %s7 = scalar_select 0, %s6, %s4
  $region1: #{feature_extractor_forward.12} parent=0
    #allocation2 [shape = 'u8[49152]{0}', space=vmem, size = 0xc000, scoped, tag = 'input window, operand 0']
    #allocation3 [shape = 's32[2]{0}', space=sflag, size = 0x8, scoped, tag = 'scoped memory for feature_extractor_forward.12']
    #allocation4 [shape = 's32[2]{0}', space=sflag, size = 0x8, scoped, tag = 'scoped memory for feature_extractor_forward.12']
    #allocation5 [shape = 'u8[442368]{0}', space=vmem, size = 0x6c000, scoped, tag = 'input window, operand 1, single buffered']
    #allocation6 [shape = 's32[1]{0}', space=sflag, size = 0x4, scoped, tag = 'scoped memory for feature_extractor_forward.12']
    #allocation7 [shape = 'u8[512]{0}', space=vmem, size = 0x400, scoped, tag = 'input window, operand 2, single buffered']
    #allocation8 [shape = 'u8[16384]{0}', space=vmem, size = 0x4000, scoped, tag = 'output window, operand 0']
    %8 = vsyncpa [#allocation3], 0
    %s9 = scalar_lea.sflag [#allocation3], 1
    %10 = vsyncpa %s9, 0
    %11 = vsyncpa [#allocation6], 0
    %12 = vsyncpa [#allocation4], 0
    %s13 = scalar_lea.sflag [#allocation4], 1
    %14 = vsyncpa %s13, 0
    loop: start=0, step=1, limit=10
    $region2: #{feature_extractor_forward.12} parent=1 // loop_pre_header
      _
    $region3: #{feature_extractor_forward.12} parent=1 // loop_header
      %s16 = sphi 0, %s20
      %p17 = scmp.ge.s32.totalorder %s16, 10
      %s26 = sphi 0, %s28
      %s29 = sphi 0, %s26
      %s30 = sphi 0, %s29
      %s46 = sphi 0, %s30
      %s50 = sphi 0, %s50
      %s52 = sphi 0, %s50
      %s53 = sphi 0, %s52
      %s67 = sphi 0, %s53
      %s71 = sphi 0, %s71
      %s73 = sphi 0, %s71
      %s74 = sphi 0, %s73
      %s88 = sphi 0, %s74
      %s94 = sphi 0, %s96
      %s97 = sphi 0, %s94
      %s98 = sphi 0, %s97
      %s114 = sphi 0, %s98
    $region4: #{feature_extractor_forward.12} parent=1 // loop_header_branch
      %19 = sbr.rel (%p17) target = $region8
    $region5: #{feature_extractor_forward.12} parent=1 // loop_body
      %s21 = ssub.s32 %s16, 1
      %s22 = ssub.s32 %s16, 2
      %s23 = sadd.s32 %s16, 1
      %s24 = ssub.s32 %s16, %s23
      %p25 = scmp.eq.s32.totalorder %s24, 0
      %s27 = sadd.s32 %s26, 1
      %s28 = scalar_select %p25, %s26, %s27
      %p31 = pneg %p25
      %p32 = scmp.eq.s32.totalorder %s16, 7
      %p33 = por %p31, %p32
      %p34 = scmp.ne.s32.totalorder %s26, %s29
      %p35 = scmp.eq.s32.totalorder %s16, 0
      %p36 = por %p34, %p35
      %p37 = scmp.ne.s32.totalorder %s26, %s29
      %p38 = scmp.eq.s32.totalorder %s21, 7
      %p39 = por %p37, %p38
      %p40 = scmp.ne.s32.totalorder %s29, %s30
      %p41 = scmp.eq.s32.totalorder %s21, 0
      %p42 = por %p40, %p41
      %p43 = scmp.ne.s32.totalorder %s29, %s30
      %p44 = scmp.eq.s32.totalorder %s22, 7
      %p45 = por %p43, %p44
      %p47 = scmp.ne.s32.totalorder %s30, %s46
      %p48 = scmp.eq.s32.totalorder %s22, 0
      %p49 = por %p47, %p48
      %s51 = sadd.s32 %s50, 1
      %p54 = scmp.eq.s32.totalorder %s16, 7
      %p55 = scmp.ne.s32.totalorder %s50, %s52
      %p56 = scmp.eq.s32.totalorder %s16, 0
      %p57 = por %p55, %p56
      %p58 = scmp.ne.s32.totalorder %s50, %s52
      %p59 = scmp.eq.s32.totalorder %s21, 7
      %p60 = por %p58, %p59
      %p61 = scmp.ne.s32.totalorder %s52, %s53
      %p62 = scmp.eq.s32.totalorder %s21, 0
      %p63 = por %p61, %p62
      %p64 = scmp.ne.s32.totalorder %s52, %s53
      %p65 = scmp.eq.s32.totalorder %s22, 7
      %p66 = por %p64, %p65
      %p68 = scmp.ne.s32.totalorder %s53, %s67
      %p69 = scmp.eq.s32.totalorder %s22, 0
      %p70 = por %p68, %p69
      %s72 = sadd.s32 %s71, 1
      %p75 = scmp.eq.s32.totalorder %s16, 7
      %p76 = scmp.ne.s32.totalorder %s71, %s73
      %p77 = scmp.eq.s32.totalorder %s16, 0
      %p78 = por %p76, %p77
      %p79 = scmp.ne.s32.totalorder %s71, %s73
      %p80 = scmp.eq.s32.totalorder %s21, 7
      %p81 = por %p79, %p80
      %p82 = scmp.ne.s32.totalorder %s73, %s74
      %p83 = scmp.eq.s32.totalorder %s21, 0
      %p84 = por %p82, %p83
      %p85 = scmp.ne.s32.totalorder %s73, %s74
      %p86 = scmp.eq.s32.totalorder %s22, 7
      %p87 = por %p85, %p86
      %p89 = scmp.ne.s32.totalorder %s74, %s88
      %p90 = scmp.eq.s32.totalorder %s22, 0
      %p91 = por %p89, %p90
      %s92 = ssub.s32 %s16, %s23
      %p93 = scmp.eq.s32.totalorder %s92, 0
      %s95 = sadd.s32 %s94, 1
      %s96 = scalar_select %p93, %s94, %s95
      %p99 = pneg %p93
      %p100 = scmp.eq.s32.totalorder %s16, 7
      %p101 = por %p99, %p100
      %p102 = scmp.ne.s32.totalorder %s94, %s97
      %p103 = scmp.eq.s32.totalorder %s16, 0
      %p104 = por %p102, %p103
      %p105 = scmp.ne.s32.totalorder %s94, %s97
      %p106 = scmp.eq.s32.totalorder %s21, 7
      %p107 = por %p105, %p106
      %p108 = scmp.ne.s32.totalorder %s97, %s98
      %p109 = scmp.eq.s32.totalorder %s21, 0
      %p110 = por %p108, %p109
      %p111 = scmp.ne.s32.totalorder %s97, %s98
      %p112 = scmp.eq.s32.totalorder %s22, 7
      %p113 = por %p111, %p112
      %p115 = scmp.ne.s32.totalorder %s98, %s114
      %p116 = scmp.eq.s32.totalorder %s22, 0
      %p117 = por %p115, %p116
      %p118 = scmp.le.s32.totalorder 1, %s16
      %p119 = scmp.lt.s32.totalorder %s16, 9
      %p120 = pnand %p118, %p119
      %p121 = pneg %p120
      // Predicated region
      $region9: #{feature_extractor_forward.12} parent=5 // pred_check
        _
      $region10: #{feature_extractor_forward.12} parent=5 // pred_check_branch
        %123 = sbr.rel (%p120) target = $region12
      $region11: #{feature_extractor_forward.12} parent=5 // pred_region
        %s124 = ssub.s32 %s16, 1
        // Predicated region
        $region13: #{feature_extractor_forward.12} parent=11 // pred_check
          %p125 = pneg %p63
        $region14: #{feature_extractor_forward.12} parent=11 // pred_check_branch
          %127 = sbr.rel (%p125) target = $region16
        $region15: #{feature_extractor_forward.12} parent=11 // pred_region
          %s129 = ssub.s32 13824, 13824
          %130 = vsyncadd [#allocation6], %s129
          %s131 = sshll.u32 [#allocation5], 4
          %s132 = int_to_ptr.vmem [resolvable:$true] %s131
          %137 = dma.hbm_to_vmem [thread:$0]  %s1, 13824, %s132, [#allocation6], 64, 64, 4
        $region16: #{feature_extractor_forward.12} parent=11 // pred_fallthru
          _
        // Predicated region
        $region17: #{feature_extractor_forward.12} parent=11 // pred_check
          %p138 = pneg %p84
        $region18: #{feature_extractor_forward.12} parent=11 // pred_check_branch
          %140 = sbr.rel (%p138) target = $region20
        $region19: #{feature_extractor_forward.12} parent=11 // pred_region
          %s142 = ssub.s32 16, 16
          %143 = vsyncadd [#allocation6], %s142
          %s145 = sshll.u32 [#allocation7], 4
          %s146 = int_to_ptr.vmem [resolvable:$true] %s145
          %148 = dma.hbm_to_vmem [thread:$0]  %s2, 16, %s146, [#allocation6]
        $region20: #{feature_extractor_forward.12} parent=11 // pred_fallthru
          _
      $region12: #{feature_extractor_forward.12} parent=5 // pred_fallthru
        _
      %p149 = scmp.lt.s32.totalorder %s16, 8
      // Predicated region
      $region21: #{feature_extractor_forward.12} parent=5 // pred_check
        %p150 = pneg %p149
      $region22: #{feature_extractor_forward.12} parent=5 // pred_check_branch
        %152 = sbr.rel (%p150) target = $region24
      $region23: #{feature_extractor_forward.12} parent=5 // pred_region
        // Predicated region
        $region25: #{feature_extractor_forward.12} parent=23 // pred_check
          %p153 = pneg %p36
        $region26: #{feature_extractor_forward.12} parent=23 // pred_check_branch
          %155 = sbr.rel (%p153) target = $region28
        $region27: #{feature_extractor_forward.12} parent=23 // pred_region
          %s156 = sand.u32 %s26, 1
          %s157 = scalar_lea.sflag [#allocation3], %s156
          %s158 = sand.u32 %s26, 1
          %s159 = smul.addr %s158, 48
          %s160 = scalar_lea.vmem [#allocation2], %s159
          %s162 = ssub.s32 768, 768
          %163 = vsyncadd %s157, %s162
          %s164 = smul.addr %s16, 12
          %s165 = smul.addr %s164, 64
          %s166 = scalar_lea.hbm %s0, %s165
          %s167 = sshll.u32 %s160, 4
          %s168 = int_to_ptr.vmem [resolvable:$true] %s167
          %173 = dma.hbm_to_vmem [thread:$0]  %s166, 768, %s168, %s157, 128, 128, 8
        $region28: #{feature_extractor_forward.12} parent=23 // pred_fallthru
          _
      $region24: #{feature_extractor_forward.12} parent=5 // pred_fallthru
        _
      %p174 = scmp.le.s32.totalorder 1, %s16
      %p175 = scmp.lt.s32.totalorder %s16, 9
      %p176 = pnand %p174, %p175
      %p177 = pneg %p176
      // Predicated region
      $region29: #{feature_extractor_forward.12} parent=5 // pred_check
        _
      $region30: #{feature_extractor_forward.12} parent=5 // pred_check_branch
        %179 = sbr.rel (%p176) target = $region32
      $region31: #{feature_extractor_forward.12} parent=5 // pred_region
        %s180 = ssub.s32 %s16, 1
        %s181 = sand.u32 %s29, 1
        %s182 = scalar_lea.sflag [#allocation3], %s181
        %s183 = sand.u32 %s29, 1
        %s184 = smul.addr %s183, 48
        %s185 = scalar_lea.vmem [#allocation2], %s184
        // Predicated region
        $region33: #{feature_extractor_forward.12} parent=31 // pred_check
          %p186 = pneg %p42
        $region34: #{feature_extractor_forward.12} parent=31 // pred_check_branch
          %188 = sbr.rel (%p186) target = $region36
        $region35: #{feature_extractor_forward.12} parent=31 // pred_region
          %189 = dma.done %s182, 768
        $region36: #{feature_extractor_forward.12} parent=31 // pred_fallthru
          _
        // Predicated region
        $region37: #{feature_extractor_forward.12} parent=31 // pred_check
          %p190 = pneg %p63
        $region38: #{feature_extractor_forward.12} parent=31 // pred_check_branch
          %192 = sbr.rel (%p190) target = $region40
        $region39: #{feature_extractor_forward.12} parent=31 // pred_region
          %193 = dma.done [#allocation6], 13824
        $region40: #{feature_extractor_forward.12} parent=31 // pred_fallthru
          _
        // Predicated region
        $region41: #{feature_extractor_forward.12} parent=31 // pred_check
          %p194 = pneg %p84
        $region42: #{feature_extractor_forward.12} parent=31 // pred_check_branch
          %196 = sbr.rel (%p194) target = $region44
        $region43: #{feature_extractor_forward.12} parent=31 // pred_region
          %197 = dma.done [#allocation6], 16
        $region44: #{feature_extractor_forward.12} parent=31 // pred_fallthru
          _
        %s198 = sand.u32 %s29, 1
        %s199 = scalar_lea.sflag [#allocation3], %s198
        %s200 = sand.u32 %s29, 1
        %s201 = smul.addr %s200, 48
        %s202 = scalar_lea.vmem [#allocation2], %s201
        %p203 = pneg %p42
        %p204 = pneg %p39
        %p205 = pneg %p63
        %p206 = pneg %p60
        %p207 = pneg %p84
        %p208 = pneg %p81
        %p209 = pneg %p110
        %p210 = pneg %p107
        %s211 = sand.u32 %s97, 1
        %s212 = scalar_lea.sflag [#allocation4], %s211
        %s213 = sand.u32 %s97, 1
        %s214 = smul.addr %s213, 16
        %s215 = scalar_lea.vmem [#allocation8], %s214
        %v217 = vld [vmem:[%s185] sm:$0x77]
        %v218 = vld [vmem:[%s185 + $0x8] sm:$0x77]
        %v219 = vld [vmem:[%s185 + $0x10] sm:$0x77]
        %v220 = vld [vmem:[%s185 + $0x18] sm:$0x77]
        %v221 = vld [vmem:[%s185 + $0x20] sm:$0x77]
        %v222 = vld [vmem:[%s185 + $0x28] sm:$0x77]
        %v228 = vunpack.c.l.s4 1983009808
        %v229 = vunpack.c.0.s8 %v228
        %v230 = vlaneseq
        %v231 = vshrl.u32 %v230, 7
        %v232 = vsub.s32 %v229, %v231
        %v233 = vrot.slane %v217, %v232
        %v235 = vunpack.c.l.s4 1983009808
        %v236 = vunpack.c.0.s8 %v235
        %v237 = vlaneseq
        %v238 = vshrl.u32 %v237, 7
        %v239 = vsub.s32 %v236, %v238
        %v240 = vrot.slane %v218, %v239
        %v242 = vunpack.c.l.s4 1983009808
        %v243 = vunpack.c.0.s8 %v242
        %v244 = vlaneseq
        %v245 = vshrl.u32 %v244, 7
        %v246 = vsub.s32 %v243, %v245
        %v247 = vrot.slane %v219, %v246
        %v249 = vunpack.c.l.s4 1983009808
        %v250 = vunpack.c.0.s8 %v249
        %v251 = vlaneseq
        %v252 = vshrl.u32 %v251, 7
        %v253 = vsub.s32 %v250, %v252
        %v254 = vrot.slane %v220, %v253
        %v255 = vld [vmem:[#allocation5] sm:$0xf]
        %v256 = vld [vmem:[#allocation5 + $0x4] sm:$0xf]
        %v257 = vld [vmem:[#allocation5 + $0x8] sm:$0xf]
        %v258 = vld [vmem:[#allocation5 + $0xc] sm:$0xf]
        %v259 = vld [vmem:[#allocation5 + $0x10] sm:$0xf]
        %v260 = vld [vmem:[#allocation5 + $0x14] sm:$0xf]
        %v261 = vld [vmem:[#allocation5 + $0x18] sm:$0xf]
        %v262 = vld [vmem:[#allocation5 + $0x1c] sm:$0xf]
        %v263 = vld [vmem:[#allocation5 + $0x20] sm:$0xf]
        %v264 = vld [vmem:[#allocation5 + $0x24] sm:$0xf]
        %v265 = vld [vmem:[#allocation5 + $0x28] sm:$0xf]
        %v266 = vld [vmem:[#allocation5 + $0x2c] sm:$0xf]
        %v267 = vld [vmem:[#allocation5 + $0x30] sm:$0xf]
        %v268 = vld [vmem:[#allocation5 + $0x34] sm:$0xf]
        %v269 = vld [vmem:[#allocation5 + $0x38] sm:$0xf]
        %v270 = vld [vmem:[#allocation5 + $0x3c] sm:$0xf]
        %v271 = vld [vmem:[#allocation5 + $0x40] sm:$0xf]
        %v272 = vld [vmem:[#allocation5 + $0x44] sm:$0xf]
        %v273 = vld [vmem:[#allocation5 + $0x48] sm:$0xf]
        %v274 = vld [vmem:[#allocation5 + $0x4c] sm:$0xf]
        %v275 = vld [vmem:[#allocation5 + $0x50] sm:$0xf]
        %v276 = vld [vmem:[#allocation5 + $0x54] sm:$0xf]
        %v277 = vld [vmem:[#allocation5 + $0x58] sm:$0xf]
        %v278 = vld [vmem:[#allocation5 + $0x5c] sm:$0xf]
        %v279 = vcombine.high %v233, %v233
        %v280 = vcombine.high %v240, %v240
        %v281 = vcombine.high %v247, %v247
        %v282 = vcombine.high %v254, %v254
        %vm283 = vsmask.f32 1280
        %vm284 = vsmask.f32 3336
        %vm285 = vmor %vm283, %vm284
        %vm286 = vsmask.f32 5392
        %vm287 = vmor %vm285, %vm286
        %vm288 = vsmask.f32 7448
        %vm289 = vmor %vm287, %vm288
        %v291 = vshrl.u32 %v233, 16
        %v293 = vrot.slane %v291, 6
        %v294 = vshll.u32 %v233, 16
        %v296 = vrot.slane %v294, 7
        %v297 = vor.u32 %v293, %v296
        %v298 = vrot.slane %v297, 2
        %v300 = vshll.u32 %v279, 16
        %v302 = vrot.slane %v300, 7
        %v303 = vsel %vm289, %v298, %v302
        %v305 = vshrl.u32 %v240, 16
        %v307 = vrot.slane %v305, 6
        %v308 = vshll.u32 %v240, 16
        %v310 = vrot.slane %v308, 7
        %v311 = vor.u32 %v307, %v310
        %v312 = vrot.slane %v311, 2
        %v314 = vshll.u32 %v280, 16
        %v316 = vrot.slane %v314, 7
        %v317 = vsel %vm289, %v312, %v316
        %v319 = vshrl.u32 %v247, 16
        %v321 = vrot.slane %v319, 6
        %v322 = vshll.u32 %v247, 16
        %v324 = vrot.slane %v322, 7
        %v325 = vor.u32 %v321, %v324
        %v326 = vrot.slane %v325, 2
        %v328 = vshll.u32 %v281, 16
        %v330 = vrot.slane %v328, 7
        %v331 = vsel %vm289, %v326, %v330
        %v333 = vshrl.u32 %v254, 16
        %v335 = vrot.slane %v333, 6
        %v336 = vshll.u32 %v254, 16
        %v338 = vrot.slane %v336, 7
        %v339 = vor.u32 %v335, %v338
        %v340 = vrot.slane %v339, 2
        %v342 = vshll.u32 %v282, 16
        %v344 = vrot.slane %v342, 7
        %v345 = vsel %vm289, %v340, %v344
        %s346 = scalar_lea.vmem [#allocation5], 96
        %v347 = vld [vmem:[%s346] sm:$0xf]
        %v348 = vld [vmem:[%s346 + $0x4] sm:$0xf]
        %v349 = vld [vmem:[%s346 + $0x8] sm:$0xf]
        %v350 = vld [vmem:[%s346 + $0xc] sm:$0xf]
        %v351 = vld [vmem:[%s346 + $0x10] sm:$0xf]
        %v352 = vld [vmem:[%s346 + $0x14] sm:$0xf]
        %v353 = vld [vmem:[%s346 + $0x18] sm:$0xf]
        %v354 = vld [vmem:[%s346 + $0x1c] sm:$0xf]
        %v355 = vld [vmem:[%s346 + $0x20] sm:$0xf]
        %v356 = vld [vmem:[%s346 + $0x24] sm:$0xf]
        %v357 = vld [vmem:[%s346 + $0x28] sm:$0xf]
        %v358 = vld [vmem:[%s346 + $0x2c] sm:$0xf]
        %v359 = vld [vmem:[%s346 + $0x30] sm:$0xf]
        %v360 = vld [vmem:[%s346 + $0x34] sm:$0xf]
        %v361 = vld [vmem:[%s346 + $0x38] sm:$0xf]
        %v362 = vld [vmem:[%s346 + $0x3c] sm:$0xf]
        %v363 = vld [vmem:[%s346 + $0x40] sm:$0xf]
        %v364 = vld [vmem:[%s346 + $0x44] sm:$0xf]
        %v365 = vld [vmem:[%s346 + $0x48] sm:$0xf]
        %v366 = vld [vmem:[%s346 + $0x4c] sm:$0xf]
        %v367 = vld [vmem:[%s346 + $0x50] sm:$0xf]
        %v368 = vld [vmem:[%s346 + $0x54] sm:$0xf]
        %v369 = vld [vmem:[%s346 + $0x58] sm:$0xf]
        %v370 = vld [vmem:[%s346 + $0x5c] sm:$0xf]
        %v371 = vcombine.low %v303, %v317
        %v372 = vcombine.low %v331, %v345
        %v374 = vunpack.c.l.s4 1983009808
        %v375 = vunpack.c.0.s8 %v374
        %v376 = vlaneseq
        %v377 = vshrl.u32 %v376, 7
        %v378 = vsub.s32 %v375, %v377
        %v379 = vrot.slane %v371, %v378
        %v381 = vunpack.c.l.s4 1983009808
        %v382 = vunpack.c.0.s8 %v381
        %v383 = vlaneseq
        %v384 = vshrl.u32 %v383, 7
        %v385 = vsub.s32 %v382, %v384
        %v386 = vrot.slane %v372, %v385
        %v387 = vcombine.low %v379, %v386
        %v388 = vcombine.high %v379, %v386
        %v414 = vunpack.c.l.b16 %v347
        %v415 = vunpack.c.l.b16 %v348
        %v416 = vunpack.c.l.b16 %v349
        %v417 = vunpack.c.l.b16 %v350
        %v418 = vunpack.c.l.b16 %v351
        %v419 = vunpack.c.l.b16 %v352
        %v420 = vunpack.c.l.b16 %v353
        %v421 = vunpack.c.l.b16 %v354
        %v422 = vunpack.c.l.b16 %v355
        %v423 = vunpack.c.l.b16 %v356
        %v424 = vunpack.c.l.b16 %v357
        %v425 = vunpack.c.l.b16 %v358
        %v426 = vunpack.c.l.b16 %v359
        %v427 = vunpack.c.l.b16 %v360
        %v428 = vunpack.c.l.b16 %v361
        %v429 = vunpack.c.l.b16 %v362
        %v430 = vunpack.c.l.b16 %v363
        %v431 = vunpack.c.l.b16 %v364
        %v432 = vunpack.c.l.b16 %v365
        %v433 = vunpack.c.l.b16 %v366
        %v434 = vunpack.c.l.b16 %v367
        %v435 = vunpack.c.l.b16 %v368
        %v436 = vunpack.c.l.b16 %v369
        %v437 = vunpack.c.l.b16 %v370
        %v438 = vpack.c.b16 %v415, %v414
        %v439 = vpack.c.b16 %v417, %v416
        %v440 = vpack.c.b16 %v419, %v418
        %v441 = vpack.c.b16 %v421, %v420
        %v442 = vpack.c.b16 %v423, %v422
        %v443 = vpack.c.b16 %v425, %v424
        %v444 = vpack.c.b16 %v427, %v426
        %v445 = vpack.c.b16 %v429, %v428
        %v446 = vpack.c.b16 %v431, %v430
        %v447 = vpack.c.b16 %v433, %v432
        %v448 = vpack.c.b16 %v435, %v434
        %v449 = vpack.c.b16 %v437, %v436
        %vm462 = vcmask 523264
        %v464 = vsel %vm462, %v388, 0
        %466 = vmatprep.subr.bf16.mxu0 0
        %467 = vmatpush1.bf16.msra.mxu0 %v438
        %468 = vmatprep.subr.bf16.mxu0 0
        %469 = vmatpush1.bf16.msra.mxu0 %v439
        %470 = vmatprep.subr.bf16.mxu0 0
        %471 = vmatpush1.bf16.msra.mxu0 %v440
        %472 = vmatprep.subr.bf16.mxu0 0
        %473 = vmatpush1.bf16.msra.mxu0 %v441
        %474 = vmatprep.subr.bf16.mxu0 0
        %475 = vmatpush1.bf16.msra.mxu0 %v442
        %476 = vmatprep.subr.bf16.mxu0 0
        %477 = vmatpush1.bf16.msra.mxu0 %v443
        %478 = vmatprep.subr.bf16.mxu0 0
        %479 = vmatpush1.bf16.msra.mxu0 %v444
        %480 = vmatprep.subr.bf16.mxu0 0
        %481 = vmatpush1.bf16.msra.mxu0 %v445
        %482 = vmatprep.subr.bf16.mxu0 0
        %483 = vmatpush1.bf16.msra.mxu0 %v446
        %484 = vmatprep.subr.bf16.mxu0 0
        %485 = vmatpush1.bf16.msra.mxu0 %v447
        %486 = vmatprep.subr.bf16.mxu0 0
        %487 = vmatpush1.bf16.msra.mxu0 %v448
        %488 = vmatprep.subr.bf16.mxu0 0
        %489 = vmatpush1.bf16.msra.mxu0 %v449
        %490 = vmatprep.subr.bf16.mxu0 0
        %491 = vmatpush1.bf16.msra.mxu0 0
        %492 = vmatprep.subr.bf16.mxu0 0
        %493 = vmatpush1.bf16.msra.mxu0 0
        %494 = vmatprep.subr.bf16.mxu0 0
        %495 = vmatpush1.bf16.msra.mxu0 0
        %496 = vmatprep.subr.bf16.mxu0 0
        %497 = vmatpush1.bf16.msra.mxu0 0
        %498 = vmatprep.mubr.bf16.mxu0 %v464
        %499 = vmatmul.mubr.bf16.gmra.mrb[0].mxu0 %v387
        %v500 = vpop.f32.mrb[0].mxu0
        %v501 = vadd.f32 0.0, %v500
        %v502 = vpop.f32.mrb[0].mxu0
        %v503 = vpop.f32.mrb[0].mxu0
        %v504 = vadd.f32 0.0, %v503
        %v505 = vpop.f32.mrb[0].mxu0
        %506 = vdwg.mxu0
        %v507 = vcombine.low %v233, %v240
        %v508 = vcombine.low %v247, %v254
        %v510 = vunpack.c.l.s4 1983009808
        %v511 = vunpack.c.0.s8 %v510
        %v512 = vlaneseq
        %v513 = vshrl.u32 %v512, 7
        %v514 = vsub.s32 %v511, %v513
        %v515 = vrot.slane %v507, %v514
        %v517 = vunpack.c.l.s4 1983009808
        %v518 = vunpack.c.0.s8 %v517
        %v519 = vlaneseq
        %v520 = vshrl.u32 %v519, 7
        %v521 = vsub.s32 %v518, %v520
        %v522 = vrot.slane %v508, %v521
        %v523 = vcombine.low %v515, %v522
        %v524 = vcombine.high %v515, %v522
        %v550 = vunpack.c.l.b16 %v255
        %v551 = vunpack.c.l.b16 %v256
        %v552 = vunpack.c.l.b16 %v257
        %v553 = vunpack.c.l.b16 %v258
        %v554 = vunpack.c.l.b16 %v259
        %v555 = vunpack.c.l.b16 %v260
        %v556 = vunpack.c.l.b16 %v261
        %v557 = vunpack.c.l.b16 %v262
        %v558 = vunpack.c.l.b16 %v263
        %v559 = vunpack.c.l.b16 %v264
        %v560 = vunpack.c.l.b16 %v265
        %v561 = vunpack.c.l.b16 %v266
        %v562 = vunpack.c.l.b16 %v267
        %v563 = vunpack.c.l.b16 %v268
        %v564 = vunpack.c.l.b16 %v269
        %v565 = vunpack.c.l.b16 %v270
        %v566 = vunpack.c.l.b16 %v271
        %v567 = vunpack.c.l.b16 %v272
        %v568 = vunpack.c.l.b16 %v273
        %v569 = vunpack.c.l.b16 %v274
        %v570 = vunpack.c.l.b16 %v275
        %v571 = vunpack.c.l.b16 %v276
        %v572 = vunpack.c.l.b16 %v277
        %v573 = vunpack.c.l.b16 %v278
        %v574 = vpack.c.b16 %v551, %v550
        %v575 = vpack.c.b16 %v553, %v552
        %v576 = vpack.c.b16 %v555, %v554
        %v577 = vpack.c.b16 %v557, %v556
        %v578 = vpack.c.b16 %v559, %v558
        %v579 = vpack.c.b16 %v561, %v560
        %v580 = vpack.c.b16 %v563, %v562
        %v581 = vpack.c.b16 %v565, %v564
        %v582 = vpack.c.b16 %v567, %v566
        %v583 = vpack.c.b16 %v569, %v568
        %v584 = vpack.c.b16 %v571, %v570
        %v585 = vpack.c.b16 %v573, %v572
        %v599 = vsel %vm462, %v524, 0
        %601 = vmatprep.subr.bf16.mxu0 0
        %602 = vmatpush1.bf16.msra.mxu0 %v574
        %603 = vmatprep.subr.bf16.mxu0 0
        %604 = vmatpush1.bf16.msra.mxu0 %v575
        %605 = vmatprep.subr.bf16.mxu0 0
        %606 = vmatpush1.bf16.msra.mxu0 %v576
        %607 = vmatprep.subr.bf16.mxu0 0
        %608 = vmatpush1.bf16.msra.mxu0 %v577
        %609 = vmatprep.subr.bf16.mxu0 0
        %610 = vmatpush1.bf16.msra.mxu0 %v578
        %611 = vmatprep.subr.bf16.mxu0 0
        %612 = vmatpush1.bf16.msra.mxu0 %v579
        %613 = vmatprep.subr.bf16.mxu0 0
        %614 = vmatpush1.bf16.msra.mxu0 %v580
        %615 = vmatprep.subr.bf16.mxu0 0
        %616 = vmatpush1.bf16.msra.mxu0 %v581
        %617 = vmatprep.subr.bf16.mxu0 0
        %618 = vmatpush1.bf16.msra.mxu0 %v582
        %619 = vmatprep.subr.bf16.mxu0 0
        %620 = vmatpush1.bf16.msra.mxu0 %v583
        %621 = vmatprep.subr.bf16.mxu0 0
        %622 = vmatpush1.bf16.msra.mxu0 %v584
        %623 = vmatprep.subr.bf16.mxu0 0
        %624 = vmatpush1.bf16.msra.mxu0 %v585
        %625 = vmatprep.subr.bf16.mxu0 0
        %626 = vmatpush1.bf16.msra.mxu0 0
        %627 = vmatprep.subr.bf16.mxu0 0
        %628 = vmatpush1.bf16.msra.mxu0 0
        %629 = vmatprep.subr.bf16.mxu0 0
        %630 = vmatpush1.bf16.msra.mxu0 0
        %631 = vmatprep.subr.bf16.mxu0 0
        %632 = vmatpush1.bf16.msra.mxu0 0
        %633 = vmatprep.mubr.bf16.mxu0 %v599
        %634 = vmatmul.mubr.bf16.gmra.mrb[0].mxu0 %v523
        %v635 = vpop.f32.mrb[0].mxu0
        %v636 = vadd.f32 %v501, %v635
        %v637 = vpop.f32.mrb[0].mxu0
        %v638 = vpop.f32.mrb[0].mxu0
        %v639 = vadd.f32 %v504, %v638
        %v640 = vpop.f32.mrb[0].mxu0
        %641 = vdwg.mxu0
        %vm642 = vcmask 1040384
        %vm643 = vcmask 1042434
        %vm644 = vmor %vm642, %vm643
        %vm645 = vcmask 1044484
        %vm646 = vmor %vm644, %vm645
        %vm647 = vcmask 1046534
        %vm648 = vmor %vm646, %vm647
        %v649 = vrot.slane %v233, 7
        %v650 = vrot.slane %v649, 2
        %v651 = vrot.slane %v279, 7
        %v652 = vsel %vm648, %v650, %v651
        %v653 = vrot.slane %v240, 7
        %v654 = vrot.slane %v653, 2
        %v655 = vrot.slane %v280, 7
        %v656 = vsel %vm648, %v654, %v655
        %v657 = vrot.slane %v247, 7
        %v658 = vrot.slane %v657, 2
        %v659 = vrot.slane %v281, 7
        %v660 = vsel %vm648, %v658, %v659
        %v661 = vrot.slane %v254, 7
        %v662 = vrot.slane %v661, 2
        %v663 = vrot.slane %v282, 7
        %v664 = vsel %vm648, %v662, %v663
        %s665 = scalar_lea.vmem [#allocation5], 192
        %v666 = vld [vmem:[%s665] sm:$0xf]
        %v667 = vld [vmem:[%s665 + $0x4] sm:$0xf]
        %v668 = vld [vmem:[%s665 + $0x8] sm:$0xf]
        %v669 = vld [vmem:[%s665 + $0xc] sm:$0xf]
        %v670 = vld [vmem:[%s665 + $0x10] sm:$0xf]
        %v671 = vld [vmem:[%s665 + $0x14] sm:$0xf]
        %v672 = vld [vmem:[%s665 + $0x18] sm:$0xf]
        %v673 = vld [vmem:[%s665 + $0x1c] sm:$0xf]
        %v674 = vld [vmem:[%s665 + $0x20] sm:$0xf]
        %v675 = vld [vmem:[%s665 + $0x24] sm:$0xf]
        %v676 = vld [vmem:[%s665 + $0x28] sm:$0xf]
        %v677 = vld [vmem:[%s665 + $0x2c] sm:$0xf]
        %v678 = vld [vmem:[%s665 + $0x30] sm:$0xf]
        %v679 = vld [vmem:[%s665 + $0x34] sm:$0xf]
        %v680 = vld [vmem:[%s665 + $0x38] sm:$0xf]
        %v681 = vld [vmem:[%s665 + $0x3c] sm:$0xf]
        %v682 = vld [vmem:[%s665 + $0x40] sm:$0xf]
        %v683 = vld [vmem:[%s665 + $0x44] sm:$0xf]
        %v684 = vld [vmem:[%s665 + $0x48] sm:$0xf]
        %v685 = vld [vmem:[%s665 + $0x4c] sm:$0xf]
        %v686 = vld [vmem:[%s665 + $0x50] sm:$0xf]
        %v687 = vld [vmem:[%s665 + $0x54] sm:$0xf]
        %v688 = vld [vmem:[%s665 + $0x58] sm:$0xf]
        %v689 = vld [vmem:[%s665 + $0x5c] sm:$0xf]
        %v690 = vcombine.low %v652, %v656
        %v691 = vcombine.low %v660, %v664
        %v693 = vunpack.c.l.s4 1983009808
        %v694 = vunpack.c.0.s8 %v693
        %v695 = vlaneseq
        %v696 = vshrl.u32 %v695, 7
        %v697 = vsub.s32 %v694, %v696
        %v698 = vrot.slane %v690, %v697
        %v700 = vunpack.c.l.s4 1983009808
        %v701 = vunpack.c.0.s8 %v700
        %v702 = vlaneseq
        %v703 = vshrl.u32 %v702, 7
        %v704 = vsub.s32 %v701, %v703
        %v705 = vrot.slane %v691, %v704
        %v706 = vcombine.low %v698, %v705
        %v707 = vcombine.high %v698, %v705
        %v733 = vunpack.c.l.b16 %v666
        %v734 = vunpack.c.l.b16 %v667
        %v735 = vunpack.c.l.b16 %v668
        %v736 = vunpack.c.l.b16 %v669
        %v737 = vunpack.c.l.b16 %v670
        %v738 = vunpack.c.l.b16 %v671
        %v739 = vunpack.c.l.b16 %v672
        %v740 = vunpack.c.l.b16 %v673
        %v741 = vunpack.c.l.b16 %v674
        %v742 = vunpack.c.l.b16 %v675
        %v743 = vunpack.c.l.b16 %v676
        %v744 = vunpack.c.l.b16 %v677
        %v745 = vunpack.c.l.b16 %v678
        %v746 = vunpack.c.l.b16 %v679
        %v747 = vunpack.c.l.b16 %v680
        %v748 = vunpack.c.l.b16 %v681
        %v749 = vunpack.c.l.b16 %v682
        %v750 = vunpack.c.l.b16 %v683
        %v751 = vunpack.c.l.b16 %v684
        %v752 = vunpack.c.l.b16 %v685
        %v753 = vunpack.c.l.b16 %v686
        %v754 = vunpack.c.l.b16 %v687
        %v755 = vunpack.c.l.b16 %v688
        %v756 = vunpack.c.l.b16 %v689
        %v757 = vpack.c.b16 %v734, %v733
        %v758 = vpack.c.b16 %v736, %v735
        %v759 = vpack.c.b16 %v738, %v737
        %v760 = vpack.c.b16 %v740, %v739
        %v761 = vpack.c.b16 %v742, %v741
        %v762 = vpack.c.b16 %v744, %v743
        %v763 = vpack.c.b16 %v746, %v745
        %v764 = vpack.c.b16 %v748, %v747
        %v765 = vpack.c.b16 %v750, %v749
        %v766 = vpack.c.b16 %v752, %v751
        %v767 = vpack.c.b16 %v754, %v753
        %v768 = vpack.c.b16 %v756, %v755
        %v782 = vsel %vm462, %v707, 0
        %784 = vmatprep.subr.bf16.mxu0 0
        %785 = vmatpush1.bf16.msra.mxu0 %v757
        %786 = vmatprep.subr.bf16.mxu0 0
        %787 = vmatpush1.bf16.msra.mxu0 %v758
        %788 = vmatprep.subr.bf16.mxu0 0
        %789 = vmatpush1.bf16.msra.mxu0 %v759
        %790 = vmatprep.subr.bf16.mxu0 0
        %791 = vmatpush1.bf16.msra.mxu0 %v760
        %792 = vmatprep.subr.bf16.mxu0 0
        %793 = vmatpush1.bf16.msra.mxu0 %v761
        %794 = vmatprep.subr.bf16.mxu0 0
        %795 = vmatpush1.bf16.msra.mxu0 %v762
        %796 = vmatprep.subr.bf16.mxu0 0
        %797 = vmatpush1.bf16.msra.mxu0 %v763
        %798 = vmatprep.subr.bf16.mxu0 0
        %799 = vmatpush1.bf16.msra.mxu0 %v764
        %800 = vmatprep.subr.bf16.mxu0 0
        %801 = vmatpush1.bf16.msra.mxu0 %v765
        %802 = vmatprep.subr.bf16.mxu0 0
        %803 = vmatpush1.bf16.msra.mxu0 %v766
        %804 = vmatprep.subr.bf16.mxu0 0
        %805 = vmatpush1.bf16.msra.mxu0 %v767
        %806 = vmatprep.subr.bf16.mxu0 0
        %807 = vmatpush1.bf16.msra.mxu0 %v768
        %808 = vmatprep.subr.bf16.mxu0 0
        %809 = vmatpush1.bf16.msra.mxu0 0
        %810 = vmatprep.subr.bf16.mxu0 0
        %811 = vmatpush1.bf16.msra.mxu0 0
        %812 = vmatprep.subr.bf16.mxu0 0
        %813 = vmatpush1.bf16.msra.mxu0 0
        %814 = vmatprep.subr.bf16.mxu0 0
        %815 = vmatpush1.bf16.msra.mxu0 0
        %816 = vmatprep.mubr.bf16.mxu0 %v782
        %817 = vmatmul.mubr.bf16.gmra.mrb[0].mxu0 %v706
        %v818 = vpop.f32.mrb[0].mxu0
        %v819 = vadd.f32 0.0, %v818
        %v820 = vpop.f32.mrb[0].mxu0
        %v821 = vpop.f32.mrb[0].mxu0
        %v822 = vadd.f32 0.0, %v821
        %v823 = vpop.f32.mrb[0].mxu0
        %824 = vdwg.mxu0
        %v825 = vadd.f32 %v636, %v819
        %v826 = vadd.f32 %v639, %v822
        %v829 = vunpack.c.l.s4 1983009808
        %v830 = vunpack.c.0.s8 %v829
        %v831 = vlaneseq
        %v832 = vshrl.u32 %v831, 7
        %v833 = vsub.s32 %v830, %v832
        %v834 = vrot.slane %v221, %v833
        %s835 = scalar_lea.vmem [#allocation5], 288
        %v836 = vld [vmem:[%s835] sm:$0xf]
        %v837 = vld [vmem:[%s835 + $0x4] sm:$0xf]
        %v838 = vld [vmem:[%s835 + $0x8] sm:$0xf]
        %v839 = vld [vmem:[%s835 + $0xc] sm:$0xf]
        %v840 = vld [vmem:[%s835 + $0x10] sm:$0xf]
        %v841 = vld [vmem:[%s835 + $0x14] sm:$0xf]
        %v842 = vld [vmem:[%s835 + $0x18] sm:$0xf]
        %v843 = vld [vmem:[%s835 + $0x1c] sm:$0xf]
        %v844 = vld [vmem:[%s835 + $0x20] sm:$0xf]
        %v845 = vld [vmem:[%s835 + $0x24] sm:$0xf]
        %v846 = vld [vmem:[%s835 + $0x28] sm:$0xf]
        %v847 = vld [vmem:[%s835 + $0x2c] sm:$0xf]
        %v848 = vld [vmem:[%s835 + $0x30] sm:$0xf]
        %v849 = vld [vmem:[%s835 + $0x34] sm:$0xf]
        %v850 = vld [vmem:[%s835 + $0x38] sm:$0xf]
        %v851 = vld [vmem:[%s835 + $0x3c] sm:$0xf]
        %v852 = vld [vmem:[%s835 + $0x40] sm:$0xf]
        %v853 = vld [vmem:[%s835 + $0x44] sm:$0xf]
        %v854 = vld [vmem:[%s835 + $0x48] sm:$0xf]
        %v855 = vld [vmem:[%s835 + $0x4c] sm:$0xf]
        %v856 = vld [vmem:[%s835 + $0x50] sm:$0xf]
        %v857 = vld [vmem:[%s835 + $0x54] sm:$0xf]
        %v858 = vld [vmem:[%s835 + $0x58] sm:$0xf]
        %v859 = vld [vmem:[%s835 + $0x5c] sm:$0xf]
        %v860 = vcombine.low %v240, %v247
        %v861 = vcombine.low %v254, %v834
        %v863 = vunpack.c.l.s4 1983009808
        %v864 = vunpack.c.0.s8 %v863
        %v865 = vlaneseq
        %v866 = vshrl.u32 %v865, 7
        %v867 = vsub.s32 %v864, %v866
        %v868 = vrot.slane %v860, %v867
        %v870 = vunpack.c.l.s4 1983009808
        %v871 = vunpack.c.0.s8 %v870
        %v872 = vlaneseq
        %v873 = vshrl.u32 %v872, 7
        %v874 = vsub.s32 %v871, %v873
        %v875 = vrot.slane %v861, %v874
        %v876 = vcombine.low %v868, %v875
        %v877 = vcombine.high %v868, %v875
        %v903 = vunpack.c.l.b16 %v836
        %v904 = vunpack.c.l.b16 %v837
        %v905 = vunpack.c.l.b16 %v838
        %v906 = vunpack.c.l.b16 %v839
        %v907 = vunpack.c.l.b16 %v840
        %v908 = vunpack.c.l.b16 %v841
        %v909 = vunpack.c.l.b16 %v842
        %v910 = vunpack.c.l.b16 %v843
        %v911 = vunpack.c.l.b16 %v844
        %v912 = vunpack.c.l.b16 %v845
        %v913 = vunpack.c.l.b16 %v846
        %v914 = vunpack.c.l.b16 %v847
        %v915 = vunpack.c.l.b16 %v848
        %v916 = vunpack.c.l.b16 %v849
        %v917 = vunpack.c.l.b16 %v850
        %v918 = vunpack.c.l.b16 %v851
        %v919 = vunpack.c.l.b16 %v852
        %v920 = vunpack.c.l.b16 %v853
        %v921 = vunpack.c.l.b16 %v854
        %v922 = vunpack.c.l.b16 %v855
        %v923 = vunpack.c.l.b16 %v856
        %v924 = vunpack.c.l.b16 %v857
        %v925 = vunpack.c.l.b16 %v858
        %v926 = vunpack.c.l.b16 %v859
        %v927 = vpack.c.b16 %v904, %v903
        %v928 = vpack.c.b16 %v906, %v905
        %v929 = vpack.c.b16 %v908, %v907
        %v930 = vpack.c.b16 %v910, %v909
        %v931 = vpack.c.b16 %v912, %v911
        %v932 = vpack.c.b16 %v914, %v913
        %v933 = vpack.c.b16 %v916, %v915
        %v934 = vpack.c.b16 %v918, %v917
        %v935 = vpack.c.b16 %v920, %v919
        %v936 = vpack.c.b16 %v922, %v921
        %v937 = vpack.c.b16 %v924, %v923
        %v938 = vpack.c.b16 %v926, %v925
        %v952 = vsel %vm462, %v877, 0
        %954 = vmatprep.subr.bf16.mxu0 0
        %955 = vmatpush1.bf16.msra.mxu0 %v927
        %956 = vmatprep.subr.bf16.mxu0 0
        %957 = vmatpush1.bf16.msra.mxu0 %v928
        %958 = vmatprep.subr.bf16.mxu0 0
        %959 = vmatpush1.bf16.msra.mxu0 %v929
        %960 = vmatprep.subr.bf16.mxu0 0
        %961 = vmatpush1.bf16.msra.mxu0 %v930
        %962 = vmatprep.subr.bf16.mxu0 0
        %963 = vmatpush1.bf16.msra.mxu0 %v931
        %964 = vmatprep.subr.bf16.mxu0 0
        %965 = vmatpush1.bf16.msra.mxu0 %v932
        %966 = vmatprep.subr.bf16.mxu0 0
        %967 = vmatpush1.bf16.msra.mxu0 %v933
        %968 = vmatprep.subr.bf16.mxu0 0
        %969 = vmatpush1.bf16.msra.mxu0 %v934
        %970 = vmatprep.subr.bf16.mxu0 0
        %971 = vmatpush1.bf16.msra.mxu0 %v935
        %972 = vmatprep.subr.bf16.mxu0 0
        %973 = vmatpush1.bf16.msra.mxu0 %v936
        %974 = vmatprep.subr.bf16.mxu0 0
        %975 = vmatpush1.bf16.msra.mxu0 %v937
        %976 = vmatprep.subr.bf16.mxu0 0
        %977 = vmatpush1.bf16.msra.mxu0 %v938
        %978 = vmatprep.subr.bf16.mxu0 0
        %979 = vmatpush1.bf16.msra.mxu0 0
        %980 = vmatprep.subr.bf16.mxu0 0
        %981 = vmatpush1.bf16.msra.mxu0 0
        %982 = vmatprep.subr.bf16.mxu0 0
        %983 = vmatpush1.bf16.msra.mxu0 0
        %984 = vmatprep.subr.bf16.mxu0 0
        %985 = vmatpush1.bf16.msra.mxu0 0
        %986 = vmatprep.mubr.bf16.mxu0 %v952
        %987 = vmatmul.mubr.bf16.gmra.mrb[0].mxu0 %v876
        %v988 = vpop.f32.mrb[0].mxu0
        %v989 = vadd.f32 0.0, %v988
        %v990 = vpop.f32.mrb[0].mxu0
        %v991 = vpop.f32.mrb[0].mxu0
        %v992 = vadd.f32 0.0, %v991
        %v993 = vpop.f32.mrb[0].mxu0
        %994 = vdwg.mxu0
        %v995 = vadd.f32 %v825, %v989
        %v996 = vadd.f32 %v826, %v992
        %v997 = vcombine.high %v834, %v834
        %v999 = vshrl.u32 %v834, 16
        %v1001 = vrot.slane %v999, 6
        %v1002 = vshll.u32 %v834, 16
        %v1004 = vrot.slane %v1002, 7
        %v1005 = vor.u32 %v1001, %v1004
        %v1006 = vrot.slane %v1005, 2
        %v1008 = vshll.u32 %v997, 16
        %v1010 = vrot.slane %v1008, 7
        %v1011 = vsel %vm289, %v1006, %v1010
        %s1012 = scalar_lea.vmem [#allocation5], 384
        %v1013 = vld [vmem:[%s1012] sm:$0xf]
        %v1014 = vld [vmem:[%s1012 + $0x4] sm:$0xf]
        %v1015 = vld [vmem:[%s1012 + $0x8] sm:$0xf]
        %v1016 = vld [vmem:[%s1012 + $0xc] sm:$0xf]
        %v1017 = vld [vmem:[%s1012 + $0x10] sm:$0xf]
        %v1018 = vld [vmem:[%s1012 + $0x14] sm:$0xf]
        %v1019 = vld [vmem:[%s1012 + $0x18] sm:$0xf]
        %v1020 = vld [vmem:[%s1012 + $0x1c] sm:$0xf]
        %v1021 = vld [vmem:[%s1012 + $0x20] sm:$0xf]
        %v1022 = vld [vmem:[%s1012 + $0x24] sm:$0xf]
        %v1023 = vld [vmem:[%s1012 + $0x28] sm:$0xf]
        %v1024 = vld [vmem:[%s1012 + $0x2c] sm:$0xf]
        %v1025 = vld [vmem:[%s1012 + $0x30] sm:$0xf]
        %v1026 = vld [vmem:[%s1012 + $0x34] sm:$0xf]
        %v1027 = vld [vmem:[%s1012 + $0x38] sm:$0xf]
        %v1028 = vld [vmem:[%s1012 + $0x3c] sm:$0xf]
        %v1029 = vld [vmem:[%s1012 + $0x40] sm:$0xf]
        %v1030 = vld [vmem:[%s1012 + $0x44] sm:$0xf]
        %v1031 = vld [vmem:[%s1012 + $0x48] sm:$0xf]
        %v1032 = vld [vmem:[%s1012 + $0x4c] sm:$0xf]
        %v1033 = vld [vmem:[%s1012 + $0x50] sm:$0xf]
        %v1034 = vld [vmem:[%s1012 + $0x54] sm:$0xf]
        %v1035 = vld [vmem:[%s1012 + $0x58] sm:$0xf]
        %v1036 = vld [vmem:[%s1012 + $0x5c] sm:$0xf]
        %v1037 = vcombine.low %v317, %v331
        %v1038 = vcombine.low %v345, %v1011
        %v1040 = vunpack.c.l.s4 1983009808
        %v1041 = vunpack.c.0.s8 %v1040
        %v1042 = vlaneseq
        %v1043 = vshrl.u32 %v1042, 7
        %v1044 = vsub.s32 %v1041, %v1043
        %v1045 = vrot.slane %v1037, %v1044
        %v1047 = vunpack.c.l.s4 1983009808
        %v1048 = vunpack.c.0.s8 %v1047
        %v1049 = vlaneseq
        %v1050 = vshrl.u32 %v1049, 7
        %v1051 = vsub.s32 %v1048, %v1050
        %v1052 = vrot.slane %v1038, %v1051
        %v1053 = vcombine.low %v1045, %v1052
        %v1054 = vcombine.high %v1045, %v1052
        %v1080 = vunpack.c.l.b16 %v1013
        %v1081 = vunpack.c.l.b16 %v1014
        %v1082 = vunpack.c.l.b16 %v1015
        %v1083 = vunpack.c.l.b16 %v1016
        %v1084 = vunpack.c.l.b16 %v1017
        %v1085 = vunpack.c.l.b16 %v1018
        %v1086 = vunpack.c.l.b16 %v1019
        %v1087 = vunpack.c.l.b16 %v1020
        %v1088 = vunpack.c.l.b16 %v1021
        %v1089 = vunpack.c.l.b16 %v1022
        %v1090 = vunpack.c.l.b16 %v1023
        %v1091 = vunpack.c.l.b16 %v1024
        %v1092 = vunpack.c.l.b16 %v1025
        %v1093 = vunpack.c.l.b16 %v1026
        %v1094 = vunpack.c.l.b16 %v1027
        %v1095 = vunpack.c.l.b16 %v1028
        %v1096 = vunpack.c.l.b16 %v1029
        %v1097 = vunpack.c.l.b16 %v1030
        %v1098 = vunpack.c.l.b16 %v1031
        %v1099 = vunpack.c.l.b16 %v1032
        %v1100 = vunpack.c.l.b16 %v1033
        %v1101 = vunpack.c.l.b16 %v1034
        %v1102 = vunpack.c.l.b16 %v1035
        %v1103 = vunpack.c.l.b16 %v1036
        %v1104 = vpack.c.b16 %v1081, %v1080
        %v1105 = vpack.c.b16 %v1083, %v1082
        %v1106 = vpack.c.b16 %v1085, %v1084
        %v1107 = vpack.c.b16 %v1087, %v1086
        %v1108 = vpack.c.b16 %v1089, %v1088
        %v1109 = vpack.c.b16 %v1091, %v1090
        %v1110 = vpack.c.b16 %v1093, %v1092
        %v1111 = vpack.c.b16 %v1095, %v1094
        %v1112 = vpack.c.b16 %v1097, %v1096
        %v1113 = vpack.c.b16 %v1099, %v1098
        %v1114 = vpack.c.b16 %v1101, %v1100
        %v1115 = vpack.c.b16 %v1103, %v1102
        %v1129 = vsel %vm462, %v1054, 0
        %1131 = vmatprep.subr.bf16.mxu0 0
        %1132 = vmatpush1.bf16.msra.mxu0 %v1104
        %1133 = vmatprep.subr.bf16.mxu0 0
        %1134 = vmatpush1.bf16.msra.mxu0 %v1105
        %1135 = vmatprep.subr.bf16.mxu0 0
        %1136 = vmatpush1.bf16.msra.mxu0 %v1106
        %1137 = vmatprep.subr.bf16.mxu0 0
        %1138 = vmatpush1.bf16.msra.mxu0 %v1107
        %1139 = vmatprep.subr.bf16.mxu0 0
        %1140 = vmatpush1.bf16.msra.mxu0 %v1108
        %1141 = vmatprep.subr.bf16.mxu0 0
        %1142 = vmatpush1.bf16.msra.mxu0 %v1109
        %1143 = vmatprep.subr.bf16.mxu0 0
        %1144 = vmatpush1.bf16.msra.mxu0 %v1110
        %1145 = vmatprep.subr.bf16.mxu0 0
        %1146 = vmatpush1.bf16.msra.mxu0 %v1111
        %1147 = vmatprep.subr.bf16.mxu0 0
        %1148 = vmatpush1.bf16.msra.mxu0 %v1112
        %1149 = vmatprep.subr.bf16.mxu0 0
        %1150 = vmatpush1.bf16.msra.mxu0 %v1113
        %1151 = vmatprep.subr.bf16.mxu0 0
        %1152 = vmatpush1.bf16.msra.mxu0 %v1114
        %1153 = vmatprep.subr.bf16.mxu0 0
        %1154 = vmatpush1.bf16.msra.mxu0 %v1115
        %1155 = vmatprep.subr.bf16.mxu0 0
        %1156 = vmatpush1.bf16.msra.mxu0 0
        %1157 = vmatprep.subr.bf16.mxu0 0
        %1158 = vmatpush1.bf16.msra.mxu0 0
        %1159 = vmatprep.subr.bf16.mxu0 0
        %1160 = vmatpush1.bf16.msra.mxu0 0
        %1161 = vmatprep.subr.bf16.mxu0 0
        %1162 = vmatpush1.bf16.msra.mxu0 0
        %1163 = vmatprep.mubr.bf16.mxu0 %v1129
        %1164 = vmatmul.mubr.bf16.gmra.mrb[0].mxu0 %v1053
        %v1165 = vpop.f32.mrb[0].mxu0
        %v1166 = vadd.f32 0.0, %v1165
        %v1167 = vpop.f32.mrb[0].mxu0
        %v1168 = vpop.f32.mrb[0].mxu0
        %v1169 = vadd.f32 0.0, %v1168
        %v1170 = vpop.f32.mrb[0].mxu0
        %1171 = vdwg.mxu0
        %v1172 = vadd.f32 %v995, %v1166
        %v1173 = vadd.f32 %v996, %v1169
        %v1174 = vrot.slane %v834, 7
        %v1175 = vrot.slane %v1174, 2
        %v1176 = vrot.slane %v997, 7
        %v1177 = vsel %vm648, %v1175, %v1176
        %s1178 = scalar_lea.vmem [#allocation5], 480
        %v1179 = vld [vmem:[%s1178] sm:$0xf]
        %v1180 = vld [vmem:[%s1178 + $0x4] sm:$0xf]
        %v1181 = vld [vmem:[%s1178 + $0x8] sm:$0xf]
        %v1182 = vld [vmem:[%s1178 + $0xc] sm:$0xf]
        %v1183 = vld [vmem:[%s1178 + $0x10] sm:$0xf]
        %v1184 = vld [vmem:[%s1178 + $0x14] sm:$0xf]
        %v1185 = vld [vmem:[%s1178 + $0x18] sm:$0xf]
        %v1186 = vld [vmem:[%s1178 + $0x1c] sm:$0xf]
        %v1187 = vld [vmem:[%s1178 + $0x20] sm:$0xf]
        %v1188 = vld [vmem:[%s1178 + $0x24] sm:$0xf]
        %v1189 = vld [vmem:[%s1178 + $0x28] sm:$0xf]
        %v1190 = vld [vmem:[%s1178 + $0x2c] sm:$0xf]
        %v1191 = vld [vmem:[%s1178 + $0x30] sm:$0xf]
        %v1192 = vld [vmem:[%s1178 + $0x34] sm:$0xf]
        %v1193 = vld [vmem:[%s1178 + $0x38] sm:$0xf]
        %v1194 = vld [vmem:[%s1178 + $0x3c] sm:$0xf]
        %v1195 = vld [vmem:[%s1178 + $0x40] sm:$0xf]
        %v1196 = vld [vmem:[%s1178 + $0x44] sm:$0xf]
        %v1197 = vld [vmem:[%s1178 + $0x48] sm:$0xf]
        %v1198 = vld [vmem:[%s1178 + $0x4c] sm:$0xf]
        %v1199 = vld [vmem:[%s1178 + $0x50] sm:$0xf]
        %v1200 = vld [vmem:[%s1178 + $0x54] sm:$0xf]
        %v1201 = vld [vmem:[%s1178 + $0x58] sm:$0xf]
        %v1202 = vld [vmem:[%s1178 + $0x5c] sm:$0xf]
        %v1203 = vcombine.low %v656, %v660
        %v1204 = vcombine.low %v664, %v1177
        %v1206 = vunpack.c.l.s4 1983009808
        %v1207 = vunpack.c.0.s8 %v1206
        %v1208 = vlaneseq
        %v1209 = vshrl.u32 %v1208, 7
        %v1210 = vsub.s32 %v1207, %v1209
        %v1211 = vrot.slane %v1203, %v1210
        %v1213 = vunpack.c.l.s4 1983009808
        %v1214 = vunpack.c.0.s8 %v1213
        %v1215 = vlaneseq
        %v1216 = vshrl.u32 %v1215, 7
        %v1217 = vsub.s32 %v1214, %v1216
        %v1218 = vrot.slane %v1204, %v1217
        %v1219 = vcombine.low %v1211, %v1218
        %v1220 = vcombine.high %v1211, %v1218
        %v1246 = vunpack.c.l.b16 %v1179
        %v1247 = vunpack.c.l.b16 %v1180
        %v1248 = vunpack.c.l.b16 %v1181
        %v1249 = vunpack.c.l.b16 %v1182
        %v1250 = vunpack.c.l.b16 %v1183
        %v1251 = vunpack.c.l.b16 %v1184
        %v1252 = vunpack.c.l.b16 %v1185
        %v1253 = vunpack.c.l.b16 %v1186
        %v1254 = vunpack.c.l.b16 %v1187
        %v1255 = vunpack.c.l.b16 %v1188
        %v1256 = vunpack.c.l.b16 %v1189
        %v1257 = vunpack.c.l.b16 %v1190
        %v1258 = vunpack.c.l.b16 %v1191
        %v1259 = vunpack.c.l.b16 %v1192
        %v1260 = vunpack.c.l.b16 %v1193
        %v1261 = vunpack.c.l.b16 %v1194
        %v1262 = vunpack.c.l.b16 %v1195
        %v1263 = vunpack.c.l.b16 %v1196
        %v1264 = vunpack.c.l.b16 %v1197
        %v1265 = vunpack.c.l.b16 %v1198
        %v1266 = vunpack.c.l.b16 %v1199
        %v1267 = vunpack.c.l.b16 %v1200
        %v1268 = vunpack.c.l.b16 %v1201
        %v1269 = vunpack.c.l.b16 %v1202
        %v1270 = vpack.c.b16 %v1247, %v1246
        %v1271 = vpack.c.b16 %v1249, %v1248
        %v1272 = vpack.c.b16 %v1251, %v1250
        %v1273 = vpack.c.b16 %v1253, %v1252
        %v1274 = vpack.c.b16 %v1255, %v1254
        %v1275 = vpack.c.b16 %v1257, %v1256
        %v1276 = vpack.c.b16 %v1259, %v1258
        %v1277 = vpack.c.b16 %v1261, %v1260
        %v1278 = vpack.c.b16 %v1263, %v1262
        %v1279 = vpack.c.b16 %v1265, %v1264
        %v1280 = vpack.c.b16 %v1267, %v1266
        %v1281 = vpack.c.b16 %v1269, %v1268
        %v1295 = vsel %vm462, %v1220, 0
        %1297 = vmatprep.subr.bf16.mxu0 0
        %1298 = vmatpush1.bf16.msra.mxu0 %v1270
        %1299 = vmatprep.subr.bf16.mxu0 0
        %1300 = vmatpush1.bf16.msra.mxu0 %v1271
        %1301 = vmatprep.subr.bf16.mxu0 0
        %1302 = vmatpush1.bf16.msra.mxu0 %v1272
        %1303 = vmatprep.subr.bf16.mxu0 0
        %1304 = vmatpush1.bf16.msra.mxu0 %v1273
        %1305 = vmatprep.subr.bf16.mxu0 0
        %1306 = vmatpush1.bf16.msra.mxu0 %v1274
        %1307 = vmatprep.subr.bf16.mxu0 0
        %1308 = vmatpush1.bf16.msra.mxu0 %v1275
        %1309 = vmatprep.subr.bf16.mxu0 0
        %1310 = vmatpush1.bf16.msra.mxu0 %v1276
        %1311 = vmatprep.subr.bf16.mxu0 0
        %1312 = vmatpush1.bf16.msra.mxu0 %v1277
        %1313 = vmatprep.subr.bf16.mxu0 0
        %1314 = vmatpush1.bf16.msra.mxu0 %v1278
        %1315 = vmatprep.subr.bf16.mxu0 0
        %1316 = vmatpush1.bf16.msra.mxu0 %v1279
        %1317 = vmatprep.subr.bf16.mxu0 0
        %1318 = vmatpush1.bf16.msra.mxu0 %v1280
        %1319 = vmatprep.subr.bf16.mxu0 0
        %1320 = vmatpush1.bf16.msra.mxu0 %v1281
        %1321 = vmatprep.subr.bf16.mxu0 0
        %1322 = vmatpush1.bf16.msra.mxu0 0
        %1323 = vmatprep.subr.bf16.mxu0 0
        %1324 = vmatpush1.bf16.msra.mxu0 0
        %1325 = vmatprep.subr.bf16.mxu0 0
        %1326 = vmatpush1.bf16.msra.mxu0 0
        %1327 = vmatprep.subr.bf16.mxu0 0
        %1328 = vmatpush1.bf16.msra.mxu0 0
        %1329 = vmatprep.mubr.bf16.mxu0 %v1295
        %1330 = vmatmul.mubr.bf16.gmra.mrb[0].mxu0 %v1219
        %v1331 = vpop.f32.mrb[0].mxu0
        %v1332 = vadd.f32 0.0, %v1331
        %v1333 = vpop.f32.mrb[0].mxu0
        %v1334 = vpop.f32.mrb[0].mxu0
        %v1335 = vadd.f32 0.0, %v1334
        %v1336 = vpop.f32.mrb[0].mxu0
        %1337 = vdwg.mxu0
        %v1338 = vadd.f32 %v1172, %v1332
        %v1339 = vadd.f32 %v1173, %v1335
        %v1342 = vunpack.c.l.s4 1983009808
        %v1343 = vunpack.c.0.s8 %v1342
        %v1344 = vlaneseq
        %v1345 = vshrl.u32 %v1344, 7
        %v1346 = vsub.s32 %v1343, %v1345
        %v1347 = vrot.slane %v222, %v1346
        %s1348 = scalar_lea.vmem [#allocation5], 576
        %v1349 = vld [vmem:[%s1348] sm:$0xf]
        %v1350 = vld [vmem:[%s1348 + $0x4] sm:$0xf]
        %v1351 = vld [vmem:[%s1348 + $0x8] sm:$0xf]
        %v1352 = vld [vmem:[%s1348 + $0xc] sm:$0xf]
        %v1353 = vld [vmem:[%s1348 + $0x10] sm:$0xf]
        %v1354 = vld [vmem:[%s1348 + $0x14] sm:$0xf]
        %v1355 = vld [vmem:[%s1348 + $0x18] sm:$0xf]
        %v1356 = vld [vmem:[%s1348 + $0x1c] sm:$0xf]
        %v1357 = vld [vmem:[%s1348 + $0x20] sm:$0xf]
        %v1358 = vld [vmem:[%s1348 + $0x24] sm:$0xf]
        %v1359 = vld [vmem:[%s1348 + $0x28] sm:$0xf]
        %v1360 = vld [vmem:[%s1348 + $0x2c] sm:$0xf]
        %v1361 = vld [vmem:[%s1348 + $0x30] sm:$0xf]
        %v1362 = vld [vmem:[%s1348 + $0x34] sm:$0xf]
        %v1363 = vld [vmem:[%s1348 + $0x38] sm:$0xf]
        %v1364 = vld [vmem:[%s1348 + $0x3c] sm:$0xf]
        %v1365 = vld [vmem:[%s1348 + $0x40] sm:$0xf]
        %v1366 = vld [vmem:[%s1348 + $0x44] sm:$0xf]
        %v1367 = vld [vmem:[%s1348 + $0x48] sm:$0xf]
        %v1368 = vld [vmem:[%s1348 + $0x4c] sm:$0xf]
        %v1369 = vld [vmem:[%s1348 + $0x50] sm:$0xf]
        %v1370 = vld [vmem:[%s1348 + $0x54] sm:$0xf]
        %v1371 = vld [vmem:[%s1348 + $0x58] sm:$0xf]
        %v1372 = vld [vmem:[%s1348 + $0x5c] sm:$0xf]
        %v1373 = vcombine.low %v834, %v1347
        %v1375 = vunpack.c.l.s4 1983009808
        %v1376 = vunpack.c.0.s8 %v1375
        %v1377 = vlaneseq
        %v1378 = vshrl.u32 %v1377, 7
        %v1379 = vsub.s32 %v1376, %v1378
        %v1380 = vrot.slane %v1373, %v1379
        %v1381 = vcombine.low %v522, %v1380
        %v1382 = vcombine.high %v522, %v1380
        %v1408 = vunpack.c.l.b16 %v1349
        %v1409 = vunpack.c.l.b16 %v1350
        %v1410 = vunpack.c.l.b16 %v1351
        %v1411 = vunpack.c.l.b16 %v1352
        %v1412 = vunpack.c.l.b16 %v1353
        %v1413 = vunpack.c.l.b16 %v1354
        %v1414 = vunpack.c.l.b16 %v1355
        %v1415 = vunpack.c.l.b16 %v1356
        %v1416 = vunpack.c.l.b16 %v1357
        %v1417 = vunpack.c.l.b16 %v1358
        %v1418 = vunpack.c.l.b16 %v1359
        %v1419 = vunpack.c.l.b16 %v1360
        %v1420 = vunpack.c.l.b16 %v1361
        %v1421 = vunpack.c.l.b16 %v1362
        %v1422 = vunpack.c.l.b16 %v1363
        %v1423 = vunpack.c.l.b16 %v1364
        %v1424 = vunpack.c.l.b16 %v1365
        %v1425 = vunpack.c.l.b16 %v1366
        %v1426 = vunpack.c.l.b16 %v1367
        %v1427 = vunpack.c.l.b16 %v1368
        %v1428 = vunpack.c.l.b16 %v1369
        %v1429 = vunpack.c.l.b16 %v1370
        %v1430 = vunpack.c.l.b16 %v1371
        %v1431 = vunpack.c.l.b16 %v1372
        %v1432 = vpack.c.b16 %v1409, %v1408
        %v1433 = vpack.c.b16 %v1411, %v1410
        %v1434 = vpack.c.b16 %v1413, %v1412
        %v1435 = vpack.c.b16 %v1415, %v1414
        %v1436 = vpack.c.b16 %v1417, %v1416
        %v1437 = vpack.c.b16 %v1419, %v1418
        %v1438 = vpack.c.b16 %v1421, %v1420
        %v1439 = vpack.c.b16 %v1423, %v1422
        %v1440 = vpack.c.b16 %v1425, %v1424
        %v1441 = vpack.c.b16 %v1427, %v1426
        %v1442 = vpack.c.b16 %v1429, %v1428
        %v1443 = vpack.c.b16 %v1431, %v1430
        %v1457 = vsel %vm462, %v1382, 0
        %1459 = vmatprep.subr.bf16.mxu0 0
        %1460 = vmatpush1.bf16.msra.mxu0 %v1432
        %1461 = vmatprep.subr.bf16.mxu0 0
        %1462 = vmatpush1.bf16.msra.mxu0 %v1433
        %1463 = vmatprep.subr.bf16.mxu0 0
        %1464 = vmatpush1.bf16.msra.mxu0 %v1434
        %1465 = vmatprep.subr.bf16.mxu0 0
        %1466 = vmatpush1.bf16.msra.mxu0 %v1435
        %1467 = vmatprep.subr.bf16.mxu0 0
        %1468 = vmatpush1.bf16.msra.mxu0 %v1436
        %1469 = vmatprep.subr.bf16.mxu0 0
        %1470 = vmatpush1.bf16.msra.mxu0 %v1437
        %1471 = vmatprep.subr.bf16.mxu0 0
        %1472 = vmatpush1.bf16.msra.mxu0 %v1438
        %1473 = vmatprep.subr.bf16.mxu0 0
        %1474 = vmatpush1.bf16.msra.mxu0 %v1439
        %1475 = vmatprep.subr.bf16.mxu0 0
        %1476 = vmatpush1.bf16.msra.mxu0 %v1440
        %1477 = vmatprep.subr.bf16.mxu0 0
        %1478 = vmatpush1.bf16.msra.mxu0 %v1441
        %1479 = vmatprep.subr.bf16.mxu0 0
        %1480 = vmatpush1.bf16.msra.mxu0 %v1442
        %1481 = vmatprep.subr.bf16.mxu0 0
        %1482 = vmatpush1.bf16.msra.mxu0 %v1443
        %1483 = vmatprep.subr.bf16.mxu0 0
        %1484 = vmatpush1.bf16.msra.mxu0 0
        %1485 = vmatprep.subr.bf16.mxu0 0
        %1486 = vmatpush1.bf16.msra.mxu0 0
        %1487 = vmatprep.subr.bf16.mxu0 0
        %1488 = vmatpush1.bf16.msra.mxu0 0
        %1489 = vmatprep.subr.bf16.mxu0 0
        %1490 = vmatpush1.bf16.msra.mxu0 0
        %1491 = vmatprep.mubr.bf16.mxu0 %v1457
        %1492 = vmatmul.mubr.bf16.gmra.mrb[0].mxu0 %v1381
        %v1493 = vpop.f32.mrb[0].mxu0
        %v1494 = vadd.f32 0.0, %v1493
        %v1495 = vpop.f32.mrb[0].mxu0
        %v1496 = vpop.f32.mrb[0].mxu0
        %v1497 = vadd.f32 0.0, %v1496
        %v1498 = vpop.f32.mrb[0].mxu0
        %1499 = vdwg.mxu0
        %v1500 = vadd.f32 %v1338, %v1494
        %v1501 = vadd.f32 %v1339, %v1497
        %v1502 = vcombine.high %v1347, %v1347
        %v1504 = vshrl.u32 %v1347, 16
        %v1506 = vrot.slane %v1504, 6
        %v1507 = vshll.u32 %v1347, 16
        %v1509 = vrot.slane %v1507, 7
        %v1510 = vor.u32 %v1506, %v1509
        %v1511 = vrot.slane %v1510, 2
        %v1513 = vshll.u32 %v1502, 16
        %v1515 = vrot.slane %v1513, 7
        %v1516 = vsel %vm289, %v1511, %v1515
        %s1517 = scalar_lea.vmem [#allocation5], 672
        %v1518 = vld [vmem:[%s1517] sm:$0xf]
        %v1519 = vld [vmem:[%s1517 + $0x4] sm:$0xf]
        %v1520 = vld [vmem:[%s1517 + $0x8] sm:$0xf]
        %v1521 = vld [vmem:[%s1517 + $0xc] sm:$0xf]
        %v1522 = vld [vmem:[%s1517 + $0x10] sm:$0xf]
        %v1523 = vld [vmem:[%s1517 + $0x14] sm:$0xf]
        %v1524 = vld [vmem:[%s1517 + $0x18] sm:$0xf]
        %v1525 = vld [vmem:[%s1517 + $0x1c] sm:$0xf]
        %v1526 = vld [vmem:[%s1517 + $0x20] sm:$0xf]
        %v1527 = vld [vmem:[%s1517 + $0x24] sm:$0xf]
        %v1528 = vld [vmem:[%s1517 + $0x28] sm:$0xf]
        %v1529 = vld [vmem:[%s1517 + $0x2c] sm:$0xf]
        %v1530 = vld [vmem:[%s1517 + $0x30] sm:$0xf]
        %v1531 = vld [vmem:[%s1517 + $0x34] sm:$0xf]
        %v1532 = vld [vmem:[%s1517 + $0x38] sm:$0xf]
        %v1533 = vld [vmem:[%s1517 + $0x3c] sm:$0xf]
        %v1534 = vld [vmem:[%s1517 + $0x40] sm:$0xf]
        %v1535 = vld [vmem:[%s1517 + $0x44] sm:$0xf]
        %v1536 = vld [vmem:[%s1517 + $0x48] sm:$0xf]
        %v1537 = vld [vmem:[%s1517 + $0x4c] sm:$0xf]
        %v1538 = vld [vmem:[%s1517 + $0x50] sm:$0xf]
        %v1539 = vld [vmem:[%s1517 + $0x54] sm:$0xf]
        %v1540 = vld [vmem:[%s1517 + $0x58] sm:$0xf]
        %v1541 = vld [vmem:[%s1517 + $0x5c] sm:$0xf]
        %v1542 = vcombine.low %v1011, %v1516
        %v1544 = vunpack.c.l.s4 1983009808
        %v1545 = vunpack.c.0.s8 %v1544
        %v1546 = vlaneseq
        %v1547 = vshrl.u32 %v1546, 7
        %v1548 = vsub.s32 %v1545, %v1547
        %v1549 = vrot.slane %v1542, %v1548
        %v1550 = vcombine.low %v386, %v1549
        %v1551 = vcombine.high %v386, %v1549
        %v1577 = vunpack.c.l.b16 %v1518
        %v1578 = vunpack.c.l.b16 %v1519
        %v1579 = vunpack.c.l.b16 %v1520
        %v1580 = vunpack.c.l.b16 %v1521
        %v1581 = vunpack.c.l.b16 %v1522
        %v1582 = vunpack.c.l.b16 %v1523
        %v1583 = vunpack.c.l.b16 %v1524
        %v1584 = vunpack.c.l.b16 %v1525
        %v1585 = vunpack.c.l.b16 %v1526
        %v1586 = vunpack.c.l.b16 %v1527
        %v1587 = vunpack.c.l.b16 %v1528
        %v1588 = vunpack.c.l.b16 %v1529
        %v1589 = vunpack.c.l.b16 %v1530
        %v1590 = vunpack.c.l.b16 %v1531
        %v1591 = vunpack.c.l.b16 %v1532
        %v1592 = vunpack.c.l.b16 %v1533
        %v1593 = vunpack.c.l.b16 %v1534
        %v1594 = vunpack.c.l.b16 %v1535
        %v1595 = vunpack.c.l.b16 %v1536
        %v1596 = vunpack.c.l.b16 %v1537
        %v1597 = vunpack.c.l.b16 %v1538
        %v1598 = vunpack.c.l.b16 %v1539
        %v1599 = vunpack.c.l.b16 %v1540
        %v1600 = vunpack.c.l.b16 %v1541
        %v1601 = vpack.c.b16 %v1578, %v1577
        %v1602 = vpack.c.b16 %v1580, %v1579
        %v1603 = vpack.c.b16 %v1582, %v1581
        %v1604 = vpack.c.b16 %v1584, %v1583
        %v1605 = vpack.c.b16 %v1586, %v1585
        %v1606 = vpack.c.b16 %v1588, %v1587
        %v1607 = vpack.c.b16 %v1590, %v1589
        %v1608 = vpack.c.b16 %v1592, %v1591
        %v1609 = vpack.c.b16 %v1594, %v1593
        %v1610 = vpack.c.b16 %v1596, %v1595
        %v1611 = vpack.c.b16 %v1598, %v1597
        %v1612 = vpack.c.b16 %v1600, %v1599
        %v1626 = vsel %vm462, %v1551, 0
        %1628 = vmatprep.subr.bf16.mxu0 0
        %1629 = vmatpush1.bf16.msra.mxu0 %v1601
        %1630 = vmatprep.subr.bf16.mxu0 0
        %1631 = vmatpush1.bf16.msra.mxu0 %v1602
        %1632 = vmatprep.subr.bf16.mxu0 0
        %1633 = vmatpush1.bf16.msra.mxu0 %v1603
        %1634 = vmatprep.subr.bf16.mxu0 0
        %1635 = vmatpush1.bf16.msra.mxu0 %v1604
        %1636 = vmatprep.subr.bf16.mxu0 0
        %1637 = vmatpush1.bf16.msra.mxu0 %v1605
        %1638 = vmatprep.subr.bf16.mxu0 0
        %1639 = vmatpush1.bf16.msra.mxu0 %v1606
        %1640 = vmatprep.subr.bf16.mxu0 0
        %1641 = vmatpush1.bf16.msra.mxu0 %v1607
        %1642 = vmatprep.subr.bf16.mxu0 0
        %1643 = vmatpush1.bf16.msra.mxu0 %v1608
        %1644 = vmatprep.subr.bf16.mxu0 0
        %1645 = vmatpush1.bf16.msra.mxu0 %v1609
        %1646 = vmatprep.subr.bf16.mxu0 0
        %1647 = vmatpush1.bf16.msra.mxu0 %v1610
        %1648 = vmatprep.subr.bf16.mxu0 0
        %1649 = vmatpush1.bf16.msra.mxu0 %v1611
        %1650 = vmatprep.subr.bf16.mxu0 0
        %1651 = vmatpush1.bf16.msra.mxu0 %v1612
        %1652 = vmatprep.subr.bf16.mxu0 0
        %1653 = vmatpush1.bf16.msra.mxu0 0
        %1654 = vmatprep.subr.bf16.mxu0 0
        %1655 = vmatpush1.bf16.msra.mxu0 0
        %1656 = vmatprep.subr.bf16.mxu0 0
        %1657 = vmatpush1.bf16.msra.mxu0 0
        %1658 = vmatprep.subr.bf16.mxu0 0
        %1659 = vmatpush1.bf16.msra.mxu0 0
        %1660 = vmatprep.mubr.bf16.mxu0 %v1626
        %1661 = vmatmul.mubr.bf16.gmra.mrb[0].mxu0 %v1550
        %v1662 = vpop.f32.mrb[0].mxu0
        %v1663 = vadd.f32 0.0, %v1662
        %v1664 = vpop.f32.mrb[0].mxu0
        %v1665 = vpop.f32.mrb[0].mxu0
        %v1666 = vadd.f32 0.0, %v1665
        %v1667 = vpop.f32.mrb[0].mxu0
        %1668 = vdwg.mxu0
        %v1669 = vadd.f32 %v1500, %v1663
        %v1670 = vadd.f32 %v1501, %v1666
        %v1671 = vrot.slane %v1347, 7
        %v1672 = vrot.slane %v1671, 2
        %v1673 = vrot.slane %v1502, 7
        %v1674 = vsel %vm648, %v1672, %v1673
        %s1675 = scalar_lea.vmem [#allocation5], 768
        %v1676 = vld [vmem:[%s1675] sm:$0xf]
        %v1677 = vld [vmem:[%s1675 + $0x4] sm:$0xf]
        %v1678 = vld [vmem:[%s1675 + $0x8] sm:$0xf]
        %v1679 = vld [vmem:[%s1675 + $0xc] sm:$0xf]
        %v1680 = vld [vmem:[%s1675 + $0x10] sm:$0xf]
        %v1681 = vld [vmem:[%s1675 + $0x14] sm:$0xf]
        %v1682 = vld [vmem:[%s1675 + $0x18] sm:$0xf]
        %v1683 = vld [vmem:[%s1675 + $0x1c] sm:$0xf]
        %v1684 = vld [vmem:[%s1675 + $0x20] sm:$0xf]
        %v1685 = vld [vmem:[%s1675 + $0x24] sm:$0xf]
        %v1686 = vld [vmem:[%s1675 + $0x28] sm:$0xf]
        %v1687 = vld [vmem:[%s1675 + $0x2c] sm:$0xf]
        %v1688 = vld [vmem:[%s1675 + $0x30] sm:$0xf]
        %v1689 = vld [vmem:[%s1675 + $0x34] sm:$0xf]
        %v1690 = vld [vmem:[%s1675 + $0x38] sm:$0xf]
        %v1691 = vld [vmem:[%s1675 + $0x3c] sm:$0xf]
        %v1692 = vld [vmem:[%s1675 + $0x40] sm:$0xf]
        %v1693 = vld [vmem:[%s1675 + $0x44] sm:$0xf]
        %v1694 = vld [vmem:[%s1675 + $0x48] sm:$0xf]
        %v1695 = vld [vmem:[%s1675 + $0x4c] sm:$0xf]
        %v1696 = vld [vmem:[%s1675 + $0x50] sm:$0xf]
        %v1697 = vld [vmem:[%s1675 + $0x54] sm:$0xf]
        %v1698 = vld [vmem:[%s1675 + $0x58] sm:$0xf]
        %v1699 = vld [vmem:[%s1675 + $0x5c] sm:$0xf]
        %v1700 = vcombine.low %v1177, %v1674
        %v1702 = vunpack.c.l.s4 1983009808
        %v1703 = vunpack.c.0.s8 %v1702
        %v1704 = vlaneseq
        %v1705 = vshrl.u32 %v1704, 7
        %v1706 = vsub.s32 %v1703, %v1705
        %v1707 = vrot.slane %v1700, %v1706
        %v1708 = vcombine.low %v705, %v1707
        %v1709 = vcombine.high %v705, %v1707
        %v1735 = vunpack.c.l.b16 %v1676
        %v1736 = vunpack.c.l.b16 %v1677
        %v1737 = vunpack.c.l.b16 %v1678
        %v1738 = vunpack.c.l.b16 %v1679
        %v1739 = vunpack.c.l.b16 %v1680
        %v1740 = vunpack.c.l.b16 %v1681
        %v1741 = vunpack.c.l.b16 %v1682
        %v1742 = vunpack.c.l.b16 %v1683
        %v1743 = vunpack.c.l.b16 %v1684
        %v1744 = vunpack.c.l.b16 %v1685
        %v1745 = vunpack.c.l.b16 %v1686
        %v1746 = vunpack.c.l.b16 %v1687
        %v1747 = vunpack.c.l.b16 %v1688
        %v1748 = vunpack.c.l.b16 %v1689
        %v1749 = vunpack.c.l.b16 %v1690
        %v1750 = vunpack.c.l.b16 %v1691
        %v1751 = vunpack.c.l.b16 %v1692
        %v1752 = vunpack.c.l.b16 %v1693
        %v1753 = vunpack.c.l.b16 %v1694
        %v1754 = vunpack.c.l.b16 %v1695
        %v1755 = vunpack.c.l.b16 %v1696
        %v1756 = vunpack.c.l.b16 %v1697
        %v1757 = vunpack.c.l.b16 %v1698
        %v1758 = vunpack.c.l.b16 %v1699
        %v1759 = vpack.c.b16 %v1736, %v1735
        %v1760 = vpack.c.b16 %v1738, %v1737
        %v1761 = vpack.c.b16 %v1740, %v1739
        %v1762 = vpack.c.b16 %v1742, %v1741
        %v1763 = vpack.c.b16 %v1744, %v1743
        %v1764 = vpack.c.b16 %v1746, %v1745
        %v1765 = vpack.c.b16 %v1748, %v1747
        %v1766 = vpack.c.b16 %v1750, %v1749
        %v1767 = vpack.c.b16 %v1752, %v1751
        %v1768 = vpack.c.b16 %v1754, %v1753
        %v1769 = vpack.c.b16 %v1756, %v1755
        %v1770 = vpack.c.b16 %v1758, %v1757
        %v1784 = vsel %vm462, %v1709, 0
        %1786 = vmatprep.subr.bf16.mxu0 0
        %1787 = vmatpush1.bf16.msra.mxu0 %v1759
        %1788 = vmatprep.subr.bf16.mxu0 0
        %1789 = vmatpush1.bf16.msra.mxu0 %v1760
        %1790 = vmatprep.subr.bf16.mxu0 0
        %1791 = vmatpush1.bf16.msra.mxu0 %v1761
        %1792 = vmatprep.subr.bf16.mxu0 0
        %1793 = vmatpush1.bf16.msra.mxu0 %v1762
        %1794 = vmatprep.subr.bf16.mxu0 0
        %1795 = vmatpush1.bf16.msra.mxu0 %v1763
        %1796 = vmatprep.subr.bf16.mxu0 0
        %1797 = vmatpush1.bf16.msra.mxu0 %v1764
        %1798 = vmatprep.subr.bf16.mxu0 0
        %1799 = vmatpush1.bf16.msra.mxu0 %v1765
        %1800 = vmatprep.subr.bf16.mxu0 0
        %1801 = vmatpush1.bf16.msra.mxu0 %v1766
        %1802 = vmatprep.subr.bf16.mxu0 0
        %1803 = vmatpush1.bf16.msra.mxu0 %v1767
        %1804 = vmatprep.subr.bf16.mxu0 0
        %1805 = vmatpush1.bf16.msra.mxu0 %v1768
        %1806 = vmatprep.subr.bf16.mxu0 0
        %1807 = vmatpush1.bf16.msra.mxu0 %v1769
        %1808 = vmatprep.subr.bf16.mxu0 0
        %1809 = vmatpush1.bf16.msra.mxu0 %v1770
        %1810 = vmatprep.subr.bf16.mxu0 0
        %1811 = vmatpush1.bf16.msra.mxu0 0
        %1812 = vmatprep.subr.bf16.mxu0 0
        %1813 = vmatpush1.bf16.msra.mxu0 0
        %1814 = vmatprep.subr.bf16.mxu0 0
        %1815 = vmatpush1.bf16.msra.mxu0 0
        %1816 = vmatprep.subr.bf16.mxu0 0
        %1817 = vmatpush1.bf16.msra.mxu0 0
        %1818 = vmatprep.mubr.bf16.mxu0 %v1784
        %1819 = vmatmul.mubr.bf16.gmra.mrb[0].mxu0 %v1708
        %v1820 = vpop.f32.mrb[0].mxu0
        %v1821 = vadd.f32 0.0, %v1820
        %v1822 = vpop.f32.mrb[0].mxu0
        %v1823 = vpop.f32.mrb[0].mxu0
        %v1824 = vadd.f32 0.0, %v1823
        %v1825 = vpop.f32.mrb[0].mxu0
        %1826 = vdwg.mxu0
        %v1827 = vadd.f32 %v1669, %v1821
        %v1828 = vadd.f32 %v1670, %v1824
        %v1829 = vld [vmem:[#allocation7] sm:$0x1]
        %v1831 = vlaneseq
        %v1832 = vshrl.u32 %v1831, 7
        %v1833 = vsub.s32 0, %v1832
        %v1834 = vrot.slane %v1829, %v1833
        %v1836 = vadd.f32 %v1827, %v1834
        %v1837 = vadd.f32 %v1828, %v1834
        %v1840 = vcombine.high %v1836, %v1836
        %v1841 = vcombine.high %v1837, %v1837
        %1844 = vst [vmem:[%s215] sm:$0xf] %v1836
        %1845 = vst [vmem:[%s215 + $0x4] sm:$0xf] %v1840
        %1846 = vst [vmem:[%s215 + $0x8] sm:$0xf] %v1837
        %1847 = vst [vmem:[%s215 + $0xc] sm:$0xf] %v1841
        %s1848 = sand.u32 %s97, 1
        %s1849 = scalar_lea.sflag [#allocation4], %s1848
        %s1850 = sand.u32 %s97, 1
        %s1851 = smul.addr %s1850, 16
        %s1852 = scalar_lea.vmem [#allocation8], %s1851
        // Predicated region
        $region45: #{feature_extractor_forward.12} parent=31 // pred_check
          %p1853 = pneg %p107
        $region46: #{feature_extractor_forward.12} parent=31 // pred_check_branch
          %1855 = sbr.rel (%p1853) target = $region48
        $region47: #{feature_extractor_forward.12} parent=31 // pred_region
          %s1857 = ssub.s32 256, 256
          %1858 = vsyncadd %s1849, %s1857
          %s1859 = smul.addr %s21, 4
          %s1860 = smul.addr %s1859, 64
          %s1861 = scalar_lea.hbm %s3, %s1860
          %s1862 = sshll.u32 %s1852, 4
          %s1863 = int_to_ptr.vmem [resolvable:$true] %s1862
          %1868 = dma.vmem_to_hbm [thread:$0]  %s1863, 256, %s1861, %s1849, 64, 64, 4
        $region48: #{feature_extractor_forward.12} parent=31 // pred_fallthru
          _
      $region32: #{feature_extractor_forward.12} parent=5 // pred_fallthru
        _
      %p1869 = scmp.le.s32.totalorder 2, %s16
      // Predicated region
      $region49: #{feature_extractor_forward.12} parent=5 // pred_check
        %p1870 = pneg %p1869
      $region50: #{feature_extractor_forward.12} parent=5 // pred_check_branch
        %1872 = sbr.rel (%p1870) target = $region52
      $region51: #{feature_extractor_forward.12} parent=5 // pred_region
        %s1873 = ssub.s32 %s16, 2
        // Predicated region
        $region53: #{feature_extractor_forward.12} parent=51 // pred_check
          %p1874 = pneg %p113
        $region54: #{feature_extractor_forward.12} parent=51 // pred_check_branch
          %1876 = sbr.rel (%p1874) target = $region56
        $region55: #{feature_extractor_forward.12} parent=51 // pred_region
          %s1877 = sand.u32 %s98, 1
          %s1878 = scalar_lea.sflag [#allocation4], %s1877
          %s1879 = sand.u32 %s98, 1
          %s1880 = smul.addr %s1879, 16
          %s1881 = scalar_lea.vmem [#allocation8], %s1880
          %1882 = dma.done %s1878, 256
        $region56: #{feature_extractor_forward.12} parent=51 // pred_fallthru
          _
      $region52: #{feature_extractor_forward.12} parent=5 // pred_fallthru
        _
    $region6: #{feature_extractor_forward.12} parent=1 // loop_footer
      %s20 = sadd.s32 1, %s16
    $region7: #{feature_extractor_forward.12} parent=1 // loop_footer_branch
      %15 = sbr.rel target = $region3
    $region8: #{feature_extractor_forward.12} parent=1 // loop_exit
      _
    %1883 = vsyncpa [#allocation3], 1
    %s1884 = scalar_lea.sflag [#allocation3], 1
    %1885 = vsyncpa %s1884, 1
    %1886 = vsyncpa [#allocation6], 1
    %1887 = vsyncpa [#allocation4], 1
    %s1888 = scalar_lea.sflag [#allocation4], 1
    %1889 = vsyncpa %s1888, 1

// kernel: feature_extractor_forward.16
$region0: #{feature_extractor_forward.16}
  #allocation0 [shape = 'u32[]', space=smem, size = 0x4, offset = 0x4, fixed_abs, tag = 'smem constant byte address 0x4 - core index']
  #allocation1 [shape = 'u32[144,128]{1,0:T(1,128)}', space=vmem, size = 0x12000, scoped, tag = 'internal scratch']
  %s0 = inlined_call_operand.hbm [shape: s32[4,8], index: 0, kind: input, shape index: {}]
  %s1 = inlined_call_operand.hbm [shape: f32[4,8], index: 1, kind: input, shape index: {}]
  %s2 = inlined_call_operand.hbm [shape: f32[16,128], index: 2, kind: input, shape index: {}]
  %s3 = inlined_call_operand.hbm [shape: f32[8,128], index: 3, kind: output, shape index: {}]
  %s4 = sld [smem:[#allocation0]]
  $region41: #{feature_extractor_forward.16} parent=0
    _
  %s6 = ssub.s32 1, %s4
  %s7 = scalar_select 0, %s6, %s4
  $region1: #{feature_extractor_forward.16} parent=0
    #allocation2 [shape = 'u8[2048]{0}', space=smem, size = 0x800, scoped, tag = 'input window, operand 0, single buffered']
    #allocation3 [shape = 's32[1]{0}', space=sflag, size = 0x4, scoped, tag = 'scoped memory for feature_extractor_forward.16']
    #allocation4 [shape = 's32[1]{0}', space=sflag, size = 0x4, scoped, tag = 'scoped memory for feature_extractor_forward.16']
    #allocation5 [shape = 's32[1]{0}', space=sflag, size = 0x4, scoped, tag = 'scoped memory for feature_extractor_forward.16']
    #allocation6 [shape = 'u8[2048]{0}', space=smem, size = 0x800, scoped, tag = 'input window, operand 1, single buffered']
    #allocation7 [shape = 's32[1]{0}', space=sflag, size = 0x4, scoped, tag = 'scoped memory for feature_extractor_forward.16']
    #allocation8 [shape = 'u8[8192]{0}', space=vmem, size = 0x2000, scoped, tag = 'input window, operand 2, single buffered']
    #allocation9 [shape = 'u8[4096]{0}', space=vmem, size = 0x1000, scoped, tag = 'output window, operand 0, single buffered']
    %8 = vsyncpa [#allocation5], 0
    %9 = vsyncpa [#allocation7], 0
    %10 = vsyncpa [#allocation3], 0
    %11 = vsyncpa [#allocation4], 0
    // Predicated region
    $region2: #{feature_extractor_forward.16} parent=1 // pred_check
      _
    $region3: #{feature_extractor_forward.16} parent=1 // pred_check_branch
      %13 = sbr.rel (0) target = $region5
    $region4: #{feature_extractor_forward.16} parent=1 // pred_region
      %s15 = ssub.s32 64, 64
      %16 = vsyncadd [#allocation5], %s15
      %19 = dma.hbm_to_smem %s0, 64, [#allocation2], [#allocation5]
    $region5: #{feature_extractor_forward.16} parent=1 // pred_fallthru
      _
    // Predicated region
    $region6: #{feature_extractor_forward.16} parent=1 // pred_check
      _
    $region7: #{feature_extractor_forward.16} parent=1 // pred_check_branch
      %21 = sbr.rel (0) target = $region9
    $region8: #{feature_extractor_forward.16} parent=1 // pred_region
      %s23 = ssub.s32 64, 64
      %24 = vsyncadd [#allocation7], %s23
      %27 = dma.hbm_to_smem %s1, 64, [#allocation6], [#allocation7]
    $region9: #{feature_extractor_forward.16} parent=1 // pred_fallthru
      _
    // Predicated region
    $region10: #{feature_extractor_forward.16} parent=1 // pred_check
      _
    $region11: #{feature_extractor_forward.16} parent=1 // pred_check_branch
      %29 = sbr.rel (0) target = $region13
    $region12: #{feature_extractor_forward.16} parent=1 // pred_region
      %s31 = ssub.s32 256, 256
      %32 = vsyncadd [#allocation3], %s31
      %s33 = sshll.u32 [#allocation8], 4
      %s34 = int_to_ptr.vmem [resolvable:$true] %s33
      %39 = dma.hbm_to_vmem [thread:$0]  %s2, 256, %s34, [#allocation3], 128, 128, 8
    $region13: #{feature_extractor_forward.16} parent=1 // pred_fallthru
      _
    // Predicated region
    $region14: #{feature_extractor_forward.16} parent=1 // pred_check
      _
    $region15: #{feature_extractor_forward.16} parent=1 // pred_check_branch
      %41 = sbr.rel (0) target = $region17
    $region16: #{feature_extractor_forward.16} parent=1 // pred_region
      %42 = dma.done [#allocation5], 64
    $region17: #{feature_extractor_forward.16} parent=1 // pred_fallthru
      _
    // Predicated region
    $region18: #{feature_extractor_forward.16} parent=1 // pred_check
      _
    $region19: #{feature_extractor_forward.16} parent=1 // pred_check_branch
      %44 = sbr.rel (0) target = $region21
    $region20: #{feature_extractor_forward.16} parent=1 // pred_region
      %45 = dma.done [#allocation7], 64
    $region21: #{feature_extractor_forward.16} parent=1 // pred_fallthru
      _
    // Predicated region
    $region22: #{feature_extractor_forward.16} parent=1 // pred_check
      _
    $region23: #{feature_extractor_forward.16} parent=1 // pred_check_branch
      %47 = sbr.rel (0) target = $region25
    $region24: #{feature_extractor_forward.16} parent=1 // pred_region
      %48 = dma.done [#allocation3], 256
    $region25: #{feature_extractor_forward.16} parent=1 // pred_fallthru
      _
    %49 = sfence
    %s50 = smul.u32 0, 8
    loop: start=0, step=1, limit=8
    $region26: #{feature_extractor_forward.16} parent=1 // loop_pre_header
      _
    $region27: #{feature_extractor_forward.16} parent=1 // loop_header
      %s52 = sphi 0, %s56
      %p53 = scmp.ge.s32.totalorder %s52, 8
    $region28: #{feature_extractor_forward.16} parent=1 // loop_header_branch
      %55 = sbr.rel (%p53) target = $region32
    $region29: #{feature_extractor_forward.16} parent=1 // loop_body
      %s57 = sadd.s32 %s50, %s52
      %s58 = sld [smem:[#allocation6 + %s57]]
      %s59 = sld [smem:[#allocation2 + %s57]]
      %s60 = scalar_lea.vmem [#allocation8], %s59
      %v61 = vld [vmem:[%s60] sm:$0x1]
      %v62 = vstv %s58
      %v63 = vmul.f32 %v62, %v61
      %s64 = sshra.s32 %s57, 7
      %s65 = sand.u32 %s57, 127
      %s66 = sadd.s32 %s64, 1
      %s67 = smul.u32 %s66, 128
      %s68 = sshra.s32 %s57, 7
      %s69 = sand.u32 %s57, 127
      %s70 = sadd.s32 %s67, %s69
      %s71 = sld [smem:[#allocation6 + %s70]]
      %s72 = sld [smem:[#allocation2 + %s70]]
      %s73 = scalar_lea.vmem [#allocation8], %s72
      %v74 = vld [vmem:[%s73] sm:$0x1]
      %v75 = vstv %s71
      %v76 = vmul.f32 %v75, %v74
      %v77 = vadd.f32 %v63, %v76
      %s78 = sadd.s32 %s64, 2
      %s79 = smul.u32 %s78, 128
      %s80 = sadd.s32 %s79, %s69
      %s81 = sld [smem:[#allocation6 + %s80]]
      %s82 = sld [smem:[#allocation2 + %s80]]
      %s83 = scalar_lea.vmem [#allocation8], %s82
      %v84 = vld [vmem:[%s83] sm:$0x1]
      %v85 = vstv %s81
      %v86 = vmul.f32 %v85, %v84
      %v87 = vadd.f32 %v77, %v86
      %s88 = sadd.s32 %s64, 3
      %s89 = smul.u32 %s88, 128
      %s90 = sadd.s32 %s89, %s69
      %s91 = sld [smem:[#allocation6 + %s90]]
      %s92 = sld [smem:[#allocation2 + %s90]]
      %s93 = scalar_lea.vmem [#allocation8], %s92
      %v94 = vld [vmem:[%s93] sm:$0x1]
      %v95 = vstv %s91
      %v96 = vmul.f32 %v95, %v94
      %v97 = vadd.f32 %v87, %v96
      %s98 = scalar_lea.vmem [#allocation9], %s52
      %99 = vst [vmem:[%s98] sm:$0x1] %v97
    $region30: #{feature_extractor_forward.16} parent=1 // loop_footer
      %s56 = sadd.s32 1, %s52
    $region31: #{feature_extractor_forward.16} parent=1 // loop_footer_branch
      %51 = sbr.rel target = $region27
    $region32: #{feature_extractor_forward.16} parent=1 // loop_exit
      _
    // Predicated region
    $region33: #{feature_extractor_forward.16} parent=1 // pred_check
      _
    $region34: #{feature_extractor_forward.16} parent=1 // pred_check_branch
      %101 = sbr.rel (0) target = $region36
    $region35: #{feature_extractor_forward.16} parent=1 // pred_region
      %s103 = ssub.s32 128, 128
      %104 = vsyncadd [#allocation4], %s103
      %s106 = sshll.u32 [#allocation9], 4
      %s107 = int_to_ptr.vmem [resolvable:$true] %s106
      %109 = dma.vmem_to_hbm [thread:$0]  %s107, 128, %s3, [#allocation4]
    $region36: #{feature_extractor_forward.16} parent=1 // pred_fallthru
      _
    // Predicated region
    $region37: #{feature_extractor_forward.16} parent=1 // pred_check
      _
    $region38: #{feature_extractor_forward.16} parent=1 // pred_check_branch
      %111 = sbr.rel (0) target = $region40
    $region39: #{feature_extractor_forward.16} parent=1 // pred_region
      %112 = dma.done [#allocation4], 128
    $region40: #{feature_extractor_forward.16} parent=1 // pred_fallthru
      _
    %113 = vsyncpa [#allocation3], 1
    %114 = vsyncpa [#allocation4], 1
    %115 = vsyncpa [#allocation5], 1
    %116 = vsyncpa [#allocation7], 1

// kernel: feature_extractor_forward.13
$region0: #{feature_extractor_forward.13}
  #allocation0 [shape = 'u32[]', space=smem, size = 0x4, offset = 0x4, fixed_abs, tag = 'smem constant byte address 0x4 - core index']
  #allocation1 [shape = 'u32[144,128]{1,0:T(1,128)}', space=vmem, size = 0x12000, scoped, tag = 'internal scratch']
  #allocation2 [shape = 'f32[6,6,128]{2,1,0:T(8,128)}', space=vmem, size = 0x6000, scoped, tag = 'scratch operand']
  %s0 = inlined_call_operand.hbm [shape: bf16[8,6,6,128], index: 0, kind: input, shape index: {}]
  %s1 = inlined_call_operand.hbm [shape: bf16[9,128,128], index: 1, kind: input, shape index: {}]
  %s2 = inlined_call_operand.hbm [shape: f32[1,128], index: 2, kind: input, shape index: {}]
  %s3 = inlined_call_operand.hbm [shape: bf16[9,128,128], index: 3, kind: input, shape index: {}]
  %s4 = inlined_call_operand.hbm [shape: f32[1,128], index: 4, kind: input, shape index: {}]
  %s5 = inlined_call_operand.hbm [shape: f32[8,4,4,128], index: 5, kind: output, shape index: {}]
  %s6 = sld [smem:[#allocation0]]
  $region73: #{feature_extractor_forward.13} parent=0
    _
  %s8 = ssub.s32 1, %s6
  %s9 = scalar_select 0, %s8, %s6
  $region1: #{feature_extractor_forward.13} parent=0
    #allocation3 [shape = 'u8[24576]{0}', space=vmem, size = 0x6000, scoped, tag = 'input window, operand 0']
    #allocation4 [shape = 's32[2]{0}', space=sflag, size = 0x8, scoped, tag = 'scoped memory for feature_extractor_forward.13']
    #allocation5 [shape = 's32[2]{0}', space=sflag, size = 0x8, scoped, tag = 'scoped memory for feature_extractor_forward.13']
    #allocation6 [shape = 'u8[294912]{0}', space=vmem, size = 0x48000, scoped, tag = 'input window, operand 1, single buffered']
    #allocation7 [shape = 's32[1]{0}', space=sflag, size = 0x4, scoped, tag = 'scoped memory for feature_extractor_forward.13']
    #allocation8 [shape = 'u8[512]{0}', space=vmem, size = 0x400, scoped, tag = 'input window, operand 2, single buffered']
    #allocation9 [shape = 'u8[294912]{0}', space=vmem, size = 0x48000, scoped, tag = 'input window, operand 3, single buffered']
    #allocation10 [shape = 's32[1]{0}', space=sflag, size = 0x4, scoped, tag = 'scoped memory for feature_extractor_forward.13']
    #allocation11 [shape = 'u8[512]{0}', space=vmem, size = 0x400, scoped, tag = 'input window, operand 4, single buffered']
    #allocation12 [shape = 'u8[16384]{0}', space=vmem, size = 0x4000, scoped, tag = 'output window, operand 0']
    %10 = vsyncpa [#allocation4], 0
    %s11 = scalar_lea.sflag [#allocation4], 1
    %12 = vsyncpa %s11, 0
    %13 = vsyncpa [#allocation7], 0
    %14 = vsyncpa [#allocation10], 0
    %15 = vsyncpa [#allocation5], 0
    %s16 = scalar_lea.sflag [#allocation5], 1
    %17 = vsyncpa %s16, 0
    loop: start=0, step=1, limit=10
    $region2: #{feature_extractor_forward.13} parent=1 // loop_pre_header
      _
    $region3: #{feature_extractor_forward.13} parent=1 // loop_header
      %s19 = sphi 0, %s23
      %p20 = scmp.ge.s32.totalorder %s19, 10
      %s29 = sphi 0, %s31
      %s32 = sphi 0, %s29
      %s33 = sphi 0, %s32
      %s49 = sphi 0, %s33
      %s53 = sphi 0, %s53
      %s55 = sphi 0, %s53
      %s56 = sphi 0, %s55
      %s70 = sphi 0, %s56
      %s74 = sphi 0, %s74
      %s76 = sphi 0, %s74
      %s77 = sphi 0, %s76
      %s91 = sphi 0, %s77
      %s95 = sphi 0, %s95
      %s97 = sphi 0, %s95
      %s98 = sphi 0, %s97
      %s112 = sphi 0, %s98
      %s116 = sphi 0, %s116
      %s118 = sphi 0, %s116
      %s119 = sphi 0, %s118
      %s133 = sphi 0, %s119
      %s139 = sphi 0, %s141
      %s142 = sphi 0, %s139
      %s143 = sphi 0, %s142
      %s159 = sphi 0, %s143
    $region4: #{feature_extractor_forward.13} parent=1 // loop_header_branch
      %22 = sbr.rel (%p20) target = $region8
    $region5: #{feature_extractor_forward.13} parent=1 // loop_body
      %s24 = ssub.s32 %s19, 1
      %s25 = ssub.s32 %s19, 2
      %s26 = sadd.s32 %s19, 1
      %s27 = ssub.s32 %s19, %s26
      %p28 = scmp.eq.s32.totalorder %s27, 0
      %s30 = sadd.s32 %s29, 1
      %s31 = scalar_select %p28, %s29, %s30
      %p34 = pneg %p28
      %p35 = scmp.eq.s32.totalorder %s19, 7
      %p36 = por %p34, %p35
      %p37 = scmp.ne.s32.totalorder %s29, %s32
      %p38 = scmp.eq.s32.totalorder %s19, 0
      %p39 = por %p37, %p38
      %p40 = scmp.ne.s32.totalorder %s29, %s32
      %p41 = scmp.eq.s32.totalorder %s24, 7
      %p42 = por %p40, %p41
      %p43 = scmp.ne.s32.totalorder %s32, %s33
      %p44 = scmp.eq.s32.totalorder %s24, 0
      %p45 = por %p43, %p44
      %p46 = scmp.ne.s32.totalorder %s32, %s33
      %p47 = scmp.eq.s32.totalorder %s25, 7
      %p48 = por %p46, %p47
      %p50 = scmp.ne.s32.totalorder %s33, %s49
      %p51 = scmp.eq.s32.totalorder %s25, 0
      %p52 = por %p50, %p51
      %s54 = sadd.s32 %s53, 1
      %p57 = scmp.eq.s32.totalorder %s19, 7
      %p58 = scmp.ne.s32.totalorder %s53, %s55
      %p59 = scmp.eq.s32.totalorder %s19, 0
      %p60 = por %p58, %p59
      %p61 = scmp.ne.s32.totalorder %s53, %s55
      %p62 = scmp.eq.s32.totalorder %s24, 7
      %p63 = por %p61, %p62
      %p64 = scmp.ne.s32.totalorder %s55, %s56
      %p65 = scmp.eq.s32.totalorder %s24, 0
      %p66 = por %p64, %p65
      %p67 = scmp.ne.s32.totalorder %s55, %s56
      %p68 = scmp.eq.s32.totalorder %s25, 7
      %p69 = por %p67, %p68
      %p71 = scmp.ne.s32.totalorder %s56, %s70
      %p72 = scmp.eq.s32.totalorder %s25, 0
      %p73 = por %p71, %p72
      %s75 = sadd.s32 %s74, 1
      %p78 = scmp.eq.s32.totalorder %s19, 7
      %p79 = scmp.ne.s32.totalorder %s74, %s76
      %p80 = scmp.eq.s32.totalorder %s19, 0
      %p81 = por %p79, %p80
      %p82 = scmp.ne.s32.totalorder %s74, %s76
      %p83 = scmp.eq.s32.totalorder %s24, 7
      %p84 = por %p82, %p83
      %p85 = scmp.ne.s32.totalorder %s76, %s77
      %p86 = scmp.eq.s32.totalorder %s24, 0
      %p87 = por %p85, %p86
      %p88 = scmp.ne.s32.totalorder %s76, %s77
      %p89 = scmp.eq.s32.totalorder %s25, 7
      %p90 = por %p88, %p89
      %p92 = scmp.ne.s32.totalorder %s77, %s91
      %p93 = scmp.eq.s32.totalorder %s25, 0
      %p94 = por %p92, %p93
      %s96 = sadd.s32 %s95, 1
      %p99 = scmp.eq.s32.totalorder %s19, 7
      %p100 = scmp.ne.s32.totalorder %s95, %s97
      %p101 = scmp.eq.s32.totalorder %s19, 0
      %p102 = por %p100, %p101
      %p103 = scmp.ne.s32.totalorder %s95, %s97
      %p104 = scmp.eq.s32.totalorder %s24, 7
      %p105 = por %p103, %p104
      %p106 = scmp.ne.s32.totalorder %s97, %s98
      %p107 = scmp.eq.s32.totalorder %s24, 0
      %p108 = por %p106, %p107
      %p109 = scmp.ne.s32.totalorder %s97, %s98
      %p110 = scmp.eq.s32.totalorder %s25, 7
      %p111 = por %p109, %p110
      %p113 = scmp.ne.s32.totalorder %s98, %s112
      %p114 = scmp.eq.s32.totalorder %s25, 0
      %p115 = por %p113, %p114
      %s117 = sadd.s32 %s116, 1
      %p120 = scmp.eq.s32.totalorder %s19, 7
      %p121 = scmp.ne.s32.totalorder %s116, %s118
      %p122 = scmp.eq.s32.totalorder %s19, 0
      %p123 = por %p121, %p122
      %p124 = scmp.ne.s32.totalorder %s116, %s118
      %p125 = scmp.eq.s32.totalorder %s24, 7
      %p126 = por %p124, %p125
      %p127 = scmp.ne.s32.totalorder %s118, %s119
      %p128 = scmp.eq.s32.totalorder %s24, 0
      %p129 = por %p127, %p128
      %p130 = scmp.ne.s32.totalorder %s118, %s119
      %p131 = scmp.eq.s32.totalorder %s25, 7
      %p132 = por %p130, %p131
      %p134 = scmp.ne.s32.totalorder %s119, %s133
      %p135 = scmp.eq.s32.totalorder %s25, 0
      %p136 = por %p134, %p135
      %s137 = ssub.s32 %s19, %s26
      %p138 = scmp.eq.s32.totalorder %s137, 0
      %s140 = sadd.s32 %s139, 1
      %s141 = scalar_select %p138, %s139, %s140
      %p144 = pneg %p138
      %p145 = scmp.eq.s32.totalorder %s19, 7
      %p146 = por %p144, %p145
      %p147 = scmp.ne.s32.totalorder %s139, %s142
      %p148 = scmp.eq.s32.totalorder %s19, 0
      %p149 = por %p147, %p148
      %p150 = scmp.ne.s32.totalorder %s139, %s142
      %p151 = scmp.eq.s32.totalorder %s24, 7
      %p152 = por %p150, %p151
      %p153 = scmp.ne.s32.totalorder %s142, %s143
      %p154 = scmp.eq.s32.totalorder %s24, 0
      %p155 = por %p153, %p154
      %p156 = scmp.ne.s32.totalorder %s142, %s143
      %p157 = scmp.eq.s32.totalorder %s25, 7
      %p158 = por %p156, %p157
      %p160 = scmp.ne.s32.totalorder %s143, %s159
      %p161 = scmp.eq.s32.totalorder %s25, 0
      %p162 = por %p160, %p161
      %p163 = scmp.le.s32.totalorder 1, %s19
      %p164 = scmp.lt.s32.totalorder %s19, 9
      %p165 = pnand %p163, %p164
      %p166 = pneg %p165
      // Predicated region
      $region9: #{feature_extractor_forward.13} parent=5 // pred_check
        _
      $region10: #{feature_extractor_forward.13} parent=5 // pred_check_branch
        %168 = sbr.rel (%p165) target = $region12
      $region11: #{feature_extractor_forward.13} parent=5 // pred_region
        %s169 = ssub.s32 %s19, 1
        // Predicated region
        $region13: #{feature_extractor_forward.13} parent=11 // pred_check
          %p170 = pneg %p66
        $region14: #{feature_extractor_forward.13} parent=11 // pred_check_branch
          %172 = sbr.rel (%p170) target = $region16
        $region15: #{feature_extractor_forward.13} parent=11 // pred_region
          %s174 = ssub.s32 9216, 9216
          %175 = vsyncadd [#allocation7], %s174
          %s176 = sshll.u32 [#allocation6], 4
          %s177 = int_to_ptr.vmem [resolvable:$true] %s176
          %182 = dma.hbm_to_vmem [thread:$0]  %s1, 9216, %s177, [#allocation7], 64, 64, 4
        $region16: #{feature_extractor_forward.13} parent=11 // pred_fallthru
          _
        // Predicated region
        $region17: #{feature_extractor_forward.13} parent=11 // pred_check
          %p183 = pneg %p87
        $region18: #{feature_extractor_forward.13} parent=11 // pred_check_branch
          %185 = sbr.rel (%p183) target = $region20
        $region19: #{feature_extractor_forward.13} parent=11 // pred_region
          %s187 = ssub.s32 16, 16
          %188 = vsyncadd [#allocation7], %s187
          %s190 = sshll.u32 [#allocation8], 4
          %s191 = int_to_ptr.vmem [resolvable:$true] %s190
          %193 = dma.hbm_to_vmem [thread:$0]  %s2, 16, %s191, [#allocation7]
        $region20: #{feature_extractor_forward.13} parent=11 // pred_fallthru
          _
        // Predicated region
        $region21: #{feature_extractor_forward.13} parent=11 // pred_check
          %p194 = pneg %p108
        $region22: #{feature_extractor_forward.13} parent=11 // pred_check_branch
          %196 = sbr.rel (%p194) target = $region24
        $region23: #{feature_extractor_forward.13} parent=11 // pred_region
          %s198 = ssub.s32 9216, 9216
          %199 = vsyncadd [#allocation10], %s198
          %s200 = sshll.u32 [#allocation9], 4
          %s201 = int_to_ptr.vmem [resolvable:$true] %s200
          %206 = dma.hbm_to_vmem [thread:$0]  %s3, 9216, %s201, [#allocation10], 64, 64, 4
        $region24: #{feature_extractor_forward.13} parent=11 // pred_fallthru
          _
        // Predicated region
        $region25: #{feature_extractor_forward.13} parent=11 // pred_check
          %p207 = pneg %p129
        $region26: #{feature_extractor_forward.13} parent=11 // pred_check_branch
          %209 = sbr.rel (%p207) target = $region28
        $region27: #{feature_extractor_forward.13} parent=11 // pred_region
          %s211 = ssub.s32 16, 16
          %212 = vsyncadd [#allocation10], %s211
          %s214 = sshll.u32 [#allocation11], 4
          %s215 = int_to_ptr.vmem [resolvable:$true] %s214
          %217 = dma.hbm_to_vmem [thread:$0]  %s4, 16, %s215, [#allocation10]
        $region28: #{feature_extractor_forward.13} parent=11 // pred_fallthru
          _
      $region12: #{feature_extractor_forward.13} parent=5 // pred_fallthru
        _
      %p218 = scmp.lt.s32.totalorder %s19, 8
      // Predicated region
      $region29: #{feature_extractor_forward.13} parent=5 // pred_check
        %p219 = pneg %p218
      $region30: #{feature_extractor_forward.13} parent=5 // pred_check_branch
        %221 = sbr.rel (%p219) target = $region32
      $region31: #{feature_extractor_forward.13} parent=5 // pred_region
        // Predicated region
        $region33: #{feature_extractor_forward.13} parent=31 // pred_check
          %p222 = pneg %p39
        $region34: #{feature_extractor_forward.13} parent=31 // pred_check_branch
          %224 = sbr.rel (%p222) target = $region36
        $region35: #{feature_extractor_forward.13} parent=31 // pred_region
          %s225 = sand.u32 %s29, 1
          %s226 = scalar_lea.sflag [#allocation4], %s225
          %s227 = sand.u32 %s29, 1
          %s228 = smul.addr %s227, 24
          %s229 = scalar_lea.vmem [#allocation3], %s228
          %s231 = ssub.s32 384, 384
          %232 = vsyncadd %s226, %s231
          %s233 = smul.addr %s19, 6
          %s234 = smul.addr %s233, 64
          %s235 = scalar_lea.hbm %s0, %s234
          %s236 = sshll.u32 %s229, 4
          %s237 = int_to_ptr.vmem [resolvable:$true] %s236
          %242 = dma.hbm_to_vmem [thread:$0]  %s235, 384, %s237, %s226, 64, 64, 4
        $region36: #{feature_extractor_forward.13} parent=31 // pred_fallthru
          _
      $region32: #{feature_extractor_forward.13} parent=5 // pred_fallthru
        _
      %p243 = scmp.le.s32.totalorder 1, %s19
      %p244 = scmp.lt.s32.totalorder %s19, 9
      %p245 = pnand %p243, %p244
      %p246 = pneg %p245
      // Predicated region
      $region37: #{feature_extractor_forward.13} parent=5 // pred_check
        _
      $region38: #{feature_extractor_forward.13} parent=5 // pred_check_branch
        %248 = sbr.rel (%p245) target = $region40
      $region39: #{feature_extractor_forward.13} parent=5 // pred_region
        %s249 = ssub.s32 %s19, 1
        %s250 = sand.u32 %s32, 1
        %s251 = scalar_lea.sflag [#allocation4], %s250
        %s252 = sand.u32 %s32, 1
        %s253 = smul.addr %s252, 24
        %s254 = scalar_lea.vmem [#allocation3], %s253
        // Predicated region
        $region41: #{feature_extractor_forward.13} parent=39 // pred_check
          %p255 = pneg %p45
        $region42: #{feature_extractor_forward.13} parent=39 // pred_check_branch
          %257 = sbr.rel (%p255) target = $region44
        $region43: #{feature_extractor_forward.13} parent=39 // pred_region
          %258 = dma.done %s251, 384
        $region44: #{feature_extractor_forward.13} parent=39 // pred_fallthru
          _
        // Predicated region
        $region45: #{feature_extractor_forward.13} parent=39 // pred_check
          %p259 = pneg %p66
        $region46: #{feature_extractor_forward.13} parent=39 // pred_check_branch
          %261 = sbr.rel (%p259) target = $region48
        $region47: #{feature_extractor_forward.13} parent=39 // pred_region
          %262 = dma.done [#allocation7], 9216
        $region48: #{feature_extractor_forward.13} parent=39 // pred_fallthru
          _
        // Predicated region
        $region49: #{feature_extractor_forward.13} parent=39 // pred_check
          %p263 = pneg %p87
        $region50: #{feature_extractor_forward.13} parent=39 // pred_check_branch
          %265 = sbr.rel (%p263) target = $region52
        $region51: #{feature_extractor_forward.13} parent=39 // pred_region
          %266 = dma.done [#allocation7], 16
        $region52: #{feature_extractor_forward.13} parent=39 // pred_fallthru
          _
        // Predicated region
        $region53: #{feature_extractor_forward.13} parent=39 // pred_check
          %p267 = pneg %p108
        $region54: #{feature_extractor_forward.13} parent=39 // pred_check_branch
          %269 = sbr.rel (%p267) target = $region56
        $region55: #{feature_extractor_forward.13} parent=39 // pred_region
          %270 = dma.done [#allocation10], 9216
        $region56: #{feature_extractor_forward.13} parent=39 // pred_fallthru
          _
        // Predicated region
        $region57: #{feature_extractor_forward.13} parent=39 // pred_check
          %p271 = pneg %p129
        $region58: #{feature_extractor_forward.13} parent=39 // pred_check_branch
          %273 = sbr.rel (%p271) target = $region60
        $region59: #{feature_extractor_forward.13} parent=39 // pred_region
          %274 = dma.done [#allocation10], 16
        $region60: #{feature_extractor_forward.13} parent=39 // pred_fallthru
          _
        %s275 = sand.u32 %s32, 1
        %s276 = scalar_lea.sflag [#allocation4], %s275
        %s277 = sand.u32 %s32, 1
        %s278 = smul.addr %s277, 24
        %s279 = scalar_lea.vmem [#allocation3], %s278
        %p280 = pneg %p45
        %p281 = pneg %p42
        %p282 = pneg %p66
        %p283 = pneg %p63
        %p284 = pneg %p87
        %p285 = pneg %p84
        %p286 = pneg %p108
        %p287 = pneg %p105
        %p288 = pneg %p129
        %p289 = pneg %p126
        %p290 = pneg %p155
        %p291 = pneg %p152
        %s292 = sand.u32 %s142, 1
        %s293 = scalar_lea.sflag [#allocation5], %s292
        %s294 = sand.u32 %s142, 1
        %s295 = smul.addr %s294, 16
        %s296 = scalar_lea.vmem [#allocation12], %s295
        %v298 = vld [vmem:[%s254] sm:$0x7]
        %v299 = vld [vmem:[%s254 + $0x4] sm:$0x7]
        %v300 = vld [vmem:[%s254 + $0x8] sm:$0x7]
        %v301 = vld [vmem:[%s254 + $0xc] sm:$0x7]
        %v302 = vld [vmem:[%s254 + $0x10] sm:$0x7]
        %v303 = vld [vmem:[%s254 + $0x14] sm:$0x7]
        %v304 = vld [vmem:[#allocation6] sm:$0xf]
        %v305 = vld [vmem:[#allocation6 + $0x4] sm:$0xf]
        %v306 = vld [vmem:[#allocation6 + $0x8] sm:$0xf]
        %v307 = vld [vmem:[#allocation6 + $0xc] sm:$0xf]
        %v308 = vld [vmem:[#allocation6 + $0x10] sm:$0xf]
        %v309 = vld [vmem:[#allocation6 + $0x14] sm:$0xf]
        %v310 = vld [vmem:[#allocation6 + $0x18] sm:$0xf]
        %v311 = vld [vmem:[#allocation6 + $0x1c] sm:$0xf]
        %v312 = vld [vmem:[#allocation6 + $0x20] sm:$0xf]
        %v313 = vld [vmem:[#allocation6 + $0x24] sm:$0xf]
        %v314 = vld [vmem:[#allocation6 + $0x28] sm:$0xf]
        %v315 = vld [vmem:[#allocation6 + $0x2c] sm:$0xf]
        %v316 = vld [vmem:[#allocation6 + $0x30] sm:$0xf]
        %v317 = vld [vmem:[#allocation6 + $0x34] sm:$0xf]
        %v318 = vld [vmem:[#allocation6 + $0x38] sm:$0xf]
        %v319 = vld [vmem:[#allocation6 + $0x3c] sm:$0xf]
        %v325 = vunpack.c.l.s4 1983009808
        %v326 = vunpack.c.0.s8 %v325
        %v327 = vlaneseq
        %v328 = vshrl.u32 %v327, 7
        %v329 = vsub.s32 %v326, %v328
        %v330 = vrot.slane %v298, %v329
        %v331 = vcombine.high %v330, %v330
        %v333 = vunpack.c.l.s4 1983009808
        %v334 = vunpack.c.0.s8 %v333
        %v335 = vlaneseq
        %v336 = vshrl.u32 %v335, 7
        %v337 = vsub.s32 %v334, %v336
        %v338 = vrot.slane %v299, %v337
        %v339 = vcombine.high %v338, %v338
        %v341 = vunpack.c.l.s4 1983009808
        %v342 = vunpack.c.0.s8 %v341
        %v343 = vlaneseq
        %v344 = vshrl.u32 %v343, 7
        %v345 = vsub.s32 %v342, %v344
        %v346 = vrot.slane %v300, %v345
        %v347 = vcombine.high %v346, %v346
        %v349 = vunpack.c.l.s4 1983009808
        %v350 = vunpack.c.0.s8 %v349
        %v351 = vlaneseq
        %v352 = vshrl.u32 %v351, 7
        %v353 = vsub.s32 %v350, %v352
        %v354 = vrot.slane %v301, %v353
        %v355 = vcombine.high %v354, %v354
        %vm356 = vsmask.f32 1280
        %vm357 = vsmask.f32 3336
        %vm358 = vmor %vm356, %vm357
        %vm359 = vsmask.f32 5392
        %vm360 = vmor %vm358, %vm359
        %vm361 = vsmask.f32 7448
        %vm362 = vmor %vm360, %vm361
        %v364 = vshrl.u32 %v330, 16
        %v366 = vrot.slane %v364, 6
        %v367 = vshll.u32 %v330, 16
        %v369 = vrot.slane %v367, 7
        %v370 = vor.u32 %v366, %v369
        %v371 = vrot.slane %v370, 2
        %v373 = vshll.u32 %v331, 16
        %v375 = vrot.slane %v373, 7
        %v376 = vsel %vm362, %v371, %v375
        %v378 = vshrl.u32 %v338, 16
        %v380 = vrot.slane %v378, 6
        %v381 = vshll.u32 %v338, 16
        %v383 = vrot.slane %v381, 7
        %v384 = vor.u32 %v380, %v383
        %v385 = vrot.slane %v384, 2
        %v387 = vshll.u32 %v339, 16
        %v389 = vrot.slane %v387, 7
        %v390 = vsel %vm362, %v385, %v389
        %v392 = vshrl.u32 %v346, 16
        %v394 = vrot.slane %v392, 6
        %v395 = vshll.u32 %v346, 16
        %v397 = vrot.slane %v395, 7
        %v398 = vor.u32 %v394, %v397
        %v399 = vrot.slane %v398, 2
        %v401 = vshll.u32 %v347, 16
        %v403 = vrot.slane %v401, 7
        %v404 = vsel %vm362, %v399, %v403
        %v406 = vshrl.u32 %v354, 16
        %v408 = vrot.slane %v406, 6
        %v409 = vshll.u32 %v354, 16
        %v411 = vrot.slane %v409, 7
        %v412 = vor.u32 %v408, %v411
        %v413 = vrot.slane %v412, 2
        %v415 = vshll.u32 %v355, 16
        %v417 = vrot.slane %v415, 7
        %v418 = vsel %vm362, %v413, %v417
        %s419 = scalar_lea.vmem [#allocation6], 64
        %v420 = vld [vmem:[%s419] sm:$0xf]
        %v421 = vld [vmem:[%s419 + $0x4] sm:$0xf]
        %v422 = vld [vmem:[%s419 + $0x8] sm:$0xf]
        %v423 = vld [vmem:[%s419 + $0xc] sm:$0xf]
        %v424 = vld [vmem:[%s419 + $0x10] sm:$0xf]
        %v425 = vld [vmem:[%s419 + $0x14] sm:$0xf]
        %v426 = vld [vmem:[%s419 + $0x18] sm:$0xf]
        %v427 = vld [vmem:[%s419 + $0x1c] sm:$0xf]
        %v428 = vld [vmem:[%s419 + $0x20] sm:$0xf]
        %v429 = vld [vmem:[%s419 + $0x24] sm:$0xf]
        %v430 = vld [vmem:[%s419 + $0x28] sm:$0xf]
        %v431 = vld [vmem:[%s419 + $0x2c] sm:$0xf]
        %v432 = vld [vmem:[%s419 + $0x30] sm:$0xf]
        %v433 = vld [vmem:[%s419 + $0x34] sm:$0xf]
        %v434 = vld [vmem:[%s419 + $0x38] sm:$0xf]
        %v435 = vld [vmem:[%s419 + $0x3c] sm:$0xf]
        %v436 = vcombine.low %v376, %v390
        %v437 = vcombine.low %v404, %v418
        %v439 = vunpack.c.l.s4 1983009808
        %v440 = vunpack.c.0.s8 %v439
        %v441 = vlaneseq
        %v442 = vshrl.u32 %v441, 7
        %v443 = vsub.s32 %v440, %v442
        %v444 = vrot.slane %v436, %v443
        %v446 = vunpack.c.l.s4 1983009808
        %v447 = vunpack.c.0.s8 %v446
        %v448 = vlaneseq
        %v449 = vshrl.u32 %v448, 7
        %v450 = vsub.s32 %v447, %v449
        %v451 = vrot.slane %v437, %v450
        %v452 = vcombine.low %v444, %v451
        %v470 = vunpack.c.l.b16 %v420
        %v471 = vunpack.c.l.b16 %v421
        %v472 = vunpack.c.l.b16 %v422
        %v473 = vunpack.c.l.b16 %v423
        %v474 = vunpack.c.l.b16 %v424
        %v475 = vunpack.c.l.b16 %v425
        %v476 = vunpack.c.l.b16 %v426
        %v477 = vunpack.c.l.b16 %v427
        %v478 = vunpack.c.l.b16 %v428
        %v479 = vunpack.c.l.b16 %v429
        %v480 = vunpack.c.l.b16 %v430
        %v481 = vunpack.c.l.b16 %v431
        %v482 = vunpack.c.l.b16 %v432
        %v483 = vunpack.c.l.b16 %v433
        %v484 = vunpack.c.l.b16 %v434
        %v485 = vunpack.c.l.b16 %v435
        %v486 = vpack.c.b16 %v471, %v470
        %v487 = vpack.c.b16 %v473, %v472
        %v488 = vpack.c.b16 %v475, %v474
        %v489 = vpack.c.b16 %v477, %v476
        %v490 = vpack.c.b16 %v479, %v478
        %v491 = vpack.c.b16 %v481, %v480
        %v492 = vpack.c.b16 %v483, %v482
        %v493 = vpack.c.b16 %v485, %v484
        %502 = vmatprep.subr.bf16.mxu0 0
        %503 = vmatpush1.bf16.msra.mxu0 %v486
        %504 = vmatprep.subr.bf16.mxu0 0
        %505 = vmatpush1.bf16.msra.mxu0 %v487
        %506 = vmatprep.subr.bf16.mxu0 0
        %507 = vmatpush1.bf16.msra.mxu0 %v488
        %508 = vmatprep.subr.bf16.mxu0 0
        %509 = vmatpush1.bf16.msra.mxu0 %v489
        %510 = vmatprep.subr.bf16.mxu0 0
        %511 = vmatpush1.bf16.msra.mxu0 %v490
        %512 = vmatprep.subr.bf16.mxu0 0
        %513 = vmatpush1.bf16.msra.mxu0 %v491
        %514 = vmatprep.subr.bf16.mxu0 0
        %515 = vmatpush1.bf16.msra.mxu0 %v492
        %516 = vmatprep.subr.bf16.mxu0 0
        %517 = vmatpush1.bf16.msra.mxu0 %v493
        %518 = vmatprep.subr.bf16.mxu0 0
        %519 = vmatpush1.bf16.msra.mxu0 0
        %520 = vmatprep.subr.bf16.mxu0 0
        %521 = vmatpush1.bf16.msra.mxu0 0
        %522 = vmatprep.subr.bf16.mxu0 0
        %523 = vmatpush1.bf16.msra.mxu0 0
        %524 = vmatprep.subr.bf16.mxu0 0
        %525 = vmatpush1.bf16.msra.mxu0 0
        %526 = vmatprep.subr.bf16.mxu0 0
        %527 = vmatpush1.bf16.msra.mxu0 0
        %528 = vmatprep.subr.bf16.mxu0 0
        %529 = vmatpush1.bf16.msra.mxu0 0
        %530 = vmatprep.subr.bf16.mxu0 0
        %531 = vmatpush1.bf16.msra.mxu0 0
        %532 = vmatprep.subr.bf16.mxu0 0
        %533 = vmatpush1.bf16.msra.mxu0 0
        %534 = vmatprep.mubr.bf16.mxu0 0
        %535 = vmatmul.mubr.bf16.gmra.mrb[0].mxu0 %v452
        %v536 = vpop.f32.mrb[0].mxu0
        %v537 = vadd.f32 0.0, %v536
        %v538 = vpop.f32.mrb[0].mxu0
        %v539 = vpop.f32.mrb[0].mxu0
        %v540 = vadd.f32 0.0, %v539
        %v541 = vpop.f32.mrb[0].mxu0
        %542 = vdwg.mxu0
        %v543 = vcombine.low %v298, %v299
        %v544 = vcombine.low %v300, %v301
        %v546 = vunpack.c.l.s4 1983009808
        %v547 = vunpack.c.0.s8 %v546
        %v548 = vlaneseq
        %v549 = vshrl.u32 %v548, 7
        %v550 = vsub.s32 %v547, %v549
        %v551 = vrot.slane %v543, %v550
        %v553 = vunpack.c.l.s4 1983009808
        %v554 = vunpack.c.0.s8 %v553
        %v555 = vlaneseq
        %v556 = vshrl.u32 %v555, 7
        %v557 = vsub.s32 %v554, %v556
        %v558 = vrot.slane %v544, %v557
        %v559 = vcombine.low %v551, %v558
        %v577 = vunpack.c.l.b16 %v304
        %v578 = vunpack.c.l.b16 %v305
        %v579 = vunpack.c.l.b16 %v306
        %v580 = vunpack.c.l.b16 %v307
        %v581 = vunpack.c.l.b16 %v308
        %v582 = vunpack.c.l.b16 %v309
        %v583 = vunpack.c.l.b16 %v310
        %v584 = vunpack.c.l.b16 %v311
        %v585 = vunpack.c.l.b16 %v312
        %v586 = vunpack.c.l.b16 %v313
        %v587 = vunpack.c.l.b16 %v314
        %v588 = vunpack.c.l.b16 %v315
        %v589 = vunpack.c.l.b16 %v316
        %v590 = vunpack.c.l.b16 %v317
        %v591 = vunpack.c.l.b16 %v318
        %v592 = vunpack.c.l.b16 %v319
        %v593 = vpack.c.b16 %v578, %v577
        %v594 = vpack.c.b16 %v580, %v579
        %v595 = vpack.c.b16 %v582, %v581
        %v596 = vpack.c.b16 %v584, %v583
        %v597 = vpack.c.b16 %v586, %v585
        %v598 = vpack.c.b16 %v588, %v587
        %v599 = vpack.c.b16 %v590, %v589
        %v600 = vpack.c.b16 %v592, %v591
        %609 = vmatprep.subr.bf16.mxu0 0
        %610 = vmatpush1.bf16.msra.mxu0 %v593
        %611 = vmatprep.subr.bf16.mxu0 0
        %612 = vmatpush1.bf16.msra.mxu0 %v594
        %613 = vmatprep.subr.bf16.mxu0 0
        %614 = vmatpush1.bf16.msra.mxu0 %v595
        %615 = vmatprep.subr.bf16.mxu0 0
        %616 = vmatpush1.bf16.msra.mxu0 %v596
        %617 = vmatprep.subr.bf16.mxu0 0
        %618 = vmatpush1.bf16.msra.mxu0 %v597
        %619 = vmatprep.subr.bf16.mxu0 0
        %620 = vmatpush1.bf16.msra.mxu0 %v598
        %621 = vmatprep.subr.bf16.mxu0 0
        %622 = vmatpush1.bf16.msra.mxu0 %v599
        %623 = vmatprep.subr.bf16.mxu0 0
        %624 = vmatpush1.bf16.msra.mxu0 %v600
        %625 = vmatprep.subr.bf16.mxu0 0
        %626 = vmatpush1.bf16.msra.mxu0 0
        %627 = vmatprep.subr.bf16.mxu0 0
        %628 = vmatpush1.bf16.msra.mxu0 0
        %629 = vmatprep.subr.bf16.mxu0 0
        %630 = vmatpush1.bf16.msra.mxu0 0
        %631 = vmatprep.subr.bf16.mxu0 0
        %632 = vmatpush1.bf16.msra.mxu0 0
        %633 = vmatprep.subr.bf16.mxu0 0
        %634 = vmatpush1.bf16.msra.mxu0 0
        %635 = vmatprep.subr.bf16.mxu0 0
        %636 = vmatpush1.bf16.msra.mxu0 0
        %637 = vmatprep.subr.bf16.mxu0 0
        %638 = vmatpush1.bf16.msra.mxu0 0
        %639 = vmatprep.subr.bf16.mxu0 0
        %640 = vmatpush1.bf16.msra.mxu0 0
        %641 = vmatprep.mubr.bf16.mxu0 0
        %642 = vmatmul.mubr.bf16.gmra.mrb[0].mxu0 %v559
        %v643 = vpop.f32.mrb[0].mxu0
        %v644 = vadd.f32 %v537, %v643
        %v645 = vpop.f32.mrb[0].mxu0
        %v646 = vpop.f32.mrb[0].mxu0
        %v647 = vadd.f32 %v540, %v646
        %v648 = vpop.f32.mrb[0].mxu0
        %649 = vdwg.mxu0
        %vm650 = vcmask 1040384
        %vm651 = vcmask 1042434
        %vm652 = vmor %vm650, %vm651
        %vm653 = vcmask 1044484
        %vm654 = vmor %vm652, %vm653
        %vm655 = vcmask 1046534
        %vm656 = vmor %vm654, %vm655
        %v657 = vrot.slane %v330, 7
        %v658 = vrot.slane %v657, 2
        %v659 = vrot.slane %v331, 7
        %v660 = vsel %vm656, %v658, %v659
        %v661 = vrot.slane %v338, 7
        %v662 = vrot.slane %v661, 2
        %v663 = vrot.slane %v339, 7
        %v664 = vsel %vm656, %v662, %v663
        %v665 = vrot.slane %v346, 7
        %v666 = vrot.slane %v665, 2
        %v667 = vrot.slane %v347, 7
        %v668 = vsel %vm656, %v666, %v667
        %v669 = vrot.slane %v354, 7
        %v670 = vrot.slane %v669, 2
        %v671 = vrot.slane %v355, 7
        %v672 = vsel %vm656, %v670, %v671
        %s673 = scalar_lea.vmem [#allocation6], 128
        %v674 = vld [vmem:[%s673] sm:$0xf]
        %v675 = vld [vmem:[%s673 + $0x4] sm:$0xf]
        %v676 = vld [vmem:[%s673 + $0x8] sm:$0xf]
        %v677 = vld [vmem:[%s673 + $0xc] sm:$0xf]
        %v678 = vld [vmem:[%s673 + $0x10] sm:$0xf]
        %v679 = vld [vmem:[%s673 + $0x14] sm:$0xf]
        %v680 = vld [vmem:[%s673 + $0x18] sm:$0xf]
        %v681 = vld [vmem:[%s673 + $0x1c] sm:$0xf]
        %v682 = vld [vmem:[%s673 + $0x20] sm:$0xf]
        %v683 = vld [vmem:[%s673 + $0x24] sm:$0xf]
        %v684 = vld [vmem:[%s673 + $0x28] sm:$0xf]
        %v685 = vld [vmem:[%s673 + $0x2c] sm:$0xf]
        %v686 = vld [vmem:[%s673 + $0x30] sm:$0xf]
        %v687 = vld [vmem:[%s673 + $0x34] sm:$0xf]
        %v688 = vld [vmem:[%s673 + $0x38] sm:$0xf]
        %v689 = vld [vmem:[%s673 + $0x3c] sm:$0xf]
        %v690 = vcombine.low %v660, %v664
        %v691 = vcombine.low %v668, %v672
        %v693 = vunpack.c.l.s4 1983009808
        %v694 = vunpack.c.0.s8 %v693
        %v695 = vlaneseq
        %v696 = vshrl.u32 %v695, 7
        %v697 = vsub.s32 %v694, %v696
        %v698 = vrot.slane %v690, %v697
        %v700 = vunpack.c.l.s4 1983009808
        %v701 = vunpack.c.0.s8 %v700
        %v702 = vlaneseq
        %v703 = vshrl.u32 %v702, 7
        %v704 = vsub.s32 %v701, %v703
        %v705 = vrot.slane %v691, %v704
        %v706 = vcombine.low %v698, %v705
        %v724 = vunpack.c.l.b16 %v674
        %v725 = vunpack.c.l.b16 %v675
        %v726 = vunpack.c.l.b16 %v676
        %v727 = vunpack.c.l.b16 %v677
        %v728 = vunpack.c.l.b16 %v678
        %v729 = vunpack.c.l.b16 %v679
        %v730 = vunpack.c.l.b16 %v680
        %v731 = vunpack.c.l.b16 %v681
        %v732 = vunpack.c.l.b16 %v682
        %v733 = vunpack.c.l.b16 %v683
        %v734 = vunpack.c.l.b16 %v684
        %v735 = vunpack.c.l.b16 %v685
        %v736 = vunpack.c.l.b16 %v686
        %v737 = vunpack.c.l.b16 %v687
        %v738 = vunpack.c.l.b16 %v688
        %v739 = vunpack.c.l.b16 %v689
        %v740 = vpack.c.b16 %v725, %v724
        %v741 = vpack.c.b16 %v727, %v726
        %v742 = vpack.c.b16 %v729, %v728
        %v743 = vpack.c.b16 %v731, %v730
        %v744 = vpack.c.b16 %v733, %v732
        %v745 = vpack.c.b16 %v735, %v734
        %v746 = vpack.c.b16 %v737, %v736
        %v747 = vpack.c.b16 %v739, %v738
        %756 = vmatprep.subr.bf16.mxu0 0
        %757 = vmatpush1.bf16.msra.mxu0 %v740
        %758 = vmatprep.subr.bf16.mxu0 0
        %759 = vmatpush1.bf16.msra.mxu0 %v741
        %760 = vmatprep.subr.bf16.mxu0 0
        %761 = vmatpush1.bf16.msra.mxu0 %v742
        %762 = vmatprep.subr.bf16.mxu0 0
        %763 = vmatpush1.bf16.msra.mxu0 %v743
        %764 = vmatprep.subr.bf16.mxu0 0
        %765 = vmatpush1.bf16.msra.mxu0 %v744
        %766 = vmatprep.subr.bf16.mxu0 0
        %767 = vmatpush1.bf16.msra.mxu0 %v745
        %768 = vmatprep.subr.bf16.mxu0 0
        %769 = vmatpush1.bf16.msra.mxu0 %v746
        %770 = vmatprep.subr.bf16.mxu0 0
        %771 = vmatpush1.bf16.msra.mxu0 %v747
        %772 = vmatprep.subr.bf16.mxu0 0
        %773 = vmatpush1.bf16.msra.mxu0 0
        %774 = vmatprep.subr.bf16.mxu0 0
        %775 = vmatpush1.bf16.msra.mxu0 0
        %776 = vmatprep.subr.bf16.mxu0 0
        %777 = vmatpush1.bf16.msra.mxu0 0
        %778 = vmatprep.subr.bf16.mxu0 0
        %779 = vmatpush1.bf16.msra.mxu0 0
        %780 = vmatprep.subr.bf16.mxu0 0
        %781 = vmatpush1.bf16.msra.mxu0 0
        %782 = vmatprep.subr.bf16.mxu0 0
        %783 = vmatpush1.bf16.msra.mxu0 0
        %784 = vmatprep.subr.bf16.mxu0 0
        %785 = vmatpush1.bf16.msra.mxu0 0
        %786 = vmatprep.subr.bf16.mxu0 0
        %787 = vmatpush1.bf16.msra.mxu0 0
        %788 = vmatprep.mubr.bf16.mxu0 0
        %789 = vmatmul.mubr.bf16.gmra.mrb[0].mxu0 %v706
        %v790 = vpop.f32.mrb[0].mxu0
        %v791 = vadd.f32 0.0, %v790
        %v792 = vpop.f32.mrb[0].mxu0
        %v793 = vpop.f32.mrb[0].mxu0
        %v794 = vadd.f32 0.0, %v793
        %v795 = vpop.f32.mrb[0].mxu0
        %796 = vdwg.mxu0
        %v797 = vadd.f32 %v644, %v791
        %v798 = vadd.f32 %v647, %v794
        %s799 = scalar_lea.vmem [#allocation6], 192
        %v800 = vld [vmem:[%s799] sm:$0xf]
        %v801 = vld [vmem:[%s799 + $0x4] sm:$0xf]
        %v802 = vld [vmem:[%s799 + $0x8] sm:$0xf]
        %v803 = vld [vmem:[%s799 + $0xc] sm:$0xf]
        %v804 = vld [vmem:[%s799 + $0x10] sm:$0xf]
        %v805 = vld [vmem:[%s799 + $0x14] sm:$0xf]
        %v806 = vld [vmem:[%s799 + $0x18] sm:$0xf]
        %v807 = vld [vmem:[%s799 + $0x1c] sm:$0xf]
        %v808 = vld [vmem:[%s799 + $0x20] sm:$0xf]
        %v809 = vld [vmem:[%s799 + $0x24] sm:$0xf]
        %v810 = vld [vmem:[%s799 + $0x28] sm:$0xf]
        %v811 = vld [vmem:[%s799 + $0x2c] sm:$0xf]
        %v812 = vld [vmem:[%s799 + $0x30] sm:$0xf]
        %v813 = vld [vmem:[%s799 + $0x34] sm:$0xf]
        %v814 = vld [vmem:[%s799 + $0x38] sm:$0xf]
        %v815 = vld [vmem:[%s799 + $0x3c] sm:$0xf]
        %v817 = vcombine.low %v299, %v300
        %v818 = vcombine.low %v301, %v302
        %v820 = vunpack.c.l.s4 1983009808
        %v821 = vunpack.c.0.s8 %v820
        %v822 = vlaneseq
        %v823 = vshrl.u32 %v822, 7
        %v824 = vsub.s32 %v821, %v823
        %v825 = vrot.slane %v817, %v824
        %v827 = vunpack.c.l.s4 1983009808
        %v828 = vunpack.c.0.s8 %v827
        %v829 = vlaneseq
        %v830 = vshrl.u32 %v829, 7
        %v831 = vsub.s32 %v828, %v830
        %v832 = vrot.slane %v818, %v831
        %v833 = vcombine.low %v825, %v832
        %v851 = vunpack.c.l.b16 %v800
        %v852 = vunpack.c.l.b16 %v801
        %v853 = vunpack.c.l.b16 %v802
        %v854 = vunpack.c.l.b16 %v803
        %v855 = vunpack.c.l.b16 %v804
        %v856 = vunpack.c.l.b16 %v805
        %v857 = vunpack.c.l.b16 %v806
        %v858 = vunpack.c.l.b16 %v807
        %v859 = vunpack.c.l.b16 %v808
        %v860 = vunpack.c.l.b16 %v809
        %v861 = vunpack.c.l.b16 %v810
        %v862 = vunpack.c.l.b16 %v811
        %v863 = vunpack.c.l.b16 %v812
        %v864 = vunpack.c.l.b16 %v813
        %v865 = vunpack.c.l.b16 %v814
        %v866 = vunpack.c.l.b16 %v815
        %v867 = vpack.c.b16 %v852, %v851
        %v868 = vpack.c.b16 %v854, %v853
        %v869 = vpack.c.b16 %v856, %v855
        %v870 = vpack.c.b16 %v858, %v857
        %v871 = vpack.c.b16 %v860, %v859
        %v872 = vpack.c.b16 %v862, %v861
        %v873 = vpack.c.b16 %v864, %v863
        %v874 = vpack.c.b16 %v866, %v865
        %883 = vmatprep.subr.bf16.mxu0 0
        %884 = vmatpush1.bf16.msra.mxu0 %v867
        %885 = vmatprep.subr.bf16.mxu0 0
        %886 = vmatpush1.bf16.msra.mxu0 %v868
        %887 = vmatprep.subr.bf16.mxu0 0
        %888 = vmatpush1.bf16.msra.mxu0 %v869
        %889 = vmatprep.subr.bf16.mxu0 0
        %890 = vmatpush1.bf16.msra.mxu0 %v870
        %891 = vmatprep.subr.bf16.mxu0 0
        %892 = vmatpush1.bf16.msra.mxu0 %v871
        %893 = vmatprep.subr.bf16.mxu0 0
        %894 = vmatpush1.bf16.msra.mxu0 %v872
        %895 = vmatprep.subr.bf16.mxu0 0
        %896 = vmatpush1.bf16.msra.mxu0 %v873
        %897 = vmatprep.subr.bf16.mxu0 0
        %898 = vmatpush1.bf16.msra.mxu0 %v874
        %899 = vmatprep.subr.bf16.mxu0 0
        %900 = vmatpush1.bf16.msra.mxu0 0
        %901 = vmatprep.subr.bf16.mxu0 0
        %902 = vmatpush1.bf16.msra.mxu0 0
        %903 = vmatprep.subr.bf16.mxu0 0
        %904 = vmatpush1.bf16.msra.mxu0 0
        %905 = vmatprep.subr.bf16.mxu0 0
        %906 = vmatpush1.bf16.msra.mxu0 0
        %907 = vmatprep.subr.bf16.mxu0 0
        %908 = vmatpush1.bf16.msra.mxu0 0
        %909 = vmatprep.subr.bf16.mxu0 0
        %910 = vmatpush1.bf16.msra.mxu0 0
        %911 = vmatprep.subr.bf16.mxu0 0
        %912 = vmatpush1.bf16.msra.mxu0 0
        %913 = vmatprep.subr.bf16.mxu0 0
        %914 = vmatpush1.bf16.msra.mxu0 0
        %915 = vmatprep.mubr.bf16.mxu0 0
        %916 = vmatmul.mubr.bf16.gmra.mrb[0].mxu0 %v833
        %v917 = vpop.f32.mrb[0].mxu0
        %v918 = vadd.f32 0.0, %v917
        %v919 = vpop.f32.mrb[0].mxu0
        %v920 = vpop.f32.mrb[0].mxu0
        %v921 = vadd.f32 0.0, %v920
        %v922 = vpop.f32.mrb[0].mxu0
        %923 = vdwg.mxu0
        %v924 = vadd.f32 %v797, %v918
        %v925 = vadd.f32 %v798, %v921
        %v927 = vunpack.c.l.s4 1983009808
        %v928 = vunpack.c.0.s8 %v927
        %v929 = vlaneseq
        %v930 = vshrl.u32 %v929, 7
        %v931 = vsub.s32 %v928, %v930
        %v932 = vrot.slane %v302, %v931
        %v933 = vcombine.high %v932, %v932
        %v935 = vshrl.u32 %v932, 16
        %v937 = vrot.slane %v935, 6
        %v938 = vshll.u32 %v932, 16
        %v940 = vrot.slane %v938, 7
        %v941 = vor.u32 %v937, %v940
        %v942 = vrot.slane %v941, 2
        %v944 = vshll.u32 %v933, 16
        %v946 = vrot.slane %v944, 7
        %v947 = vsel %vm362, %v942, %v946
        %s948 = scalar_lea.vmem [#allocation6], 256
        %v949 = vld [vmem:[%s948] sm:$0xf]
        %v950 = vld [vmem:[%s948 + $0x4] sm:$0xf]
        %v951 = vld [vmem:[%s948 + $0x8] sm:$0xf]
        %v952 = vld [vmem:[%s948 + $0xc] sm:$0xf]
        %v953 = vld [vmem:[%s948 + $0x10] sm:$0xf]
        %v954 = vld [vmem:[%s948 + $0x14] sm:$0xf]
        %v955 = vld [vmem:[%s948 + $0x18] sm:$0xf]
        %v956 = vld [vmem:[%s948 + $0x1c] sm:$0xf]
        %v957 = vld [vmem:[%s948 + $0x20] sm:$0xf]
        %v958 = vld [vmem:[%s948 + $0x24] sm:$0xf]
        %v959 = vld [vmem:[%s948 + $0x28] sm:$0xf]
        %v960 = vld [vmem:[%s948 + $0x2c] sm:$0xf]
        %v961 = vld [vmem:[%s948 + $0x30] sm:$0xf]
        %v962 = vld [vmem:[%s948 + $0x34] sm:$0xf]
        %v963 = vld [vmem:[%s948 + $0x38] sm:$0xf]
        %v964 = vld [vmem:[%s948 + $0x3c] sm:$0xf]
        %v965 = vcombine.low %v390, %v404
        %v966 = vcombine.low %v418, %v947
        %v968 = vunpack.c.l.s4 1983009808
        %v969 = vunpack.c.0.s8 %v968
        %v970 = vlaneseq
        %v971 = vshrl.u32 %v970, 7
        %v972 = vsub.s32 %v969, %v971
        %v973 = vrot.slane %v965, %v972
        %v975 = vunpack.c.l.s4 1983009808
        %v976 = vunpack.c.0.s8 %v975
        %v977 = vlaneseq
        %v978 = vshrl.u32 %v977, 7
        %v979 = vsub.s32 %v976, %v978
        %v980 = vrot.slane %v966, %v979
        %v981 = vcombine.low %v973, %v980
        %v999 = vunpack.c.l.b16 %v949
        %v1000 = vunpack.c.l.b16 %v950
        %v1001 = vunpack.c.l.b16 %v951
        %v1002 = vunpack.c.l.b16 %v952
        %v1003 = vunpack.c.l.b16 %v953
        %v1004 = vunpack.c.l.b16 %v954
        %v1005 = vunpack.c.l.b16 %v955
        %v1006 = vunpack.c.l.b16 %v956
        %v1007 = vunpack.c.l.b16 %v957
        %v1008 = vunpack.c.l.b16 %v958
        %v1009 = vunpack.c.l.b16 %v959
        %v1010 = vunpack.c.l.b16 %v960
        %v1011 = vunpack.c.l.b16 %v961
        %v1012 = vunpack.c.l.b16 %v962
        %v1013 = vunpack.c.l.b16 %v963
        %v1014 = vunpack.c.l.b16 %v964
        %v1015 = vpack.c.b16 %v1000, %v999
        %v1016 = vpack.c.b16 %v1002, %v1001
        %v1017 = vpack.c.b16 %v1004, %v1003
        %v1018 = vpack.c.b16 %v1006, %v1005
        %v1019 = vpack.c.b16 %v1008, %v1007
        %v1020 = vpack.c.b16 %v1010, %v1009
        %v1021 = vpack.c.b16 %v1012, %v1011
        %v1022 = vpack.c.b16 %v1014, %v1013
        %1031 = vmatprep.subr.bf16.mxu0 0
        %1032 = vmatpush1.bf16.msra.mxu0 %v1015
        %1033 = vmatprep.subr.bf16.mxu0 0
        %1034 = vmatpush1.bf16.msra.mxu0 %v1016
        %1035 = vmatprep.subr.bf16.mxu0 0
        %1036 = vmatpush1.bf16.msra.mxu0 %v1017
        %1037 = vmatprep.subr.bf16.mxu0 0
        %1038 = vmatpush1.bf16.msra.mxu0 %v1018
        %1039 = vmatprep.subr.bf16.mxu0 0
        %1040 = vmatpush1.bf16.msra.mxu0 %v1019
        %1041 = vmatprep.subr.bf16.mxu0 0
        %1042 = vmatpush1.bf16.msra.mxu0 %v1020
        %1043 = vmatprep.subr.bf16.mxu0 0
        %1044 = vmatpush1.bf16.msra.mxu0 %v1021
        %1045 = vmatprep.subr.bf16.mxu0 0
        %1046 = vmatpush1.bf16.msra.mxu0 %v1022
        %1047 = vmatprep.subr.bf16.mxu0 0
        %1048 = vmatpush1.bf16.msra.mxu0 0
        %1049 = vmatprep.subr.bf16.mxu0 0
        %1050 = vmatpush1.bf16.msra.mxu0 0
        %1051 = vmatprep.subr.bf16.mxu0 0
        %1052 = vmatpush1.bf16.msra.mxu0 0
        %1053 = vmatprep.subr.bf16.mxu0 0
        %1054 = vmatpush1.bf16.msra.mxu0 0
        %1055 = vmatprep.subr.bf16.mxu0 0
        %1056 = vmatpush1.bf16.msra.mxu0 0
        %1057 = vmatprep.subr.bf16.mxu0 0
        %1058 = vmatpush1.bf16.msra.mxu0 0
        %1059 = vmatprep.subr.bf16.mxu0 0
        %1060 = vmatpush1.bf16.msra.mxu0 0
        %1061 = vmatprep.subr.bf16.mxu0 0
        %1062 = vmatpush1.bf16.msra.mxu0 0
        %1063 = vmatprep.mubr.bf16.mxu0 0
        %1064 = vmatmul.mubr.bf16.gmra.mrb[0].mxu0 %v981
        %v1065 = vpop.f32.mrb[0].mxu0
        %v1066 = vadd.f32 0.0, %v1065
        %v1067 = vpop.f32.mrb[0].mxu0
        %v1068 = vpop.f32.mrb[0].mxu0
        %v1069 = vadd.f32 0.0, %v1068
        %v1070 = vpop.f32.mrb[0].mxu0
        %1071 = vdwg.mxu0
        %v1072 = vadd.f32 %v924, %v1066
        %v1073 = vadd.f32 %v925, %v1069
        %v1074 = vrot.slane %v932, 7
        %v1075 = vrot.slane %v1074, 2
        %v1076 = vrot.slane %v933, 7
        %v1077 = vsel %vm656, %v1075, %v1076
        %s1078 = scalar_lea.vmem [#allocation6], 320
        %v1079 = vld [vmem:[%s1078] sm:$0xf]
        %v1080 = vld [vmem:[%s1078 + $0x4] sm:$0xf]
        %v1081 = vld [vmem:[%s1078 + $0x8] sm:$0xf]
        %v1082 = vld [vmem:[%s1078 + $0xc] sm:$0xf]
        %v1083 = vld [vmem:[%s1078 + $0x10] sm:$0xf]
        %v1084 = vld [vmem:[%s1078 + $0x14] sm:$0xf]
        %v1085 = vld [vmem:[%s1078 + $0x18] sm:$0xf]
        %v1086 = vld [vmem:[%s1078 + $0x1c] sm:$0xf]
        %v1087 = vld [vmem:[%s1078 + $0x20] sm:$0xf]
        %v1088 = vld [vmem:[%s1078 + $0x24] sm:$0xf]
        %v1089 = vld [vmem:[%s1078 + $0x28] sm:$0xf]
        %v1090 = vld [vmem:[%s1078 + $0x2c] sm:$0xf]
        %v1091 = vld [vmem:[%s1078 + $0x30] sm:$0xf]
        %v1092 = vld [vmem:[%s1078 + $0x34] sm:$0xf]
        %v1093 = vld [vmem:[%s1078 + $0x38] sm:$0xf]
        %v1094 = vld [vmem:[%s1078 + $0x3c] sm:$0xf]
        %v1095 = vcombine.low %v664, %v668
        %v1096 = vcombine.low %v672, %v1077
        %v1098 = vunpack.c.l.s4 1983009808
        %v1099 = vunpack.c.0.s8 %v1098
        %v1100 = vlaneseq
        %v1101 = vshrl.u32 %v1100, 7
        %v1102 = vsub.s32 %v1099, %v1101
        %v1103 = vrot.slane %v1095, %v1102
        %v1105 = vunpack.c.l.s4 1983009808
        %v1106 = vunpack.c.0.s8 %v1105
        %v1107 = vlaneseq
        %v1108 = vshrl.u32 %v1107, 7
        %v1109 = vsub.s32 %v1106, %v1108
        %v1110 = vrot.slane %v1096, %v1109
        %v1111 = vcombine.low %v1103, %v1110
        %v1129 = vunpack.c.l.b16 %v1079
        %v1130 = vunpack.c.l.b16 %v1080
        %v1131 = vunpack.c.l.b16 %v1081
        %v1132 = vunpack.c.l.b16 %v1082
        %v1133 = vunpack.c.l.b16 %v1083
        %v1134 = vunpack.c.l.b16 %v1084
        %v1135 = vunpack.c.l.b16 %v1085
        %v1136 = vunpack.c.l.b16 %v1086
        %v1137 = vunpack.c.l.b16 %v1087
        %v1138 = vunpack.c.l.b16 %v1088
        %v1139 = vunpack.c.l.b16 %v1089
        %v1140 = vunpack.c.l.b16 %v1090
        %v1141 = vunpack.c.l.b16 %v1091
        %v1142 = vunpack.c.l.b16 %v1092
        %v1143 = vunpack.c.l.b16 %v1093
        %v1144 = vunpack.c.l.b16 %v1094
        %v1145 = vpack.c.b16 %v1130, %v1129
        %v1146 = vpack.c.b16 %v1132, %v1131
        %v1147 = vpack.c.b16 %v1134, %v1133
        %v1148 = vpack.c.b16 %v1136, %v1135
        %v1149 = vpack.c.b16 %v1138, %v1137
        %v1150 = vpack.c.b16 %v1140, %v1139
        %v1151 = vpack.c.b16 %v1142, %v1141
        %v1152 = vpack.c.b16 %v1144, %v1143
        %1161 = vmatprep.subr.bf16.mxu0 0
        %1162 = vmatpush1.bf16.msra.mxu0 %v1145
        %1163 = vmatprep.subr.bf16.mxu0 0
        %1164 = vmatpush1.bf16.msra.mxu0 %v1146
        %1165 = vmatprep.subr.bf16.mxu0 0
        %1166 = vmatpush1.bf16.msra.mxu0 %v1147
        %1167 = vmatprep.subr.bf16.mxu0 0
        %1168 = vmatpush1.bf16.msra.mxu0 %v1148
        %1169 = vmatprep.subr.bf16.mxu0 0
        %1170 = vmatpush1.bf16.msra.mxu0 %v1149
        %1171 = vmatprep.subr.bf16.mxu0 0
        %1172 = vmatpush1.bf16.msra.mxu0 %v1150
        %1173 = vmatprep.subr.bf16.mxu0 0
        %1174 = vmatpush1.bf16.msra.mxu0 %v1151
        %1175 = vmatprep.subr.bf16.mxu0 0
        %1176 = vmatpush1.bf16.msra.mxu0 %v1152
        %1177 = vmatprep.subr.bf16.mxu0 0
        %1178 = vmatpush1.bf16.msra.mxu0 0
        %1179 = vmatprep.subr.bf16.mxu0 0
        %1180 = vmatpush1.bf16.msra.mxu0 0
        %1181 = vmatprep.subr.bf16.mxu0 0
        %1182 = vmatpush1.bf16.msra.mxu0 0
        %1183 = vmatprep.subr.bf16.mxu0 0
        %1184 = vmatpush1.bf16.msra.mxu0 0
        %1185 = vmatprep.subr.bf16.mxu0 0
        %1186 = vmatpush1.bf16.msra.mxu0 0
        %1187 = vmatprep.subr.bf16.mxu0 0
        %1188 = vmatpush1.bf16.msra.mxu0 0
        %1189 = vmatprep.subr.bf16.mxu0 0
        %1190 = vmatpush1.bf16.msra.mxu0 0
        %1191 = vmatprep.subr.bf16.mxu0 0
        %1192 = vmatpush1.bf16.msra.mxu0 0
        %1193 = vmatprep.mubr.bf16.mxu0 0
        %1194 = vmatmul.mubr.bf16.gmra.mrb[0].mxu0 %v1111
        %v1195 = vpop.f32.mrb[0].mxu0
        %v1196 = vadd.f32 0.0, %v1195
        %v1197 = vpop.f32.mrb[0].mxu0
        %v1198 = vpop.f32.mrb[0].mxu0
        %v1199 = vadd.f32 0.0, %v1198
        %v1200 = vpop.f32.mrb[0].mxu0
        %1201 = vdwg.mxu0
        %v1202 = vadd.f32 %v1072, %v1196
        %v1203 = vadd.f32 %v1073, %v1199
        %s1204 = scalar_lea.vmem [#allocation6], 384
        %v1205 = vld [vmem:[%s1204] sm:$0xf]
        %v1206 = vld [vmem:[%s1204 + $0x4] sm:$0xf]
        %v1207 = vld [vmem:[%s1204 + $0x8] sm:$0xf]
        %v1208 = vld [vmem:[%s1204 + $0xc] sm:$0xf]
        %v1209 = vld [vmem:[%s1204 + $0x10] sm:$0xf]
        %v1210 = vld [vmem:[%s1204 + $0x14] sm:$0xf]
        %v1211 = vld [vmem:[%s1204 + $0x18] sm:$0xf]
        %v1212 = vld [vmem:[%s1204 + $0x1c] sm:$0xf]
        %v1213 = vld [vmem:[%s1204 + $0x20] sm:$0xf]
        %v1214 = vld [vmem:[%s1204 + $0x24] sm:$0xf]
        %v1215 = vld [vmem:[%s1204 + $0x28] sm:$0xf]
        %v1216 = vld [vmem:[%s1204 + $0x2c] sm:$0xf]
        %v1217 = vld [vmem:[%s1204 + $0x30] sm:$0xf]
        %v1218 = vld [vmem:[%s1204 + $0x34] sm:$0xf]
        %v1219 = vld [vmem:[%s1204 + $0x38] sm:$0xf]
        %v1220 = vld [vmem:[%s1204 + $0x3c] sm:$0xf]
        %v1222 = vcombine.low %v302, %v303
        %v1224 = vunpack.c.l.s4 1983009808
        %v1225 = vunpack.c.0.s8 %v1224
        %v1226 = vlaneseq
        %v1227 = vshrl.u32 %v1226, 7
        %v1228 = vsub.s32 %v1225, %v1227
        %v1229 = vrot.slane %v1222, %v1228
        %v1230 = vcombine.low %v558, %v1229
        %v1248 = vunpack.c.l.b16 %v1205
        %v1249 = vunpack.c.l.b16 %v1206
        %v1250 = vunpack.c.l.b16 %v1207
        %v1251 = vunpack.c.l.b16 %v1208
        %v1252 = vunpack.c.l.b16 %v1209
        %v1253 = vunpack.c.l.b16 %v1210
        %v1254 = vunpack.c.l.b16 %v1211
        %v1255 = vunpack.c.l.b16 %v1212
        %v1256 = vunpack.c.l.b16 %v1213
        %v1257 = vunpack.c.l.b16 %v1214
        %v1258 = vunpack.c.l.b16 %v1215
        %v1259 = vunpack.c.l.b16 %v1216
        %v1260 = vunpack.c.l.b16 %v1217
        %v1261 = vunpack.c.l.b16 %v1218
        %v1262 = vunpack.c.l.b16 %v1219
        %v1263 = vunpack.c.l.b16 %v1220
        %v1264 = vpack.c.b16 %v1249, %v1248
        %v1265 = vpack.c.b16 %v1251, %v1250
        %v1266 = vpack.c.b16 %v1253, %v1252
        %v1267 = vpack.c.b16 %v1255, %v1254
        %v1268 = vpack.c.b16 %v1257, %v1256
        %v1269 = vpack.c.b16 %v1259, %v1258
        %v1270 = vpack.c.b16 %v1261, %v1260
        %v1271 = vpack.c.b16 %v1263, %v1262
        %1280 = vmatprep.subr.bf16.mxu0 0
        %1281 = vmatpush1.bf16.msra.mxu0 %v1264
        %1282 = vmatprep.subr.bf16.mxu0 0
        %1283 = vmatpush1.bf16.msra.mxu0 %v1265
        %1284 = vmatprep.subr.bf16.mxu0 0
        %1285 = vmatpush1.bf16.msra.mxu0 %v1266
        %1286 = vmatprep.subr.bf16.mxu0 0
        %1287 = vmatpush1.bf16.msra.mxu0 %v1267
        %1288 = vmatprep.subr.bf16.mxu0 0
        %1289 = vmatpush1.bf16.msra.mxu0 %v1268
        %1290 = vmatprep.subr.bf16.mxu0 0
        %1291 = vmatpush1.bf16.msra.mxu0 %v1269
        %1292 = vmatprep.subr.bf16.mxu0 0
        %1293 = vmatpush1.bf16.msra.mxu0 %v1270
        %1294 = vmatprep.subr.bf16.mxu0 0
        %1295 = vmatpush1.bf16.msra.mxu0 %v1271
        %1296 = vmatprep.subr.bf16.mxu0 0
        %1297 = vmatpush1.bf16.msra.mxu0 0
        %1298 = vmatprep.subr.bf16.mxu0 0
        %1299 = vmatpush1.bf16.msra.mxu0 0
        %1300 = vmatprep.subr.bf16.mxu0 0
        %1301 = vmatpush1.bf16.msra.mxu0 0
        %1302 = vmatprep.subr.bf16.mxu0 0
        %1303 = vmatpush1.bf16.msra.mxu0 0
        %1304 = vmatprep.subr.bf16.mxu0 0
        %1305 = vmatpush1.bf16.msra.mxu0 0
        %1306 = vmatprep.subr.bf16.mxu0 0
        %1307 = vmatpush1.bf16.msra.mxu0 0
        %1308 = vmatprep.subr.bf16.mxu0 0
        %1309 = vmatpush1.bf16.msra.mxu0 0
        %1310 = vmatprep.subr.bf16.mxu0 0
        %1311 = vmatpush1.bf16.msra.mxu0 0
        %1312 = vmatprep.mubr.bf16.mxu0 0
        %1313 = vmatmul.mubr.bf16.gmra.mrb[0].mxu0 %v1230
        %v1314 = vpop.f32.mrb[0].mxu0
        %v1315 = vadd.f32 0.0, %v1314
        %v1316 = vpop.f32.mrb[0].mxu0
        %v1317 = vpop.f32.mrb[0].mxu0
        %v1318 = vadd.f32 0.0, %v1317
        %v1319 = vpop.f32.mrb[0].mxu0
        %1320 = vdwg.mxu0
        %v1321 = vadd.f32 %v1202, %v1315
        %v1322 = vadd.f32 %v1203, %v1318
        %v1324 = vunpack.c.l.s4 1983009808
        %v1325 = vunpack.c.0.s8 %v1324
        %v1326 = vlaneseq
        %v1327 = vshrl.u32 %v1326, 7
        %v1328 = vsub.s32 %v1325, %v1327
        %v1329 = vrot.slane %v303, %v1328
        %v1330 = vcombine.high %v1329, %v1329
        %v1332 = vshrl.u32 %v1329, 16
        %v1334 = vrot.slane %v1332, 6
        %v1335 = vshll.u32 %v1329, 16
        %v1337 = vrot.slane %v1335, 7
        %v1338 = vor.u32 %v1334, %v1337
        %v1339 = vrot.slane %v1338, 2
        %v1341 = vshll.u32 %v1330, 16
        %v1343 = vrot.slane %v1341, 7
        %v1344 = vsel %vm362, %v1339, %v1343
        %s1345 = scalar_lea.vmem [#allocation6], 448
        %v1346 = vld [vmem:[%s1345] sm:$0xf]
        %v1347 = vld [vmem:[%s1345 + $0x4] sm:$0xf]
        %v1348 = vld [vmem:[%s1345 + $0x8] sm:$0xf]
        %v1349 = vld [vmem:[%s1345 + $0xc] sm:$0xf]
        %v1350 = vld [vmem:[%s1345 + $0x10] sm:$0xf]
        %v1351 = vld [vmem:[%s1345 + $0x14] sm:$0xf]
        %v1352 = vld [vmem:[%s1345 + $0x18] sm:$0xf]
        %v1353 = vld [vmem:[%s1345 + $0x1c] sm:$0xf]
        %v1354 = vld [vmem:[%s1345 + $0x20] sm:$0xf]
        %v1355 = vld [vmem:[%s1345 + $0x24] sm:$0xf]
        %v1356 = vld [vmem:[%s1345 + $0x28] sm:$0xf]
        %v1357 = vld [vmem:[%s1345 + $0x2c] sm:$0xf]
        %v1358 = vld [vmem:[%s1345 + $0x30] sm:$0xf]
        %v1359 = vld [vmem:[%s1345 + $0x34] sm:$0xf]
        %v1360 = vld [vmem:[%s1345 + $0x38] sm:$0xf]
        %v1361 = vld [vmem:[%s1345 + $0x3c] sm:$0xf]
        %v1362 = vcombine.low %v947, %v1344
        %v1364 = vunpack.c.l.s4 1983009808
        %v1365 = vunpack.c.0.s8 %v1364
        %v1366 = vlaneseq
        %v1367 = vshrl.u32 %v1366, 7
        %v1368 = vsub.s32 %v1365, %v1367
        %v1369 = vrot.slane %v1362, %v1368
        %v1370 = vcombine.low %v451, %v1369
        %v1388 = vunpack.c.l.b16 %v1346
        %v1389 = vunpack.c.l.b16 %v1347
        %v1390 = vunpack.c.l.b16 %v1348
        %v1391 = vunpack.c.l.b16 %v1349
        %v1392 = vunpack.c.l.b16 %v1350
        %v1393 = vunpack.c.l.b16 %v1351
        %v1394 = vunpack.c.l.b16 %v1352
        %v1395 = vunpack.c.l.b16 %v1353
        %v1396 = vunpack.c.l.b16 %v1354
        %v1397 = vunpack.c.l.b16 %v1355
        %v1398 = vunpack.c.l.b16 %v1356
        %v1399 = vunpack.c.l.b16 %v1357
        %v1400 = vunpack.c.l.b16 %v1358
        %v1401 = vunpack.c.l.b16 %v1359
        %v1402 = vunpack.c.l.b16 %v1360
        %v1403 = vunpack.c.l.b16 %v1361
        %v1404 = vpack.c.b16 %v1389, %v1388
        %v1405 = vpack.c.b16 %v1391, %v1390
        %v1406 = vpack.c.b16 %v1393, %v1392
        %v1407 = vpack.c.b16 %v1395, %v1394
        %v1408 = vpack.c.b16 %v1397, %v1396
        %v1409 = vpack.c.b16 %v1399, %v1398
        %v1410 = vpack.c.b16 %v1401, %v1400
        %v1411 = vpack.c.b16 %v1403, %v1402
        %1420 = vmatprep.subr.bf16.mxu0 0
        %1421 = vmatpush1.bf16.msra.mxu0 %v1404
        %1422 = vmatprep.subr.bf16.mxu0 0
        %1423 = vmatpush1.bf16.msra.mxu0 %v1405
        %1424 = vmatprep.subr.bf16.mxu0 0
        %1425 = vmatpush1.bf16.msra.mxu0 %v1406
        %1426 = vmatprep.subr.bf16.mxu0 0
        %1427 = vmatpush1.bf16.msra.mxu0 %v1407
        %1428 = vmatprep.subr.bf16.mxu0 0
        %1429 = vmatpush1.bf16.msra.mxu0 %v1408
        %1430 = vmatprep.subr.bf16.mxu0 0
        %1431 = vmatpush1.bf16.msra.mxu0 %v1409
        %1432 = vmatprep.subr.bf16.mxu0 0
        %1433 = vmatpush1.bf16.msra.mxu0 %v1410
        %1434 = vmatprep.subr.bf16.mxu0 0
        %1435 = vmatpush1.bf16.msra.mxu0 %v1411
        %1436 = vmatprep.subr.bf16.mxu0 0
        %1437 = vmatpush1.bf16.msra.mxu0 0
        %1438 = vmatprep.subr.bf16.mxu0 0
        %1439 = vmatpush1.bf16.msra.mxu0 0
        %1440 = vmatprep.subr.bf16.mxu0 0
        %1441 = vmatpush1.bf16.msra.mxu0 0
        %1442 = vmatprep.subr.bf16.mxu0 0
        %1443 = vmatpush1.bf16.msra.mxu0 0
        %1444 = vmatprep.subr.bf16.mxu0 0
        %1445 = vmatpush1.bf16.msra.mxu0 0
        %1446 = vmatprep.subr.bf16.mxu0 0
        %1447 = vmatpush1.bf16.msra.mxu0 0
        %1448 = vmatprep.subr.bf16.mxu0 0
        %1449 = vmatpush1.bf16.msra.mxu0 0
        %1450 = vmatprep.subr.bf16.mxu0 0
        %1451 = vmatpush1.bf16.msra.mxu0 0
        %1452 = vmatprep.mubr.bf16.mxu0 0
        %1453 = vmatmul.mubr.bf16.gmra.mrb[0].mxu0 %v1370
        %v1454 = vpop.f32.mrb[0].mxu0
        %v1455 = vadd.f32 0.0, %v1454
        %v1456 = vpop.f32.mrb[0].mxu0
        %v1457 = vpop.f32.mrb[0].mxu0
        %v1458 = vadd.f32 0.0, %v1457
        %v1459 = vpop.f32.mrb[0].mxu0
        %1460 = vdwg.mxu0
        %v1461 = vadd.f32 %v1321, %v1455
        %v1462 = vadd.f32 %v1322, %v1458
        %v1463 = vrot.slane %v1329, 7
        %v1464 = vrot.slane %v1463, 2
        %v1465 = vrot.slane %v1330, 7
        %v1466 = vsel %vm656, %v1464, %v1465
        %s1467 = scalar_lea.vmem [#allocation6], 512
        %v1468 = vld [vmem:[%s1467] sm:$0xf]
        %v1469 = vld [vmem:[%s1467 + $0x4] sm:$0xf]
        %v1470 = vld [vmem:[%s1467 + $0x8] sm:$0xf]
        %v1471 = vld [vmem:[%s1467 + $0xc] sm:$0xf]
        %v1472 = vld [vmem:[%s1467 + $0x10] sm:$0xf]
        %v1473 = vld [vmem:[%s1467 + $0x14] sm:$0xf]
        %v1474 = vld [vmem:[%s1467 + $0x18] sm:$0xf]
        %v1475 = vld [vmem:[%s1467 + $0x1c] sm:$0xf]
        %v1476 = vld [vmem:[%s1467 + $0x20] sm:$0xf]
        %v1477 = vld [vmem:[%s1467 + $0x24] sm:$0xf]
        %v1478 = vld [vmem:[%s1467 + $0x28] sm:$0xf]
        %v1479 = vld [vmem:[%s1467 + $0x2c] sm:$0xf]
        %v1480 = vld [vmem:[%s1467 + $0x30] sm:$0xf]
        %v1481 = vld [vmem:[%s1467 + $0x34] sm:$0xf]
        %v1482 = vld [vmem:[%s1467 + $0x38] sm:$0xf]
        %v1483 = vld [vmem:[%s1467 + $0x3c] sm:$0xf]
        %v1484 = vcombine.low %v1077, %v1466
        %v1486 = vunpack.c.l.s4 1983009808
        %v1487 = vunpack.c.0.s8 %v1486
        %v1488 = vlaneseq
        %v1489 = vshrl.u32 %v1488, 7
        %v1490 = vsub.s32 %v1487, %v1489
        %v1491 = vrot.slane %v1484, %v1490
        %v1492 = vcombine.low %v705, %v1491
        %v1510 = vunpack.c.l.b16 %v1468
        %v1511 = vunpack.c.l.b16 %v1469
        %v1512 = vunpack.c.l.b16 %v1470
        %v1513 = vunpack.c.l.b16 %v1471
        %v1514 = vunpack.c.l.b16 %v1472
        %v1515 = vunpack.c.l.b16 %v1473
        %v1516 = vunpack.c.l.b16 %v1474
        %v1517 = vunpack.c.l.b16 %v1475
        %v1518 = vunpack.c.l.b16 %v1476
        %v1519 = vunpack.c.l.b16 %v1477
        %v1520 = vunpack.c.l.b16 %v1478
        %v1521 = vunpack.c.l.b16 %v1479
        %v1522 = vunpack.c.l.b16 %v1480
        %v1523 = vunpack.c.l.b16 %v1481
        %v1524 = vunpack.c.l.b16 %v1482
        %v1525 = vunpack.c.l.b16 %v1483
        %v1526 = vpack.c.b16 %v1511, %v1510
        %v1527 = vpack.c.b16 %v1513, %v1512
        %v1528 = vpack.c.b16 %v1515, %v1514
        %v1529 = vpack.c.b16 %v1517, %v1516
        %v1530 = vpack.c.b16 %v1519, %v1518
        %v1531 = vpack.c.b16 %v1521, %v1520
        %v1532 = vpack.c.b16 %v1523, %v1522
        %v1533 = vpack.c.b16 %v1525, %v1524
        %1542 = vmatprep.subr.bf16.mxu0 0
        %1543 = vmatpush1.bf16.msra.mxu0 %v1526
        %1544 = vmatprep.subr.bf16.mxu0 0
        %1545 = vmatpush1.bf16.msra.mxu0 %v1527
        %1546 = vmatprep.subr.bf16.mxu0 0
        %1547 = vmatpush1.bf16.msra.mxu0 %v1528
        %1548 = vmatprep.subr.bf16.mxu0 0
        %1549 = vmatpush1.bf16.msra.mxu0 %v1529
        %1550 = vmatprep.subr.bf16.mxu0 0
        %1551 = vmatpush1.bf16.msra.mxu0 %v1530
        %1552 = vmatprep.subr.bf16.mxu0 0
        %1553 = vmatpush1.bf16.msra.mxu0 %v1531
        %1554 = vmatprep.subr.bf16.mxu0 0
        %1555 = vmatpush1.bf16.msra.mxu0 %v1532
        %1556 = vmatprep.subr.bf16.mxu0 0
        %1557 = vmatpush1.bf16.msra.mxu0 %v1533
        %1558 = vmatprep.subr.bf16.mxu0 0
        %1559 = vmatpush1.bf16.msra.mxu0 0
        %1560 = vmatprep.subr.bf16.mxu0 0
        %1561 = vmatpush1.bf16.msra.mxu0 0
        %1562 = vmatprep.subr.bf16.mxu0 0
        %1563 = vmatpush1.bf16.msra.mxu0 0
        %1564 = vmatprep.subr.bf16.mxu0 0
        %1565 = vmatpush1.bf16.msra.mxu0 0
        %1566 = vmatprep.subr.bf16.mxu0 0
        %1567 = vmatpush1.bf16.msra.mxu0 0
        %1568 = vmatprep.subr.bf16.mxu0 0
        %1569 = vmatpush1.bf16.msra.mxu0 0
        %1570 = vmatprep.subr.bf16.mxu0 0
        %1571 = vmatpush1.bf16.msra.mxu0 0
        %1572 = vmatprep.subr.bf16.mxu0 0
        %1573 = vmatpush1.bf16.msra.mxu0 0
        %1574 = vmatprep.mubr.bf16.mxu0 0
        %1575 = vmatmul.mubr.bf16.gmra.mrb[0].mxu0 %v1492
        %v1576 = vpop.f32.mrb[0].mxu0
        %v1577 = vadd.f32 0.0, %v1576
        %v1578 = vpop.f32.mrb[0].mxu0
        %v1579 = vpop.f32.mrb[0].mxu0
        %v1580 = vadd.f32 0.0, %v1579
        %v1581 = vpop.f32.mrb[0].mxu0
        %1582 = vdwg.mxu0
        %v1583 = vadd.f32 %v1461, %v1577
        %v1584 = vadd.f32 %v1462, %v1580
        %v1585 = vld [vmem:[#allocation8] sm:$0x1]
        %v1587 = vlaneseq
        %v1588 = vshrl.u32 %v1587, 7
        %v1589 = vsub.s32 0, %v1588
        %v1590 = vrot.slane %v1585, %v1589
        %v1592 = vadd.f32 %v1583, %v1590
        %v1593 = vadd.f32 %v1584, %v1590
        %v1594 = vmax.f32 %v1592, 0.0
        %v1595 = vmax.f32 %v1593, 0.0
        %1596 = vst [vmem:[#allocation2] sm:$0x3f] 0.0
        %s1597 = scalar_lea.vmem [#allocation2], 40
        %1598 = vst [vmem:[%s1597] sm:$0x3f] 0.0
        %1599 = vst [vmem:[#allocation2] sm:$0x1] 0.0
        %1600 = vst [vmem:[#allocation2 + $0x8] sm:$0x1] 0.0
        %1601 = vst [vmem:[#allocation2 + $0x10] sm:$0x1] 0.0
        %1602 = vst [vmem:[#allocation2 + $0x18] sm:$0x1] 0.0
        %1603 = vst [vmem:[#allocation2 + $0x20] sm:$0x1] 0.0
        %1604 = vst [vmem:[#allocation2 + $0x28] sm:$0x1] 0.0
        %1605 = vst [vmem:[#allocation2 + $0x5] sm:$0x1] 0.0
        %1606 = vst [vmem:[#allocation2 + $0xd] sm:$0x1] 0.0
        %1607 = vst [vmem:[#allocation2 + $0x15] sm:$0x1] 0.0
        %1608 = vst [vmem:[#allocation2 + $0x1d] sm:$0x1] 0.0
        %1609 = vst [vmem:[#allocation2 + $0x25] sm:$0x1] 0.0
        %1610 = vst [vmem:[#allocation2 + $0x2d] sm:$0x1] 0.0
        %v1613 = vcombine.high %v1594, %v1594
        %v1614 = vcombine.high %v1595, %v1595
        %s1617 = scalar_lea.vmem [#allocation2], 8
        %1618 = vst [vmem:[%s1617 + $0x1] sm:$0xf] %v1594
        %1619 = vst [vmem:[%s1617 + $0x9] sm:$0xf] %v1613
        %1620 = vst [vmem:[%s1617 + $0x11] sm:$0xf] %v1595
        %1621 = vst [vmem:[%s1617 + $0x19] sm:$0xf] %v1614
        %v1622 = vld [vmem:[#allocation2] sm:$0xf]
        %v1623 = vld [vmem:[#allocation2 + $0x8] sm:$0xf]
        %v1624 = vld [vmem:[#allocation2 + $0x10] sm:$0xf]
        %v1625 = vld [vmem:[#allocation2 + $0x18] sm:$0xf]
        %v1630 = vcombine.low %v1622, %v1623
        %v1631 = vcombine.low %v1624, %v1625
        %v1634 = vpack.c.bf16 %v1631, %v1630
        %v1635 = vld [vmem:[#allocation9] sm:$0xf]
        %v1636 = vld [vmem:[#allocation9 + $0x4] sm:$0xf]
        %v1637 = vld [vmem:[#allocation9 + $0x8] sm:$0xf]
        %v1638 = vld [vmem:[#allocation9 + $0xc] sm:$0xf]
        %v1639 = vld [vmem:[#allocation9 + $0x10] sm:$0xf]
        %v1640 = vld [vmem:[#allocation9 + $0x14] sm:$0xf]
        %v1641 = vld [vmem:[#allocation9 + $0x18] sm:$0xf]
        %v1642 = vld [vmem:[#allocation9 + $0x1c] sm:$0xf]
        %v1643 = vld [vmem:[#allocation9 + $0x20] sm:$0xf]
        %v1644 = vld [vmem:[#allocation9 + $0x24] sm:$0xf]
        %v1645 = vld [vmem:[#allocation9 + $0x28] sm:$0xf]
        %v1646 = vld [vmem:[#allocation9 + $0x2c] sm:$0xf]
        %v1647 = vld [vmem:[#allocation9 + $0x30] sm:$0xf]
        %v1648 = vld [vmem:[#allocation9 + $0x34] sm:$0xf]
        %v1649 = vld [vmem:[#allocation9 + $0x38] sm:$0xf]
        %v1650 = vld [vmem:[#allocation9 + $0x3c] sm:$0xf]
        %v1651 = vld [vmem:[#allocation2 + $0x1] sm:$0xf]
        %v1652 = vld [vmem:[#allocation2 + $0x9] sm:$0xf]
        %v1653 = vld [vmem:[#allocation2 + $0x11] sm:$0xf]
        %v1654 = vld [vmem:[#allocation2 + $0x19] sm:$0xf]
        %v1659 = vcombine.low %v1651, %v1652
        %v1660 = vcombine.low %v1653, %v1654
        %v1663 = vpack.c.bf16 %v1660, %v1659
        %s1664 = scalar_lea.vmem [#allocation9], 64
        %v1665 = vld [vmem:[%s1664] sm:$0xf]
        %v1666 = vld [vmem:[%s1664 + $0x4] sm:$0xf]
        %v1667 = vld [vmem:[%s1664 + $0x8] sm:$0xf]
        %v1668 = vld [vmem:[%s1664 + $0xc] sm:$0xf]
        %v1669 = vld [vmem:[%s1664 + $0x10] sm:$0xf]
        %v1670 = vld [vmem:[%s1664 + $0x14] sm:$0xf]
        %v1671 = vld [vmem:[%s1664 + $0x18] sm:$0xf]
        %v1672 = vld [vmem:[%s1664 + $0x1c] sm:$0xf]
        %v1673 = vld [vmem:[%s1664 + $0x20] sm:$0xf]
        %v1674 = vld [vmem:[%s1664 + $0x24] sm:$0xf]
        %v1675 = vld [vmem:[%s1664 + $0x28] sm:$0xf]
        %v1676 = vld [vmem:[%s1664 + $0x2c] sm:$0xf]
        %v1677 = vld [vmem:[%s1664 + $0x30] sm:$0xf]
        %v1678 = vld [vmem:[%s1664 + $0x34] sm:$0xf]
        %v1679 = vld [vmem:[%s1664 + $0x38] sm:$0xf]
        %v1680 = vld [vmem:[%s1664 + $0x3c] sm:$0xf]
        %v1697 = vunpack.c.l.b16 %v1665
        %v1698 = vunpack.c.l.b16 %v1666
        %v1699 = vunpack.c.l.b16 %v1667
        %v1700 = vunpack.c.l.b16 %v1668
        %v1701 = vunpack.c.l.b16 %v1669
        %v1702 = vunpack.c.l.b16 %v1670
        %v1703 = vunpack.c.l.b16 %v1671
        %v1704 = vunpack.c.l.b16 %v1672
        %v1705 = vunpack.c.l.b16 %v1673
        %v1706 = vunpack.c.l.b16 %v1674
        %v1707 = vunpack.c.l.b16 %v1675
        %v1708 = vunpack.c.l.b16 %v1676
        %v1709 = vunpack.c.l.b16 %v1677
        %v1710 = vunpack.c.l.b16 %v1678
        %v1711 = vunpack.c.l.b16 %v1679
        %v1712 = vunpack.c.l.b16 %v1680
        %v1713 = vpack.c.b16 %v1698, %v1697
        %v1714 = vpack.c.b16 %v1700, %v1699
        %v1715 = vpack.c.b16 %v1702, %v1701
        %v1716 = vpack.c.b16 %v1704, %v1703
        %v1717 = vpack.c.b16 %v1706, %v1705
        %v1718 = vpack.c.b16 %v1708, %v1707
        %v1719 = vpack.c.b16 %v1710, %v1709
        %v1720 = vpack.c.b16 %v1712, %v1711
        %1729 = vmatprep.subr.bf16.mxu0 0
        %1730 = vmatpush1.bf16.msra.mxu0 %v1713
        %1731 = vmatprep.subr.bf16.mxu0 0
        %1732 = vmatpush1.bf16.msra.mxu0 %v1714
        %1733 = vmatprep.subr.bf16.mxu0 0
        %1734 = vmatpush1.bf16.msra.mxu0 %v1715
        %1735 = vmatprep.subr.bf16.mxu0 0
        %1736 = vmatpush1.bf16.msra.mxu0 %v1716
        %1737 = vmatprep.subr.bf16.mxu0 0
        %1738 = vmatpush1.bf16.msra.mxu0 %v1717
        %1739 = vmatprep.subr.bf16.mxu0 0
        %1740 = vmatpush1.bf16.msra.mxu0 %v1718
        %1741 = vmatprep.subr.bf16.mxu0 0
        %1742 = vmatpush1.bf16.msra.mxu0 %v1719
        %1743 = vmatprep.subr.bf16.mxu0 0
        %1744 = vmatpush1.bf16.msra.mxu0 %v1720
        %1745 = vmatprep.subr.bf16.mxu0 0
        %1746 = vmatpush1.bf16.msra.mxu0 0
        %1747 = vmatprep.subr.bf16.mxu0 0
        %1748 = vmatpush1.bf16.msra.mxu0 0
        %1749 = vmatprep.subr.bf16.mxu0 0
        %1750 = vmatpush1.bf16.msra.mxu0 0
        %1751 = vmatprep.subr.bf16.mxu0 0
        %1752 = vmatpush1.bf16.msra.mxu0 0
        %1753 = vmatprep.subr.bf16.mxu0 0
        %1754 = vmatpush1.bf16.msra.mxu0 0
        %1755 = vmatprep.subr.bf16.mxu0 0
        %1756 = vmatpush1.bf16.msra.mxu0 0
        %1757 = vmatprep.subr.bf16.mxu0 0
        %1758 = vmatpush1.bf16.msra.mxu0 0
        %1759 = vmatprep.subr.bf16.mxu0 0
        %1760 = vmatpush1.bf16.msra.mxu0 0
        %1761 = vmatprep.mubr.bf16.mxu0 0
        %1762 = vmatmul.mubr.bf16.gmra.mrb[0].mxu0 %v1663
        %v1763 = vpop.f32.mrb[0].mxu0
        %v1764 = vadd.f32 0.0, %v1763
        %v1765 = vpop.f32.mrb[0].mxu0
        %v1766 = vpop.f32.mrb[0].mxu0
        %v1767 = vadd.f32 0.0, %v1766
        %v1768 = vpop.f32.mrb[0].mxu0
        %1769 = vdwg.mxu0
        %v1786 = vunpack.c.l.b16 %v1635
        %v1787 = vunpack.c.l.b16 %v1636
        %v1788 = vunpack.c.l.b16 %v1637
        %v1789 = vunpack.c.l.b16 %v1638
        %v1790 = vunpack.c.l.b16 %v1639
        %v1791 = vunpack.c.l.b16 %v1640
        %v1792 = vunpack.c.l.b16 %v1641
        %v1793 = vunpack.c.l.b16 %v1642
        %v1794 = vunpack.c.l.b16 %v1643
        %v1795 = vunpack.c.l.b16 %v1644
        %v1796 = vunpack.c.l.b16 %v1645
        %v1797 = vunpack.c.l.b16 %v1646
        %v1798 = vunpack.c.l.b16 %v1647
        %v1799 = vunpack.c.l.b16 %v1648
        %v1800 = vunpack.c.l.b16 %v1649
        %v1801 = vunpack.c.l.b16 %v1650
        %v1802 = vpack.c.b16 %v1787, %v1786
        %v1803 = vpack.c.b16 %v1789, %v1788
        %v1804 = vpack.c.b16 %v1791, %v1790
        %v1805 = vpack.c.b16 %v1793, %v1792
        %v1806 = vpack.c.b16 %v1795, %v1794
        %v1807 = vpack.c.b16 %v1797, %v1796
        %v1808 = vpack.c.b16 %v1799, %v1798
        %v1809 = vpack.c.b16 %v1801, %v1800
        %1818 = vmatprep.subr.bf16.mxu0 0
        %1819 = vmatpush1.bf16.msra.mxu0 %v1802
        %1820 = vmatprep.subr.bf16.mxu0 0
        %1821 = vmatpush1.bf16.msra.mxu0 %v1803
        %1822 = vmatprep.subr.bf16.mxu0 0
        %1823 = vmatpush1.bf16.msra.mxu0 %v1804
        %1824 = vmatprep.subr.bf16.mxu0 0
        %1825 = vmatpush1.bf16.msra.mxu0 %v1805
        %1826 = vmatprep.subr.bf16.mxu0 0
        %1827 = vmatpush1.bf16.msra.mxu0 %v1806
        %1828 = vmatprep.subr.bf16.mxu0 0
        %1829 = vmatpush1.bf16.msra.mxu0 %v1807
        %1830 = vmatprep.subr.bf16.mxu0 0
        %1831 = vmatpush1.bf16.msra.mxu0 %v1808
        %1832 = vmatprep.subr.bf16.mxu0 0
        %1833 = vmatpush1.bf16.msra.mxu0 %v1809
        %1834 = vmatprep.subr.bf16.mxu0 0
        %1835 = vmatpush1.bf16.msra.mxu0 0
        %1836 = vmatprep.subr.bf16.mxu0 0
        %1837 = vmatpush1.bf16.msra.mxu0 0
        %1838 = vmatprep.subr.bf16.mxu0 0
        %1839 = vmatpush1.bf16.msra.mxu0 0
        %1840 = vmatprep.subr.bf16.mxu0 0
        %1841 = vmatpush1.bf16.msra.mxu0 0
        %1842 = vmatprep.subr.bf16.mxu0 0
        %1843 = vmatpush1.bf16.msra.mxu0 0
        %1844 = vmatprep.subr.bf16.mxu0 0
        %1845 = vmatpush1.bf16.msra.mxu0 0
        %1846 = vmatprep.subr.bf16.mxu0 0
        %1847 = vmatpush1.bf16.msra.mxu0 0
        %1848 = vmatprep.subr.bf16.mxu0 0
        %1849 = vmatpush1.bf16.msra.mxu0 0
        %1850 = vmatprep.mubr.bf16.mxu0 0
        %1851 = vmatmul.mubr.bf16.gmra.mrb[0].mxu0 %v1634
        %v1852 = vpop.f32.mrb[0].mxu0
        %v1853 = vadd.f32 %v1764, %v1852
        %v1854 = vpop.f32.mrb[0].mxu0
        %v1855 = vpop.f32.mrb[0].mxu0
        %v1856 = vadd.f32 %v1767, %v1855
        %v1857 = vpop.f32.mrb[0].mxu0
        %1858 = vdwg.mxu0
        %v1859 = vld [vmem:[#allocation2 + $0x2] sm:$0xf]
        %v1860 = vld [vmem:[#allocation2 + $0xa] sm:$0xf]
        %v1861 = vld [vmem:[#allocation2 + $0x12] sm:$0xf]
        %v1862 = vld [vmem:[#allocation2 + $0x1a] sm:$0xf]
        %v1867 = vcombine.low %v1859, %v1860
        %v1868 = vcombine.low %v1861, %v1862
        %v1871 = vpack.c.bf16 %v1868, %v1867
        %s1872 = scalar_lea.vmem [#allocation9], 128
        %v1873 = vld [vmem:[%s1872] sm:$0xf]
        %v1874 = vld [vmem:[%s1872 + $0x4] sm:$0xf]
        %v1875 = vld [vmem:[%s1872 + $0x8] sm:$0xf]
        %v1876 = vld [vmem:[%s1872 + $0xc] sm:$0xf]
        %v1877 = vld [vmem:[%s1872 + $0x10] sm:$0xf]
        %v1878 = vld [vmem:[%s1872 + $0x14] sm:$0xf]
        %v1879 = vld [vmem:[%s1872 + $0x18] sm:$0xf]
        %v1880 = vld [vmem:[%s1872 + $0x1c] sm:$0xf]
        %v1881 = vld [vmem:[%s1872 + $0x20] sm:$0xf]
        %v1882 = vld [vmem:[%s1872 + $0x24] sm:$0xf]
        %v1883 = vld [vmem:[%s1872 + $0x28] sm:$0xf]
        %v1884 = vld [vmem:[%s1872 + $0x2c] sm:$0xf]
        %v1885 = vld [vmem:[%s1872 + $0x30] sm:$0xf]
        %v1886 = vld [vmem:[%s1872 + $0x34] sm:$0xf]
        %v1887 = vld [vmem:[%s1872 + $0x38] sm:$0xf]
        %v1888 = vld [vmem:[%s1872 + $0x3c] sm:$0xf]
        %v1905 = vunpack.c.l.b16 %v1873
        %v1906 = vunpack.c.l.b16 %v1874
        %v1907 = vunpack.c.l.b16 %v1875
        %v1908 = vunpack.c.l.b16 %v1876
        %v1909 = vunpack.c.l.b16 %v1877
        %v1910 = vunpack.c.l.b16 %v1878
        %v1911 = vunpack.c.l.b16 %v1879
        %v1912 = vunpack.c.l.b16 %v1880
        %v1913 = vunpack.c.l.b16 %v1881
        %v1914 = vunpack.c.l.b16 %v1882
        %v1915 = vunpack.c.l.b16 %v1883
        %v1916 = vunpack.c.l.b16 %v1884
        %v1917 = vunpack.c.l.b16 %v1885
        %v1918 = vunpack.c.l.b16 %v1886
        %v1919 = vunpack.c.l.b16 %v1887
        %v1920 = vunpack.c.l.b16 %v1888
        %v1921 = vpack.c.b16 %v1906, %v1905
        %v1922 = vpack.c.b16 %v1908, %v1907
        %v1923 = vpack.c.b16 %v1910, %v1909
        %v1924 = vpack.c.b16 %v1912, %v1911
        %v1925 = vpack.c.b16 %v1914, %v1913
        %v1926 = vpack.c.b16 %v1916, %v1915
        %v1927 = vpack.c.b16 %v1918, %v1917
        %v1928 = vpack.c.b16 %v1920, %v1919
        %1937 = vmatprep.subr.bf16.mxu0 0
        %1938 = vmatpush1.bf16.msra.mxu0 %v1921
        %1939 = vmatprep.subr.bf16.mxu0 0
        %1940 = vmatpush1.bf16.msra.mxu0 %v1922
        %1941 = vmatprep.subr.bf16.mxu0 0
        %1942 = vmatpush1.bf16.msra.mxu0 %v1923
        %1943 = vmatprep.subr.bf16.mxu0 0
        %1944 = vmatpush1.bf16.msra.mxu0 %v1924
        %1945 = vmatprep.subr.bf16.mxu0 0
        %1946 = vmatpush1.bf16.msra.mxu0 %v1925
        %1947 = vmatprep.subr.bf16.mxu0 0
        %1948 = vmatpush1.bf16.msra.mxu0 %v1926
        %1949 = vmatprep.subr.bf16.mxu0 0
        %1950 = vmatpush1.bf16.msra.mxu0 %v1927
        %1951 = vmatprep.subr.bf16.mxu0 0
        %1952 = vmatpush1.bf16.msra.mxu0 %v1928
        %1953 = vmatprep.subr.bf16.mxu0 0
        %1954 = vmatpush1.bf16.msra.mxu0 0
        %1955 = vmatprep.subr.bf16.mxu0 0
        %1956 = vmatpush1.bf16.msra.mxu0 0
        %1957 = vmatprep.subr.bf16.mxu0 0
        %1958 = vmatpush1.bf16.msra.mxu0 0
        %1959 = vmatprep.subr.bf16.mxu0 0
        %1960 = vmatpush1.bf16.msra.mxu0 0
        %1961 = vmatprep.subr.bf16.mxu0 0
        %1962 = vmatpush1.bf16.msra.mxu0 0
        %1963 = vmatprep.subr.bf16.mxu0 0
        %1964 = vmatpush1.bf16.msra.mxu0 0
        %1965 = vmatprep.subr.bf16.mxu0 0
        %1966 = vmatpush1.bf16.msra.mxu0 0
        %1967 = vmatprep.subr.bf16.mxu0 0
        %1968 = vmatpush1.bf16.msra.mxu0 0
        %1969 = vmatprep.mubr.bf16.mxu0 0
        %1970 = vmatmul.mubr.bf16.gmra.mrb[0].mxu0 %v1871
        %v1971 = vpop.f32.mrb[0].mxu0
        %v1972 = vadd.f32 0.0, %v1971
        %v1973 = vpop.f32.mrb[0].mxu0
        %v1974 = vpop.f32.mrb[0].mxu0
        %v1975 = vadd.f32 0.0, %v1974
        %v1976 = vpop.f32.mrb[0].mxu0
        %1977 = vdwg.mxu0
        %v1978 = vadd.f32 %v1853, %v1972
        %v1979 = vadd.f32 %v1856, %v1975
        %v1980 = vld [vmem:[%s1617] sm:$0xf]
        %v1981 = vld [vmem:[%s1617 + $0x8] sm:$0xf]
        %v1982 = vld [vmem:[%s1617 + $0x10] sm:$0xf]
        %v1983 = vld [vmem:[%s1617 + $0x18] sm:$0xf]
        %v1988 = vcombine.low %v1980, %v1981
        %v1989 = vcombine.low %v1982, %v1983
        %v1992 = vpack.c.bf16 %v1989, %v1988
        %s1993 = scalar_lea.vmem [#allocation9], 192
        %v1994 = vld [vmem:[%s1993] sm:$0xf]
        %v1995 = vld [vmem:[%s1993 + $0x4] sm:$0xf]
        %v1996 = vld [vmem:[%s1993 + $0x8] sm:$0xf]
        %v1997 = vld [vmem:[%s1993 + $0xc] sm:$0xf]
        %v1998 = vld [vmem:[%s1993 + $0x10] sm:$0xf]
        %v1999 = vld [vmem:[%s1993 + $0x14] sm:$0xf]
        %v2000 = vld [vmem:[%s1993 + $0x18] sm:$0xf]
        %v2001 = vld [vmem:[%s1993 + $0x1c] sm:$0xf]
        %v2002 = vld [vmem:[%s1993 + $0x20] sm:$0xf]
        %v2003 = vld [vmem:[%s1993 + $0x24] sm:$0xf]
        %v2004 = vld [vmem:[%s1993 + $0x28] sm:$0xf]
        %v2005 = vld [vmem:[%s1993 + $0x2c] sm:$0xf]
        %v2006 = vld [vmem:[%s1993 + $0x30] sm:$0xf]
        %v2007 = vld [vmem:[%s1993 + $0x34] sm:$0xf]
        %v2008 = vld [vmem:[%s1993 + $0x38] sm:$0xf]
        %v2009 = vld [vmem:[%s1993 + $0x3c] sm:$0xf]
        %v2026 = vunpack.c.l.b16 %v1994
        %v2027 = vunpack.c.l.b16 %v1995
        %v2028 = vunpack.c.l.b16 %v1996
        %v2029 = vunpack.c.l.b16 %v1997
        %v2030 = vunpack.c.l.b16 %v1998
        %v2031 = vunpack.c.l.b16 %v1999
        %v2032 = vunpack.c.l.b16 %v2000
        %v2033 = vunpack.c.l.b16 %v2001
        %v2034 = vunpack.c.l.b16 %v2002
        %v2035 = vunpack.c.l.b16 %v2003
        %v2036 = vunpack.c.l.b16 %v2004
        %v2037 = vunpack.c.l.b16 %v2005
        %v2038 = vunpack.c.l.b16 %v2006
        %v2039 = vunpack.c.l.b16 %v2007
        %v2040 = vunpack.c.l.b16 %v2008
        %v2041 = vunpack.c.l.b16 %v2009
        %v2042 = vpack.c.b16 %v2027, %v2026
        %v2043 = vpack.c.b16 %v2029, %v2028
        %v2044 = vpack.c.b16 %v2031, %v2030
        %v2045 = vpack.c.b16 %v2033, %v2032
        %v2046 = vpack.c.b16 %v2035, %v2034
        %v2047 = vpack.c.b16 %v2037, %v2036
        %v2048 = vpack.c.b16 %v2039, %v2038
        %v2049 = vpack.c.b16 %v2041, %v2040
        %2058 = vmatprep.subr.bf16.mxu0 0
        %2059 = vmatpush1.bf16.msra.mxu0 %v2042
        %2060 = vmatprep.subr.bf16.mxu0 0
        %2061 = vmatpush1.bf16.msra.mxu0 %v2043
        %2062 = vmatprep.subr.bf16.mxu0 0
        %2063 = vmatpush1.bf16.msra.mxu0 %v2044
        %2064 = vmatprep.subr.bf16.mxu0 0
        %2065 = vmatpush1.bf16.msra.mxu0 %v2045
        %2066 = vmatprep.subr.bf16.mxu0 0
        %2067 = vmatpush1.bf16.msra.mxu0 %v2046
        %2068 = vmatprep.subr.bf16.mxu0 0
        %2069 = vmatpush1.bf16.msra.mxu0 %v2047
        %2070 = vmatprep.subr.bf16.mxu0 0
        %2071 = vmatpush1.bf16.msra.mxu0 %v2048
        %2072 = vmatprep.subr.bf16.mxu0 0
        %2073 = vmatpush1.bf16.msra.mxu0 %v2049
        %2074 = vmatprep.subr.bf16.mxu0 0
        %2075 = vmatpush1.bf16.msra.mxu0 0
        %2076 = vmatprep.subr.bf16.mxu0 0
        %2077 = vmatpush1.bf16.msra.mxu0 0
        %2078 = vmatprep.subr.bf16.mxu0 0
        %2079 = vmatpush1.bf16.msra.mxu0 0
        %2080 = vmatprep.subr.bf16.mxu0 0
        %2081 = vmatpush1.bf16.msra.mxu0 0
        %2082 = vmatprep.subr.bf16.mxu0 0
        %2083 = vmatpush1.bf16.msra.mxu0 0
        %2084 = vmatprep.subr.bf16.mxu0 0
        %2085 = vmatpush1.bf16.msra.mxu0 0
        %2086 = vmatprep.subr.bf16.mxu0 0
        %2087 = vmatpush1.bf16.msra.mxu0 0
        %2088 = vmatprep.subr.bf16.mxu0 0
        %2089 = vmatpush1.bf16.msra.mxu0 0
        %2090 = vmatprep.mubr.bf16.mxu0 0
        %2091 = vmatmul.mubr.bf16.gmra.mrb[0].mxu0 %v1992
        %v2092 = vpop.f32.mrb[0].mxu0
        %v2093 = vadd.f32 0.0, %v2092
        %v2094 = vpop.f32.mrb[0].mxu0
        %v2095 = vpop.f32.mrb[0].mxu0
        %v2096 = vadd.f32 0.0, %v2095
        %v2097 = vpop.f32.mrb[0].mxu0
        %2098 = vdwg.mxu0
        %v2099 = vadd.f32 %v1978, %v2093
        %v2100 = vadd.f32 %v1979, %v2096
        %v2101 = vld [vmem:[%s1617 + $0x1] sm:$0xf]
        %v2102 = vld [vmem:[%s1617 + $0x9] sm:$0xf]
        %v2103 = vld [vmem:[%s1617 + $0x11] sm:$0xf]
        %v2104 = vld [vmem:[%s1617 + $0x19] sm:$0xf]
        %v2109 = vcombine.low %v2101, %v2102
        %v2110 = vcombine.low %v2103, %v2104
        %v2113 = vpack.c.bf16 %v2110, %v2109
        %s2114 = scalar_lea.vmem [#allocation9], 256
        %v2115 = vld [vmem:[%s2114] sm:$0xf]
        %v2116 = vld [vmem:[%s2114 + $0x4] sm:$0xf]
        %v2117 = vld [vmem:[%s2114 + $0x8] sm:$0xf]
        %v2118 = vld [vmem:[%s2114 + $0xc] sm:$0xf]
        %v2119 = vld [vmem:[%s2114 + $0x10] sm:$0xf]
        %v2120 = vld [vmem:[%s2114 + $0x14] sm:$0xf]
        %v2121 = vld [vmem:[%s2114 + $0x18] sm:$0xf]
        %v2122 = vld [vmem:[%s2114 + $0x1c] sm:$0xf]
        %v2123 = vld [vmem:[%s2114 + $0x20] sm:$0xf]
        %v2124 = vld [vmem:[%s2114 + $0x24] sm:$0xf]
        %v2125 = vld [vmem:[%s2114 + $0x28] sm:$0xf]
        %v2126 = vld [vmem:[%s2114 + $0x2c] sm:$0xf]
        %v2127 = vld [vmem:[%s2114 + $0x30] sm:$0xf]
        %v2128 = vld [vmem:[%s2114 + $0x34] sm:$0xf]
        %v2129 = vld [vmem:[%s2114 + $0x38] sm:$0xf]
        %v2130 = vld [vmem:[%s2114 + $0x3c] sm:$0xf]
        %v2147 = vunpack.c.l.b16 %v2115
        %v2148 = vunpack.c.l.b16 %v2116
        %v2149 = vunpack.c.l.b16 %v2117
        %v2150 = vunpack.c.l.b16 %v2118
        %v2151 = vunpack.c.l.b16 %v2119
        %v2152 = vunpack.c.l.b16 %v2120
        %v2153 = vunpack.c.l.b16 %v2121
        %v2154 = vunpack.c.l.b16 %v2122
        %v2155 = vunpack.c.l.b16 %v2123
        %v2156 = vunpack.c.l.b16 %v2124
        %v2157 = vunpack.c.l.b16 %v2125
        %v2158 = vunpack.c.l.b16 %v2126
        %v2159 = vunpack.c.l.b16 %v2127
        %v2160 = vunpack.c.l.b16 %v2128
        %v2161 = vunpack.c.l.b16 %v2129
        %v2162 = vunpack.c.l.b16 %v2130
        %v2163 = vpack.c.b16 %v2148, %v2147
        %v2164 = vpack.c.b16 %v2150, %v2149
        %v2165 = vpack.c.b16 %v2152, %v2151
        %v2166 = vpack.c.b16 %v2154, %v2153
        %v2167 = vpack.c.b16 %v2156, %v2155
        %v2168 = vpack.c.b16 %v2158, %v2157
        %v2169 = vpack.c.b16 %v2160, %v2159
        %v2170 = vpack.c.b16 %v2162, %v2161
        %2179 = vmatprep.subr.bf16.mxu0 0
        %2180 = vmatpush1.bf16.msra.mxu0 %v2163
        %2181 = vmatprep.subr.bf16.mxu0 0
        %2182 = vmatpush1.bf16.msra.mxu0 %v2164
        %2183 = vmatprep.subr.bf16.mxu0 0
        %2184 = vmatpush1.bf16.msra.mxu0 %v2165
        %2185 = vmatprep.subr.bf16.mxu0 0
        %2186 = vmatpush1.bf16.msra.mxu0 %v2166
        %2187 = vmatprep.subr.bf16.mxu0 0
        %2188 = vmatpush1.bf16.msra.mxu0 %v2167
        %2189 = vmatprep.subr.bf16.mxu0 0
        %2190 = vmatpush1.bf16.msra.mxu0 %v2168
        %2191 = vmatprep.subr.bf16.mxu0 0
        %2192 = vmatpush1.bf16.msra.mxu0 %v2169
        %2193 = vmatprep.subr.bf16.mxu0 0
        %2194 = vmatpush1.bf16.msra.mxu0 %v2170
        %2195 = vmatprep.subr.bf16.mxu0 0
        %2196 = vmatpush1.bf16.msra.mxu0 0
        %2197 = vmatprep.subr.bf16.mxu0 0
        %2198 = vmatpush1.bf16.msra.mxu0 0
        %2199 = vmatprep.subr.bf16.mxu0 0
        %2200 = vmatpush1.bf16.msra.mxu0 0
        %2201 = vmatprep.subr.bf16.mxu0 0
        %2202 = vmatpush1.bf16.msra.mxu0 0
        %2203 = vmatprep.subr.bf16.mxu0 0
        %2204 = vmatpush1.bf16.msra.mxu0 0
        %2205 = vmatprep.subr.bf16.mxu0 0
        %2206 = vmatpush1.bf16.msra.mxu0 0
        %2207 = vmatprep.subr.bf16.mxu0 0
        %2208 = vmatpush1.bf16.msra.mxu0 0
        %2209 = vmatprep.subr.bf16.mxu0 0
        %2210 = vmatpush1.bf16.msra.mxu0 0
        %2211 = vmatprep.mubr.bf16.mxu0 0
        %2212 = vmatmul.mubr.bf16.gmra.mrb[0].mxu0 %v2113
        %v2213 = vpop.f32.mrb[0].mxu0
        %v2214 = vadd.f32 0.0, %v2213
        %v2215 = vpop.f32.mrb[0].mxu0
        %v2216 = vpop.f32.mrb[0].mxu0
        %v2217 = vadd.f32 0.0, %v2216
        %v2218 = vpop.f32.mrb[0].mxu0
        %2219 = vdwg.mxu0
        %v2220 = vadd.f32 %v2099, %v2214
        %v2221 = vadd.f32 %v2100, %v2217
        %v2222 = vld [vmem:[%s1617 + $0x2] sm:$0xf]
        %v2223 = vld [vmem:[%s1617 + $0xa] sm:$0xf]
        %v2224 = vld [vmem:[%s1617 + $0x12] sm:$0xf]
        %v2225 = vld [vmem:[%s1617 + $0x1a] sm:$0xf]
        %v2230 = vcombine.low %v2222, %v2223
        %v2231 = vcombine.low %v2224, %v2225
        %v2234 = vpack.c.bf16 %v2231, %v2230
        %s2235 = scalar_lea.vmem [#allocation9], 320
        %v2236 = vld [vmem:[%s2235] sm:$0xf]
        %v2237 = vld [vmem:[%s2235 + $0x4] sm:$0xf]
        %v2238 = vld [vmem:[%s2235 + $0x8] sm:$0xf]
        %v2239 = vld [vmem:[%s2235 + $0xc] sm:$0xf]
        %v2240 = vld [vmem:[%s2235 + $0x10] sm:$0xf]
        %v2241 = vld [vmem:[%s2235 + $0x14] sm:$0xf]
        %v2242 = vld [vmem:[%s2235 + $0x18] sm:$0xf]
        %v2243 = vld [vmem:[%s2235 + $0x1c] sm:$0xf]
        %v2244 = vld [vmem:[%s2235 + $0x20] sm:$0xf]
        %v2245 = vld [vmem:[%s2235 + $0x24] sm:$0xf]
        %v2246 = vld [vmem:[%s2235 + $0x28] sm:$0xf]
        %v2247 = vld [vmem:[%s2235 + $0x2c] sm:$0xf]
        %v2248 = vld [vmem:[%s2235 + $0x30] sm:$0xf]
        %v2249 = vld [vmem:[%s2235 + $0x34] sm:$0xf]
        %v2250 = vld [vmem:[%s2235 + $0x38] sm:$0xf]
        %v2251 = vld [vmem:[%s2235 + $0x3c] sm:$0xf]
        %v2268 = vunpack.c.l.b16 %v2236
        %v2269 = vunpack.c.l.b16 %v2237
        %v2270 = vunpack.c.l.b16 %v2238
        %v2271 = vunpack.c.l.b16 %v2239
        %v2272 = vunpack.c.l.b16 %v2240
        %v2273 = vunpack.c.l.b16 %v2241
        %v2274 = vunpack.c.l.b16 %v2242
        %v2275 = vunpack.c.l.b16 %v2243
        %v2276 = vunpack.c.l.b16 %v2244
        %v2277 = vunpack.c.l.b16 %v2245
        %v2278 = vunpack.c.l.b16 %v2246
        %v2279 = vunpack.c.l.b16 %v2247
        %v2280 = vunpack.c.l.b16 %v2248
        %v2281 = vunpack.c.l.b16 %v2249
        %v2282 = vunpack.c.l.b16 %v2250
        %v2283 = vunpack.c.l.b16 %v2251
        %v2284 = vpack.c.b16 %v2269, %v2268
        %v2285 = vpack.c.b16 %v2271, %v2270
        %v2286 = vpack.c.b16 %v2273, %v2272
        %v2287 = vpack.c.b16 %v2275, %v2274
        %v2288 = vpack.c.b16 %v2277, %v2276
        %v2289 = vpack.c.b16 %v2279, %v2278
        %v2290 = vpack.c.b16 %v2281, %v2280
        %v2291 = vpack.c.b16 %v2283, %v2282
        %2300 = vmatprep.subr.bf16.mxu0 0
        %2301 = vmatpush1.bf16.msra.mxu0 %v2284
        %2302 = vmatprep.subr.bf16.mxu0 0
        %2303 = vmatpush1.bf16.msra.mxu0 %v2285
        %2304 = vmatprep.subr.bf16.mxu0 0
        %2305 = vmatpush1.bf16.msra.mxu0 %v2286
        %2306 = vmatprep.subr.bf16.mxu0 0
        %2307 = vmatpush1.bf16.msra.mxu0 %v2287
        %2308 = vmatprep.subr.bf16.mxu0 0
        %2309 = vmatpush1.bf16.msra.mxu0 %v2288
        %2310 = vmatprep.subr.bf16.mxu0 0
        %2311 = vmatpush1.bf16.msra.mxu0 %v2289
        %2312 = vmatprep.subr.bf16.mxu0 0
        %2313 = vmatpush1.bf16.msra.mxu0 %v2290
        %2314 = vmatprep.subr.bf16.mxu0 0
        %2315 = vmatpush1.bf16.msra.mxu0 %v2291
        %2316 = vmatprep.subr.bf16.mxu0 0
        %2317 = vmatpush1.bf16.msra.mxu0 0
        %2318 = vmatprep.subr.bf16.mxu0 0
        %2319 = vmatpush1.bf16.msra.mxu0 0
        %2320 = vmatprep.subr.bf16.mxu0 0
        %2321 = vmatpush1.bf16.msra.mxu0 0
        %2322 = vmatprep.subr.bf16.mxu0 0
        %2323 = vmatpush1.bf16.msra.mxu0 0
        %2324 = vmatprep.subr.bf16.mxu0 0
        %2325 = vmatpush1.bf16.msra.mxu0 0
        %2326 = vmatprep.subr.bf16.mxu0 0
        %2327 = vmatpush1.bf16.msra.mxu0 0
        %2328 = vmatprep.subr.bf16.mxu0 0
        %2329 = vmatpush1.bf16.msra.mxu0 0
        %2330 = vmatprep.subr.bf16.mxu0 0
        %2331 = vmatpush1.bf16.msra.mxu0 0
        %2332 = vmatprep.mubr.bf16.mxu0 0
        %2333 = vmatmul.mubr.bf16.gmra.mrb[0].mxu0 %v2234
        %v2334 = vpop.f32.mrb[0].mxu0
        %v2335 = vadd.f32 0.0, %v2334
        %v2336 = vpop.f32.mrb[0].mxu0
        %v2337 = vpop.f32.mrb[0].mxu0
        %v2338 = vadd.f32 0.0, %v2337
        %v2339 = vpop.f32.mrb[0].mxu0
        %2340 = vdwg.mxu0
        %v2341 = vadd.f32 %v2220, %v2335
        %v2342 = vadd.f32 %v2221, %v2338
        %s2343 = scalar_lea.vmem [#allocation2], 16
        %v2344 = vld [vmem:[%s2343] sm:$0xf]
        %v2345 = vld [vmem:[%s2343 + $0x8] sm:$0xf]
        %v2346 = vld [vmem:[%s2343 + $0x10] sm:$0xf]
        %v2347 = vld [vmem:[%s2343 + $0x18] sm:$0xf]
        %v2352 = vcombine.low %v2344, %v2345
        %v2353 = vcombine.low %v2346, %v2347
        %v2356 = vpack.c.bf16 %v2353, %v2352
        %s2357 = scalar_lea.vmem [#allocation9], 384
        %v2358 = vld [vmem:[%s2357] sm:$0xf]
        %v2359 = vld [vmem:[%s2357 + $0x4] sm:$0xf]
        %v2360 = vld [vmem:[%s2357 + $0x8] sm:$0xf]
        %v2361 = vld [vmem:[%s2357 + $0xc] sm:$0xf]
        %v2362 = vld [vmem:[%s2357 + $0x10] sm:$0xf]
        %v2363 = vld [vmem:[%s2357 + $0x14] sm:$0xf]
        %v2364 = vld [vmem:[%s2357 + $0x18] sm:$0xf]
        %v2365 = vld [vmem:[%s2357 + $0x1c] sm:$0xf]
        %v2366 = vld [vmem:[%s2357 + $0x20] sm:$0xf]
        %v2367 = vld [vmem:[%s2357 + $0x24] sm:$0xf]
        %v2368 = vld [vmem:[%s2357 + $0x28] sm:$0xf]
        %v2369 = vld [vmem:[%s2357 + $0x2c] sm:$0xf]
        %v2370 = vld [vmem:[%s2357 + $0x30] sm:$0xf]
        %v2371 = vld [vmem:[%s2357 + $0x34] sm:$0xf]
        %v2372 = vld [vmem:[%s2357 + $0x38] sm:$0xf]
        %v2373 = vld [vmem:[%s2357 + $0x3c] sm:$0xf]
        %v2390 = vunpack.c.l.b16 %v2358
        %v2391 = vunpack.c.l.b16 %v2359
        %v2392 = vunpack.c.l.b16 %v2360
        %v2393 = vunpack.c.l.b16 %v2361
        %v2394 = vunpack.c.l.b16 %v2362
        %v2395 = vunpack.c.l.b16 %v2363
        %v2396 = vunpack.c.l.b16 %v2364
        %v2397 = vunpack.c.l.b16 %v2365
        %v2398 = vunpack.c.l.b16 %v2366
        %v2399 = vunpack.c.l.b16 %v2367
        %v2400 = vunpack.c.l.b16 %v2368
        %v2401 = vunpack.c.l.b16 %v2369
        %v2402 = vunpack.c.l.b16 %v2370
        %v2403 = vunpack.c.l.b16 %v2371
        %v2404 = vunpack.c.l.b16 %v2372
        %v2405 = vunpack.c.l.b16 %v2373
        %v2406 = vpack.c.b16 %v2391, %v2390
        %v2407 = vpack.c.b16 %v2393, %v2392
        %v2408 = vpack.c.b16 %v2395, %v2394
        %v2409 = vpack.c.b16 %v2397, %v2396
        %v2410 = vpack.c.b16 %v2399, %v2398
        %v2411 = vpack.c.b16 %v2401, %v2400
        %v2412 = vpack.c.b16 %v2403, %v2402
        %v2413 = vpack.c.b16 %v2405, %v2404
        %2422 = vmatprep.subr.bf16.mxu0 0
        %2423 = vmatpush1.bf16.msra.mxu0 %v2406
        %2424 = vmatprep.subr.bf16.mxu0 0
        %2425 = vmatpush1.bf16.msra.mxu0 %v2407
        %2426 = vmatprep.subr.bf16.mxu0 0
        %2427 = vmatpush1.bf16.msra.mxu0 %v2408
        %2428 = vmatprep.subr.bf16.mxu0 0
        %2429 = vmatpush1.bf16.msra.mxu0 %v2409
        %2430 = vmatprep.subr.bf16.mxu0 0
        %2431 = vmatpush1.bf16.msra.mxu0 %v2410
        %2432 = vmatprep.subr.bf16.mxu0 0
        %2433 = vmatpush1.bf16.msra.mxu0 %v2411
        %2434 = vmatprep.subr.bf16.mxu0 0
        %2435 = vmatpush1.bf16.msra.mxu0 %v2412
        %2436 = vmatprep.subr.bf16.mxu0 0
        %2437 = vmatpush1.bf16.msra.mxu0 %v2413
        %2438 = vmatprep.subr.bf16.mxu0 0
        %2439 = vmatpush1.bf16.msra.mxu0 0
        %2440 = vmatprep.subr.bf16.mxu0 0
        %2441 = vmatpush1.bf16.msra.mxu0 0
        %2442 = vmatprep.subr.bf16.mxu0 0
        %2443 = vmatpush1.bf16.msra.mxu0 0
        %2444 = vmatprep.subr.bf16.mxu0 0
        %2445 = vmatpush1.bf16.msra.mxu0 0
        %2446 = vmatprep.subr.bf16.mxu0 0
        %2447 = vmatpush1.bf16.msra.mxu0 0
        %2448 = vmatprep.subr.bf16.mxu0 0
        %2449 = vmatpush1.bf16.msra.mxu0 0
        %2450 = vmatprep.subr.bf16.mxu0 0
        %2451 = vmatpush1.bf16.msra.mxu0 0
        %2452 = vmatprep.subr.bf16.mxu0 0
        %2453 = vmatpush1.bf16.msra.mxu0 0
        %2454 = vmatprep.mubr.bf16.mxu0 0
        %2455 = vmatmul.mubr.bf16.gmra.mrb[0].mxu0 %v2356
        %v2456 = vpop.f32.mrb[0].mxu0
        %v2457 = vadd.f32 0.0, %v2456
        %v2458 = vpop.f32.mrb[0].mxu0
        %v2459 = vpop.f32.mrb[0].mxu0
        %v2460 = vadd.f32 0.0, %v2459
        %v2461 = vpop.f32.mrb[0].mxu0
        %2462 = vdwg.mxu0
        %v2463 = vadd.f32 %v2341, %v2457
        %v2464 = vadd.f32 %v2342, %v2460
        %v2465 = vld [vmem:[%s2343 + $0x1] sm:$0xf]
        %v2466 = vld [vmem:[%s2343 + $0x9] sm:$0xf]
        %v2467 = vld [vmem:[%s2343 + $0x11] sm:$0xf]
        %v2468 = vld [vmem:[%s2343 + $0x19] sm:$0xf]
        %v2473 = vcombine.low %v2465, %v2466
        %v2474 = vcombine.low %v2467, %v2468
        %v2477 = vpack.c.bf16 %v2474, %v2473
        %s2478 = scalar_lea.vmem [#allocation9], 448
        %v2479 = vld [vmem:[%s2478] sm:$0xf]
        %v2480 = vld [vmem:[%s2478 + $0x4] sm:$0xf]
        %v2481 = vld [vmem:[%s2478 + $0x8] sm:$0xf]
        %v2482 = vld [vmem:[%s2478 + $0xc] sm:$0xf]
        %v2483 = vld [vmem:[%s2478 + $0x10] sm:$0xf]
        %v2484 = vld [vmem:[%s2478 + $0x14] sm:$0xf]
        %v2485 = vld [vmem:[%s2478 + $0x18] sm:$0xf]
        %v2486 = vld [vmem:[%s2478 + $0x1c] sm:$0xf]
        %v2487 = vld [vmem:[%s2478 + $0x20] sm:$0xf]
        %v2488 = vld [vmem:[%s2478 + $0x24] sm:$0xf]
        %v2489 = vld [vmem:[%s2478 + $0x28] sm:$0xf]
        %v2490 = vld [vmem:[%s2478 + $0x2c] sm:$0xf]
        %v2491 = vld [vmem:[%s2478 + $0x30] sm:$0xf]
        %v2492 = vld [vmem:[%s2478 + $0x34] sm:$0xf]
        %v2493 = vld [vmem:[%s2478 + $0x38] sm:$0xf]
        %v2494 = vld [vmem:[%s2478 + $0x3c] sm:$0xf]
        %v2511 = vunpack.c.l.b16 %v2479
        %v2512 = vunpack.c.l.b16 %v2480
        %v2513 = vunpack.c.l.b16 %v2481
        %v2514 = vunpack.c.l.b16 %v2482
        %v2515 = vunpack.c.l.b16 %v2483
        %v2516 = vunpack.c.l.b16 %v2484
        %v2517 = vunpack.c.l.b16 %v2485
        %v2518 = vunpack.c.l.b16 %v2486
        %v2519 = vunpack.c.l.b16 %v2487
        %v2520 = vunpack.c.l.b16 %v2488
        %v2521 = vunpack.c.l.b16 %v2489
        %v2522 = vunpack.c.l.b16 %v2490
        %v2523 = vunpack.c.l.b16 %v2491
        %v2524 = vunpack.c.l.b16 %v2492
        %v2525 = vunpack.c.l.b16 %v2493
        %v2526 = vunpack.c.l.b16 %v2494
        %v2527 = vpack.c.b16 %v2512, %v2511
        %v2528 = vpack.c.b16 %v2514, %v2513
        %v2529 = vpack.c.b16 %v2516, %v2515
        %v2530 = vpack.c.b16 %v2518, %v2517
        %v2531 = vpack.c.b16 %v2520, %v2519
        %v2532 = vpack.c.b16 %v2522, %v2521
        %v2533 = vpack.c.b16 %v2524, %v2523
        %v2534 = vpack.c.b16 %v2526, %v2525
        %2543 = vmatprep.subr.bf16.mxu0 0
        %2544 = vmatpush1.bf16.msra.mxu0 %v2527
        %2545 = vmatprep.subr.bf16.mxu0 0
        %2546 = vmatpush1.bf16.msra.mxu0 %v2528
        %2547 = vmatprep.subr.bf16.mxu0 0
        %2548 = vmatpush1.bf16.msra.mxu0 %v2529
        %2549 = vmatprep.subr.bf16.mxu0 0
        %2550 = vmatpush1.bf16.msra.mxu0 %v2530
        %2551 = vmatprep.subr.bf16.mxu0 0
        %2552 = vmatpush1.bf16.msra.mxu0 %v2531
        %2553 = vmatprep.subr.bf16.mxu0 0
        %2554 = vmatpush1.bf16.msra.mxu0 %v2532
        %2555 = vmatprep.subr.bf16.mxu0 0
        %2556 = vmatpush1.bf16.msra.mxu0 %v2533
        %2557 = vmatprep.subr.bf16.mxu0 0
        %2558 = vmatpush1.bf16.msra.mxu0 %v2534
        %2559 = vmatprep.subr.bf16.mxu0 0
        %2560 = vmatpush1.bf16.msra.mxu0 0
        %2561 = vmatprep.subr.bf16.mxu0 0
        %2562 = vmatpush1.bf16.msra.mxu0 0
        %2563 = vmatprep.subr.bf16.mxu0 0
        %2564 = vmatpush1.bf16.msra.mxu0 0
        %2565 = vmatprep.subr.bf16.mxu0 0
        %2566 = vmatpush1.bf16.msra.mxu0 0
        %2567 = vmatprep.subr.bf16.mxu0 0
        %2568 = vmatpush1.bf16.msra.mxu0 0
        %2569 = vmatprep.subr.bf16.mxu0 0
        %2570 = vmatpush1.bf16.msra.mxu0 0
        %2571 = vmatprep.subr.bf16.mxu0 0
        %2572 = vmatpush1.bf16.msra.mxu0 0
        %2573 = vmatprep.subr.bf16.mxu0 0
        %2574 = vmatpush1.bf16.msra.mxu0 0
        %2575 = vmatprep.mubr.bf16.mxu0 0
        %2576 = vmatmul.mubr.bf16.gmra.mrb[0].mxu0 %v2477
        %v2577 = vpop.f32.mrb[0].mxu0
        %v2578 = vadd.f32 0.0, %v2577
        %v2579 = vpop.f32.mrb[0].mxu0
        %v2580 = vpop.f32.mrb[0].mxu0
        %v2581 = vadd.f32 0.0, %v2580
        %v2582 = vpop.f32.mrb[0].mxu0
        %2583 = vdwg.mxu0
        %v2584 = vadd.f32 %v2463, %v2578
        %v2585 = vadd.f32 %v2464, %v2581
        %v2586 = vld [vmem:[%s2343 + $0x2] sm:$0xf]
        %v2587 = vld [vmem:[%s2343 + $0xa] sm:$0xf]
        %v2588 = vld [vmem:[%s2343 + $0x12] sm:$0xf]
        %v2589 = vld [vmem:[%s2343 + $0x1a] sm:$0xf]
        %v2594 = vcombine.low %v2586, %v2587
        %v2595 = vcombine.low %v2588, %v2589
        %v2598 = vpack.c.bf16 %v2595, %v2594
        %s2599 = scalar_lea.vmem [#allocation9], 512
        %v2600 = vld [vmem:[%s2599] sm:$0xf]
        %v2601 = vld [vmem:[%s2599 + $0x4] sm:$0xf]
        %v2602 = vld [vmem:[%s2599 + $0x8] sm:$0xf]
        %v2603 = vld [vmem:[%s2599 + $0xc] sm:$0xf]
        %v2604 = vld [vmem:[%s2599 + $0x10] sm:$0xf]
        %v2605 = vld [vmem:[%s2599 + $0x14] sm:$0xf]
        %v2606 = vld [vmem:[%s2599 + $0x18] sm:$0xf]
        %v2607 = vld [vmem:[%s2599 + $0x1c] sm:$0xf]
        %v2608 = vld [vmem:[%s2599 + $0x20] sm:$0xf]
        %v2609 = vld [vmem:[%s2599 + $0x24] sm:$0xf]
        %v2610 = vld [vmem:[%s2599 + $0x28] sm:$0xf]
        %v2611 = vld [vmem:[%s2599 + $0x2c] sm:$0xf]
        %v2612 = vld [vmem:[%s2599 + $0x30] sm:$0xf]
        %v2613 = vld [vmem:[%s2599 + $0x34] sm:$0xf]
        %v2614 = vld [vmem:[%s2599 + $0x38] sm:$0xf]
        %v2615 = vld [vmem:[%s2599 + $0x3c] sm:$0xf]
        %v2632 = vunpack.c.l.b16 %v2600
        %v2633 = vunpack.c.l.b16 %v2601
        %v2634 = vunpack.c.l.b16 %v2602
        %v2635 = vunpack.c.l.b16 %v2603
        %v2636 = vunpack.c.l.b16 %v2604
        %v2637 = vunpack.c.l.b16 %v2605
        %v2638 = vunpack.c.l.b16 %v2606
        %v2639 = vunpack.c.l.b16 %v2607
        %v2640 = vunpack.c.l.b16 %v2608
        %v2641 = vunpack.c.l.b16 %v2609
        %v2642 = vunpack.c.l.b16 %v2610
        %v2643 = vunpack.c.l.b16 %v2611
        %v2644 = vunpack.c.l.b16 %v2612
        %v2645 = vunpack.c.l.b16 %v2613
        %v2646 = vunpack.c.l.b16 %v2614
        %v2647 = vunpack.c.l.b16 %v2615
        %v2648 = vpack.c.b16 %v2633, %v2632
        %v2649 = vpack.c.b16 %v2635, %v2634
        %v2650 = vpack.c.b16 %v2637, %v2636
        %v2651 = vpack.c.b16 %v2639, %v2638
        %v2652 = vpack.c.b16 %v2641, %v2640
        %v2653 = vpack.c.b16 %v2643, %v2642
        %v2654 = vpack.c.b16 %v2645, %v2644
        %v2655 = vpack.c.b16 %v2647, %v2646
        %2664 = vmatprep.subr.bf16.mxu0 0
        %2665 = vmatpush1.bf16.msra.mxu0 %v2648
        %2666 = vmatprep.subr.bf16.mxu0 0
        %2667 = vmatpush1.bf16.msra.mxu0 %v2649
        %2668 = vmatprep.subr.bf16.mxu0 0
        %2669 = vmatpush1.bf16.msra.mxu0 %v2650
        %2670 = vmatprep.subr.bf16.mxu0 0
        %2671 = vmatpush1.bf16.msra.mxu0 %v2651
        %2672 = vmatprep.subr.bf16.mxu0 0
        %2673 = vmatpush1.bf16.msra.mxu0 %v2652
        %2674 = vmatprep.subr.bf16.mxu0 0
        %2675 = vmatpush1.bf16.msra.mxu0 %v2653
        %2676 = vmatprep.subr.bf16.mxu0 0
        %2677 = vmatpush1.bf16.msra.mxu0 %v2654
        %2678 = vmatprep.subr.bf16.mxu0 0
        %2679 = vmatpush1.bf16.msra.mxu0 %v2655
        %2680 = vmatprep.subr.bf16.mxu0 0
        %2681 = vmatpush1.bf16.msra.mxu0 0
        %2682 = vmatprep.subr.bf16.mxu0 0
        %2683 = vmatpush1.bf16.msra.mxu0 0
        %2684 = vmatprep.subr.bf16.mxu0 0
        %2685 = vmatpush1.bf16.msra.mxu0 0
        %2686 = vmatprep.subr.bf16.mxu0 0
        %2687 = vmatpush1.bf16.msra.mxu0 0
        %2688 = vmatprep.subr.bf16.mxu0 0
        %2689 = vmatpush1.bf16.msra.mxu0 0
        %2690 = vmatprep.subr.bf16.mxu0 0
        %2691 = vmatpush1.bf16.msra.mxu0 0
        %2692 = vmatprep.subr.bf16.mxu0 0
        %2693 = vmatpush1.bf16.msra.mxu0 0
        %2694 = vmatprep.subr.bf16.mxu0 0
        %2695 = vmatpush1.bf16.msra.mxu0 0
        %2696 = vmatprep.mubr.bf16.mxu0 0
        %2697 = vmatmul.mubr.bf16.gmra.mrb[0].mxu0 %v2598
        %v2698 = vpop.f32.mrb[0].mxu0
        %v2699 = vadd.f32 0.0, %v2698
        %v2700 = vpop.f32.mrb[0].mxu0
        %v2701 = vpop.f32.mrb[0].mxu0
        %v2702 = vadd.f32 0.0, %v2701
        %v2703 = vpop.f32.mrb[0].mxu0
        %2704 = vdwg.mxu0
        %v2705 = vadd.f32 %v2584, %v2699
        %v2706 = vadd.f32 %v2585, %v2702
        %v2707 = vld [vmem:[#allocation11] sm:$0x1]
        %v2709 = vlaneseq
        %v2710 = vshrl.u32 %v2709, 7
        %v2711 = vsub.s32 0, %v2710
        %v2712 = vrot.slane %v2707, %v2711
        %v2714 = vadd.f32 %v2705, %v2712
        %v2715 = vadd.f32 %v2706, %v2712
        %v2718 = vcombine.high %v2714, %v2714
        %v2719 = vcombine.high %v2715, %v2715
        %2722 = vst [vmem:[%s296] sm:$0xf] %v2714
        %2723 = vst [vmem:[%s296 + $0x4] sm:$0xf] %v2718
        %2724 = vst [vmem:[%s296 + $0x8] sm:$0xf] %v2715
        %2725 = vst [vmem:[%s296 + $0xc] sm:$0xf] %v2719
        %s2726 = sand.u32 %s142, 1
        %s2727 = scalar_lea.sflag [#allocation5], %s2726
        %s2728 = sand.u32 %s142, 1
        %s2729 = smul.addr %s2728, 16
        %s2730 = scalar_lea.vmem [#allocation12], %s2729
        // Predicated region
        $region61: #{feature_extractor_forward.13} parent=39 // pred_check
          %p2731 = pneg %p152
        $region62: #{feature_extractor_forward.13} parent=39 // pred_check_branch
          %2733 = sbr.rel (%p2731) target = $region64
        $region63: #{feature_extractor_forward.13} parent=39 // pred_region
          %s2735 = ssub.s32 256, 256
          %2736 = vsyncadd %s2727, %s2735
          %s2737 = smul.addr %s24, 4
          %s2738 = smul.addr %s2737, 64
          %s2739 = scalar_lea.hbm %s5, %s2738
          %s2740 = sshll.u32 %s2730, 4
          %s2741 = int_to_ptr.vmem [resolvable:$true] %s2740
          %2746 = dma.vmem_to_hbm [thread:$0]  %s2741, 256, %s2739, %s2727, 64, 64, 4
        $region64: #{feature_extractor_forward.13} parent=39 // pred_fallthru
          _
      $region40: #{feature_extractor_forward.13} parent=5 // pred_fallthru
        _
      %p2747 = scmp.le.s32.totalorder 2, %s19
      // Predicated region
      $region65: #{feature_extractor_forward.13} parent=5 // pred_check
        %p2748 = pneg %p2747
      $region66: #{feature_extractor_forward.13} parent=5 // pred_check_branch
        %2750 = sbr.rel (%p2748) target = $region68
      $region67: #{feature_extractor_forward.13} parent=5 // pred_region
        %s2751 = ssub.s32 %s19, 2
        // Predicated region
        $region69: #{feature_extractor_forward.13} parent=67 // pred_check
          %p2752 = pneg %p158
        $region70: #{feature_extractor_forward.13} parent=67 // pred_check_branch
          %2754 = sbr.rel (%p2752) target = $region72
        $region71: #{feature_extractor_forward.13} parent=67 // pred_region
          %s2755 = sand.u32 %s143, 1
          %s2756 = scalar_lea.sflag [#allocation5], %s2755
          %s2757 = sand.u32 %s143, 1
          %s2758 = smul.addr %s2757, 16
          %s2759 = scalar_lea.vmem [#allocation12], %s2758
          %2760 = dma.done %s2756, 256
        $region72: #{feature_extractor_forward.13} parent=67 // pred_fallthru
          _
      $region68: #{feature_extractor_forward.13} parent=5 // pred_fallthru
        _
    $region6: #{feature_extractor_forward.13} parent=1 // loop_footer
      %s23 = sadd.s32 1, %s19
    $region7: #{feature_extractor_forward.13} parent=1 // loop_footer_branch
      %18 = sbr.rel target = $region3
    $region8: #{feature_extractor_forward.13} parent=1 // loop_exit
      _
    %2761 = vsyncpa [#allocation4], 1
    %s2762 = scalar_lea.sflag [#allocation4], 1
    %2763 = vsyncpa %s2762, 1
    %2764 = vsyncpa [#allocation7], 1
    %2765 = vsyncpa [#allocation10], 1
    %2766 = vsyncpa [#allocation5], 1
    %s2767 = scalar_lea.sflag [#allocation5], 1
    %2768 = vsyncpa %s2767, 1

</llo_original>
